<compile_context>
chip_gen: v6e
topology: v6e:2x2x1
jax: 0.10.0
libtpu: 0.0.40
codegen_flags: <defaults>
</compile_context>

<pallas_src>
import functools

import jax
import jax.numpy as jnp
from jax.experimental import pallas as pl
from jax.experimental.pallas import tpu as pltpu

LN_EPS = 1e-5


# ----------------------------------------------------------------------------
# Fused attention helper: per-(batch, head) score GEMMs, ONE shared softmax,
# per-(batch, head) PV GEMMs, ONE out-projection GEMM.
# ----------------------------------------------------------------------------
def _attention(q_bf, k_bf, v_bf, add_mask, wT_out_bf, b_out, *, B, H, Dh, Lq, Lk):
    # q_bf: (B*Lq, E) bf16, k_bf/v_bf: (B*Lk, E) bf16, add_mask: (B*H*Lq, Lk) f32 or None.
    s_blocks = []
    for b in range(B):
        for h in range(H):
            qh = q_bf[b * Lq:(b + 1) * Lq, h * Dh:(h + 1) * Dh]
            kh = k_bf[b * Lk:(b + 1) * Lk, h * Dh:(h + 1) * Dh]
            s_blocks.append(jax.lax.dot_general(
                qh, kh, (((1,), (1,)), ((), ())),
                preferred_element_type=jnp.float32))
    s = jnp.concatenate(s_blocks, axis=0)                 # (B*H*Lq, Lk) f32
    if add_mask is not None:
        s = s + add_mask                                  # scale pre-folded into Q weights
    mx = jnp.max(s, axis=-1, keepdims=True)
    p = jnp.exp(s - mx)
    denom = jnp.sum(p, axis=-1, keepdims=True)
    p = (p * pl.reciprocal(denom, approx=True)).astype(jnp.bfloat16)

    o_rows = []
    for b in range(B):
        o_heads = []
        for h in range(H):
            idx = b * H + h
            ph = p[idx * Lq:(idx + 1) * Lq, :]
            vh = v_bf[b * Lk:(b + 1) * Lk, h * Dh:(h + 1) * Dh]
            o_heads.append(jnp.dot(ph, vh, preferred_element_type=jnp.float32))
        o_rows.append(jnp.concatenate(o_heads, axis=-1))  # (Lq, E) f32
    o = jnp.concatenate(o_rows, axis=0).astype(jnp.bfloat16)   # (B*Lq, E) bf16
    return jnp.dot(o, wT_out_bf, preferred_element_type=jnp.float32) + b_out


# ----------------------------------------------------------------------------
# Fused decoder kernel: one invocation does embedding + all layers + output head.
# ----------------------------------------------------------------------------
def _decoder_kernel(*refs, num_layers, num_heads, hidden_dim, B, Lt, Lm,
                    has_tmask, has_mmask):
    E = hidden_dim
    H = num_heads
    Dh = E // H

    it = iter(refs)
    tgt_ref = next(it)
    mem_ref = next(it)
    tmask_ref = next(it) if has_tmask else None
    mmask_ref = next(it) if has_mmask else None
    (emb_wT_ref, emb_b_ref,
     sa_in_wT_ref, sa_in_b_ref, sa_out_wT_ref, sa_out_b_ref,
     ca_q_wT_ref, ca_q_b_ref, ca_kv_wT_ref, ca_kv_b_ref,
     ca_out_wT_ref, ca_out_b_ref,
     n1_w_ref, n1_b_ref, n2_w_ref, n2_b_ref, n3_w_ref, n3_b_ref,
     lin1_wT_ref, lin1_b_ref, lin2_wT_ref, lin2_b_ref,
     out_wT_ref, out_b_ref, o_ref) = list(it)

    # ---- fold native (seq, batch, feat) -> (batch*seq, feat), once, in VMEM ----
    tgt = tgt_ref[...]                                    # (Lt, B, 2E)
    mem = mem_ref[...]                                    # (Lm, B, E)
    x_in = jnp.concatenate([tgt[:, b, :] for b in range(B)], axis=0)   # (B*Lt, 2E)
    mem_f = jnp.concatenate([mem[:, b, :] for b in range(B)], axis=0)  # (B*Lm, E)
    mem_bf = mem_f.astype(jnp.bfloat16)                   # loop-invariant

    # ---- stacked additive masks (built once, shared across layers/heads) --------
    self_add = (jnp.concatenate([tmask_ref[...]] * (B * H), axis=0)
                if has_tmask else None)                   # (B*H*Lt, Lt)
    cross_add = (jnp.concatenate([mmask_ref[...]] * (B * H), axis=0)
                 if has_mmask else None)                  # (B*H*Lt, Lm)

    def layernorm(y, g, b):
        mean = jnp.mean(y, axis=-1, keepdims=True)
        c = y - mean
        var = jnp.mean(c * c, axis=-1, keepdims=True)
        return c * jax.lax.rsqrt(var + LN_EPS) * g + b

    attn = functools.partial(_attention, B=B, H=H, Dh=Dh)

    # ---- embedding: Linear(2E -> E) ---------------------------------------------
    x = jnp.dot(x_in.astype(jnp.bfloat16), emb_wT_ref[...],
                preferred_element_type=jnp.float32) + emb_b_ref[...]   # (B*Lt, E) f32

    for l in range(num_layers):
        # ---- self attention: single fused QKV GEMM, cast to bf16 once ----------
        qkv = (jnp.dot(x.astype(jnp.bfloat16), sa_in_wT_ref[l],
                       preferred_element_type=jnp.float32)
               + sa_in_b_ref[l]).astype(jnp.bfloat16)      # (B*Lt, 3E)
        sa = attn(qkv[:, :E], qkv[:, E:2 * E], qkv[:, 2 * E:], self_add,
                  sa_out_wT_ref[l], sa_out_b_ref[l], Lq=Lt, Lk=Lt)
        x = layernorm(x + sa, n1_w_ref[l], n1_b_ref[l])

        # ---- cross attention: pre-split Q / fused-KV weights --------------------
        x_bf = x.astype(jnp.bfloat16)
        q = (jnp.dot(x_bf, ca_q_wT_ref[l], preferred_element_type=jnp.float32)
             + ca_q_b_ref[l]).astype(jnp.bfloat16)         # (B*Lt, E)
        kv = (jnp.dot(mem_bf, ca_kv_wT_ref[l], preferred_element_type=jnp.float32)
              + ca_kv_b_ref[l]).astype(jnp.bfloat16)       # (B*Lm, 2E)
        ca = attn(q, kv[:, :E], kv[:, E:], cross_add,
                  ca_out_wT_ref[l], ca_out_b_ref[l], Lq=Lt, Lk=Lm)
        x = layernorm(x + ca, n2_w_ref[l], n2_b_ref[l])

        # ---- feed-forward (relu); intermediate never leaves VMEM ----------------
        ff = jnp.maximum(jnp.dot(x.astype(jnp.bfloat16), lin1_wT_ref[l],
                                 preferred_element_type=jnp.float32)
                         + lin1_b_ref[l], 0.0)
        ff = jnp.dot(ff.astype(jnp.bfloat16), lin2_wT_ref[l],
                     preferred_element_type=jnp.float32) + lin2_b_ref[l]
        x = layernorm(x + ff, n3_w_ref[l], n3_b_ref[l])

    # ---- output head (lane-dense Vpad) and write directly in caller layout -----
    logits = jnp.dot(x.astype(jnp.bfloat16), out_wT_ref[...],
                     preferred_element_type=jnp.float32) + out_b_ref[...]  # (B*Lt, Vpad)
    parts = [logits[b * Lt:(b + 1) * Lt, :][:, None, :] for b in range(B)]
    o_ref[...] = jnp.concatenate(parts, axis=1)            # (Lt, B, Vpad)


# ----------------------------------------------------------------------------
# Wrapper
# ----------------------------------------------------------------------------
def autoregressive_decoder_forward(target, memory, params, num_heads, vocab_out,
                                   target_mask=None, memory_mask=None):
    """target: (Lt, B, 2E) f32, memory: (Lm, B, E) f32 -> logits (Lt, B, vocab_out)."""
    Lt, B, E2 = target.shape
    Lm = memory.shape[0]
    E = E2 // 2
    num_layers = params["sa_in_wT"].shape[0]
    F = params["lin1_wT"].shape[2]
    Vpad = params["out_wT"].shape[1]
    Dh = E // num_heads

    has_tmask = target_mask is not None
    has_mmask = memory_mask is not None

    weight_order = ["emb_wT", "emb_b",
                    "sa_in_wT", "sa_in_b", "sa_out_wT", "sa_out_b",
                    "ca_q_wT", "ca_q_b", "ca_kv_wT", "ca_kv_b",
                    "ca_out_wT", "ca_out_b",
                    "n1_w", "n1_b", "n2_w", "n2_b", "n3_w", "n3_b",
                    "lin1_wT", "lin1_b", "lin2_wT", "lin2_b",
                    "out_wT", "out_b"]
    weights = [params[k] for k in weight_order]

    inputs = [target.astype(jnp.float32), memory.astype(jnp.float32)]
    if has_tmask:
        inputs.append(target_mask.astype(jnp.float32))
    if has_mmask:
        inputs.append(memory_mask.astype(jnp.float32))
    inputs += weights

    def full_spec(a):
        nd = a.ndim
        return pl.BlockSpec(a.shape, lambda i, _nd=nd: (0,) * _nd)
    # NOTE: at production sizes add pipeline_mode=pl.Buffered(1) to the weight specs
    # to avoid double-buffering the (constant-index) resident weights in VMEM.

    in_specs = [full_spec(a) for a in inputs]

    kernel = functools.partial(_decoder_kernel, num_layers=num_layers,
                               num_heads=num_heads, hidden_dim=E,
                               B=B, Lt=Lt, Lm=Lm,
                               has_tmask=has_tmask, has_mmask=has_mmask)

    # advisory cost estimate (helps XLA schedule surrounding ops)
    M, Mk = B * Lt, B * Lm
    attn_fl = lambda Lk: 2 * B * num_heads * Lt * Dh * Lk * 2 + 2 * M * E * E
    fl_layer = (2 * M * E * 3 * E + attn_fl(Lt)
                + 2 * M * E * E + 2 * Mk * E * 2 * E + attn_fl(Lm)
                + 2 * M * E * F + 2 * M * F * E)
    flops = 2 * M * (2 * E) * E + num_layers * fl_layer + 2 * M * E * Vpad
    trans = num_layers * B * num_heads * Lt * (Lt + Lm + 2)
    bytes_accessed = int(sum(a.size * jnp.dtype(a.dtype).itemsize for a in inputs)
                         + Lt * B * Vpad * 4)

    out = pl.pallas_call(
        kernel,
        grid=(1,),
        out_shape=jax.ShapeDtypeStruct((Lt, B, Vpad), jnp.float32),
        in_specs=in_specs,
        out_specs=pl.BlockSpec((Lt, B, Vpad), lambda i: (0, 0, 0)),
        compiler_params=pltpu.CompilerParams(dimension_semantics=("arbitrary",)),
        cost_estimate=pl.CostEstimate(flops=int(flops), transcendentals=int(trans),
                                      bytes_accessed=bytes_accessed),
    )(*inputs)

    # only remaining glue op: drop the lane padding of the output head
    return out[:, :, :vocab_out]


# ----------------------------------------------------------------------------
# Deterministic parameter init (PyTorch-like uniform fan-in init, synthetic),
# prepared directly in kernel-ready layout: pre-transposed, layer-stacked, bf16
# matmul weights, cross-attn Q/KV pre-split, 1/sqrt(Dh) folded into Q, output
# head lane-padded to 128.
# ----------------------------------------------------------------------------
def init_params(seed_key, vocab_size, num_layers, num_heads, hidden_dim):
    E = hidden_dim
    F = hidden_dim                       # module passes dim_feedforward=hidden_dim
    V = vocab_size + 1
    Vpad = ((V + 127) // 128) * 128
    Dh = E // num_heads
    scale = 1.0 / float(Dh) ** 0.5
    counter = [0]

    def nk():
        counter[0] += 1
        return jax.random.fold_in(seed_key, counter[0])

    def lin(out_f, in_f):
        lim = 1.0 / float(in_f) ** 0.5
        w = jax.random.uniform(nk(), (out_f, in_f), jnp.float32, -lim, lim)
        b = jax.random.uniform(nk(), (out_f,), jnp.float32, -lim, lim)
        return w, b

    def stack(items):
        cols = list(zip(*items))
        return [jnp.stack(c) for c in cols]

    def sa_in():
        w, b = lin(3 * E, E)                               # rows [Wq; Wk; Wv]
        wT = w.T                                           # (E, 3E)
        wT = wT.at[:, :E].multiply(scale)                  # fold 1/sqrt(Dh) into Q
        b = b.reshape(1, 3 * E).at[:, :E].multiply(scale)
        return wT, b

    def ca_in():
        w, b = lin(3 * E, E)
        q_wT = w[:E].T * scale                             # (E, E), pre-scaled
        q_b = (b[:E] * scale).reshape(1, E)
        kv_wT = w[E:].T                                    # (E, 2E)
        kv_b = b[E:].reshape(1, 2 * E)
        return q_wT, q_b, kv_wT, kv_b

    def proj_ee():
        w, b = lin(E, E)
        return w.T, b.reshape(1, E)

    def ffn1():
        w, b = lin(F, E)
        return w.T, b.reshape(1, F)

    def ffn2():
        w, b = lin(E, F)
        return w.T, b.reshape(1, E)

    p = {}
    emb_w, emb_b = lin(E, 2 * E)
    p["emb_wT"] = emb_w.T.astype(jnp.bfloat16)             # (2E, E)
    p["emb_b"] = emb_b.reshape(1, E)

    sa_in_wT, sa_in_b = stack([sa_in() for _ in range(num_layers)])
    sa_out_wT, sa_out_b = stack([proj_ee() for _ in range(num_layers)])
    ca_q_wT, ca_q_b, ca_kv_wT, ca_kv_b = stack([ca_in() for _ in range(num_layers)])
    ca_out_wT, ca_out_b = stack([proj_ee() for _ in range(num_layers)])
    lin1_wT, lin1_b = stack([ffn1() for _ in range(num_layers)])
    lin2_wT, lin2_b = stack([ffn2() for _ in range(num_layers)])

    p["sa_in_wT"] = sa_in_wT.astype(jnp.bfloat16)          # (L, E, 3E)
    p["sa_in_b"] = sa_in_b                                 # (L, 1, 3E)
    p["sa_out_wT"] = sa_out_wT.astype(jnp.bfloat16)        # (L, E, E)
    p["sa_out_b"] = sa_out_b                               # (L, 1, E)
    p["ca_q_wT"] = ca_q_wT.astype(jnp.bfloat16)            # (L, E, E)
    p["ca_q_b"] = ca_q_b                                   # (L, 1, E)
    p["ca_kv_wT"] = ca_kv_wT.astype(jnp.bfloat16)          # (L, E, 2E)
    p["ca_kv_b"] = ca_kv_b                                 # (L, 1, 2E)
    p["ca_out_wT"] = ca_out_wT.astype(jnp.bfloat16)        # (L, E, E)
    p["ca_out_b"] = ca_out_b                               # (L, 1, E)
    p["lin1_wT"] = lin1_wT.astype(jnp.bfloat16)            # (L, E, F)
    p["lin1_b"] = lin1_b
    p["lin2_wT"] = lin2_wT.astype(jnp.bfloat16)            # (L, F, E)
    p["lin2_b"] = lin2_b
    for n in ("n1", "n2", "n3"):
        p[n + "_w"] = jnp.ones((num_layers, 1, E), jnp.float32)
        p[n + "_b"] = jnp.zeros((num_layers, 1, E), jnp.float32)

    out_w, out_b = lin(V, E)
    out_wT = jnp.zeros((E, Vpad), jnp.float32).at[:, :V].set(out_w.T)
    out_bp = jnp.zeros((1, Vpad), jnp.float32).at[:, :V].set(out_b.reshape(1, V))
    p["out_wT"] = out_wT.astype(jnp.bfloat16)              # (E, Vpad) lane-dense
    p["out_b"] = out_bp                                    # (1, Vpad)
    return p


# ----------------------------------------------------------------------------
if __name__ == "__main__":
    vocab_size = 20
    num_layers = 2
    num_heads = 4
    hidden_dim = 32
    Lt, Lm, B = 8, 8, 2

    key = jax.random.PRNGKey(0)
    params = init_params(jax.random.fold_in(key, 100), vocab_size, num_layers,
                         num_heads, hidden_dim)

    target = jax.random.normal(jax.random.fold_in(key, 1), (Lt, B, 2 * hidden_dim), jnp.float32)
    memory = jax.random.normal(jax.random.fold_in(key, 2), (Lm, B, hidden_dim), jnp.float32)

    # causal target mask (additive float), memory mask = None (statically skipped)
    causal = jnp.where(
        jnp.arange(Lt)[:, None] >= jnp.arange(Lt)[None, :], 0.0, -1e9
    ).astype(jnp.float32)

    fwd = jax.jit(autoregressive_decoder_forward, static_argnums=(3, 4))
    logits = fwd(target, memory, params, num_heads, vocab_size + 1, causal, None)
    logits = jax.block_until_ready(logits)
    assert logits.shape == (Lt, B, vocab_size + 1)
    assert bool(jnp.all(jnp.isfinite(logits)))
    print("KERNEL_OK")
</pallas_src>

<mosaic_0001>
module attributes {stable_mosaic.version = 11 : i64} {
  func.func @_decoder_kernel(%arg0: i32, %arg1: memref<8x2x64xf32, #tpu.memory_space<vmem>>, %arg2: memref<8x2x32xf32, #tpu.memory_space<vmem>>, %arg3: memref<8x8xf32, #tpu.memory_space<vmem>>, %arg4: memref<64x32xbf16, #tpu.memory_space<vmem>>, %arg5: memref<1x32xf32, #tpu.memory_space<vmem>>, %arg6: memref<2x32x96xbf16, #tpu.memory_space<vmem>>, %arg7: memref<2x1x96xf32, #tpu.memory_space<vmem>>, %arg8: memref<2x32x32xbf16, #tpu.memory_space<vmem>>, %arg9: memref<2x1x32xf32, #tpu.memory_space<vmem>>, %arg10: memref<2x32x32xbf16, #tpu.memory_space<vmem>>, %arg11: memref<2x1x32xf32, #tpu.memory_space<vmem>>, %arg12: memref<2x32x64xbf16, #tpu.memory_space<vmem>>, %arg13: memref<2x1x64xf32, #tpu.memory_space<vmem>>, %arg14: memref<2x32x32xbf16, #tpu.memory_space<vmem>>, %arg15: memref<2x1x32xf32, #tpu.memory_space<vmem>>, %arg16: memref<2x1x32xf32, #tpu.memory_space<vmem>>, %arg17: memref<2x1x32xf32, #tpu.memory_space<vmem>>, %arg18: memref<2x1x32xf32, #tpu.memory_space<vmem>>, %arg19: memref<2x1x32xf32, #tpu.memory_space<vmem>>, %arg20: memref<2x1x32xf32, #tpu.memory_space<vmem>>, %arg21: memref<2x1x32xf32, #tpu.memory_space<vmem>>, %arg22: memref<2x32x32xbf16, #tpu.memory_space<vmem>>, %arg23: memref<2x1x32xf32, #tpu.memory_space<vmem>>, %arg24: memref<2x32x32xbf16, #tpu.memory_space<vmem>>, %arg25: memref<2x1x32xf32, #tpu.memory_space<vmem>>, %arg26: memref<32x128xbf16, #tpu.memory_space<vmem>>, %arg27: memref<1x128xf32, #tpu.memory_space<vmem>>, %arg28: memref<8x2x128xf32, #tpu.memory_space<vmem>>) attributes {dimension_semantics = [#tpu.dimension_semantics<arbitrary>], iteration_bounds = array<i64: 1>, scalar_prefetch = 0 : i64, scratch_operands = 0 : i64, tpu.core_type = #tpu.core_type<tc>, window_params = [{pipeline_mode = #tpu.pipeline_mode<synchronous>, transform_indices = @transform_0, window_bounds = array<i64: 8, 2, 64>}, {pipeline_mode = #tpu.pipeline_mode<synchronous>, transform_indices = @transform_1, window_bounds = array<i64: 8, 2, 32>}, {pipeline_mode = #tpu.pipeline_mode<synchronous>, transform_indices = @transform_2, window_bounds = array<i64: 8, 8>}, {pipeline_mode = #tpu.pipeline_mode<synchronous>, transform_indices = @transform_3, window_bounds = array<i64: 64, 32>}, {pipeline_mode = #tpu.pipeline_mode<synchronous>, transform_indices = @transform_4, window_bounds = array<i64: 1, 32>}, {pipeline_mode = #tpu.pipeline_mode<synchronous>, transform_indices = @transform_5, window_bounds = array<i64: 2, 32, 96>}, {pipeline_mode = #tpu.pipeline_mode<synchronous>, transform_indices = @transform_6, window_bounds = array<i64: 2, 1, 96>}, {pipeline_mode = #tpu.pipeline_mode<synchronous>, transform_indices = @transform_7, window_bounds = array<i64: 2, 32, 32>}, {pipeline_mode = #tpu.pipeline_mode<synchronous>, transform_indices = @transform_8, window_bounds = array<i64: 2, 1, 32>}, {pipeline_mode = #tpu.pipeline_mode<synchronous>, transform_indices = @transform_9, window_bounds = array<i64: 2, 32, 32>}, {pipeline_mode = #tpu.pipeline_mode<synchronous>, transform_indices = @transform_10, window_bounds = array<i64: 2, 1, 32>}, {pipeline_mode = #tpu.pipeline_mode<synchronous>, transform_indices = @transform_11, window_bounds = array<i64: 2, 32, 64>}, {pipeline_mode = #tpu.pipeline_mode<synchronous>, transform_indices = @transform_12, window_bounds = array<i64: 2, 1, 64>}, {pipeline_mode = #tpu.pipeline_mode<synchronous>, transform_indices = @transform_13, window_bounds = array<i64: 2, 32, 32>}, {pipeline_mode = #tpu.pipeline_mode<synchronous>, transform_indices = @transform_14, window_bounds = array<i64: 2, 1, 32>}, {pipeline_mode = #tpu.pipeline_mode<synchronous>, transform_indices = @transform_15, window_bounds = array<i64: 2, 1, 32>}, {pipeline_mode = #tpu.pipeline_mode<synchronous>, transform_indices = @transform_16, window_bounds = array<i64: 2, 1, 32>}, {pipeline_mode = #tpu.pipeline_mode<synchronous>, transform_indices = @transform_17, window_bounds = array<i64: 2, 1, 32>}, {pipeline_mode = #tpu.pipeline_mode<synchronous>, transform_indices = @transform_18, window_bounds = array<i64: 2, 1, 32>}, {pipeline_mode = #tpu.pipeline_mode<synchronous>, transform_indices = @transform_19, window_bounds = array<i64: 2, 1, 32>}, {pipeline_mode = #tpu.pipeline_mode<synchronous>, transform_indices = @transform_20, window_bounds = array<i64: 2, 1, 32>}, {pipeline_mode = #tpu.pipeline_mode<synchronous>, transform_indices = @transform_21, window_bounds = array<i64: 2, 32, 32>}, {pipeline_mode = #tpu.pipeline_mode<synchronous>, transform_indices = @transform_22, window_bounds = array<i64: 2, 1, 32>}, {pipeline_mode = #tpu.pipeline_mode<synchronous>, transform_indices = @transform_23, window_bounds = array<i64: 2, 32, 32>}, {pipeline_mode = #tpu.pipeline_mode<synchronous>, transform_indices = @transform_24, window_bounds = array<i64: 2, 1, 32>}, {pipeline_mode = #tpu.pipeline_mode<synchronous>, transform_indices = @transform_25, window_bounds = array<i64: 32, 128>}, {pipeline_mode = #tpu.pipeline_mode<synchronous>, transform_indices = @transform_26, window_bounds = array<i64: 1, 128>}, {pipeline_mode = #tpu.pipeline_mode<synchronous>, transform_indices = @transform_27, window_bounds = array<i64: 8, 2, 128>}]} {
    %c0 = arith.constant 0 : index
    %c0_0 = arith.constant 0 : index
    %c0_1 = arith.constant 0 : index
    %0 = vector.load %arg1[%c0, %c0_0, %c0_1] : memref<8x2x64xf32, #tpu.memory_space<vmem>>, vector<8x2x64xf32>
    %c0_2 = arith.constant 0 : index
    %c0_3 = arith.constant 0 : index
    %c0_4 = arith.constant 0 : index
    %1 = vector.load %arg2[%c0_2, %c0_3, %c0_4] : memref<8x2x32xf32, #tpu.memory_space<vmem>>, vector<8x2x32xf32>
    %2 = vector.extract_strided_slice %0 {offsets = [0, 0, 0], sizes = [8, 1, 64], strides = [1, 1, 1]} : vector<8x2x64xf32> to vector<8x1x64xf32>
    %3 = vector.shape_cast %2 : vector<8x1x64xf32> to vector<8x64xf32>
    %4 = vector.extract_strided_slice %0 {offsets = [0, 1, 0], sizes = [8, 1, 64], strides = [1, 1, 1]} : vector<8x2x64xf32> to vector<8x1x64xf32>
    %5 = vector.shape_cast %4 : vector<8x1x64xf32> to vector<8x64xf32>
    %6 = tpu.concatenate %3, %5 in 0 : vector<8x64xf32>, vector<8x64xf32> -> vector<16x64xf32>
    %7 = vector.extract_strided_slice %1 {offsets = [0, 0, 0], sizes = [8, 1, 32], strides = [1, 1, 1]} : vector<8x2x32xf32> to vector<8x1x32xf32>
    %8 = vector.shape_cast %7 : vector<8x1x32xf32> to vector<8x32xf32>
    %9 = vector.extract_strided_slice %1 {offsets = [0, 1, 0], sizes = [8, 1, 32], strides = [1, 1, 1]} : vector<8x2x32xf32> to vector<8x1x32xf32>
    %10 = vector.shape_cast %9 : vector<8x1x32xf32> to vector<8x32xf32>
    %11 = tpu.concatenate %8, %10 in 0 : vector<8x32xf32>, vector<8x32xf32> -> vector<16x32xf32>
    %12 = arith.truncf %11 : vector<16x32xf32> to vector<16x32xbf16>
    %c0_5 = arith.constant 0 : index
    %c0_6 = arith.constant 0 : index
    %13 = vector.load %arg3[%c0_5, %c0_6] : memref<8x8xf32, #tpu.memory_space<vmem>>, vector<8x8xf32>
    %14 = tpu.concatenate %13, %13, %13, %13, %13, %13, %13, %13 in 0 : vector<8x8xf32>, vector<8x8xf32>, vector<8x8xf32>, vector<8x8xf32>, vector<8x8xf32>, vector<8x8xf32>, vector<8x8xf32>, vector<8x8xf32> -> vector<64x8xf32>
    %15 = arith.truncf %6 : vector<16x64xf32> to vector<16x64xbf16>
    %c0_7 = arith.constant 0 : index
    %c0_8 = arith.constant 0 : index
    %16 = vector.load %arg4[%c0_7, %c0_8] : memref<64x32xbf16, #tpu.memory_space<vmem>>, vector<64x32xbf16>
    %cst = arith.constant dense<0.000000e+00> : vector<16x32xf32>
    %17 = tpu.matmul %15, %16, %cst {dimension_numbers = #tpu.dot_dimension_numbers<[1], [0], [0], [1], [0, 0, 1, 1], [], []>} : vector<16x64xbf16>, vector<64x32xbf16>, vector<16x32xf32> -> vector<16x32xf32>
    %c0_9 = arith.constant 0 : index
    %c0_10 = arith.constant 0 : index
    %18 = vector.load %arg5[%c0_9, %c0_10] : memref<1x32xf32, #tpu.memory_space<vmem>>, vector<1x32xf32>
    %19 = vector.broadcast %18 : vector<1x32xf32> to vector<16x32xf32>
    %20 = arith.addf %17, %19 : vector<16x32xf32>
    %21 = arith.truncf %20 : vector<16x32xf32> to vector<16x32xbf16>
    %c0_11 = arith.constant 0 : index
    %c0_12 = arith.constant 0 : index
    %c0_13 = arith.constant 0 : index
    %22 = vector.load %arg6[%c0_11, %c0_12, %c0_13] : memref<2x32x96xbf16, #tpu.memory_space<vmem>>, vector<1x32x96xbf16>
    %23 = vector.shape_cast %22 : vector<1x32x96xbf16> to vector<32x96xbf16>
    %cst_14 = arith.constant dense<0.000000e+00> : vector<16x96xf32>
    %24 = tpu.matmul %21, %23, %cst_14 {dimension_numbers = #tpu.dot_dimension_numbers<[1], [0], [0], [1], [0, 0, 1, 1], [], []>} : vector<16x32xbf16>, vector<32x96xbf16>, vector<16x96xf32> -> vector<16x96xf32>
    %c0_15 = arith.constant 0 : index
    %c0_16 = arith.constant 0 : index
    %c0_17 = arith.constant 0 : index
    %25 = vector.load %arg7[%c0_15, %c0_16, %c0_17] : memref<2x1x96xf32, #tpu.memory_space<vmem>>, vector<1x1x96xf32>
    %26 = vector.shape_cast %25 : vector<1x1x96xf32> to vector<1x96xf32>
    %27 = vector.broadcast %26 : vector<1x96xf32> to vector<16x96xf32>
    %28 = arith.addf %24, %27 : vector<16x96xf32>
    %29 = arith.truncf %28 : vector<16x96xf32> to vector<16x96xbf16>
    %30 = vector.extract_strided_slice %29 {offsets = [0, 0], sizes = [16, 32], strides = [1, 1]} : vector<16x96xbf16> to vector<16x32xbf16>
    %31 = vector.extract_strided_slice %29 {offsets = [0, 32], sizes = [16, 32], strides = [1, 1]} : vector<16x96xbf16> to vector<16x32xbf16>
    %32 = vector.extract_strided_slice %29 {offsets = [0, 64], sizes = [16, 32], strides = [1, 1]} : vector<16x96xbf16> to vector<16x32xbf16>
    %c0_18 = arith.constant 0 : index
    %c0_19 = arith.constant 0 : index
    %c0_20 = arith.constant 0 : index
    %33 = vector.load %arg8[%c0_18, %c0_19, %c0_20] : memref<2x32x32xbf16, #tpu.memory_space<vmem>>, vector<1x32x32xbf16>
    %34 = vector.shape_cast %33 : vector<1x32x32xbf16> to vector<32x32xbf16>
    %c0_21 = arith.constant 0 : index
    %c0_22 = arith.constant 0 : index
    %c0_23 = arith.constant 0 : index
    %35 = vector.load %arg9[%c0_21, %c0_22, %c0_23] : memref<2x1x32xf32, #tpu.memory_space<vmem>>, vector<1x1x32xf32>
    %36 = vector.shape_cast %35 : vector<1x1x32xf32> to vector<1x32xf32>
    %37 = vector.extract_strided_slice %30 {offsets = [0, 0], sizes = [8, 8], strides = [1, 1]} : vector<16x32xbf16> to vector<8x8xbf16>
    %38 = vector.extract_strided_slice %31 {offsets = [0, 0], sizes = [8, 8], strides = [1, 1]} : vector<16x32xbf16> to vector<8x8xbf16>
    %cst_24 = arith.constant dense<0.000000e+00> : vector<8x8xf32>
    %39 = tpu.matmul %37, %38, %cst_24 {dimension_numbers = #tpu.dot_dimension_numbers<[1], [1], [0], [0], [0, 0, 1, 0], [], []>} : vector<8x8xbf16>, vector<8x8xbf16>, vector<8x8xf32> -> vector<8x8xf32>
    %40 = vector.extract_strided_slice %30 {offsets = [0, 8], sizes = [8, 8], strides = [1, 1]} : vector<16x32xbf16> to vector<8x8xbf16>
    %41 = vector.extract_strided_slice %31 {offsets = [0, 8], sizes = [8, 8], strides = [1, 1]} : vector<16x32xbf16> to vector<8x8xbf16>
    %cst_25 = arith.constant dense<0.000000e+00> : vector<8x8xf32>
    %42 = tpu.matmul %40, %41, %cst_25 {dimension_numbers = #tpu.dot_dimension_numbers<[1], [1], [0], [0], [0, 0, 1, 0], [], []>} : vector<8x8xbf16>, vector<8x8xbf16>, vector<8x8xf32> -> vector<8x8xf32>
    %43 = vector.extract_strided_slice %30 {offsets = [0, 16], sizes = [8, 8], strides = [1, 1]} : vector<16x32xbf16> to vector<8x8xbf16>
    %44 = vector.extract_strided_slice %31 {offsets = [0, 16], sizes = [8, 8], strides = [1, 1]} : vector<16x32xbf16> to vector<8x8xbf16>
    %cst_26 = arith.constant dense<0.000000e+00> : vector<8x8xf32>
    %45 = tpu.matmul %43, %44, %cst_26 {dimension_numbers = #tpu.dot_dimension_numbers<[1], [1], [0], [0], [0, 0, 1, 0], [], []>} : vector<8x8xbf16>, vector<8x8xbf16>, vector<8x8xf32> -> vector<8x8xf32>
    %46 = vector.extract_strided_slice %30 {offsets = [0, 24], sizes = [8, 8], strides = [1, 1]} : vector<16x32xbf16> to vector<8x8xbf16>
    %47 = vector.extract_strided_slice %31 {offsets = [0, 24], sizes = [8, 8], strides = [1, 1]} : vector<16x32xbf16> to vector<8x8xbf16>
    %cst_27 = arith.constant dense<0.000000e+00> : vector<8x8xf32>
    %48 = tpu.matmul %46, %47, %cst_27 {dimension_numbers = #tpu.dot_dimension_numbers<[1], [1], [0], [0], [0, 0, 1, 0], [], []>} : vector<8x8xbf16>, vector<8x8xbf16>, vector<8x8xf32> -> vector<8x8xf32>
    %49 = vector.extract_strided_slice %30 {offsets = [8, 0], sizes = [8, 8], strides = [1, 1]} : vector<16x32xbf16> to vector<8x8xbf16>
    %50 = vector.extract_strided_slice %31 {offsets = [8, 0], sizes = [8, 8], strides = [1, 1]} : vector<16x32xbf16> to vector<8x8xbf16>
    %cst_28 = arith.constant dense<0.000000e+00> : vector<8x8xf32>
    %51 = tpu.matmul %49, %50, %cst_28 {dimension_numbers = #tpu.dot_dimension_numbers<[1], [1], [0], [0], [0, 0, 1, 0], [], []>} : vector<8x8xbf16>, vector<8x8xbf16>, vector<8x8xf32> -> vector<8x8xf32>
    %52 = vector.extract_strided_slice %30 {offsets = [8, 8], sizes = [8, 8], strides = [1, 1]} : vector<16x32xbf16> to vector<8x8xbf16>
    %53 = vector.extract_strided_slice %31 {offsets = [8, 8], sizes = [8, 8], strides = [1, 1]} : vector<16x32xbf16> to vector<8x8xbf16>
    %cst_29 = arith.constant dense<0.000000e+00> : vector<8x8xf32>
    %54 = tpu.matmul %52, %53, %cst_29 {dimension_numbers = #tpu.dot_dimension_numbers<[1], [1], [0], [0], [0, 0, 1, 0], [], []>} : vector<8x8xbf16>, vector<8x8xbf16>, vector<8x8xf32> -> vector<8x8xf32>
    %55 = vector.extract_strided_slice %30 {offsets = [8, 16], sizes = [8, 8], strides = [1, 1]} : vector<16x32xbf16> to vector<8x8xbf16>
    %56 = vector.extract_strided_slice %31 {offsets = [8, 16], sizes = [8, 8], strides = [1, 1]} : vector<16x32xbf16> to vector<8x8xbf16>
    %cst_30 = arith.constant dense<0.000000e+00> : vector<8x8xf32>
    %57 = tpu.matmul %55, %56, %cst_30 {dimension_numbers = #tpu.dot_dimension_numbers<[1], [1], [0], [0], [0, 0, 1, 0], [], []>} : vector<8x8xbf16>, vector<8x8xbf16>, vector<8x8xf32> -> vector<8x8xf32>
    %58 = vector.extract_strided_slice %30 {offsets = [8, 24], sizes = [8, 8], strides = [1, 1]} : vector<16x32xbf16> to vector<8x8xbf16>
    %59 = vector.extract_strided_slice %31 {offsets = [8, 24], sizes = [8, 8], strides = [1, 1]} : vector<16x32xbf16> to vector<8x8xbf16>
    %cst_31 = arith.constant dense<0.000000e+00> : vector<8x8xf32>
    %60 = tpu.matmul %58, %59, %cst_31 {dimension_numbers = #tpu.dot_dimension_numbers<[1], [1], [0], [0], [0, 0, 1, 0], [], []>} : vector<8x8xbf16>, vector<8x8xbf16>, vector<8x8xf32> -> vector<8x8xf32>
    %61 = tpu.concatenate %39, %42, %45, %48, %51, %54, %57, %60 in 0 : vector<8x8xf32>, vector<8x8xf32>, vector<8x8xf32>, vector<8x8xf32>, vector<8x8xf32>, vector<8x8xf32>, vector<8x8xf32>, vector<8x8xf32> -> vector<64x8xf32>
    %62 = arith.addf %61, %14 : vector<64x8xf32>
    %cst_32 = arith.constant dense<0xFF800000> : vector<64xf32>
    %63 = vector.multi_reduction <maximumf>, %62, %cst_32 [1] : vector<64x8xf32> to vector<64xf32>
    %64 = vector.shape_cast %63 : vector<64xf32> to vector<64x1xf32>
    %65 = vector.broadcast %64 : vector<64x1xf32> to vector<64x8xf32>
    %66 = arith.subf %62, %65 : vector<64x8xf32>
    %67 = math.exp %66 : vector<64x8xf32>
    %cst_33 = arith.constant dense<0.000000e+00> : vector<64xf32>
    %68 = vector.multi_reduction <add>, %67, %cst_33 [1] : vector<64x8xf32> to vector<64xf32>
    %69 = vector.shape_cast %68 : vector<64xf32> to vector<64x1xf32>
    %70 = tpu.reciprocal %69 {approx = true} : vector<64x1xf32> -> vector<64x1xf32>
    %71 = vector.broadcast %70 : vector<64x1xf32> to vector<64x8xf32>
    %72 = arith.mulf %67, %71 : vector<64x8xf32>
    %73 = arith.truncf %72 : vector<64x8xf32> to vector<64x8xbf16>
    %74 = vector.extract_strided_slice %73 {offsets = [0, 0], sizes = [8, 8], strides = [1, 1]} : vector<64x8xbf16> to vector<8x8xbf16>
    %75 = vector.extract_strided_slice %32 {offsets = [0, 0], sizes = [8, 8], strides = [1, 1]} : vector<16x32xbf16> to vector<8x8xbf16>
    %cst_34 = arith.constant dense<0.000000e+00> : vector<8x8xf32>
    %76 = tpu.matmul %74, %75, %cst_34 {dimension_numbers = #tpu.dot_dimension_numbers<[1], [0], [0], [1], [0, 0, 1, 1], [], []>} : vector<8x8xbf16>, vector<8x8xbf16>, vector<8x8xf32> -> vector<8x8xf32>
    %77 = vector.extract_strided_slice %73 {offsets = [8, 0], sizes = [8, 8], strides = [1, 1]} : vector<64x8xbf16> to vector<8x8xbf16>
    %78 = vector.extract_strided_slice %32 {offsets = [0, 8], sizes = [8, 8], strides = [1, 1]} : vector<16x32xbf16> to vector<8x8xbf16>
    %cst_35 = arith.constant dense<0.000000e+00> : vector<8x8xf32>
    %79 = tpu.matmul %77, %78, %cst_35 {dimension_numbers = #tpu.dot_dimension_numbers<[1], [0], [0], [1], [0, 0, 1, 1], [], []>} : vector<8x8xbf16>, vector<8x8xbf16>, vector<8x8xf32> -> vector<8x8xf32>
    %80 = vector.extract_strided_slice %73 {offsets = [16, 0], sizes = [8, 8], strides = [1, 1]} : vector<64x8xbf16> to vector<8x8xbf16>
    %81 = vector.extract_strided_slice %32 {offsets = [0, 16], sizes = [8, 8], strides = [1, 1]} : vector<16x32xbf16> to vector<8x8xbf16>
    %cst_36 = arith.constant dense<0.000000e+00> : vector<8x8xf32>
    %82 = tpu.matmul %80, %81, %cst_36 {dimension_numbers = #tpu.dot_dimension_numbers<[1], [0], [0], [1], [0, 0, 1, 1], [], []>} : vector<8x8xbf16>, vector<8x8xbf16>, vector<8x8xf32> -> vector<8x8xf32>
    %83 = vector.extract_strided_slice %73 {offsets = [24, 0], sizes = [8, 8], strides = [1, 1]} : vector<64x8xbf16> to vector<8x8xbf16>
    %84 = vector.extract_strided_slice %32 {offsets = [0, 24], sizes = [8, 8], strides = [1, 1]} : vector<16x32xbf16> to vector<8x8xbf16>
    %cst_37 = arith.constant dense<0.000000e+00> : vector<8x8xf32>
    %85 = tpu.matmul %83, %84, %cst_37 {dimension_numbers = #tpu.dot_dimension_numbers<[1], [0], [0], [1], [0, 0, 1, 1], [], []>} : vector<8x8xbf16>, vector<8x8xbf16>, vector<8x8xf32> -> vector<8x8xf32>
    %86 = tpu.concatenate %76, %79, %82, %85 in 1 : vector<8x8xf32>, vector<8x8xf32>, vector<8x8xf32>, vector<8x8xf32> -> vector<8x32xf32>
    %87 = vector.extract_strided_slice %73 {offsets = [32, 0], sizes = [8, 8], strides = [1, 1]} : vector<64x8xbf16> to vector<8x8xbf16>
    %88 = vector.extract_strided_slice %32 {offsets = [8, 0], sizes = [8, 8], strides = [1, 1]} : vector<16x32xbf16> to vector<8x8xbf16>
    %cst_38 = arith.constant dense<0.000000e+00> : vector<8x8xf32>
    %89 = tpu.matmul %87, %88, %cst_38 {dimension_numbers = #tpu.dot_dimension_numbers<[1], [0], [0], [1], [0, 0, 1, 1], [], []>} : vector<8x8xbf16>, vector<8x8xbf16>, vector<8x8xf32> -> vector<8x8xf32>
    %90 = vector.extract_strided_slice %73 {offsets = [40, 0], sizes = [8, 8], strides = [1, 1]} : vector<64x8xbf16> to vector<8x8xbf16>
    %91 = vector.extract_strided_slice %32 {offsets = [8, 8], sizes = [8, 8], strides = [1, 1]} : vector<16x32xbf16> to vector<8x8xbf16>
    %cst_39 = arith.constant dense<0.000000e+00> : vector<8x8xf32>
    %92 = tpu.matmul %90, %91, %cst_39 {dimension_numbers = #tpu.dot_dimension_numbers<[1], [0], [0], [1], [0, 0, 1, 1], [], []>} : vector<8x8xbf16>, vector<8x8xbf16>, vector<8x8xf32> -> vector<8x8xf32>
    %93 = vector.extract_strided_slice %73 {offsets = [48, 0], sizes = [8, 8], strides = [1, 1]} : vector<64x8xbf16> to vector<8x8xbf16>
    %94 = vector.extract_strided_slice %32 {offsets = [8, 16], sizes = [8, 8], strides = [1, 1]} : vector<16x32xbf16> to vector<8x8xbf16>
    %cst_40 = arith.constant dense<0.000000e+00> : vector<8x8xf32>
    %95 = tpu.matmul %93, %94, %cst_40 {dimension_numbers = #tpu.dot_dimension_numbers<[1], [0], [0], [1], [0, 0, 1, 1], [], []>} : vector<8x8xbf16>, vector<8x8xbf16>, vector<8x8xf32> -> vector<8x8xf32>
    %96 = vector.extract_strided_slice %73 {offsets = [56, 0], sizes = [8, 8], strides = [1, 1]} : vector<64x8xbf16> to vector<8x8xbf16>
    %97 = vector.extract_strided_slice %32 {offsets = [8, 24], sizes = [8, 8], strides = [1, 1]} : vector<16x32xbf16> to vector<8x8xbf16>
    %cst_41 = arith.constant dense<0.000000e+00> : vector<8x8xf32>
    %98 = tpu.matmul %96, %97, %cst_41 {dimension_numbers = #tpu.dot_dimension_numbers<[1], [0], [0], [1], [0, 0, 1, 1], [], []>} : vector<8x8xbf16>, vector<8x8xbf16>, vector<8x8xf32> -> vector<8x8xf32>
    %99 = tpu.concatenate %89, %92, %95, %98 in 1 : vector<8x8xf32>, vector<8x8xf32>, vector<8x8xf32>, vector<8x8xf32> -> vector<8x32xf32>
    %100 = tpu.concatenate %86, %99 in 0 : vector<8x32xf32>, vector<8x32xf32> -> vector<16x32xf32>
    %101 = arith.truncf %100 : vector<16x32xf32> to vector<16x32xbf16>
    %cst_42 = arith.constant dense<0.000000e+00> : vector<16x32xf32>
    %102 = tpu.matmul %101, %34, %cst_42 {dimension_numbers = #tpu.dot_dimension_numbers<[1], [0], [0], [1], [0, 0, 1, 1], [], []>} : vector<16x32xbf16>, vector<32x32xbf16>, vector<16x32xf32> -> vector<16x32xf32>
    %103 = vector.broadcast %36 : vector<1x32xf32> to vector<16x32xf32>
    %104 = arith.addf %102, %103 : vector<16x32xf32>
    %105 = arith.addf %20, %104 : vector<16x32xf32>
    %c0_43 = arith.constant 0 : index
    %c0_44 = arith.constant 0 : index
    %c0_45 = arith.constant 0 : index
    %106 = vector.load %arg16[%c0_43, %c0_44, %c0_45] : memref<2x1x32xf32, #tpu.memory_space<vmem>>, vector<1x1x32xf32>
    %107 = vector.shape_cast %106 : vector<1x1x32xf32> to vector<1x32xf32>
    %c0_46 = arith.constant 0 : index
    %c0_47 = arith.constant 0 : index
    %c0_48 = arith.constant 0 : index
    %108 = vector.load %arg17[%c0_46, %c0_47, %c0_48] : memref<2x1x32xf32, #tpu.memory_space<vmem>>, vector<1x1x32xf32>
    %109 = vector.shape_cast %108 : vector<1x1x32xf32> to vector<1x32xf32>
    %cst_49 = arith.constant dense<0.000000e+00> : vector<16xf32>
    %110 = vector.multi_reduction <add>, %105, %cst_49 [1] : vector<16x32xf32> to vector<16xf32>
    %111 = vector.shape_cast %110 : vector<16xf32> to vector<16x1xf32>
    %cst_50 = arith.constant 3.200000e+01 : f32
    %112 = vector.broadcast %cst_50 : f32 to vector<16x1xf32>
    %113 = arith.divf %111, %112 : vector<16x1xf32>
    %114 = vector.broadcast %113 : vector<16x1xf32> to vector<16x32xf32>
    %115 = arith.subf %105, %114 : vector<16x32xf32>
    %116 = arith.mulf %115, %115 : vector<16x32xf32>
    %cst_51 = arith.constant dense<0.000000e+00> : vector<16xf32>
    %117 = vector.multi_reduction <add>, %116, %cst_51 [1] : vector<16x32xf32> to vector<16xf32>
    %118 = vector.shape_cast %117 : vector<16xf32> to vector<16x1xf32>
    %cst_52 = arith.constant 3.200000e+01 : f32
    %119 = vector.broadcast %cst_52 : f32 to vector<16x1xf32>
    %120 = arith.divf %118, %119 : vector<16x1xf32>
    %cst_53 = arith.constant 9.99999974E-6 : f32
    %121 = vector.broadcast %cst_53 : f32 to vector<16x1xf32>
    %122 = arith.addf %120, %121 : vector<16x1xf32>
    %123 = math.rsqrt %122 : vector<16x1xf32>
    %124 = vector.broadcast %123 : vector<16x1xf32> to vector<16x32xf32>
    %125 = arith.mulf %115, %124 : vector<16x32xf32>
    %126 = vector.broadcast %107 : vector<1x32xf32> to vector<16x32xf32>
    %127 = arith.mulf %125, %126 : vector<16x32xf32>
    %128 = vector.broadcast %109 : vector<1x32xf32> to vector<16x32xf32>
    %129 = arith.addf %127, %128 : vector<16x32xf32>
    %130 = arith.truncf %129 : vector<16x32xf32> to vector<16x32xbf16>
    %c0_54 = arith.constant 0 : index
    %c0_55 = arith.constant 0 : index
    %c0_56 = arith.constant 0 : index
    %131 = vector.load %arg10[%c0_54, %c0_55, %c0_56] : memref<2x32x32xbf16, #tpu.memory_space<vmem>>, vector<1x32x32xbf16>
    %132 = vector.shape_cast %131 : vector<1x32x32xbf16> to vector<32x32xbf16>
    %cst_57 = arith.constant dense<0.000000e+00> : vector<16x32xf32>
    %133 = tpu.matmul %130, %132, %cst_57 {dimension_numbers = #tpu.dot_dimension_numbers<[1], [0], [0], [1], [0, 0, 1, 1], [], []>} : vector<16x32xbf16>, vector<32x32xbf16>, vector<16x32xf32> -> vector<16x32xf32>
    %c0_58 = arith.constant 0 : index
    %c0_59 = arith.constant 0 : index
    %c0_60 = arith.constant 0 : index
    %134 = vector.load %arg11[%c0_58, %c0_59, %c0_60] : memref<2x1x32xf32, #tpu.memory_space<vmem>>, vector<1x1x32xf32>
    %135 = vector.shape_cast %134 : vector<1x1x32xf32> to vector<1x32xf32>
    %136 = vector.broadcast %135 : vector<1x32xf32> to vector<16x32xf32>
    %137 = arith.addf %133, %136 : vector<16x32xf32>
    %138 = arith.truncf %137 : vector<16x32xf32> to vector<16x32xbf16>
    %c0_61 = arith.constant 0 : index
    %c0_62 = arith.constant 0 : index
    %c0_63 = arith.constant 0 : index
    %139 = vector.load %arg12[%c0_61, %c0_62, %c0_63] : memref<2x32x64xbf16, #tpu.memory_space<vmem>>, vector<1x32x64xbf16>
    %140 = vector.shape_cast %139 : vector<1x32x64xbf16> to vector<32x64xbf16>
    %cst_64 = arith.constant dense<0.000000e+00> : vector<16x64xf32>
    %141 = tpu.matmul %12, %140, %cst_64 {dimension_numbers = #tpu.dot_dimension_numbers<[1], [0], [0], [1], [0, 0, 1, 1], [], []>} : vector<16x32xbf16>, vector<32x64xbf16>, vector<16x64xf32> -> vector<16x64xf32>
    %c0_65 = arith.constant 0 : index
    %c0_66 = arith.constant 0 : index
    %c0_67 = arith.constant 0 : index
    %142 = vector.load %arg13[%c0_65, %c0_66, %c0_67] : memref<2x1x64xf32, #tpu.memory_space<vmem>>, vector<1x1x64xf32>
    %143 = vector.shape_cast %142 : vector<1x1x64xf32> to vector<1x64xf32>
    %144 = vector.broadcast %143 : vector<1x64xf32> to vector<16x64xf32>
    %145 = arith.addf %141, %144 : vector<16x64xf32>
    %146 = arith.truncf %145 : vector<16x64xf32> to vector<16x64xbf16>
    %147 = vector.extract_strided_slice %146 {offsets = [0, 0], sizes = [16, 32], strides = [1, 1]} : vector<16x64xbf16> to vector<16x32xbf16>
    %148 = vector.extract_strided_slice %146 {offsets = [0, 32], sizes = [16, 32], strides = [1, 1]} : vector<16x64xbf16> to vector<16x32xbf16>
    %c0_68 = arith.constant 0 : index
    %c0_69 = arith.constant 0 : index
    %c0_70 = arith.constant 0 : index
    %149 = vector.load %arg14[%c0_68, %c0_69, %c0_70] : memref<2x32x32xbf16, #tpu.memory_space<vmem>>, vector<1x32x32xbf16>
    %150 = vector.shape_cast %149 : vector<1x32x32xbf16> to vector<32x32xbf16>
    %c0_71 = arith.constant 0 : index
    %c0_72 = arith.constant 0 : index
    %c0_73 = arith.constant 0 : index
    %151 = vector.load %arg15[%c0_71, %c0_72, %c0_73] : memref<2x1x32xf32, #tpu.memory_space<vmem>>, vector<1x1x32xf32>
    %152 = vector.shape_cast %151 : vector<1x1x32xf32> to vector<1x32xf32>
    %153 = vector.extract_strided_slice %138 {offsets = [0, 0], sizes = [8, 8], strides = [1, 1]} : vector<16x32xbf16> to vector<8x8xbf16>
    %154 = vector.extract_strided_slice %147 {offsets = [0, 0], sizes = [8, 8], strides = [1, 1]} : vector<16x32xbf16> to vector<8x8xbf16>
    %cst_74 = arith.constant dense<0.000000e+00> : vector<8x8xf32>
    %155 = tpu.matmul %153, %154, %cst_74 {dimension_numbers = #tpu.dot_dimension_numbers<[1], [1], [0], [0], [0, 0, 1, 0], [], []>} : vector<8x8xbf16>, vector<8x8xbf16>, vector<8x8xf32> -> vector<8x8xf32>
    %156 = vector.extract_strided_slice %138 {offsets = [0, 8], sizes = [8, 8], strides = [1, 1]} : vector<16x32xbf16> to vector<8x8xbf16>
    %157 = vector.extract_strided_slice %147 {offsets = [0, 8], sizes = [8, 8], strides = [1, 1]} : vector<16x32xbf16> to vector<8x8xbf16>
    %cst_75 = arith.constant dense<0.000000e+00> : vector<8x8xf32>
    %158 = tpu.matmul %156, %157, %cst_75 {dimension_numbers = #tpu.dot_dimension_numbers<[1], [1], [0], [0], [0, 0, 1, 0], [], []>} : vector<8x8xbf16>, vector<8x8xbf16>, vector<8x8xf32> -> vector<8x8xf32>
    %159 = vector.extract_strided_slice %138 {offsets = [0, 16], sizes = [8, 8], strides = [1, 1]} : vector<16x32xbf16> to vector<8x8xbf16>
    %160 = vector.extract_strided_slice %147 {offsets = [0, 16], sizes = [8, 8], strides = [1, 1]} : vector<16x32xbf16> to vector<8x8xbf16>
    %cst_76 = arith.constant dense<0.000000e+00> : vector<8x8xf32>
    %161 = tpu.matmul %159, %160, %cst_76 {dimension_numbers = #tpu.dot_dimension_numbers<[1], [1], [0], [0], [0, 0, 1, 0], [], []>} : vector<8x8xbf16>, vector<8x8xbf16>, vector<8x8xf32> -> vector<8x8xf32>
    %162 = vector.extract_strided_slice %138 {offsets = [0, 24], sizes = [8, 8], strides = [1, 1]} : vector<16x32xbf16> to vector<8x8xbf16>
    %163 = vector.extract_strided_slice %147 {offsets = [0, 24], sizes = [8, 8], strides = [1, 1]} : vector<16x32xbf16> to vector<8x8xbf16>
    %cst_77 = arith.constant dense<0.000000e+00> : vector<8x8xf32>
    %164 = tpu.matmul %162, %163, %cst_77 {dimension_numbers = #tpu.dot_dimension_numbers<[1], [1], [0], [0], [0, 0, 1, 0], [], []>} : vector<8x8xbf16>, vector<8x8xbf16>, vector<8x8xf32> -> vector<8x8xf32>
    %165 = vector.extract_strided_slice %138 {offsets = [8, 0], sizes = [8, 8], strides = [1, 1]} : vector<16x32xbf16> to vector<8x8xbf16>
    %166 = vector.extract_strided_slice %147 {offsets = [8, 0], sizes = [8, 8], strides = [1, 1]} : vector<16x32xbf16> to vector<8x8xbf16>
    %cst_78 = arith.constant dense<0.000000e+00> : vector<8x8xf32>
    %167 = tpu.matmul %165, %166, %cst_78 {dimension_numbers = #tpu.dot_dimension_numbers<[1], [1], [0], [0], [0, 0, 1, 0], [], []>} : vector<8x8xbf16>, vector<8x8xbf16>, vector<8x8xf32> -> vector<8x8xf32>
    %168 = vector.extract_strided_slice %138 {offsets = [8, 8], sizes = [8, 8], strides = [1, 1]} : vector<16x32xbf16> to vector<8x8xbf16>
    %169 = vector.extract_strided_slice %147 {offsets = [8, 8], sizes = [8, 8], strides = [1, 1]} : vector<16x32xbf16> to vector<8x8xbf16>
    %cst_79 = arith.constant dense<0.000000e+00> : vector<8x8xf32>
    %170 = tpu.matmul %168, %169, %cst_79 {dimension_numbers = #tpu.dot_dimension_numbers<[1], [1], [0], [0], [0, 0, 1, 0], [], []>} : vector<8x8xbf16>, vector<8x8xbf16>, vector<8x8xf32> -> vector<8x8xf32>
    %171 = vector.extract_strided_slice %138 {offsets = [8, 16], sizes = [8, 8], strides = [1, 1]} : vector<16x32xbf16> to vector<8x8xbf16>
    %172 = vector.extract_strided_slice %147 {offsets = [8, 16], sizes = [8, 8], strides = [1, 1]} : vector<16x32xbf16> to vector<8x8xbf16>
    %cst_80 = arith.constant dense<0.000000e+00> : vector<8x8xf32>
    %173 = tpu.matmul %171, %172, %cst_80 {dimension_numbers = #tpu.dot_dimension_numbers<[1], [1], [0], [0], [0, 0, 1, 0], [], []>} : vector<8x8xbf16>, vector<8x8xbf16>, vector<8x8xf32> -> vector<8x8xf32>
    %174 = vector.extract_strided_slice %138 {offsets = [8, 24], sizes = [8, 8], strides = [1, 1]} : vector<16x32xbf16> to vector<8x8xbf16>
    %175 = vector.extract_strided_slice %147 {offsets = [8, 24], sizes = [8, 8], strides = [1, 1]} : vector<16x32xbf16> to vector<8x8xbf16>
    %cst_81 = arith.constant dense<0.000000e+00> : vector<8x8xf32>
    %176 = tpu.matmul %174, %175, %cst_81 {dimension_numbers = #tpu.dot_dimension_numbers<[1], [1], [0], [0], [0, 0, 1, 0], [], []>} : vector<8x8xbf16>, vector<8x8xbf16>, vector<8x8xf32> -> vector<8x8xf32>
    %177 = tpu.concatenate %155, %158, %161, %164, %167, %170, %173, %176 in 0 : vector<8x8xf32>, vector<8x8xf32>, vector<8x8xf32>, vector<8x8xf32>, vector<8x8xf32>, vector<8x8xf32>, vector<8x8xf32>, vector<8x8xf32> -> vector<64x8xf32>
    %cst_82 = arith.constant dense<0xFF800000> : vector<64xf32>
    %178 = vector.multi_reduction <maximumf>, %177, %cst_82 [1] : vector<64x8xf32> to vector<64xf32>
    %179 = vector.shape_cast %178 : vector<64xf32> to vector<64x1xf32>
    %180 = vector.broadcast %179 : vector<64x1xf32> to vector<64x8xf32>
    %181 = arith.subf %177, %180 : vector<64x8xf32>
    %182 = math.exp %181 : vector<64x8xf32>
    %cst_83 = arith.constant dense<0.000000e+00> : vector<64xf32>
    %183 = vector.multi_reduction <add>, %182, %cst_83 [1] : vector<64x8xf32> to vector<64xf32>
    %184 = vector.shape_cast %183 : vector<64xf32> to vector<64x1xf32>
    %185 = tpu.reciprocal %184 {approx = true} : vector<64x1xf32> -> vector<64x1xf32>
    %186 = vector.broadcast %185 : vector<64x1xf32> to vector<64x8xf32>
    %187 = arith.mulf %182, %186 : vector<64x8xf32>
    %188 = arith.truncf %187 : vector<64x8xf32> to vector<64x8xbf16>
    %189 = vector.extract_strided_slice %188 {offsets = [0, 0], sizes = [8, 8], strides = [1, 1]} : vector<64x8xbf16> to vector<8x8xbf16>
    %190 = vector.extract_strided_slice %148 {offsets = [0, 0], sizes = [8, 8], strides = [1, 1]} : vector<16x32xbf16> to vector<8x8xbf16>
    %cst_84 = arith.constant dense<0.000000e+00> : vector<8x8xf32>
    %191 = tpu.matmul %189, %190, %cst_84 {dimension_numbers = #tpu.dot_dimension_numbers<[1], [0], [0], [1], [0, 0, 1, 1], [], []>} : vector<8x8xbf16>, vector<8x8xbf16>, vector<8x8xf32> -> vector<8x8xf32>
    %192 = vector.extract_strided_slice %188 {offsets = [8, 0], sizes = [8, 8], strides = [1, 1]} : vector<64x8xbf16> to vector<8x8xbf16>
    %193 = vector.extract_strided_slice %148 {offsets = [0, 8], sizes = [8, 8], strides = [1, 1]} : vector<16x32xbf16> to vector<8x8xbf16>
    %cst_85 = arith.constant dense<0.000000e+00> : vector<8x8xf32>
    %194 = tpu.matmul %192, %193, %cst_85 {dimension_numbers = #tpu.dot_dimension_numbers<[1], [0], [0], [1], [0, 0, 1, 1], [], []>} : vector<8x8xbf16>, vector<8x8xbf16>, vector<8x8xf32> -> vector<8x8xf32>
    %195 = vector.extract_strided_slice %188 {offsets = [16, 0], sizes = [8, 8], strides = [1, 1]} : vector<64x8xbf16> to vector<8x8xbf16>
    %196 = vector.extract_strided_slice %148 {offsets = [0, 16], sizes = [8, 8], strides = [1, 1]} : vector<16x32xbf16> to vector<8x8xbf16>
    %cst_86 = arith.constant dense<0.000000e+00> : vector<8x8xf32>
    %197 = tpu.matmul %195, %196, %cst_86 {dimension_numbers = #tpu.dot_dimension_numbers<[1], [0], [0], [1], [0, 0, 1, 1], [], []>} : vector<8x8xbf16>, vector<8x8xbf16>, vector<8x8xf32> -> vector<8x8xf32>
    %198 = vector.extract_strided_slice %188 {offsets = [24, 0], sizes = [8, 8], strides = [1, 1]} : vector<64x8xbf16> to vector<8x8xbf16>
    %199 = vector.extract_strided_slice %148 {offsets = [0, 24], sizes = [8, 8], strides = [1, 1]} : vector<16x32xbf16> to vector<8x8xbf16>
    %cst_87 = arith.constant dense<0.000000e+00> : vector<8x8xf32>
    %200 = tpu.matmul %198, %199, %cst_87 {dimension_numbers = #tpu.dot_dimension_numbers<[1], [0], [0], [1], [0, 0, 1, 1], [], []>} : vector<8x8xbf16>, vector<8x8xbf16>, vector<8x8xf32> -> vector<8x8xf32>
    %201 = tpu.concatenate %191, %194, %197, %200 in 1 : vector<8x8xf32>, vector<8x8xf32>, vector<8x8xf32>, vector<8x8xf32> -> vector<8x32xf32>
    %202 = vector.extract_strided_slice %188 {offsets = [32, 0], sizes = [8, 8], strides = [1, 1]} : vector<64x8xbf16> to vector<8x8xbf16>
    %203 = vector.extract_strided_slice %148 {offsets = [8, 0], sizes = [8, 8], strides = [1, 1]} : vector<16x32xbf16> to vector<8x8xbf16>
    %cst_88 = arith.constant dense<0.000000e+00> : vector<8x8xf32>
    %204 = tpu.matmul %202, %203, %cst_88 {dimension_numbers = #tpu.dot_dimension_numbers<[1], [0], [0], [1], [0, 0, 1, 1], [], []>} : vector<8x8xbf16>, vector<8x8xbf16>, vector<8x8xf32> -> vector<8x8xf32>
    %205 = vector.extract_strided_slice %188 {offsets = [40, 0], sizes = [8, 8], strides = [1, 1]} : vector<64x8xbf16> to vector<8x8xbf16>
    %206 = vector.extract_strided_slice %148 {offsets = [8, 8], sizes = [8, 8], strides = [1, 1]} : vector<16x32xbf16> to vector<8x8xbf16>
    %cst_89 = arith.constant dense<0.000000e+00> : vector<8x8xf32>
    %207 = tpu.matmul %205, %206, %cst_89 {dimension_numbers = #tpu.dot_dimension_numbers<[1], [0], [0], [1], [0, 0, 1, 1], [], []>} : vector<8x8xbf16>, vector<8x8xbf16>, vector<8x8xf32> -> vector<8x8xf32>
    %208 = vector.extract_strided_slice %188 {offsets = [48, 0], sizes = [8, 8], strides = [1, 1]} : vector<64x8xbf16> to vector<8x8xbf16>
    %209 = vector.extract_strided_slice %148 {offsets = [8, 16], sizes = [8, 8], strides = [1, 1]} : vector<16x32xbf16> to vector<8x8xbf16>
    %cst_90 = arith.constant dense<0.000000e+00> : vector<8x8xf32>
    %210 = tpu.matmul %208, %209, %cst_90 {dimension_numbers = #tpu.dot_dimension_numbers<[1], [0], [0], [1], [0, 0, 1, 1], [], []>} : vector<8x8xbf16>, vector<8x8xbf16>, vector<8x8xf32> -> vector<8x8xf32>
    %211 = vector.extract_strided_slice %188 {offsets = [56, 0], sizes = [8, 8], strides = [1, 1]} : vector<64x8xbf16> to vector<8x8xbf16>
    %212 = vector.extract_strided_slice %148 {offsets = [8, 24], sizes = [8, 8], strides = [1, 1]} : vector<16x32xbf16> to vector<8x8xbf16>
    %cst_91 = arith.constant dense<0.000000e+00> : vector<8x8xf32>
    %213 = tpu.matmul %211, %212, %cst_91 {dimension_numbers = #tpu.dot_dimension_numbers<[1], [0], [0], [1], [0, 0, 1, 1], [], []>} : vector<8x8xbf16>, vector<8x8xbf16>, vector<8x8xf32> -> vector<8x8xf32>
    %214 = tpu.concatenate %204, %207, %210, %213 in 1 : vector<8x8xf32>, vector<8x8xf32>, vector<8x8xf32>, vector<8x8xf32> -> vector<8x32xf32>
    %215 = tpu.concatenate %201, %214 in 0 : vector<8x32xf32>, vector<8x32xf32> -> vector<16x32xf32>
    %216 = arith.truncf %215 : vector<16x32xf32> to vector<16x32xbf16>
    %cst_92 = arith.constant dense<0.000000e+00> : vector<16x32xf32>
    %217 = tpu.matmul %216, %150, %cst_92 {dimension_numbers = #tpu.dot_dimension_numbers<[1], [0], [0], [1], [0, 0, 1, 1], [], []>} : vector<16x32xbf16>, vector<32x32xbf16>, vector<16x32xf32> -> vector<16x32xf32>
    %218 = vector.broadcast %152 : vector<1x32xf32> to vector<16x32xf32>
    %219 = arith.addf %217, %218 : vector<16x32xf32>
    %220 = arith.addf %129, %219 : vector<16x32xf32>
    %c0_93 = arith.constant 0 : index
    %c0_94 = arith.constant 0 : index
    %c0_95 = arith.constant 0 : index
    %221 = vector.load %arg18[%c0_93, %c0_94, %c0_95] : memref<2x1x32xf32, #tpu.memory_space<vmem>>, vector<1x1x32xf32>
    %222 = vector.shape_cast %221 : vector<1x1x32xf32> to vector<1x32xf32>
    %c0_96 = arith.constant 0 : index
    %c0_97 = arith.constant 0 : index
    %c0_98 = arith.constant 0 : index
    %223 = vector.load %arg19[%c0_96, %c0_97, %c0_98] : memref<2x1x32xf32, #tpu.memory_space<vmem>>, vector<1x1x32xf32>
    %224 = vector.shape_cast %223 : vector<1x1x32xf32> to vector<1x32xf32>
    %cst_99 = arith.constant dense<0.000000e+00> : vector<16xf32>
    %225 = vector.multi_reduction <add>, %220, %cst_99 [1] : vector<16x32xf32> to vector<16xf32>
    %226 = vector.shape_cast %225 : vector<16xf32> to vector<16x1xf32>
    %cst_100 = arith.constant 3.200000e+01 : f32
    %227 = vector.broadcast %cst_100 : f32 to vector<16x1xf32>
    %228 = arith.divf %226, %227 : vector<16x1xf32>
    %229 = vector.broadcast %228 : vector<16x1xf32> to vector<16x32xf32>
    %230 = arith.subf %220, %229 : vector<16x32xf32>
    %231 = arith.mulf %230, %230 : vector<16x32xf32>
    %cst_101 = arith.constant dense<0.000000e+00> : vector<16xf32>
    %232 = vector.multi_reduction <add>, %231, %cst_101 [1] : vector<16x32xf32> to vector<16xf32>
    %233 = vector.shape_cast %232 : vector<16xf32> to vector<16x1xf32>
    %cst_102 = arith.constant 3.200000e+01 : f32
    %234 = vector.broadcast %cst_102 : f32 to vector<16x1xf32>
    %235 = arith.divf %233, %234 : vector<16x1xf32>
    %cst_103 = arith.constant 9.99999974E-6 : f32
    %236 = vector.broadcast %cst_103 : f32 to vector<16x1xf32>
    %237 = arith.addf %235, %236 : vector<16x1xf32>
    %238 = math.rsqrt %237 : vector<16x1xf32>
    %239 = vector.broadcast %238 : vector<16x1xf32> to vector<16x32xf32>
    %240 = arith.mulf %230, %239 : vector<16x32xf32>
    %241 = vector.broadcast %222 : vector<1x32xf32> to vector<16x32xf32>
    %242 = arith.mulf %240, %241 : vector<16x32xf32>
    %243 = vector.broadcast %224 : vector<1x32xf32> to vector<16x32xf32>
    %244 = arith.addf %242, %243 : vector<16x32xf32>
    %245 = arith.truncf %244 : vector<16x32xf32> to vector<16x32xbf16>
    %c0_104 = arith.constant 0 : index
    %c0_105 = arith.constant 0 : index
    %c0_106 = arith.constant 0 : index
    %246 = vector.load %arg22[%c0_104, %c0_105, %c0_106] : memref<2x32x32xbf16, #tpu.memory_space<vmem>>, vector<1x32x32xbf16>
    %247 = vector.shape_cast %246 : vector<1x32x32xbf16> to vector<32x32xbf16>
    %cst_107 = arith.constant dense<0.000000e+00> : vector<16x32xf32>
    %248 = tpu.matmul %245, %247, %cst_107 {dimension_numbers = #tpu.dot_dimension_numbers<[1], [0], [0], [1], [0, 0, 1, 1], [], []>} : vector<16x32xbf16>, vector<32x32xbf16>, vector<16x32xf32> -> vector<16x32xf32>
    %c0_108 = arith.constant 0 : index
    %c0_109 = arith.constant 0 : index
    %c0_110 = arith.constant 0 : index
    %249 = vector.load %arg23[%c0_108, %c0_109, %c0_110] : memref<2x1x32xf32, #tpu.memory_space<vmem>>, vector<1x1x32xf32>
    %250 = vector.shape_cast %249 : vector<1x1x32xf32> to vector<1x32xf32>
    %251 = vector.broadcast %250 : vector<1x32xf32> to vector<16x32xf32>
    %252 = arith.addf %248, %251 : vector<16x32xf32>
    %cst_111 = arith.constant 0.000000e+00 : f32
    %253 = vector.broadcast %cst_111 : f32 to vector<16x32xf32>
    %254 = arith.maximumf %252, %253 : vector<16x32xf32>
    %255 = arith.truncf %254 : vector<16x32xf32> to vector<16x32xbf16>
    %c0_112 = arith.constant 0 : index
    %c0_113 = arith.constant 0 : index
    %c0_114 = arith.constant 0 : index
    %256 = vector.load %arg24[%c0_112, %c0_113, %c0_114] : memref<2x32x32xbf16, #tpu.memory_space<vmem>>, vector<1x32x32xbf16>
    %257 = vector.shape_cast %256 : vector<1x32x32xbf16> to vector<32x32xbf16>
    %cst_115 = arith.constant dense<0.000000e+00> : vector<16x32xf32>
    %258 = tpu.matmul %255, %257, %cst_115 {dimension_numbers = #tpu.dot_dimension_numbers<[1], [0], [0], [1], [0, 0, 1, 1], [], []>} : vector<16x32xbf16>, vector<32x32xbf16>, vector<16x32xf32> -> vector<16x32xf32>
    %c0_116 = arith.constant 0 : index
    %c0_117 = arith.constant 0 : index
    %c0_118 = arith.constant 0 : index
    %259 = vector.load %arg25[%c0_116, %c0_117, %c0_118] : memref<2x1x32xf32, #tpu.memory_space<vmem>>, vector<1x1x32xf32>
    %260 = vector.shape_cast %259 : vector<1x1x32xf32> to vector<1x32xf32>
    %261 = vector.broadcast %260 : vector<1x32xf32> to vector<16x32xf32>
    %262 = arith.addf %258, %261 : vector<16x32xf32>
    %263 = arith.addf %244, %262 : vector<16x32xf32>
    %c0_119 = arith.constant 0 : index
    %c0_120 = arith.constant 0 : index
    %c0_121 = arith.constant 0 : index
    %264 = vector.load %arg20[%c0_119, %c0_120, %c0_121] : memref<2x1x32xf32, #tpu.memory_space<vmem>>, vector<1x1x32xf32>
    %265 = vector.shape_cast %264 : vector<1x1x32xf32> to vector<1x32xf32>
    %c0_122 = arith.constant 0 : index
    %c0_123 = arith.constant 0 : index
    %c0_124 = arith.constant 0 : index
    %266 = vector.load %arg21[%c0_122, %c0_123, %c0_124] : memref<2x1x32xf32, #tpu.memory_space<vmem>>, vector<1x1x32xf32>
    %267 = vector.shape_cast %266 : vector<1x1x32xf32> to vector<1x32xf32>
    %cst_125 = arith.constant dense<0.000000e+00> : vector<16xf32>
    %268 = vector.multi_reduction <add>, %263, %cst_125 [1] : vector<16x32xf32> to vector<16xf32>
    %269 = vector.shape_cast %268 : vector<16xf32> to vector<16x1xf32>
    %cst_126 = arith.constant 3.200000e+01 : f32
    %270 = vector.broadcast %cst_126 : f32 to vector<16x1xf32>
    %271 = arith.divf %269, %270 : vector<16x1xf32>
    %272 = vector.broadcast %271 : vector<16x1xf32> to vector<16x32xf32>
    %273 = arith.subf %263, %272 : vector<16x32xf32>
    %274 = arith.mulf %273, %273 : vector<16x32xf32>
    %cst_127 = arith.constant dense<0.000000e+00> : vector<16xf32>
    %275 = vector.multi_reduction <add>, %274, %cst_127 [1] : vector<16x32xf32> to vector<16xf32>
    %276 = vector.shape_cast %275 : vector<16xf32> to vector<16x1xf32>
    %cst_128 = arith.constant 3.200000e+01 : f32
    %277 = vector.broadcast %cst_128 : f32 to vector<16x1xf32>
    %278 = arith.divf %276, %277 : vector<16x1xf32>
    %cst_129 = arith.constant 9.99999974E-6 : f32
    %279 = vector.broadcast %cst_129 : f32 to vector<16x1xf32>
    %280 = arith.addf %278, %279 : vector<16x1xf32>
    %281 = math.rsqrt %280 : vector<16x1xf32>
    %282 = vector.broadcast %281 : vector<16x1xf32> to vector<16x32xf32>
    %283 = arith.mulf %273, %282 : vector<16x32xf32>
    %284 = vector.broadcast %265 : vector<1x32xf32> to vector<16x32xf32>
    %285 = arith.mulf %283, %284 : vector<16x32xf32>
    %286 = vector.broadcast %267 : vector<1x32xf32> to vector<16x32xf32>
    %287 = arith.addf %285, %286 : vector<16x32xf32>
    %288 = arith.truncf %287 : vector<16x32xf32> to vector<16x32xbf16>
    %c1 = arith.constant 1 : index
    %c0_130 = arith.constant 0 : index
    %c0_131 = arith.constant 0 : index
    %289 = vector.load %arg6[%c1, %c0_130, %c0_131] : memref<2x32x96xbf16, #tpu.memory_space<vmem>>, vector<1x32x96xbf16>
    %290 = vector.shape_cast %289 : vector<1x32x96xbf16> to vector<32x96xbf16>
    %cst_132 = arith.constant dense<0.000000e+00> : vector<16x96xf32>
    %291 = tpu.matmul %288, %290, %cst_132 {dimension_numbers = #tpu.dot_dimension_numbers<[1], [0], [0], [1], [0, 0, 1, 1], [], []>} : vector<16x32xbf16>, vector<32x96xbf16>, vector<16x96xf32> -> vector<16x96xf32>
    %c1_133 = arith.constant 1 : index
    %c0_134 = arith.constant 0 : index
    %c0_135 = arith.constant 0 : index
    %292 = vector.load %arg7[%c1_133, %c0_134, %c0_135] : memref<2x1x96xf32, #tpu.memory_space<vmem>>, vector<1x1x96xf32>
    %293 = vector.shape_cast %292 : vector<1x1x96xf32> to vector<1x96xf32>
    %294 = vector.broadcast %293 : vector<1x96xf32> to vector<16x96xf32>
    %295 = arith.addf %291, %294 : vector<16x96xf32>
    %296 = arith.truncf %295 : vector<16x96xf32> to vector<16x96xbf16>
    %297 = vector.extract_strided_slice %296 {offsets = [0, 0], sizes = [16, 32], strides = [1, 1]} : vector<16x96xbf16> to vector<16x32xbf16>
    %298 = vector.extract_strided_slice %296 {offsets = [0, 32], sizes = [16, 32], strides = [1, 1]} : vector<16x96xbf16> to vector<16x32xbf16>
    %299 = vector.extract_strided_slice %296 {offsets = [0, 64], sizes = [16, 32], strides = [1, 1]} : vector<16x96xbf16> to vector<16x32xbf16>
    %c1_136 = arith.constant 1 : index
    %c0_137 = arith.constant 0 : index
    %c0_138 = arith.constant 0 : index
    %300 = vector.load %arg8[%c1_136, %c0_137, %c0_138] : memref<2x32x32xbf16, #tpu.memory_space<vmem>>, vector<1x32x32xbf16>
    %301 = vector.shape_cast %300 : vector<1x32x32xbf16> to vector<32x32xbf16>
    %c1_139 = arith.constant 1 : index
    %c0_140 = arith.constant 0 : index
    %c0_141 = arith.constant 0 : index
    %302 = vector.load %arg9[%c1_139, %c0_140, %c0_141] : memref<2x1x32xf32, #tpu.memory_space<vmem>>, vector<1x1x32xf32>
    %303 = vector.shape_cast %302 : vector<1x1x32xf32> to vector<1x32xf32>
    %304 = vector.extract_strided_slice %297 {offsets = [0, 0], sizes = [8, 8], strides = [1, 1]} : vector<16x32xbf16> to vector<8x8xbf16>
    %305 = vector.extract_strided_slice %298 {offsets = [0, 0], sizes = [8, 8], strides = [1, 1]} : vector<16x32xbf16> to vector<8x8xbf16>
    %cst_142 = arith.constant dense<0.000000e+00> : vector<8x8xf32>
    %306 = tpu.matmul %304, %305, %cst_142 {dimension_numbers = #tpu.dot_dimension_numbers<[1], [1], [0], [0], [0, 0, 1, 0], [], []>} : vector<8x8xbf16>, vector<8x8xbf16>, vector<8x8xf32> -> vector<8x8xf32>
    %307 = vector.extract_strided_slice %297 {offsets = [0, 8], sizes = [8, 8], strides = [1, 1]} : vector<16x32xbf16> to vector<8x8xbf16>
    %308 = vector.extract_strided_slice %298 {offsets = [0, 8], sizes = [8, 8], strides = [1, 1]} : vector<16x32xbf16> to vector<8x8xbf16>
    %cst_143 = arith.constant dense<0.000000e+00> : vector<8x8xf32>
    %309 = tpu.matmul %307, %308, %cst_143 {dimension_numbers = #tpu.dot_dimension_numbers<[1], [1], [0], [0], [0, 0, 1, 0], [], []>} : vector<8x8xbf16>, vector<8x8xbf16>, vector<8x8xf32> -> vector<8x8xf32>
    %310 = vector.extract_strided_slice %297 {offsets = [0, 16], sizes = [8, 8], strides = [1, 1]} : vector<16x32xbf16> to vector<8x8xbf16>
    %311 = vector.extract_strided_slice %298 {offsets = [0, 16], sizes = [8, 8], strides = [1, 1]} : vector<16x32xbf16> to vector<8x8xbf16>
    %cst_144 = arith.constant dense<0.000000e+00> : vector<8x8xf32>
    %312 = tpu.matmul %310, %311, %cst_144 {dimension_numbers = #tpu.dot_dimension_numbers<[1], [1], [0], [0], [0, 0, 1, 0], [], []>} : vector<8x8xbf16>, vector<8x8xbf16>, vector<8x8xf32> -> vector<8x8xf32>
    %313 = vector.extract_strided_slice %297 {offsets = [0, 24], sizes = [8, 8], strides = [1, 1]} : vector<16x32xbf16> to vector<8x8xbf16>
    %314 = vector.extract_strided_slice %298 {offsets = [0, 24], sizes = [8, 8], strides = [1, 1]} : vector<16x32xbf16> to vector<8x8xbf16>
    %cst_145 = arith.constant dense<0.000000e+00> : vector<8x8xf32>
    %315 = tpu.matmul %313, %314, %cst_145 {dimension_numbers = #tpu.dot_dimension_numbers<[1], [1], [0], [0], [0, 0, 1, 0], [], []>} : vector<8x8xbf16>, vector<8x8xbf16>, vector<8x8xf32> -> vector<8x8xf32>
    %316 = vector.extract_strided_slice %297 {offsets = [8, 0], sizes = [8, 8], strides = [1, 1]} : vector<16x32xbf16> to vector<8x8xbf16>
    %317 = vector.extract_strided_slice %298 {offsets = [8, 0], sizes = [8, 8], strides = [1, 1]} : vector<16x32xbf16> to vector<8x8xbf16>
    %cst_146 = arith.constant dense<0.000000e+00> : vector<8x8xf32>
    %318 = tpu.matmul %316, %317, %cst_146 {dimension_numbers = #tpu.dot_dimension_numbers<[1], [1], [0], [0], [0, 0, 1, 0], [], []>} : vector<8x8xbf16>, vector<8x8xbf16>, vector<8x8xf32> -> vector<8x8xf32>
    %319 = vector.extract_strided_slice %297 {offsets = [8, 8], sizes = [8, 8], strides = [1, 1]} : vector<16x32xbf16> to vector<8x8xbf16>
    %320 = vector.extract_strided_slice %298 {offsets = [8, 8], sizes = [8, 8], strides = [1, 1]} : vector<16x32xbf16> to vector<8x8xbf16>
    %cst_147 = arith.constant dense<0.000000e+00> : vector<8x8xf32>
    %321 = tpu.matmul %319, %320, %cst_147 {dimension_numbers = #tpu.dot_dimension_numbers<[1], [1], [0], [0], [0, 0, 1, 0], [], []>} : vector<8x8xbf16>, vector<8x8xbf16>, vector<8x8xf32> -> vector<8x8xf32>
    %322 = vector.extract_strided_slice %297 {offsets = [8, 16], sizes = [8, 8], strides = [1, 1]} : vector<16x32xbf16> to vector<8x8xbf16>
    %323 = vector.extract_strided_slice %298 {offsets = [8, 16], sizes = [8, 8], strides = [1, 1]} : vector<16x32xbf16> to vector<8x8xbf16>
    %cst_148 = arith.constant dense<0.000000e+00> : vector<8x8xf32>
    %324 = tpu.matmul %322, %323, %cst_148 {dimension_numbers = #tpu.dot_dimension_numbers<[1], [1], [0], [0], [0, 0, 1, 0], [], []>} : vector<8x8xbf16>, vector<8x8xbf16>, vector<8x8xf32> -> vector<8x8xf32>
    %325 = vector.extract_strided_slice %297 {offsets = [8, 24], sizes = [8, 8], strides = [1, 1]} : vector<16x32xbf16> to vector<8x8xbf16>
    %326 = vector.extract_strided_slice %298 {offsets = [8, 24], sizes = [8, 8], strides = [1, 1]} : vector<16x32xbf16> to vector<8x8xbf16>
    %cst_149 = arith.constant dense<0.000000e+00> : vector<8x8xf32>
    %327 = tpu.matmul %325, %326, %cst_149 {dimension_numbers = #tpu.dot_dimension_numbers<[1], [1], [0], [0], [0, 0, 1, 0], [], []>} : vector<8x8xbf16>, vector<8x8xbf16>, vector<8x8xf32> -> vector<8x8xf32>
    %328 = tpu.concatenate %306, %309, %312, %315, %318, %321, %324, %327 in 0 : vector<8x8xf32>, vector<8x8xf32>, vector<8x8xf32>, vector<8x8xf32>, vector<8x8xf32>, vector<8x8xf32>, vector<8x8xf32>, vector<8x8xf32> -> vector<64x8xf32>
    %329 = arith.addf %328, %14 : vector<64x8xf32>
    %cst_150 = arith.constant dense<0xFF800000> : vector<64xf32>
    %330 = vector.multi_reduction <maximumf>, %329, %cst_150 [1] : vector<64x8xf32> to vector<64xf32>
    %331 = vector.shape_cast %330 : vector<64xf32> to vector<64x1xf32>
    %332 = vector.broadcast %331 : vector<64x1xf32> to vector<64x8xf32>
    %333 = arith.subf %329, %332 : vector<64x8xf32>
    %334 = math.exp %333 : vector<64x8xf32>
    %cst_151 = arith.constant dense<0.000000e+00> : vector<64xf32>
    %335 = vector.multi_reduction <add>, %334, %cst_151 [1] : vector<64x8xf32> to vector<64xf32>
    %336 = vector.shape_cast %335 : vector<64xf32> to vector<64x1xf32>
    %337 = tpu.reciprocal %336 {approx = true} : vector<64x1xf32> -> vector<64x1xf32>
    %338 = vector.broadcast %337 : vector<64x1xf32> to vector<64x8xf32>
    %339 = arith.mulf %334, %338 : vector<64x8xf32>
    %340 = arith.truncf %339 : vector<64x8xf32> to vector<64x8xbf16>
    %341 = vector.extract_strided_slice %340 {offsets = [0, 0], sizes = [8, 8], strides = [1, 1]} : vector<64x8xbf16> to vector<8x8xbf16>
    %342 = vector.extract_strided_slice %299 {offsets = [0, 0], sizes = [8, 8], strides = [1, 1]} : vector<16x32xbf16> to vector<8x8xbf16>
    %cst_152 = arith.constant dense<0.000000e+00> : vector<8x8xf32>
    %343 = tpu.matmul %341, %342, %cst_152 {dimension_numbers = #tpu.dot_dimension_numbers<[1], [0], [0], [1], [0, 0, 1, 1], [], []>} : vector<8x8xbf16>, vector<8x8xbf16>, vector<8x8xf32> -> vector<8x8xf32>
    %344 = vector.extract_strided_slice %340 {offsets = [8, 0], sizes = [8, 8], strides = [1, 1]} : vector<64x8xbf16> to vector<8x8xbf16>
    %345 = vector.extract_strided_slice %299 {offsets = [0, 8], sizes = [8, 8], strides = [1, 1]} : vector<16x32xbf16> to vector<8x8xbf16>
    %cst_153 = arith.constant dense<0.000000e+00> : vector<8x8xf32>
    %346 = tpu.matmul %344, %345, %cst_153 {dimension_numbers = #tpu.dot_dimension_numbers<[1], [0], [0], [1], [0, 0, 1, 1], [], []>} : vector<8x8xbf16>, vector<8x8xbf16>, vector<8x8xf32> -> vector<8x8xf32>
    %347 = vector.extract_strided_slice %340 {offsets = [16, 0], sizes = [8, 8], strides = [1, 1]} : vector<64x8xbf16> to vector<8x8xbf16>
    %348 = vector.extract_strided_slice %299 {offsets = [0, 16], sizes = [8, 8], strides = [1, 1]} : vector<16x32xbf16> to vector<8x8xbf16>
    %cst_154 = arith.constant dense<0.000000e+00> : vector<8x8xf32>
    %349 = tpu.matmul %347, %348, %cst_154 {dimension_numbers = #tpu.dot_dimension_numbers<[1], [0], [0], [1], [0, 0, 1, 1], [], []>} : vector<8x8xbf16>, vector<8x8xbf16>, vector<8x8xf32> -> vector<8x8xf32>
    %350 = vector.extract_strided_slice %340 {offsets = [24, 0], sizes = [8, 8], strides = [1, 1]} : vector<64x8xbf16> to vector<8x8xbf16>
    %351 = vector.extract_strided_slice %299 {offsets = [0, 24], sizes = [8, 8], strides = [1, 1]} : vector<16x32xbf16> to vector<8x8xbf16>
    %cst_155 = arith.constant dense<0.000000e+00> : vector<8x8xf32>
    %352 = tpu.matmul %350, %351, %cst_155 {dimension_numbers = #tpu.dot_dimension_numbers<[1], [0], [0], [1], [0, 0, 1, 1], [], []>} : vector<8x8xbf16>, vector<8x8xbf16>, vector<8x8xf32> -> vector<8x8xf32>
    %353 = tpu.concatenate %343, %346, %349, %352 in 1 : vector<8x8xf32>, vector<8x8xf32>, vector<8x8xf32>, vector<8x8xf32> -> vector<8x32xf32>
    %354 = vector.extract_strided_slice %340 {offsets = [32, 0], sizes = [8, 8], strides = [1, 1]} : vector<64x8xbf16> to vector<8x8xbf16>
    %355 = vector.extract_strided_slice %299 {offsets = [8, 0], sizes = [8, 8], strides = [1, 1]} : vector<16x32xbf16> to vector<8x8xbf16>
    %cst_156 = arith.constant dense<0.000000e+00> : vector<8x8xf32>
    %356 = tpu.matmul %354, %355, %cst_156 {dimension_numbers = #tpu.dot_dimension_numbers<[1], [0], [0], [1], [0, 0, 1, 1], [], []>} : vector<8x8xbf16>, vector<8x8xbf16>, vector<8x8xf32> -> vector<8x8xf32>
    %357 = vector.extract_strided_slice %340 {offsets = [40, 0], sizes = [8, 8], strides = [1, 1]} : vector<64x8xbf16> to vector<8x8xbf16>
    %358 = vector.extract_strided_slice %299 {offsets = [8, 8], sizes = [8, 8], strides = [1, 1]} : vector<16x32xbf16> to vector<8x8xbf16>
    %cst_157 = arith.constant dense<0.000000e+00> : vector<8x8xf32>
    %359 = tpu.matmul %357, %358, %cst_157 {dimension_numbers = #tpu.dot_dimension_numbers<[1], [0], [0], [1], [0, 0, 1, 1], [], []>} : vector<8x8xbf16>, vector<8x8xbf16>, vector<8x8xf32> -> vector<8x8xf32>
    %360 = vector.extract_strided_slice %340 {offsets = [48, 0], sizes = [8, 8], strides = [1, 1]} : vector<64x8xbf16> to vector<8x8xbf16>
    %361 = vector.extract_strided_slice %299 {offsets = [8, 16], sizes = [8, 8], strides = [1, 1]} : vector<16x32xbf16> to vector<8x8xbf16>
    %cst_158 = arith.constant dense<0.000000e+00> : vector<8x8xf32>
    %362 = tpu.matmul %360, %361, %cst_158 {dimension_numbers = #tpu.dot_dimension_numbers<[1], [0], [0], [1], [0, 0, 1, 1], [], []>} : vector<8x8xbf16>, vector<8x8xbf16>, vector<8x8xf32> -> vector<8x8xf32>
    %363 = vector.extract_strided_slice %340 {offsets = [56, 0], sizes = [8, 8], strides = [1, 1]} : vector<64x8xbf16> to vector<8x8xbf16>
    %364 = vector.extract_strided_slice %299 {offsets = [8, 24], sizes = [8, 8], strides = [1, 1]} : vector<16x32xbf16> to vector<8x8xbf16>
    %cst_159 = arith.constant dense<0.000000e+00> : vector<8x8xf32>
    %365 = tpu.matmul %363, %364, %cst_159 {dimension_numbers = #tpu.dot_dimension_numbers<[1], [0], [0], [1], [0, 0, 1, 1], [], []>} : vector<8x8xbf16>, vector<8x8xbf16>, vector<8x8xf32> -> vector<8x8xf32>
    %366 = tpu.concatenate %356, %359, %362, %365 in 1 : vector<8x8xf32>, vector<8x8xf32>, vector<8x8xf32>, vector<8x8xf32> -> vector<8x32xf32>
    %367 = tpu.concatenate %353, %366 in 0 : vector<8x32xf32>, vector<8x32xf32> -> vector<16x32xf32>
    %368 = arith.truncf %367 : vector<16x32xf32> to vector<16x32xbf16>
    %cst_160 = arith.constant dense<0.000000e+00> : vector<16x32xf32>
    %369 = tpu.matmul %368, %301, %cst_160 {dimension_numbers = #tpu.dot_dimension_numbers<[1], [0], [0], [1], [0, 0, 1, 1], [], []>} : vector<16x32xbf16>, vector<32x32xbf16>, vector<16x32xf32> -> vector<16x32xf32>
    %370 = vector.broadcast %303 : vector<1x32xf32> to vector<16x32xf32>
    %371 = arith.addf %369, %370 : vector<16x32xf32>
    %372 = arith.addf %287, %371 : vector<16x32xf32>
    %c1_161 = arith.constant 1 : index
    %c0_162 = arith.constant 0 : index
    %c0_163 = arith.constant 0 : index
    %373 = vector.load %arg16[%c1_161, %c0_162, %c0_163] : memref<2x1x32xf32, #tpu.memory_space<vmem>>, vector<1x1x32xf32>
    %374 = vector.shape_cast %373 : vector<1x1x32xf32> to vector<1x32xf32>
    %c1_164 = arith.constant 1 : index
    %c0_165 = arith.constant 0 : index
    %c0_166 = arith.constant 0 : index
    %375 = vector.load %arg17[%c1_164, %c0_165, %c0_166] : memref<2x1x32xf32, #tpu.memory_space<vmem>>, vector<1x1x32xf32>
    %376 = vector.shape_cast %375 : vector<1x1x32xf32> to vector<1x32xf32>
    %cst_167 = arith.constant dense<0.000000e+00> : vector<16xf32>
    %377 = vector.multi_reduction <add>, %372, %cst_167 [1] : vector<16x32xf32> to vector<16xf32>
    %378 = vector.shape_cast %377 : vector<16xf32> to vector<16x1xf32>
    %cst_168 = arith.constant 3.200000e+01 : f32
    %379 = vector.broadcast %cst_168 : f32 to vector<16x1xf32>
    %380 = arith.divf %378, %379 : vector<16x1xf32>
    %381 = vector.broadcast %380 : vector<16x1xf32> to vector<16x32xf32>
    %382 = arith.subf %372, %381 : vector<16x32xf32>
    %383 = arith.mulf %382, %382 : vector<16x32xf32>
    %cst_169 = arith.constant dense<0.000000e+00> : vector<16xf32>
    %384 = vector.multi_reduction <add>, %383, %cst_169 [1] : vector<16x32xf32> to vector<16xf32>
    %385 = vector.shape_cast %384 : vector<16xf32> to vector<16x1xf32>
    %cst_170 = arith.constant 3.200000e+01 : f32
    %386 = vector.broadcast %cst_170 : f32 to vector<16x1xf32>
    %387 = arith.divf %385, %386 : vector<16x1xf32>
    %cst_171 = arith.constant 9.99999974E-6 : f32
    %388 = vector.broadcast %cst_171 : f32 to vector<16x1xf32>
    %389 = arith.addf %387, %388 : vector<16x1xf32>
    %390 = math.rsqrt %389 : vector<16x1xf32>
    %391 = vector.broadcast %390 : vector<16x1xf32> to vector<16x32xf32>
    %392 = arith.mulf %382, %391 : vector<16x32xf32>
    %393 = vector.broadcast %374 : vector<1x32xf32> to vector<16x32xf32>
    %394 = arith.mulf %392, %393 : vector<16x32xf32>
    %395 = vector.broadcast %376 : vector<1x32xf32> to vector<16x32xf32>
    %396 = arith.addf %394, %395 : vector<16x32xf32>
    %397 = arith.truncf %396 : vector<16x32xf32> to vector<16x32xbf16>
    %c1_172 = arith.constant 1 : index
    %c0_173 = arith.constant 0 : index
    %c0_174 = arith.constant 0 : index
    %398 = vector.load %arg10[%c1_172, %c0_173, %c0_174] : memref<2x32x32xbf16, #tpu.memory_space<vmem>>, vector<1x32x32xbf16>
    %399 = vector.shape_cast %398 : vector<1x32x32xbf16> to vector<32x32xbf16>
    %cst_175 = arith.constant dense<0.000000e+00> : vector<16x32xf32>
    %400 = tpu.matmul %397, %399, %cst_175 {dimension_numbers = #tpu.dot_dimension_numbers<[1], [0], [0], [1], [0, 0, 1, 1], [], []>} : vector<16x32xbf16>, vector<32x32xbf16>, vector<16x32xf32> -> vector<16x32xf32>
    %c1_176 = arith.constant 1 : index
    %c0_177 = arith.constant 0 : index
    %c0_178 = arith.constant 0 : index
    %401 = vector.load %arg11[%c1_176, %c0_177, %c0_178] : memref<2x1x32xf32, #tpu.memory_space<vmem>>, vector<1x1x32xf32>
    %402 = vector.shape_cast %401 : vector<1x1x32xf32> to vector<1x32xf32>
    %403 = vector.broadcast %402 : vector<1x32xf32> to vector<16x32xf32>
    %404 = arith.addf %400, %403 : vector<16x32xf32>
    %405 = arith.truncf %404 : vector<16x32xf32> to vector<16x32xbf16>
    %c1_179 = arith.constant 1 : index
    %c0_180 = arith.constant 0 : index
    %c0_181 = arith.constant 0 : index
    %406 = vector.load %arg12[%c1_179, %c0_180, %c0_181] : memref<2x32x64xbf16, #tpu.memory_space<vmem>>, vector<1x32x64xbf16>
    %407 = vector.shape_cast %406 : vector<1x32x64xbf16> to vector<32x64xbf16>
    %cst_182 = arith.constant dense<0.000000e+00> : vector<16x64xf32>
    %408 = tpu.matmul %12, %407, %cst_182 {dimension_numbers = #tpu.dot_dimension_numbers<[1], [0], [0], [1], [0, 0, 1, 1], [], []>} : vector<16x32xbf16>, vector<32x64xbf16>, vector<16x64xf32> -> vector<16x64xf32>
    %c1_183 = arith.constant 1 : index
    %c0_184 = arith.constant 0 : index
    %c0_185 = arith.constant 0 : index
    %409 = vector.load %arg13[%c1_183, %c0_184, %c0_185] : memref<2x1x64xf32, #tpu.memory_space<vmem>>, vector<1x1x64xf32>
    %410 = vector.shape_cast %409 : vector<1x1x64xf32> to vector<1x64xf32>
    %411 = vector.broadcast %410 : vector<1x64xf32> to vector<16x64xf32>
    %412 = arith.addf %408, %411 : vector<16x64xf32>
    %413 = arith.truncf %412 : vector<16x64xf32> to vector<16x64xbf16>
    %414 = vector.extract_strided_slice %413 {offsets = [0, 0], sizes = [16, 32], strides = [1, 1]} : vector<16x64xbf16> to vector<16x32xbf16>
    %415 = vector.extract_strided_slice %413 {offsets = [0, 32], sizes = [16, 32], strides = [1, 1]} : vector<16x64xbf16> to vector<16x32xbf16>
    %c1_186 = arith.constant 1 : index
    %c0_187 = arith.constant 0 : index
    %c0_188 = arith.constant 0 : index
    %416 = vector.load %arg14[%c1_186, %c0_187, %c0_188] : memref<2x32x32xbf16, #tpu.memory_space<vmem>>, vector<1x32x32xbf16>
    %417 = vector.shape_cast %416 : vector<1x32x32xbf16> to vector<32x32xbf16>
    %c1_189 = arith.constant 1 : index
    %c0_190 = arith.constant 0 : index
    %c0_191 = arith.constant 0 : index
    %418 = vector.load %arg15[%c1_189, %c0_190, %c0_191] : memref<2x1x32xf32, #tpu.memory_space<vmem>>, vector<1x1x32xf32>
    %419 = vector.shape_cast %418 : vector<1x1x32xf32> to vector<1x32xf32>
    %420 = vector.extract_strided_slice %405 {offsets = [0, 0], sizes = [8, 8], strides = [1, 1]} : vector<16x32xbf16> to vector<8x8xbf16>
    %421 = vector.extract_strided_slice %414 {offsets = [0, 0], sizes = [8, 8], strides = [1, 1]} : vector<16x32xbf16> to vector<8x8xbf16>
    %cst_192 = arith.constant dense<0.000000e+00> : vector<8x8xf32>
    %422 = tpu.matmul %420, %421, %cst_192 {dimension_numbers = #tpu.dot_dimension_numbers<[1], [1], [0], [0], [0, 0, 1, 0], [], []>} : vector<8x8xbf16>, vector<8x8xbf16>, vector<8x8xf32> -> vector<8x8xf32>
    %423 = vector.extract_strided_slice %405 {offsets = [0, 8], sizes = [8, 8], strides = [1, 1]} : vector<16x32xbf16> to vector<8x8xbf16>
    %424 = vector.extract_strided_slice %414 {offsets = [0, 8], sizes = [8, 8], strides = [1, 1]} : vector<16x32xbf16> to vector<8x8xbf16>
    %cst_193 = arith.constant dense<0.000000e+00> : vector<8x8xf32>
    %425 = tpu.matmul %423, %424, %cst_193 {dimension_numbers = #tpu.dot_dimension_numbers<[1], [1], [0], [0], [0, 0, 1, 0], [], []>} : vector<8x8xbf16>, vector<8x8xbf16>, vector<8x8xf32> -> vector<8x8xf32>
    %426 = vector.extract_strided_slice %405 {offsets = [0, 16], sizes = [8, 8], strides = [1, 1]} : vector<16x32xbf16> to vector<8x8xbf16>
    %427 = vector.extract_strided_slice %414 {offsets = [0, 16], sizes = [8, 8], strides = [1, 1]} : vector<16x32xbf16> to vector<8x8xbf16>
    %cst_194 = arith.constant dense<0.000000e+00> : vector<8x8xf32>
    %428 = tpu.matmul %426, %427, %cst_194 {dimension_numbers = #tpu.dot_dimension_numbers<[1], [1], [0], [0], [0, 0, 1, 0], [], []>} : vector<8x8xbf16>, vector<8x8xbf16>, vector<8x8xf32> -> vector<8x8xf32>
    %429 = vector.extract_strided_slice %405 {offsets = [0, 24], sizes = [8, 8], strides = [1, 1]} : vector<16x32xbf16> to vector<8x8xbf16>
    %430 = vector.extract_strided_slice %414 {offsets = [0, 24], sizes = [8, 8], strides = [1, 1]} : vector<16x32xbf16> to vector<8x8xbf16>
    %cst_195 = arith.constant dense<0.000000e+00> : vector<8x8xf32>
    %431 = tpu.matmul %429, %430, %cst_195 {dimension_numbers = #tpu.dot_dimension_numbers<[1], [1], [0], [0], [0, 0, 1, 0], [], []>} : vector<8x8xbf16>, vector<8x8xbf16>, vector<8x8xf32> -> vector<8x8xf32>
    %432 = vector.extract_strided_slice %405 {offsets = [8, 0], sizes = [8, 8], strides = [1, 1]} : vector<16x32xbf16> to vector<8x8xbf16>
    %433 = vector.extract_strided_slice %414 {offsets = [8, 0], sizes = [8, 8], strides = [1, 1]} : vector<16x32xbf16> to vector<8x8xbf16>
    %cst_196 = arith.constant dense<0.000000e+00> : vector<8x8xf32>
    %434 = tpu.matmul %432, %433, %cst_196 {dimension_numbers = #tpu.dot_dimension_numbers<[1], [1], [0], [0], [0, 0, 1, 0], [], []>} : vector<8x8xbf16>, vector<8x8xbf16>, vector<8x8xf32> -> vector<8x8xf32>
    %435 = vector.extract_strided_slice %405 {offsets = [8, 8], sizes = [8, 8], strides = [1, 1]} : vector<16x32xbf16> to vector<8x8xbf16>
    %436 = vector.extract_strided_slice %414 {offsets = [8, 8], sizes = [8, 8], strides = [1, 1]} : vector<16x32xbf16> to vector<8x8xbf16>
    %cst_197 = arith.constant dense<0.000000e+00> : vector<8x8xf32>
    %437 = tpu.matmul %435, %436, %cst_197 {dimension_numbers = #tpu.dot_dimension_numbers<[1], [1], [0], [0], [0, 0, 1, 0], [], []>} : vector<8x8xbf16>, vector<8x8xbf16>, vector<8x8xf32> -> vector<8x8xf32>
    %438 = vector.extract_strided_slice %405 {offsets = [8, 16], sizes = [8, 8], strides = [1, 1]} : vector<16x32xbf16> to vector<8x8xbf16>
    %439 = vector.extract_strided_slice %414 {offsets = [8, 16], sizes = [8, 8], strides = [1, 1]} : vector<16x32xbf16> to vector<8x8xbf16>
    %cst_198 = arith.constant dense<0.000000e+00> : vector<8x8xf32>
    %440 = tpu.matmul %438, %439, %cst_198 {dimension_numbers = #tpu.dot_dimension_numbers<[1], [1], [0], [0], [0, 0, 1, 0], [], []>} : vector<8x8xbf16>, vector<8x8xbf16>, vector<8x8xf32> -> vector<8x8xf32>
    %441 = vector.extract_strided_slice %405 {offsets = [8, 24], sizes = [8, 8], strides = [1, 1]} : vector<16x32xbf16> to vector<8x8xbf16>
    %442 = vector.extract_strided_slice %414 {offsets = [8, 24], sizes = [8, 8], strides = [1, 1]} : vector<16x32xbf16> to vector<8x8xbf16>
    %cst_199 = arith.constant dense<0.000000e+00> : vector<8x8xf32>
    %443 = tpu.matmul %441, %442, %cst_199 {dimension_numbers = #tpu.dot_dimension_numbers<[1], [1], [0], [0], [0, 0, 1, 0], [], []>} : vector<8x8xbf16>, vector<8x8xbf16>, vector<8x8xf32> -> vector<8x8xf32>
    %444 = tpu.concatenate %422, %425, %428, %431, %434, %437, %440, %443 in 0 : vector<8x8xf32>, vector<8x8xf32>, vector<8x8xf32>, vector<8x8xf32>, vector<8x8xf32>, vector<8x8xf32>, vector<8x8xf32>, vector<8x8xf32> -> vector<64x8xf32>
    %cst_200 = arith.constant dense<0xFF800000> : vector<64xf32>
    %445 = vector.multi_reduction <maximumf>, %444, %cst_200 [1] : vector<64x8xf32> to vector<64xf32>
    %446 = vector.shape_cast %445 : vector<64xf32> to vector<64x1xf32>
    %447 = vector.broadcast %446 : vector<64x1xf32> to vector<64x8xf32>
    %448 = arith.subf %444, %447 : vector<64x8xf32>
    %449 = math.exp %448 : vector<64x8xf32>
    %cst_201 = arith.constant dense<0.000000e+00> : vector<64xf32>
    %450 = vector.multi_reduction <add>, %449, %cst_201 [1] : vector<64x8xf32> to vector<64xf32>
    %451 = vector.shape_cast %450 : vector<64xf32> to vector<64x1xf32>
    %452 = tpu.reciprocal %451 {approx = true} : vector<64x1xf32> -> vector<64x1xf32>
    %453 = vector.broadcast %452 : vector<64x1xf32> to vector<64x8xf32>
    %454 = arith.mulf %449, %453 : vector<64x8xf32>
    %455 = arith.truncf %454 : vector<64x8xf32> to vector<64x8xbf16>
    %456 = vector.extract_strided_slice %455 {offsets = [0, 0], sizes = [8, 8], strides = [1, 1]} : vector<64x8xbf16> to vector<8x8xbf16>
    %457 = vector.extract_strided_slice %415 {offsets = [0, 0], sizes = [8, 8], strides = [1, 1]} : vector<16x32xbf16> to vector<8x8xbf16>
    %cst_202 = arith.constant dense<0.000000e+00> : vector<8x8xf32>
    %458 = tpu.matmul %456, %457, %cst_202 {dimension_numbers = #tpu.dot_dimension_numbers<[1], [0], [0], [1], [0, 0, 1, 1], [], []>} : vector<8x8xbf16>, vector<8x8xbf16>, vector<8x8xf32> -> vector<8x8xf32>
    %459 = vector.extract_strided_slice %455 {offsets = [8, 0], sizes = [8, 8], strides = [1, 1]} : vector<64x8xbf16> to vector<8x8xbf16>
    %460 = vector.extract_strided_slice %415 {offsets = [0, 8], sizes = [8, 8], strides = [1, 1]} : vector<16x32xbf16> to vector<8x8xbf16>
    %cst_203 = arith.constant dense<0.000000e+00> : vector<8x8xf32>
    %461 = tpu.matmul %459, %460, %cst_203 {dimension_numbers = #tpu.dot_dimension_numbers<[1], [0], [0], [1], [0, 0, 1, 1], [], []>} : vector<8x8xbf16>, vector<8x8xbf16>, vector<8x8xf32> -> vector<8x8xf32>
    %462 = vector.extract_strided_slice %455 {offsets = [16, 0], sizes = [8, 8], strides = [1, 1]} : vector<64x8xbf16> to vector<8x8xbf16>
    %463 = vector.extract_strided_slice %415 {offsets = [0, 16], sizes = [8, 8], strides = [1, 1]} : vector<16x32xbf16> to vector<8x8xbf16>
    %cst_204 = arith.constant dense<0.000000e+00> : vector<8x8xf32>
    %464 = tpu.matmul %462, %463, %cst_204 {dimension_numbers = #tpu.dot_dimension_numbers<[1], [0], [0], [1], [0, 0, 1, 1], [], []>} : vector<8x8xbf16>, vector<8x8xbf16>, vector<8x8xf32> -> vector<8x8xf32>
    %465 = vector.extract_strided_slice %455 {offsets = [24, 0], sizes = [8, 8], strides = [1, 1]} : vector<64x8xbf16> to vector<8x8xbf16>
    %466 = vector.extract_strided_slice %415 {offsets = [0, 24], sizes = [8, 8], strides = [1, 1]} : vector<16x32xbf16> to vector<8x8xbf16>
    %cst_205 = arith.constant dense<0.000000e+00> : vector<8x8xf32>
    %467 = tpu.matmul %465, %466, %cst_205 {dimension_numbers = #tpu.dot_dimension_numbers<[1], [0], [0], [1], [0, 0, 1, 1], [], []>} : vector<8x8xbf16>, vector<8x8xbf16>, vector<8x8xf32> -> vector<8x8xf32>
    %468 = tpu.concatenate %458, %461, %464, %467 in 1 : vector<8x8xf32>, vector<8x8xf32>, vector<8x8xf32>, vector<8x8xf32> -> vector<8x32xf32>
    %469 = vector.extract_strided_slice %455 {offsets = [32, 0], sizes = [8, 8], strides = [1, 1]} : vector<64x8xbf16> to vector<8x8xbf16>
    %470 = vector.extract_strided_slice %415 {offsets = [8, 0], sizes = [8, 8], strides = [1, 1]} : vector<16x32xbf16> to vector<8x8xbf16>
    %cst_206 = arith.constant dense<0.000000e+00> : vector<8x8xf32>
    %471 = tpu.matmul %469, %470, %cst_206 {dimension_numbers = #tpu.dot_dimension_numbers<[1], [0], [0], [1], [0, 0, 1, 1], [], []>} : vector<8x8xbf16>, vector<8x8xbf16>, vector<8x8xf32> -> vector<8x8xf32>
    %472 = vector.extract_strided_slice %455 {offsets = [40, 0], sizes = [8, 8], strides = [1, 1]} : vector<64x8xbf16> to vector<8x8xbf16>
    %473 = vector.extract_strided_slice %415 {offsets = [8, 8], sizes = [8, 8], strides = [1, 1]} : vector<16x32xbf16> to vector<8x8xbf16>
    %cst_207 = arith.constant dense<0.000000e+00> : vector<8x8xf32>
    %474 = tpu.matmul %472, %473, %cst_207 {dimension_numbers = #tpu.dot_dimension_numbers<[1], [0], [0], [1], [0, 0, 1, 1], [], []>} : vector<8x8xbf16>, vector<8x8xbf16>, vector<8x8xf32> -> vector<8x8xf32>
    %475 = vector.extract_strided_slice %455 {offsets = [48, 0], sizes = [8, 8], strides = [1, 1]} : vector<64x8xbf16> to vector<8x8xbf16>
    %476 = vector.extract_strided_slice %415 {offsets = [8, 16], sizes = [8, 8], strides = [1, 1]} : vector<16x32xbf16> to vector<8x8xbf16>
    %cst_208 = arith.constant dense<0.000000e+00> : vector<8x8xf32>
    %477 = tpu.matmul %475, %476, %cst_208 {dimension_numbers = #tpu.dot_dimension_numbers<[1], [0], [0], [1], [0, 0, 1, 1], [], []>} : vector<8x8xbf16>, vector<8x8xbf16>, vector<8x8xf32> -> vector<8x8xf32>
    %478 = vector.extract_strided_slice %455 {offsets = [56, 0], sizes = [8, 8], strides = [1, 1]} : vector<64x8xbf16> to vector<8x8xbf16>
    %479 = vector.extract_strided_slice %415 {offsets = [8, 24], sizes = [8, 8], strides = [1, 1]} : vector<16x32xbf16> to vector<8x8xbf16>
    %cst_209 = arith.constant dense<0.000000e+00> : vector<8x8xf32>
    %480 = tpu.matmul %478, %479, %cst_209 {dimension_numbers = #tpu.dot_dimension_numbers<[1], [0], [0], [1], [0, 0, 1, 1], [], []>} : vector<8x8xbf16>, vector<8x8xbf16>, vector<8x8xf32> -> vector<8x8xf32>
    %481 = tpu.concatenate %471, %474, %477, %480 in 1 : vector<8x8xf32>, vector<8x8xf32>, vector<8x8xf32>, vector<8x8xf32> -> vector<8x32xf32>
    %482 = tpu.concatenate %468, %481 in 0 : vector<8x32xf32>, vector<8x32xf32> -> vector<16x32xf32>
    %483 = arith.truncf %482 : vector<16x32xf32> to vector<16x32xbf16>
    %cst_210 = arith.constant dense<0.000000e+00> : vector<16x32xf32>
    %484 = tpu.matmul %483, %417, %cst_210 {dimension_numbers = #tpu.dot_dimension_numbers<[1], [0], [0], [1], [0, 0, 1, 1], [], []>} : vector<16x32xbf16>, vector<32x32xbf16>, vector<16x32xf32> -> vector<16x32xf32>
    %485 = vector.broadcast %419 : vector<1x32xf32> to vector<16x32xf32>
    %486 = arith.addf %484, %485 : vector<16x32xf32>
    %487 = arith.addf %396, %486 : vector<16x32xf32>
    %c1_211 = arith.constant 1 : index
    %c0_212 = arith.constant 0 : index
    %c0_213 = arith.constant 0 : index
    %488 = vector.load %arg18[%c1_211, %c0_212, %c0_213] : memref<2x1x32xf32, #tpu.memory_space<vmem>>, vector<1x1x32xf32>
    %489 = vector.shape_cast %488 : vector<1x1x32xf32> to vector<1x32xf32>
    %c1_214 = arith.constant 1 : index
    %c0_215 = arith.constant 0 : index
    %c0_216 = arith.constant 0 : index
    %490 = vector.load %arg19[%c1_214, %c0_215, %c0_216] : memref<2x1x32xf32, #tpu.memory_space<vmem>>, vector<1x1x32xf32>
    %491 = vector.shape_cast %490 : vector<1x1x32xf32> to vector<1x32xf32>
    %cst_217 = arith.constant dense<0.000000e+00> : vector<16xf32>
    %492 = vector.multi_reduction <add>, %487, %cst_217 [1] : vector<16x32xf32> to vector<16xf32>
    %493 = vector.shape_cast %492 : vector<16xf32> to vector<16x1xf32>
    %cst_218 = arith.constant 3.200000e+01 : f32
    %494 = vector.broadcast %cst_218 : f32 to vector<16x1xf32>
    %495 = arith.divf %493, %494 : vector<16x1xf32>
    %496 = vector.broadcast %495 : vector<16x1xf32> to vector<16x32xf32>
    %497 = arith.subf %487, %496 : vector<16x32xf32>
    %498 = arith.mulf %497, %497 : vector<16x32xf32>
    %cst_219 = arith.constant dense<0.000000e+00> : vector<16xf32>
    %499 = vector.multi_reduction <add>, %498, %cst_219 [1] : vector<16x32xf32> to vector<16xf32>
    %500 = vector.shape_cast %499 : vector<16xf32> to vector<16x1xf32>
    %cst_220 = arith.constant 3.200000e+01 : f32
    %501 = vector.broadcast %cst_220 : f32 to vector<16x1xf32>
    %502 = arith.divf %500, %501 : vector<16x1xf32>
    %cst_221 = arith.constant 9.99999974E-6 : f32
    %503 = vector.broadcast %cst_221 : f32 to vector<16x1xf32>
    %504 = arith.addf %502, %503 : vector<16x1xf32>
    %505 = math.rsqrt %504 : vector<16x1xf32>
    %506 = vector.broadcast %505 : vector<16x1xf32> to vector<16x32xf32>
    %507 = arith.mulf %497, %506 : vector<16x32xf32>
    %508 = vector.broadcast %489 : vector<1x32xf32> to vector<16x32xf32>
    %509 = arith.mulf %507, %508 : vector<16x32xf32>
    %510 = vector.broadcast %491 : vector<1x32xf32> to vector<16x32xf32>
    %511 = arith.addf %509, %510 : vector<16x32xf32>
    %512 = arith.truncf %511 : vector<16x32xf32> to vector<16x32xbf16>
    %c1_222 = arith.constant 1 : index
    %c0_223 = arith.constant 0 : index
    %c0_224 = arith.constant 0 : index
    %513 = vector.load %arg22[%c1_222, %c0_223, %c0_224] : memref<2x32x32xbf16, #tpu.memory_space<vmem>>, vector<1x32x32xbf16>
    %514 = vector.shape_cast %513 : vector<1x32x32xbf16> to vector<32x32xbf16>
    %cst_225 = arith.constant dense<0.000000e+00> : vector<16x32xf32>
    %515 = tpu.matmul %512, %514, %cst_225 {dimension_numbers = #tpu.dot_dimension_numbers<[1], [0], [0], [1], [0, 0, 1, 1], [], []>} : vector<16x32xbf16>, vector<32x32xbf16>, vector<16x32xf32> -> vector<16x32xf32>
    %c1_226 = arith.constant 1 : index
    %c0_227 = arith.constant 0 : index
    %c0_228 = arith.constant 0 : index
    %516 = vector.load %arg23[%c1_226, %c0_227, %c0_228] : memref<2x1x32xf32, #tpu.memory_space<vmem>>, vector<1x1x32xf32>
    %517 = vector.shape_cast %516 : vector<1x1x32xf32> to vector<1x32xf32>
    %518 = vector.broadcast %517 : vector<1x32xf32> to vector<16x32xf32>
    %519 = arith.addf %515, %518 : vector<16x32xf32>
    %cst_229 = arith.constant 0.000000e+00 : f32
    %520 = vector.broadcast %cst_229 : f32 to vector<16x32xf32>
    %521 = arith.maximumf %519, %520 : vector<16x32xf32>
    %522 = arith.truncf %521 : vector<16x32xf32> to vector<16x32xbf16>
    %c1_230 = arith.constant 1 : index
    %c0_231 = arith.constant 0 : index
    %c0_232 = arith.constant 0 : index
    %523 = vector.load %arg24[%c1_230, %c0_231, %c0_232] : memref<2x32x32xbf16, #tpu.memory_space<vmem>>, vector<1x32x32xbf16>
    %524 = vector.shape_cast %523 : vector<1x32x32xbf16> to vector<32x32xbf16>
    %cst_233 = arith.constant dense<0.000000e+00> : vector<16x32xf32>
    %525 = tpu.matmul %522, %524, %cst_233 {dimension_numbers = #tpu.dot_dimension_numbers<[1], [0], [0], [1], [0, 0, 1, 1], [], []>} : vector<16x32xbf16>, vector<32x32xbf16>, vector<16x32xf32> -> vector<16x32xf32>
    %c1_234 = arith.constant 1 : index
    %c0_235 = arith.constant 0 : index
    %c0_236 = arith.constant 0 : index
    %526 = vector.load %arg25[%c1_234, %c0_235, %c0_236] : memref<2x1x32xf32, #tpu.memory_space<vmem>>, vector<1x1x32xf32>
    %527 = vector.shape_cast %526 : vector<1x1x32xf32> to vector<1x32xf32>
    %528 = vector.broadcast %527 : vector<1x32xf32> to vector<16x32xf32>
    %529 = arith.addf %525, %528 : vector<16x32xf32>
    %530 = arith.addf %511, %529 : vector<16x32xf32>
    %c1_237 = arith.constant 1 : index
    %c0_238 = arith.constant 0 : index
    %c0_239 = arith.constant 0 : index
    %531 = vector.load %arg20[%c1_237, %c0_238, %c0_239] : memref<2x1x32xf32, #tpu.memory_space<vmem>>, vector<1x1x32xf32>
    %532 = vector.shape_cast %531 : vector<1x1x32xf32> to vector<1x32xf32>
    %c1_240 = arith.constant 1 : index
    %c0_241 = arith.constant 0 : index
    %c0_242 = arith.constant 0 : index
    %533 = vector.load %arg21[%c1_240, %c0_241, %c0_242] : memref<2x1x32xf32, #tpu.memory_space<vmem>>, vector<1x1x32xf32>
    %534 = vector.shape_cast %533 : vector<1x1x32xf32> to vector<1x32xf32>
    %cst_243 = arith.constant dense<0.000000e+00> : vector<16xf32>
    %535 = vector.multi_reduction <add>, %530, %cst_243 [1] : vector<16x32xf32> to vector<16xf32>
    %536 = vector.shape_cast %535 : vector<16xf32> to vector<16x1xf32>
    %cst_244 = arith.constant 3.200000e+01 : f32
    %537 = vector.broadcast %cst_244 : f32 to vector<16x1xf32>
    %538 = arith.divf %536, %537 : vector<16x1xf32>
    %539 = vector.broadcast %538 : vector<16x1xf32> to vector<16x32xf32>
    %540 = arith.subf %530, %539 : vector<16x32xf32>
    %541 = arith.mulf %540, %540 : vector<16x32xf32>
    %cst_245 = arith.constant dense<0.000000e+00> : vector<16xf32>
    %542 = vector.multi_reduction <add>, %541, %cst_245 [1] : vector<16x32xf32> to vector<16xf32>
    %543 = vector.shape_cast %542 : vector<16xf32> to vector<16x1xf32>
    %cst_246 = arith.constant 3.200000e+01 : f32
    %544 = vector.broadcast %cst_246 : f32 to vector<16x1xf32>
    %545 = arith.divf %543, %544 : vector<16x1xf32>
    %cst_247 = arith.constant 9.99999974E-6 : f32
    %546 = vector.broadcast %cst_247 : f32 to vector<16x1xf32>
    %547 = arith.addf %545, %546 : vector<16x1xf32>
    %548 = math.rsqrt %547 : vector<16x1xf32>
    %549 = vector.broadcast %548 : vector<16x1xf32> to vector<16x32xf32>
    %550 = arith.mulf %540, %549 : vector<16x32xf32>
    %551 = vector.broadcast %532 : vector<1x32xf32> to vector<16x32xf32>
    %552 = arith.mulf %550, %551 : vector<16x32xf32>
    %553 = vector.broadcast %534 : vector<1x32xf32> to vector<16x32xf32>
    %554 = arith.addf %552, %553 : vector<16x32xf32>
    %555 = arith.truncf %554 : vector<16x32xf32> to vector<16x32xbf16>
    %c0_248 = arith.constant 0 : index
    %c0_249 = arith.constant 0 : index
    %556 = vector.load %arg26[%c0_248, %c0_249] : memref<32x128xbf16, #tpu.memory_space<vmem>>, vector<32x128xbf16>
    %cst_250 = arith.constant dense<0.000000e+00> : vector<16x128xf32>
    %557 = tpu.matmul %555, %556, %cst_250 {dimension_numbers = #tpu.dot_dimension_numbers<[1], [0], [0], [1], [0, 0, 1, 1], [], []>} : vector<16x32xbf16>, vector<32x128xbf16>, vector<16x128xf32> -> vector<16x128xf32>
    %c0_251 = arith.constant 0 : index
    %c0_252 = arith.constant 0 : index
    %558 = vector.load %arg27[%c0_251, %c0_252] : memref<1x128xf32, #tpu.memory_space<vmem>>, vector<1x128xf32>
    %559 = vector.broadcast %558 : vector<1x128xf32> to vector<16x128xf32>
    %560 = arith.addf %557, %559 : vector<16x128xf32>
    %561 = vector.extract_strided_slice %560 {offsets = [0, 0], sizes = [8, 128], strides = [1, 1]} : vector<16x128xf32> to vector<8x128xf32>
    %562 = vector.shape_cast %561 : vector<8x128xf32> to vector<8x1x128xf32>
    %563 = vector.extract_strided_slice %560 {offsets = [8, 0], sizes = [8, 128], strides = [1, 1]} : vector<16x128xf32> to vector<8x128xf32>
    %564 = vector.shape_cast %563 : vector<8x128xf32> to vector<8x1x128xf32>
    %565 = tpu.concatenate %562, %564 in 1 : vector<8x1x128xf32>, vector<8x1x128xf32> -> vector<8x2x128xf32>
    %c0_253 = arith.constant 0 : index
    %c0_254 = arith.constant 0 : index
    %c0_255 = arith.constant 0 : index
    %566 = vector.load %arg28[%c0_253, %c0_254, %c0_255] : memref<8x2x128xf32, #tpu.memory_space<vmem>>, vector<8x2x128xf32>
    tpu.vector_store %arg28[%c0_253, %c0_254, %c0_255], %565 {strides = array<i32>} : memref<8x2x128xf32, #tpu.memory_space<vmem>>, vector<8x2x128xf32>,
    return
  }
  func.func @transform_0(%arg0: i32) -> (i32, i32, i32) {
    %c0_i32 = arith.constant 0 : i32
    %c0_i32_0 = arith.constant 0 : i32
    %c0_i32_1 = arith.constant 0 : i32
    %c0_i32_2 = arith.constant 0 : i32
    return %c0_i32, %c0_i32_0, %c0_i32_1 : i32, i32, i32
  }
  func.func @transform_1(%arg0: i32) -> (i32, i32, i32) {
    %c0_i32 = arith.constant 0 : i32
    %c0_i32_0 = arith.constant 0 : i32
    %c0_i32_1 = arith.constant 0 : i32
    %c0_i32_2 = arith.constant 0 : i32
    return %c0_i32, %c0_i32_0, %c0_i32_1 : i32, i32, i32
  }
  func.func @transform_2(%arg0: i32) -> (i32, i32) {
    %c0_i32 = arith.constant 0 : i32
    %c0_i32_0 = arith.constant 0 : i32
    %c0_i32_1 = arith.constant 0 : i32
    return %c0_i32, %c0_i32_0 : i32, i32
  }
  func.func @transform_3(%arg0: i32) -> (i32, i32) {
    %c0_i32 = arith.constant 0 : i32
    %c0_i32_0 = arith.constant 0 : i32
    %c0_i32_1 = arith.constant 0 : i32
    return %c0_i32, %c0_i32_0 : i32, i32
  }
  func.func @transform_4(%arg0: i32) -> (i32, i32) {
    %c0_i32 = arith.constant 0 : i32
    %c0_i32_0 = arith.constant 0 : i32
    %c0_i32_1 = arith.constant 0 : i32
    return %c0_i32, %c0_i32_0 : i32, i32
  }
  func.func @transform_5(%arg0: i32) -> (i32, i32, i32) {
    %c0_i32 = arith.constant 0 : i32
    %c0_i32_0 = arith.constant 0 : i32
    %c0_i32_1 = arith.constant 0 : i32
    %c0_i32_2 = arith.constant 0 : i32
    return %c0_i32, %c0_i32_0, %c0_i32_1 : i32, i32, i32
  }
  func.func @transform_6(%arg0: i32) -> (i32, i32, i32) {
    %c0_i32 = arith.constant 0 : i32
    %c0_i32_0 = arith.constant 0 : i32
    %c0_i32_1 = arith.constant 0 : i32
    %c0_i32_2 = arith.constant 0 : i32
    return %c0_i32, %c0_i32_0, %c0_i32_1 : i32, i32, i32
  }
  func.func @transform_7(%arg0: i32) -> (i32, i32, i32) {
    %c0_i32 = arith.constant 0 : i32
    %c0_i32_0 = arith.constant 0 : i32
    %c0_i32_1 = arith.constant 0 : i32
    %c0_i32_2 = arith.constant 0 : i32
    return %c0_i32, %c0_i32_0, %c0_i32_1 : i32, i32, i32
  }
  func.func @transform_8(%arg0: i32) -> (i32, i32, i32) {
    %c0_i32 = arith.constant 0 : i32
    %c0_i32_0 = arith.constant 0 : i32
    %c0_i32_1 = arith.constant 0 : i32
    %c0_i32_2 = arith.constant 0 : i32
    return %c0_i32, %c0_i32_0, %c0_i32_1 : i32, i32, i32
  }
  func.func @transform_9(%arg0: i32) -> (i32, i32, i32) {
    %c0_i32 = arith.constant 0 : i32
    %c0_i32_0 = arith.constant 0 : i32
    %c0_i32_1 = arith.constant 0 : i32
    %c0_i32_2 = arith.constant 0 : i32
    return %c0_i32, %c0_i32_0, %c0_i32_1 : i32, i32, i32
  }
  func.func @transform_10(%arg0: i32) -> (i32, i32, i32) {
    %c0_i32 = arith.constant 0 : i32
    %c0_i32_0 = arith.constant 0 : i32
    %c0_i32_1 = arith.constant 0 : i32
    %c0_i32_2 = arith.constant 0 : i32
    return %c0_i32, %c0_i32_0, %c0_i32_1 : i32, i32, i32
  }
  func.func @transform_11(%arg0: i32) -> (i32, i32, i32) {
    %c0_i32 = arith.constant 0 : i32
    %c0_i32_0 = arith.constant 0 : i32
    %c0_i32_1 = arith.constant 0 : i32
    %c0_i32_2 = arith.constant 0 : i32
    return %c0_i32, %c0_i32_0, %c0_i32_1 : i32, i32, i32
  }
  func.func @transform_12(%arg0: i32) -> (i32, i32, i32) {
    %c0_i32 = arith.constant 0 : i32
    %c0_i32_0 = arith.constant 0 : i32
    %c0_i32_1 = arith.constant 0 : i32
    %c0_i32_2 = arith.constant 0 : i32
    return %c0_i32, %c0_i32_0, %c0_i32_1 : i32, i32, i32
  }
  func.func @transform_13(%arg0: i32) -> (i32, i32, i32) {
    %c0_i32 = arith.constant 0 : i32
    %c0_i32_0 = arith.constant 0 : i32
    %c0_i32_1 = arith.constant 0 : i32
    %c0_i32_2 = arith.constant 0 : i32
    return %c0_i32, %c0_i32_0, %c0_i32_1 : i32, i32, i32
  }
  func.func @transform_14(%arg0: i32) -> (i32, i32, i32) {
    %c0_i32 = arith.constant 0 : i32
    %c0_i32_0 = arith.constant 0 : i32
    %c0_i32_1 = arith.constant 0 : i32
    %c0_i32_2 = arith.constant 0 : i32
    return %c0_i32, %c0_i32_0, %c0_i32_1 : i32, i32, i32
  }
  func.func @transform_15(%arg0: i32) -> (i32, i32, i32) {
    %c0_i32 = arith.constant 0 : i32
    %c0_i32_0 = arith.constant 0 : i32
    %c0_i32_1 = arith.constant 0 : i32
    %c0_i32_2 = arith.constant 0 : i32
    return %c0_i32, %c0_i32_0, %c0_i32_1 : i32, i32, i32
  }
  func.func @transform_16(%arg0: i32) -> (i32, i32, i32) {
    %c0_i32 = arith.constant 0 : i32
    %c0_i32_0 = arith.constant 0 : i32
    %c0_i32_1 = arith.constant 0 : i32
    %c0_i32_2 = arith.constant 0 : i32
    return %c0_i32, %c0_i32_0, %c0_i32_1 : i32, i32, i32
  }
  func.func @transform_17(%arg0: i32) -> (i32, i32, i32) {
    %c0_i32 = arith.constant 0 : i32
    %c0_i32_0 = arith.constant 0 : i32
    %c0_i32_1 = arith.constant 0 : i32
    %c0_i32_2 = arith.constant 0 : i32
    return %c0_i32, %c0_i32_0, %c0_i32_1 : i32, i32, i32
  }
  func.func @transform_18(%arg0: i32) -> (i32, i32, i32) {
    %c0_i32 = arith.constant 0 : i32
    %c0_i32_0 = arith.constant 0 : i32
    %c0_i32_1 = arith.constant 0 : i32
    %c0_i32_2 = arith.constant 0 : i32
    return %c0_i32, %c0_i32_0, %c0_i32_1 : i32, i32, i32
  }
  func.func @transform_19(%arg0: i32) -> (i32, i32, i32) {
    %c0_i32 = arith.constant 0 : i32
    %c0_i32_0 = arith.constant 0 : i32
    %c0_i32_1 = arith.constant 0 : i32
    %c0_i32_2 = arith.constant 0 : i32
    return %c0_i32, %c0_i32_0, %c0_i32_1 : i32, i32, i32
  }
  func.func @transform_20(%arg0: i32) -> (i32, i32, i32) {
    %c0_i32 = arith.constant 0 : i32
    %c0_i32_0 = arith.constant 0 : i32
    %c0_i32_1 = arith.constant 0 : i32
    %c0_i32_2 = arith.constant 0 : i32
    return %c0_i32, %c0_i32_0, %c0_i32_1 : i32, i32, i32
  }
  func.func @transform_21(%arg0: i32) -> (i32, i32, i32) {
    %c0_i32 = arith.constant 0 : i32
    %c0_i32_0 = arith.constant 0 : i32
    %c0_i32_1 = arith.constant 0 : i32
    %c0_i32_2 = arith.constant 0 : i32
    return %c0_i32, %c0_i32_0, %c0_i32_1 : i32, i32, i32
  }
  func.func @transform_22(%arg0: i32) -> (i32, i32, i32) {
    %c0_i32 = arith.constant 0 : i32
    %c0_i32_0 = arith.constant 0 : i32
    %c0_i32_1 = arith.constant 0 : i32
    %c0_i32_2 = arith.constant 0 : i32
    return %c0_i32, %c0_i32_0, %c0_i32_1 : i32, i32, i32
  }
  func.func @transform_23(%arg0: i32) -> (i32, i32, i32) {
    %c0_i32 = arith.constant 0 : i32
    %c0_i32_0 = arith.constant 0 : i32
    %c0_i32_1 = arith.constant 0 : i32
    %c0_i32_2 = arith.constant 0 : i32
    return %c0_i32, %c0_i32_0, %c0_i32_1 : i32, i32, i32
  }
  func.func @transform_24(%arg0: i32) -> (i32, i32, i32) {
    %c0_i32 = arith.constant 0 : i32
    %c0_i32_0 = arith.constant 0 : i32
    %c0_i32_1 = arith.constant 0 : i32
    %c0_i32_2 = arith.constant 0 : i32
    return %c0_i32, %c0_i32_0, %c0_i32_1 : i32, i32, i32
  }
  func.func @transform_25(%arg0: i32) -> (i32, i32) {
    %c0_i32 = arith.constant 0 : i32
    %c0_i32_0 = arith.constant 0 : i32
    %c0_i32_1 = arith.constant 0 : i32
    return %c0_i32, %c0_i32_0 : i32, i32
  }
  func.func @transform_26(%arg0: i32) -> (i32, i32) {
    %c0_i32 = arith.constant 0 : i32
    %c0_i32_0 = arith.constant 0 : i32
    %c0_i32_1 = arith.constant 0 : i32
    return %c0_i32, %c0_i32_0 : i32, i32
  }
  func.func @transform_27(%arg0: i32) -> (i32, i32, i32) {
    %c0_i32 = arith.constant 0 : i32
    %c0_i32_0 = arith.constant 0 : i32
    %c0_i32_1 = arith.constant 0 : i32
    %c0_i32_2 = arith.constant 0 : i32
    return %c0_i32, %c0_i32_0, %c0_i32_1 : i32, i32, i32
  }
}

</mosaic_0001>

<llo_original>
// kernel: autoregressive_decoder_forward.1
$region0: #{autoregressive_decoder_forward.1}
  #allocation0 [shape = 'u32[]', space=smem, size = 0x4, offset = 0x4, fixed_abs, tag = 'smem constant byte address 0x4 - core index']
  #allocation1 [shape = 'u32[144,128]{1,0:T(1,128)}', space=vmem, size = 0x12000, scoped, tag = 'internal scratch']
  %s0 = inlined_call_operand.hbm [shape: f32[8,2,64], index: 0, kind: input, shape index: {}]
  %s1 = inlined_call_operand.hbm [shape: f32[8,2,32], index: 1, kind: input, shape index: {}]
  %s2 = inlined_call_operand.vmem [shape: f32[8,8], index: 2, kind: input, shape index: {}]
  %s3 = inlined_call_operand.vmem [shape: bf16[64,32], index: 3, kind: input, shape index: {}]
  %s4 = inlined_call_operand.hbm [shape: f32[1,32], index: 4, kind: input, shape index: {}]
  %s5 = inlined_call_operand.vmem [shape: bf16[2,32,96], index: 5, kind: input, shape index: {}]
  %s6 = inlined_call_operand.hbm [shape: f32[2,1,96], index: 6, kind: input, shape index: {}]
  %s7 = inlined_call_operand.vmem [shape: bf16[2,32,32], index: 7, kind: input, shape index: {}]
  %s8 = inlined_call_operand.vmem [shape: f32[2,1,32], index: 8, kind: input, shape index: {}]
  %s9 = inlined_call_operand.hbm [shape: bf16[2,32,32], index: 9, kind: input, shape index: {}]
  %s10 = inlined_call_operand.hbm [shape: f32[2,1,32], index: 10, kind: input, shape index: {}]
  %s11 = inlined_call_operand.hbm [shape: bf16[2,32,64], index: 11, kind: input, shape index: {}]
  %s12 = inlined_call_operand.hbm [shape: f32[2,1,64], index: 12, kind: input, shape index: {}]
  %s13 = inlined_call_operand.hbm [shape: bf16[2,32,32], index: 13, kind: input, shape index: {}]
  %s14 = inlined_call_operand.hbm [shape: f32[2,1,32], index: 14, kind: input, shape index: {}]
  %s15 = inlined_call_operand.hbm [shape: f32[2,1,32], index: 15, kind: input, shape index: {}]
  %s16 = inlined_call_operand.hbm [shape: f32[2,1,32], index: 16, kind: input, shape index: {}]
  %s17 = inlined_call_operand.hbm [shape: f32[2,1,32], index: 17, kind: input, shape index: {}]
  %s18 = inlined_call_operand.hbm [shape: f32[2,1,32], index: 18, kind: input, shape index: {}]
  %s19 = inlined_call_operand.hbm [shape: f32[2,1,32], index: 19, kind: input, shape index: {}]
  %s20 = inlined_call_operand.hbm [shape: f32[2,1,32], index: 20, kind: input, shape index: {}]
  %s21 = inlined_call_operand.hbm [shape: bf16[2,32,32], index: 21, kind: input, shape index: {}]
  %s22 = inlined_call_operand.hbm [shape: f32[2,1,32], index: 22, kind: input, shape index: {}]
  %s23 = inlined_call_operand.hbm [shape: bf16[2,32,32], index: 23, kind: input, shape index: {}]
  %s24 = inlined_call_operand.hbm [shape: f32[2,1,32], index: 24, kind: input, shape index: {}]
  %s25 = inlined_call_operand.vmem [shape: bf16[32,128], index: 25, kind: input, shape index: {}]
  %s26 = inlined_call_operand.hbm [shape: f32[1,128], index: 26, kind: input, shape index: {}]
  %s27 = inlined_call_operand.hbm [shape: f32[8,2,128], index: 27, kind: output, shape index: {}]
  %s28 = sld [smem:[#allocation0]]
  $region202: #{autoregressive_decoder_forward.1} parent=0
    _
  %s30 = ssub.s32 1, %s28
  %s31 = scalar_select 0, %s30, %s28
  $region1: #{autoregressive_decoder_forward.1} parent=0
    #allocation2 [shape = 'u8[8192]{0}', space=vmem, size = 0x2000, scoped, tag = 'input window, operand 0, single buffered']
    #allocation3 [shape = 's32[1]{0}', space=sflag, size = 0x4, scoped, tag = 'scoped memory for autoregressive_decoder_forward.1']
    #allocation4 [shape = 's32[1]{0}', space=sflag, size = 0x4, scoped, tag = 'scoped memory for autoregressive_decoder_forward.1']
    #allocation5 [shape = 'u8[8192]{0}', space=vmem, size = 0x2000, scoped, tag = 'input window, operand 1, single buffered']
    #allocation6 [shape = 's32[1]{0}', space=sflag, size = 0x4, scoped, tag = 'scoped memory for autoregressive_decoder_forward.1']
    #allocation7 [shape = 'u8[512]{0}', space=vmem, size = 0x400, scoped, tag = 'input window, operand 4, single buffered']
    #allocation8 [shape = 'u8[1024]{0}', space=vmem, size = 0x400, scoped, tag = 'input window, operand 6, single buffered']
    #allocation9 [shape = 's32[1]{0}', space=sflag, size = 0x4, scoped, tag = 'scoped memory for autoregressive_decoder_forward.1']
    #allocation10 [shape = 'u8[16384]{0}', space=vmem, size = 0x4000, scoped, tag = 'input window, operand 9, single buffered']
    #allocation11 [shape = 'u8[1024]{0}', space=vmem, size = 0x400, scoped, tag = 'input window, operand 10, single buffered']
    #allocation12 [shape = 's32[1]{0}', space=sflag, size = 0x4, scoped, tag = 'scoped memory for autoregressive_decoder_forward.1']
    #allocation13 [shape = 'u8[16384]{0}', space=vmem, size = 0x4000, scoped, tag = 'input window, operand 11, single buffered']
    #allocation14 [shape = 'u8[1024]{0}', space=vmem, size = 0x400, scoped, tag = 'input window, operand 12, single buffered']
    #allocation15 [shape = 's32[1]{0}', space=sflag, size = 0x4, scoped, tag = 'scoped memory for autoregressive_decoder_forward.1']
    #allocation16 [shape = 'u8[16384]{0}', space=vmem, size = 0x4000, scoped, tag = 'input window, operand 13, single buffered']
    #allocation17 [shape = 'u8[1024]{0}', space=vmem, size = 0x400, scoped, tag = 'input window, operand 14, single buffered']
    #allocation18 [shape = 's32[1]{0}', space=sflag, size = 0x4, scoped, tag = 'scoped memory for autoregressive_decoder_forward.1']
    #allocation19 [shape = 'u8[1024]{0}', space=vmem, size = 0x400, scoped, tag = 'input window, operand 15, single buffered']
    #allocation20 [shape = 'u8[1024]{0}', space=vmem, size = 0x400, scoped, tag = 'input window, operand 16, single buffered']
    #allocation21 [shape = 's32[1]{0}', space=sflag, size = 0x4, scoped, tag = 'scoped memory for autoregressive_decoder_forward.1']
    #allocation22 [shape = 'u8[1024]{0}', space=vmem, size = 0x400, scoped, tag = 'input window, operand 17, single buffered']
    #allocation23 [shape = 'u8[1024]{0}', space=vmem, size = 0x400, scoped, tag = 'input window, operand 18, single buffered']
    #allocation24 [shape = 's32[1]{0}', space=sflag, size = 0x4, scoped, tag = 'scoped memory for autoregressive_decoder_forward.1']
    #allocation25 [shape = 'u8[1024]{0}', space=vmem, size = 0x400, scoped, tag = 'input window, operand 19, single buffered']
    #allocation26 [shape = 'u8[1024]{0}', space=vmem, size = 0x400, scoped, tag = 'input window, operand 20, single buffered']
    #allocation27 [shape = 's32[1]{0}', space=sflag, size = 0x4, scoped, tag = 'scoped memory for autoregressive_decoder_forward.1']
    #allocation28 [shape = 'u8[16384]{0}', space=vmem, size = 0x4000, scoped, tag = 'input window, operand 21, single buffered']
    #allocation29 [shape = 'u8[1024]{0}', space=vmem, size = 0x400, scoped, tag = 'input window, operand 22, single buffered']
    #allocation30 [shape = 's32[1]{0}', space=sflag, size = 0x4, scoped, tag = 'scoped memory for autoregressive_decoder_forward.1']
    #allocation31 [shape = 'u8[16384]{0}', space=vmem, size = 0x4000, scoped, tag = 'input window, operand 23, single buffered']
    #allocation32 [shape = 'u8[1024]{0}', space=vmem, size = 0x400, scoped, tag = 'input window, operand 24, single buffered']
    #allocation33 [shape = 's32[1]{0}', space=sflag, size = 0x4, scoped, tag = 'scoped memory for autoregressive_decoder_forward.1']
    #allocation34 [shape = 'u8[512]{0}', space=vmem, size = 0x400, scoped, tag = 'input window, operand 26, single buffered']
    #allocation35 [shape = 'u8[8192]{0}', space=vmem, size = 0x2000, scoped, tag = 'output window, operand 0, single buffered']
    %32 = vsyncpa [#allocation3], 0
    %33 = vsyncpa [#allocation6], 0
    %34 = vsyncpa [#allocation9], 0
    %35 = vsyncpa [#allocation12], 0
    %36 = vsyncpa [#allocation15], 0
    %37 = vsyncpa [#allocation18], 0
    %38 = vsyncpa [#allocation21], 0
    %39 = vsyncpa [#allocation24], 0
    %40 = vsyncpa [#allocation27], 0
    %41 = vsyncpa [#allocation30], 0
    %42 = vsyncpa [#allocation33], 0
    %43 = vsyncpa [#allocation4], 0
    // Predicated region
    $region2: #{autoregressive_decoder_forward.1} parent=1 // pred_check
      _
    $region3: #{autoregressive_decoder_forward.1} parent=1 // pred_check_branch
      %45 = sbr.rel (0) target = $region5
    $region4: #{autoregressive_decoder_forward.1} parent=1 // pred_region
      %s47 = ssub.s32 256, 256
      %48 = vsyncadd [#allocation3], %s47
      %s49 = sshll.u32 [#allocation2], 4
      %s50 = int_to_ptr.vmem [resolvable:$true] %s49
      %55 = dma.hbm_to_vmem [thread:$0]  %s0, 256, %s50, [#allocation3], 32, 32, 2
    $region5: #{autoregressive_decoder_forward.1} parent=1 // pred_fallthru
      _
    // Predicated region
    $region6: #{autoregressive_decoder_forward.1} parent=1 // pred_check
      _
    $region7: #{autoregressive_decoder_forward.1} parent=1 // pred_check_branch
      %57 = sbr.rel (0) target = $region9
    $region8: #{autoregressive_decoder_forward.1} parent=1 // pred_region
      %s59 = ssub.s32 256, 256
      %60 = vsyncadd [#allocation6], %s59
      %s61 = sshll.u32 [#allocation5], 4
      %s62 = int_to_ptr.vmem [resolvable:$true] %s61
      %67 = dma.hbm_to_vmem [thread:$0]  %s1, 256, %s62, [#allocation6], 32, 32, 2
    $region9: #{autoregressive_decoder_forward.1} parent=1 // pred_fallthru
      _
    // Predicated region
    $region10: #{autoregressive_decoder_forward.1} parent=1 // pred_check
      _
    $region11: #{autoregressive_decoder_forward.1} parent=1 // pred_check_branch
      %69 = sbr.rel (0) target = $region13
    $region12: #{autoregressive_decoder_forward.1} parent=1 // pred_region
      _
    $region13: #{autoregressive_decoder_forward.1} parent=1 // pred_fallthru
      _
    // Predicated region
    $region14: #{autoregressive_decoder_forward.1} parent=1 // pred_check
      _
    $region15: #{autoregressive_decoder_forward.1} parent=1 // pred_check_branch
      %71 = sbr.rel (0) target = $region17
    $region16: #{autoregressive_decoder_forward.1} parent=1 // pred_region
      _
    $region17: #{autoregressive_decoder_forward.1} parent=1 // pred_fallthru
      _
    // Predicated region
    $region18: #{autoregressive_decoder_forward.1} parent=1 // pred_check
      _
    $region19: #{autoregressive_decoder_forward.1} parent=1 // pred_check_branch
      %73 = sbr.rel (0) target = $region21
    $region20: #{autoregressive_decoder_forward.1} parent=1 // pred_region
      %s75 = ssub.s32 16, 16
      %76 = vsyncadd [#allocation6], %s75
      %s78 = sshll.u32 [#allocation7], 4
      %s79 = int_to_ptr.vmem [resolvable:$true] %s78
      %81 = dma.hbm_to_vmem [thread:$0]  %s4, 16, %s79, [#allocation6]
    $region21: #{autoregressive_decoder_forward.1} parent=1 // pred_fallthru
      _
    // Predicated region
    $region22: #{autoregressive_decoder_forward.1} parent=1 // pred_check
      _
    $region23: #{autoregressive_decoder_forward.1} parent=1 // pred_check_branch
      %83 = sbr.rel (0) target = $region25
    $region24: #{autoregressive_decoder_forward.1} parent=1 // pred_region
      _
    $region25: #{autoregressive_decoder_forward.1} parent=1 // pred_fallthru
      _
    // Predicated region
    $region26: #{autoregressive_decoder_forward.1} parent=1 // pred_check
      _
    $region27: #{autoregressive_decoder_forward.1} parent=1 // pred_check_branch
      %85 = sbr.rel (0) target = $region29
    $region28: #{autoregressive_decoder_forward.1} parent=1 // pred_region
      %s87 = ssub.s32 32, 32
      %88 = vsyncadd [#allocation9], %s87
      %s89 = sshll.u32 [#allocation8], 4
      %s90 = int_to_ptr.vmem [resolvable:$true] %s89
      %95 = dma.hbm_to_vmem [thread:$0]  %s6, 32, %s90, [#allocation9], 16, 16, 1
    $region29: #{autoregressive_decoder_forward.1} parent=1 // pred_fallthru
      _
    // Predicated region
    $region30: #{autoregressive_decoder_forward.1} parent=1 // pred_check
      _
    $region31: #{autoregressive_decoder_forward.1} parent=1 // pred_check_branch
      %97 = sbr.rel (0) target = $region33
    $region32: #{autoregressive_decoder_forward.1} parent=1 // pred_region
      _
    $region33: #{autoregressive_decoder_forward.1} parent=1 // pred_fallthru
      _
    // Predicated region
    $region34: #{autoregressive_decoder_forward.1} parent=1 // pred_check
      _
    $region35: #{autoregressive_decoder_forward.1} parent=1 // pred_check_branch
      %99 = sbr.rel (0) target = $region37
    $region36: #{autoregressive_decoder_forward.1} parent=1 // pred_region
      _
    $region37: #{autoregressive_decoder_forward.1} parent=1 // pred_fallthru
      _
    // Predicated region
    $region38: #{autoregressive_decoder_forward.1} parent=1 // pred_check
      _
    $region39: #{autoregressive_decoder_forward.1} parent=1 // pred_check_branch
      %101 = sbr.rel (0) target = $region41
    $region40: #{autoregressive_decoder_forward.1} parent=1 // pred_region
      %s103 = ssub.s32 512, 512
      %104 = vsyncadd [#allocation9], %s103
      %s105 = sshll.u32 [#allocation10], 4
      %s106 = int_to_ptr.vmem [resolvable:$true] %s105
      %111 = dma.hbm_to_vmem [thread:$0]  %s9, 512, %s106, [#allocation9], 64, 64, 4
    $region41: #{autoregressive_decoder_forward.1} parent=1 // pred_fallthru
      _
    // Predicated region
    $region42: #{autoregressive_decoder_forward.1} parent=1 // pred_check
      _
    $region43: #{autoregressive_decoder_forward.1} parent=1 // pred_check_branch
      %113 = sbr.rel (0) target = $region45
    $region44: #{autoregressive_decoder_forward.1} parent=1 // pred_region
      %s115 = ssub.s32 32, 32
      %116 = vsyncadd [#allocation12], %s115
      %s117 = sshll.u32 [#allocation11], 4
      %s118 = int_to_ptr.vmem [resolvable:$true] %s117
      %123 = dma.hbm_to_vmem [thread:$0]  %s10, 32, %s118, [#allocation12], 16, 16, 1
    $region45: #{autoregressive_decoder_forward.1} parent=1 // pred_fallthru
      _
    // Predicated region
    $region46: #{autoregressive_decoder_forward.1} parent=1 // pred_check
      _
    $region47: #{autoregressive_decoder_forward.1} parent=1 // pred_check_branch
      %125 = sbr.rel (0) target = $region49
    $region48: #{autoregressive_decoder_forward.1} parent=1 // pred_region
      %s127 = ssub.s32 512, 512
      %128 = vsyncadd [#allocation12], %s127
      %s129 = sshll.u32 [#allocation13], 4
      %s130 = int_to_ptr.vmem [resolvable:$true] %s129
      %135 = dma.hbm_to_vmem [thread:$0]  %s11, 512, %s130, [#allocation12], 64, 64, 4
    $region49: #{autoregressive_decoder_forward.1} parent=1 // pred_fallthru
      _
    // Predicated region
    $region50: #{autoregressive_decoder_forward.1} parent=1 // pred_check
      _
    $region51: #{autoregressive_decoder_forward.1} parent=1 // pred_check_branch
      %137 = sbr.rel (0) target = $region53
    $region52: #{autoregressive_decoder_forward.1} parent=1 // pred_region
      %s139 = ssub.s32 32, 32
      %140 = vsyncadd [#allocation15], %s139
      %s141 = sshll.u32 [#allocation14], 4
      %s142 = int_to_ptr.vmem [resolvable:$true] %s141
      %147 = dma.hbm_to_vmem [thread:$0]  %s12, 32, %s142, [#allocation15], 16, 16, 1
    $region53: #{autoregressive_decoder_forward.1} parent=1 // pred_fallthru
      _
    // Predicated region
    $region54: #{autoregressive_decoder_forward.1} parent=1 // pred_check
      _
    $region55: #{autoregressive_decoder_forward.1} parent=1 // pred_check_branch
      %149 = sbr.rel (0) target = $region57
    $region56: #{autoregressive_decoder_forward.1} parent=1 // pred_region
      %s151 = ssub.s32 512, 512
      %152 = vsyncadd [#allocation15], %s151
      %s153 = sshll.u32 [#allocation16], 4
      %s154 = int_to_ptr.vmem [resolvable:$true] %s153
      %159 = dma.hbm_to_vmem [thread:$0]  %s13, 512, %s154, [#allocation15], 64, 64, 4
    $region57: #{autoregressive_decoder_forward.1} parent=1 // pred_fallthru
      _
    // Predicated region
    $region58: #{autoregressive_decoder_forward.1} parent=1 // pred_check
      _
    $region59: #{autoregressive_decoder_forward.1} parent=1 // pred_check_branch
      %161 = sbr.rel (0) target = $region61
    $region60: #{autoregressive_decoder_forward.1} parent=1 // pred_region
      %s163 = ssub.s32 32, 32
      %164 = vsyncadd [#allocation18], %s163
      %s165 = sshll.u32 [#allocation17], 4
      %s166 = int_to_ptr.vmem [resolvable:$true] %s165
      %171 = dma.hbm_to_vmem [thread:$0]  %s14, 32, %s166, [#allocation18], 16, 16, 1
    $region61: #{autoregressive_decoder_forward.1} parent=1 // pred_fallthru
      _
    // Predicated region
    $region62: #{autoregressive_decoder_forward.1} parent=1 // pred_check
      _
    $region63: #{autoregressive_decoder_forward.1} parent=1 // pred_check_branch
      %173 = sbr.rel (0) target = $region65
    $region64: #{autoregressive_decoder_forward.1} parent=1 // pred_region
      %s175 = ssub.s32 32, 32
      %176 = vsyncadd [#allocation18], %s175
      %s177 = sshll.u32 [#allocation19], 4
      %s178 = int_to_ptr.vmem [resolvable:$true] %s177
      %183 = dma.hbm_to_vmem [thread:$0]  %s15, 32, %s178, [#allocation18], 16, 16, 1
    $region65: #{autoregressive_decoder_forward.1} parent=1 // pred_fallthru
      _
    // Predicated region
    $region66: #{autoregressive_decoder_forward.1} parent=1 // pred_check
      _
    $region67: #{autoregressive_decoder_forward.1} parent=1 // pred_check_branch
      %185 = sbr.rel (0) target = $region69
    $region68: #{autoregressive_decoder_forward.1} parent=1 // pred_region
      %s187 = ssub.s32 32, 32
      %188 = vsyncadd [#allocation21], %s187
      %s189 = sshll.u32 [#allocation20], 4
      %s190 = int_to_ptr.vmem [resolvable:$true] %s189
      %195 = dma.hbm_to_vmem [thread:$0]  %s16, 32, %s190, [#allocation21], 16, 16, 1
    $region69: #{autoregressive_decoder_forward.1} parent=1 // pred_fallthru
      _
    // Predicated region
    $region70: #{autoregressive_decoder_forward.1} parent=1 // pred_check
      _
    $region71: #{autoregressive_decoder_forward.1} parent=1 // pred_check_branch
      %197 = sbr.rel (0) target = $region73
    $region72: #{autoregressive_decoder_forward.1} parent=1 // pred_region
      %s199 = ssub.s32 32, 32
      %200 = vsyncadd [#allocation21], %s199
      %s201 = sshll.u32 [#allocation22], 4
      %s202 = int_to_ptr.vmem [resolvable:$true] %s201
      %207 = dma.hbm_to_vmem [thread:$0]  %s17, 32, %s202, [#allocation21], 16, 16, 1
    $region73: #{autoregressive_decoder_forward.1} parent=1 // pred_fallthru
      _
    // Predicated region
    $region74: #{autoregressive_decoder_forward.1} parent=1 // pred_check
      _
    $region75: #{autoregressive_decoder_forward.1} parent=1 // pred_check_branch
      %209 = sbr.rel (0) target = $region77
    $region76: #{autoregressive_decoder_forward.1} parent=1 // pred_region
      %s211 = ssub.s32 32, 32
      %212 = vsyncadd [#allocation24], %s211
      %s213 = sshll.u32 [#allocation23], 4
      %s214 = int_to_ptr.vmem [resolvable:$true] %s213
      %219 = dma.hbm_to_vmem [thread:$0]  %s18, 32, %s214, [#allocation24], 16, 16, 1
    $region77: #{autoregressive_decoder_forward.1} parent=1 // pred_fallthru
      _
    // Predicated region
    $region78: #{autoregressive_decoder_forward.1} parent=1 // pred_check
      _
    $region79: #{autoregressive_decoder_forward.1} parent=1 // pred_check_branch
      %221 = sbr.rel (0) target = $region81
    $region80: #{autoregressive_decoder_forward.1} parent=1 // pred_region
      %s223 = ssub.s32 32, 32
      %224 = vsyncadd [#allocation24], %s223
      %s225 = sshll.u32 [#allocation25], 4
      %s226 = int_to_ptr.vmem [resolvable:$true] %s225
      %231 = dma.hbm_to_vmem [thread:$0]  %s19, 32, %s226, [#allocation24], 16, 16, 1
    $region81: #{autoregressive_decoder_forward.1} parent=1 // pred_fallthru
      _
    // Predicated region
    $region82: #{autoregressive_decoder_forward.1} parent=1 // pred_check
      _
    $region83: #{autoregressive_decoder_forward.1} parent=1 // pred_check_branch
      %233 = sbr.rel (0) target = $region85
    $region84: #{autoregressive_decoder_forward.1} parent=1 // pred_region
      %s235 = ssub.s32 32, 32
      %236 = vsyncadd [#allocation27], %s235
      %s237 = sshll.u32 [#allocation26], 4
      %s238 = int_to_ptr.vmem [resolvable:$true] %s237
      %243 = dma.hbm_to_vmem [thread:$0]  %s20, 32, %s238, [#allocation27], 16, 16, 1
    $region85: #{autoregressive_decoder_forward.1} parent=1 // pred_fallthru
      _
    // Predicated region
    $region86: #{autoregressive_decoder_forward.1} parent=1 // pred_check
      _
    $region87: #{autoregressive_decoder_forward.1} parent=1 // pred_check_branch
      %245 = sbr.rel (0) target = $region89
    $region88: #{autoregressive_decoder_forward.1} parent=1 // pred_region
      %s247 = ssub.s32 512, 512
      %248 = vsyncadd [#allocation27], %s247
      %s249 = sshll.u32 [#allocation28], 4
      %s250 = int_to_ptr.vmem [resolvable:$true] %s249
      %255 = dma.hbm_to_vmem [thread:$0]  %s21, 512, %s250, [#allocation27], 64, 64, 4
    $region89: #{autoregressive_decoder_forward.1} parent=1 // pred_fallthru
      _
    // Predicated region
    $region90: #{autoregressive_decoder_forward.1} parent=1 // pred_check
      _
    $region91: #{autoregressive_decoder_forward.1} parent=1 // pred_check_branch
      %257 = sbr.rel (0) target = $region93
    $region92: #{autoregressive_decoder_forward.1} parent=1 // pred_region
      %s259 = ssub.s32 32, 32
      %260 = vsyncadd [#allocation30], %s259
      %s261 = sshll.u32 [#allocation29], 4
      %s262 = int_to_ptr.vmem [resolvable:$true] %s261
      %267 = dma.hbm_to_vmem [thread:$0]  %s22, 32, %s262, [#allocation30], 16, 16, 1
    $region93: #{autoregressive_decoder_forward.1} parent=1 // pred_fallthru
      _
    // Predicated region
    $region94: #{autoregressive_decoder_forward.1} parent=1 // pred_check
      _
    $region95: #{autoregressive_decoder_forward.1} parent=1 // pred_check_branch
      %269 = sbr.rel (0) target = $region97
    $region96: #{autoregressive_decoder_forward.1} parent=1 // pred_region
      %s271 = ssub.s32 512, 512
      %272 = vsyncadd [#allocation30], %s271
      %s273 = sshll.u32 [#allocation31], 4
      %s274 = int_to_ptr.vmem [resolvable:$true] %s273
      %279 = dma.hbm_to_vmem [thread:$0]  %s23, 512, %s274, [#allocation30], 64, 64, 4
    $region97: #{autoregressive_decoder_forward.1} parent=1 // pred_fallthru
      _
    // Predicated region
    $region98: #{autoregressive_decoder_forward.1} parent=1 // pred_check
      _
    $region99: #{autoregressive_decoder_forward.1} parent=1 // pred_check_branch
      %281 = sbr.rel (0) target = $region101
    $region100: #{autoregressive_decoder_forward.1} parent=1 // pred_region
      %s283 = ssub.s32 32, 32
      %284 = vsyncadd [#allocation33], %s283
      %s285 = sshll.u32 [#allocation32], 4
      %s286 = int_to_ptr.vmem [resolvable:$true] %s285
      %291 = dma.hbm_to_vmem [thread:$0]  %s24, 32, %s286, [#allocation33], 16, 16, 1
    $region101: #{autoregressive_decoder_forward.1} parent=1 // pred_fallthru
      _
    // Predicated region
    $region102: #{autoregressive_decoder_forward.1} parent=1 // pred_check
      _
    $region103: #{autoregressive_decoder_forward.1} parent=1 // pred_check_branch
      %293 = sbr.rel (0) target = $region105
    $region104: #{autoregressive_decoder_forward.1} parent=1 // pred_region
      _
    $region105: #{autoregressive_decoder_forward.1} parent=1 // pred_fallthru
      _
    // Predicated region
    $region106: #{autoregressive_decoder_forward.1} parent=1 // pred_check
      _
    $region107: #{autoregressive_decoder_forward.1} parent=1 // pred_check_branch
      %295 = sbr.rel (0) target = $region109
    $region108: #{autoregressive_decoder_forward.1} parent=1 // pred_region
      %s297 = ssub.s32 16, 16
      %298 = vsyncadd [#allocation33], %s297
      %s300 = sshll.u32 [#allocation34], 4
      %s301 = int_to_ptr.vmem [resolvable:$true] %s300
      %303 = dma.hbm_to_vmem [thread:$0]  %s26, 16, %s301, [#allocation33]
    $region109: #{autoregressive_decoder_forward.1} parent=1 // pred_fallthru
      _
    // Predicated region
    $region110: #{autoregressive_decoder_forward.1} parent=1 // pred_check
      _
    $region111: #{autoregressive_decoder_forward.1} parent=1 // pred_check_branch
      %305 = sbr.rel (0) target = $region113
    $region112: #{autoregressive_decoder_forward.1} parent=1 // pred_region
      %306 = dma.done [#allocation3], 256
    $region113: #{autoregressive_decoder_forward.1} parent=1 // pred_fallthru
      _
    // Predicated region
    $region114: #{autoregressive_decoder_forward.1} parent=1 // pred_check
      _
    $region115: #{autoregressive_decoder_forward.1} parent=1 // pred_check_branch
      %308 = sbr.rel (0) target = $region117
    $region116: #{autoregressive_decoder_forward.1} parent=1 // pred_region
      %309 = dma.done [#allocation6], 256
    $region117: #{autoregressive_decoder_forward.1} parent=1 // pred_fallthru
      _
    // Predicated region
    $region118: #{autoregressive_decoder_forward.1} parent=1 // pred_check
      _
    $region119: #{autoregressive_decoder_forward.1} parent=1 // pred_check_branch
      %311 = sbr.rel (0) target = $region121
    $region120: #{autoregressive_decoder_forward.1} parent=1 // pred_region
      %312 = dma.done [#allocation6], 16
    $region121: #{autoregressive_decoder_forward.1} parent=1 // pred_fallthru
      _
    // Predicated region
    $region122: #{autoregressive_decoder_forward.1} parent=1 // pred_check
      _
    $region123: #{autoregressive_decoder_forward.1} parent=1 // pred_check_branch
      %314 = sbr.rel (0) target = $region125
    $region124: #{autoregressive_decoder_forward.1} parent=1 // pred_region
      %315 = dma.done [#allocation9], 32
    $region125: #{autoregressive_decoder_forward.1} parent=1 // pred_fallthru
      _
    // Predicated region
    $region126: #{autoregressive_decoder_forward.1} parent=1 // pred_check
      _
    $region127: #{autoregressive_decoder_forward.1} parent=1 // pred_check_branch
      %317 = sbr.rel (0) target = $region129
    $region128: #{autoregressive_decoder_forward.1} parent=1 // pred_region
      %318 = dma.done [#allocation9], 512
    $region129: #{autoregressive_decoder_forward.1} parent=1 // pred_fallthru
      _
    // Predicated region
    $region130: #{autoregressive_decoder_forward.1} parent=1 // pred_check
      _
    $region131: #{autoregressive_decoder_forward.1} parent=1 // pred_check_branch
      %320 = sbr.rel (0) target = $region133
    $region132: #{autoregressive_decoder_forward.1} parent=1 // pred_region
      %321 = dma.done [#allocation12], 32
    $region133: #{autoregressive_decoder_forward.1} parent=1 // pred_fallthru
      _
    // Predicated region
    $region134: #{autoregressive_decoder_forward.1} parent=1 // pred_check
      _
    $region135: #{autoregressive_decoder_forward.1} parent=1 // pred_check_branch
      %323 = sbr.rel (0) target = $region137
    $region136: #{autoregressive_decoder_forward.1} parent=1 // pred_region
      %324 = dma.done [#allocation12], 512
    $region137: #{autoregressive_decoder_forward.1} parent=1 // pred_fallthru
      _
    // Predicated region
    $region138: #{autoregressive_decoder_forward.1} parent=1 // pred_check
      _
    $region139: #{autoregressive_decoder_forward.1} parent=1 // pred_check_branch
      %326 = sbr.rel (0) target = $region141
    $region140: #{autoregressive_decoder_forward.1} parent=1 // pred_region
      %327 = dma.done [#allocation15], 32
    $region141: #{autoregressive_decoder_forward.1} parent=1 // pred_fallthru
      _
    // Predicated region
    $region142: #{autoregressive_decoder_forward.1} parent=1 // pred_check
      _
    $region143: #{autoregressive_decoder_forward.1} parent=1 // pred_check_branch
      %329 = sbr.rel (0) target = $region145
    $region144: #{autoregressive_decoder_forward.1} parent=1 // pred_region
      %330 = dma.done [#allocation15], 512
    $region145: #{autoregressive_decoder_forward.1} parent=1 // pred_fallthru
      _
    // Predicated region
    $region146: #{autoregressive_decoder_forward.1} parent=1 // pred_check
      _
    $region147: #{autoregressive_decoder_forward.1} parent=1 // pred_check_branch
      %332 = sbr.rel (0) target = $region149
    $region148: #{autoregressive_decoder_forward.1} parent=1 // pred_region
      %333 = dma.done [#allocation18], 32
    $region149: #{autoregressive_decoder_forward.1} parent=1 // pred_fallthru
      _
    // Predicated region
    $region150: #{autoregressive_decoder_forward.1} parent=1 // pred_check
      _
    $region151: #{autoregressive_decoder_forward.1} parent=1 // pred_check_branch
      %335 = sbr.rel (0) target = $region153
    $region152: #{autoregressive_decoder_forward.1} parent=1 // pred_region
      %336 = dma.done [#allocation18], 32
    $region153: #{autoregressive_decoder_forward.1} parent=1 // pred_fallthru
      _
    // Predicated region
    $region154: #{autoregressive_decoder_forward.1} parent=1 // pred_check
      _
    $region155: #{autoregressive_decoder_forward.1} parent=1 // pred_check_branch
      %338 = sbr.rel (0) target = $region157
    $region156: #{autoregressive_decoder_forward.1} parent=1 // pred_region
      %339 = dma.done [#allocation21], 32
    $region157: #{autoregressive_decoder_forward.1} parent=1 // pred_fallthru
      _
    // Predicated region
    $region158: #{autoregressive_decoder_forward.1} parent=1 // pred_check
      _
    $region159: #{autoregressive_decoder_forward.1} parent=1 // pred_check_branch
      %341 = sbr.rel (0) target = $region161
    $region160: #{autoregressive_decoder_forward.1} parent=1 // pred_region
      %342 = dma.done [#allocation21], 32
    $region161: #{autoregressive_decoder_forward.1} parent=1 // pred_fallthru
      _
    // Predicated region
    $region162: #{autoregressive_decoder_forward.1} parent=1 // pred_check
      _
    $region163: #{autoregressive_decoder_forward.1} parent=1 // pred_check_branch
      %344 = sbr.rel (0) target = $region165
    $region164: #{autoregressive_decoder_forward.1} parent=1 // pred_region
      %345 = dma.done [#allocation24], 32
    $region165: #{autoregressive_decoder_forward.1} parent=1 // pred_fallthru
      _
    // Predicated region
    $region166: #{autoregressive_decoder_forward.1} parent=1 // pred_check
      _
    $region167: #{autoregressive_decoder_forward.1} parent=1 // pred_check_branch
      %347 = sbr.rel (0) target = $region169
    $region168: #{autoregressive_decoder_forward.1} parent=1 // pred_region
      %348 = dma.done [#allocation24], 32
    $region169: #{autoregressive_decoder_forward.1} parent=1 // pred_fallthru
      _
    // Predicated region
    $region170: #{autoregressive_decoder_forward.1} parent=1 // pred_check
      _
    $region171: #{autoregressive_decoder_forward.1} parent=1 // pred_check_branch
      %350 = sbr.rel (0) target = $region173
    $region172: #{autoregressive_decoder_forward.1} parent=1 // pred_region
      %351 = dma.done [#allocation27], 32
    $region173: #{autoregressive_decoder_forward.1} parent=1 // pred_fallthru
      _
    // Predicated region
    $region174: #{autoregressive_decoder_forward.1} parent=1 // pred_check
      _
    $region175: #{autoregressive_decoder_forward.1} parent=1 // pred_check_branch
      %353 = sbr.rel (0) target = $region177
    $region176: #{autoregressive_decoder_forward.1} parent=1 // pred_region
      %354 = dma.done [#allocation27], 512
    $region177: #{autoregressive_decoder_forward.1} parent=1 // pred_fallthru
      _
    // Predicated region
    $region178: #{autoregressive_decoder_forward.1} parent=1 // pred_check
      _
    $region179: #{autoregressive_decoder_forward.1} parent=1 // pred_check_branch
      %356 = sbr.rel (0) target = $region181
    $region180: #{autoregressive_decoder_forward.1} parent=1 // pred_region
      %357 = dma.done [#allocation30], 32
    $region181: #{autoregressive_decoder_forward.1} parent=1 // pred_fallthru
      _
    // Predicated region
    $region182: #{autoregressive_decoder_forward.1} parent=1 // pred_check
      _
    $region183: #{autoregressive_decoder_forward.1} parent=1 // pred_check_branch
      %359 = sbr.rel (0) target = $region185
    $region184: #{autoregressive_decoder_forward.1} parent=1 // pred_region
      %360 = dma.done [#allocation30], 512
    $region185: #{autoregressive_decoder_forward.1} parent=1 // pred_fallthru
      _
    // Predicated region
    $region186: #{autoregressive_decoder_forward.1} parent=1 // pred_check
      _
    $region187: #{autoregressive_decoder_forward.1} parent=1 // pred_check_branch
      %362 = sbr.rel (0) target = $region189
    $region188: #{autoregressive_decoder_forward.1} parent=1 // pred_region
      %363 = dma.done [#allocation33], 32
    $region189: #{autoregressive_decoder_forward.1} parent=1 // pred_fallthru
      _
    // Predicated region
    $region190: #{autoregressive_decoder_forward.1} parent=1 // pred_check
      _
    $region191: #{autoregressive_decoder_forward.1} parent=1 // pred_check_branch
      %365 = sbr.rel (0) target = $region193
    $region192: #{autoregressive_decoder_forward.1} parent=1 // pred_region
      %366 = dma.done [#allocation33], 16
    $region193: #{autoregressive_decoder_forward.1} parent=1 // pred_fallthru
      _
    %v368 = vld [vmem:[#allocation2] sm:$0x3]
    %v369 = vld [vmem:[#allocation2 + $0x2] sm:$0x3]
    %v370 = vld [vmem:[#allocation2 + $0x4] sm:$0x3]
    %v371 = vld [vmem:[#allocation2 + $0x6] sm:$0x3]
    %v372 = vld [vmem:[#allocation2 + $0x8] sm:$0x3]
    %v373 = vld [vmem:[#allocation2 + $0xa] sm:$0x3]
    %v374 = vld [vmem:[#allocation2 + $0xc] sm:$0x3]
    %v375 = vld [vmem:[#allocation2 + $0xe] sm:$0x3]
    %v376 = vld [vmem:[#allocation5] sm:$0x3]
    %v377 = vld [vmem:[#allocation5 + $0x2] sm:$0x3]
    %v378 = vld [vmem:[#allocation5 + $0x4] sm:$0x3]
    %v379 = vld [vmem:[#allocation5 + $0x6] sm:$0x3]
    %v380 = vld [vmem:[#allocation5 + $0x8] sm:$0x3]
    %v381 = vld [vmem:[#allocation5 + $0xa] sm:$0x3]
    %v382 = vld [vmem:[#allocation5 + $0xc] sm:$0x3]
    %v383 = vld [vmem:[#allocation5 + $0xe] sm:$0x3]
    %v392 = vrot.slane %v369, 7
    %vm393 = vcmask 1041409
    %v394 = vsel %vm393, %v392, %v368
    %v395 = vrot.slane %v370, 6
    %vm396 = vcmask 1042434
    %v397 = vsel %vm396, %v395, %v394
    %v398 = vrot.slane %v371, 5
    %vm399 = vcmask 1043459
    %v400 = vsel %vm399, %v398, %v397
    %v401 = vrot.slane %v372, 4
    %vm402 = vcmask 1044484
    %v403 = vsel %vm402, %v401, %v400
    %v404 = vrot.slane %v373, 3
    %vm405 = vcmask 1045509
    %v406 = vsel %vm405, %v404, %v403
    %v407 = vrot.slane %v374, 2
    %vm408 = vcmask 1046534
    %v409 = vsel %vm408, %v407, %v406
    %v410 = vrot.slane %v375, 1
    %vm411 = vcmask 1047559
    %v412 = vsel %vm411, %v410, %v409
    %v414 = vrot.slane %v368, 1
    %v415 = vsel %vm393, %v369, %v414
    %v416 = vrot.slane %v370, 7
    %v417 = vsel %vm396, %v416, %v415
    %v418 = vrot.slane %v371, 6
    %v419 = vsel %vm399, %v418, %v417
    %v420 = vrot.slane %v372, 5
    %v421 = vsel %vm402, %v420, %v419
    %v422 = vrot.slane %v373, 4
    %v423 = vsel %vm405, %v422, %v421
    %v424 = vrot.slane %v374, 3
    %v425 = vsel %vm408, %v424, %v423
    %v426 = vrot.slane %v375, 2
    %v427 = vsel %vm411, %v426, %v425
    %v437 = vrot.slane %v377, 7
    %v438 = vsel %vm393, %v437, %v376
    %v439 = vrot.slane %v378, 6
    %v440 = vsel %vm396, %v439, %v438
    %v441 = vrot.slane %v379, 5
    %v442 = vsel %vm399, %v441, %v440
    %v443 = vrot.slane %v380, 4
    %v444 = vsel %vm402, %v443, %v442
    %v445 = vrot.slane %v381, 3
    %v446 = vsel %vm405, %v445, %v444
    %v447 = vrot.slane %v382, 2
    %v448 = vsel %vm408, %v447, %v446
    %v449 = vrot.slane %v383, 1
    %v450 = vsel %vm411, %v449, %v448
    %v452 = vrot.slane %v376, 1
    %v453 = vsel %vm393, %v377, %v452
    %v454 = vrot.slane %v378, 7
    %v455 = vsel %vm396, %v454, %v453
    %v456 = vrot.slane %v379, 6
    %v457 = vsel %vm399, %v456, %v455
    %v458 = vrot.slane %v380, 5
    %v459 = vsel %vm402, %v458, %v457
    %v460 = vrot.slane %v381, 4
    %v461 = vsel %vm405, %v460, %v459
    %v462 = vrot.slane %v382, 3
    %v463 = vsel %vm408, %v462, %v461
    %v464 = vrot.slane %v383, 2
    %v465 = vsel %vm411, %v464, %v463
    %v467 = vpack.c.bf16 %v465, %v450
    %v468 = vld [vmem:[%s2] sm:$0xff]
    %v469 = vpack.c.bf16 %v427, %v412
    %v470 = vld [vmem:[%s3] sm:$0xf]
    %v471 = vld [vmem:[%s3 + $0x4] sm:$0xf]
    %v472 = vld [vmem:[%s3 + $0x8] sm:$0xf]
    %v473 = vld [vmem:[%s3 + $0xc] sm:$0xf]
    %v474 = vld [vmem:[%s3 + $0x10] sm:$0xf]
    %v475 = vld [vmem:[%s3 + $0x14] sm:$0xf]
    %v476 = vld [vmem:[%s3 + $0x18] sm:$0xf]
    %v477 = vld [vmem:[%s3 + $0x1c] sm:$0xf]
    %v478 = vld [vmem:[#allocation7] sm:$0x1]
    %v480 = vlaneseq
    %v481 = vshrl.u32 %v480, 7
    %v482 = vsub.s32 0, %v481
    %v483 = vrot.slane %v478, %v482
    %v493 = vunpack.c.l.b16 %v470
    %v494 = vunpack.c.l.b16 %v471
    %v495 = vunpack.c.l.b16 %v472
    %v496 = vunpack.c.l.b16 %v473
    %v497 = vunpack.c.l.b16 %v474
    %v498 = vunpack.c.l.b16 %v475
    %v499 = vunpack.c.l.b16 %v476
    %v500 = vunpack.c.l.b16 %v477
    %v501 = vpack.c.b16 %v494, %v493
    %v502 = vpack.c.b16 %v496, %v495
    %v503 = vpack.c.b16 %v498, %v497
    %v504 = vpack.c.b16 %v500, %v499
    %vm509 = vcmask 523264
    %v511 = vsel %vm509, %v469, 0
    %513 = vmatprep.subr.bf16.mxu0 0
    %514 = vmatpush1.bf16.msra.mxu0 0
    %515 = vmatprep.subr.bf16.mxu0 0
    %516 = vmatpush1.bf16.msra.mxu0 0
    %517 = vmatprep.subr.bf16.mxu0 0
    %518 = vmatpush1.bf16.msra.mxu0 0
    %519 = vmatprep.subr.bf16.mxu0 0
    %520 = vmatpush1.bf16.msra.mxu0 0
    %521 = vmatprep.subr.bf16.mxu0 0
    %522 = vmatpush1.bf16.msra.mxu0 %v504
    %523 = vmatprep.subr.bf16.mxu0 0
    %524 = vmatpush1.bf16.msra.mxu0 %v503
    %525 = vmatprep.subr.bf16.mxu0 0
    %526 = vmatpush1.bf16.msra.mxu0 %v502
    %527 = vmatprep.subr.bf16.mxu0 0
    %528 = vmatpush1.bf16.msra.mxu0 %v501
    %529 = vmatprep.subr.bf16.mxu0 0
    %530 = vmatpush2.bf16.msra.mxu0 0
    %531 = vmatprep.subr.bf16.mxu0 0
    %532 = vmatpush2.bf16.msra.mxu0 0
    %533 = vmatprep.subr.bf16.mxu0 0
    %534 = vmatpush2.bf16.msra.mxu0 0
    %535 = vmatprep.subr.bf16.mxu0 0
    %536 = vmatpush2.bf16.msra.mxu0 0
    %537 = vmatprep.subr.bf16.mxu0 0
    %538 = vmatpush2.bf16.msra.mxu0 0
    %539 = vmatprep.subr.bf16.mxu0 0
    %540 = vmatpush2.bf16.msra.mxu0 0
    %541 = vmatprep.subr.bf16.mxu0 0
    %542 = vmatpush2.bf16.msra.mxu0 0
    %543 = vmatprep.subr.bf16.mxu0 0
    %544 = vmatpush2.bf16.msra.mxu0 0
    %545 = vmatprep.mubr.bf16.mxu0 0
    %546 = vmatmul.mubr.bf16.gmra.mxu0 %v511
    %v547 = vpop.f32.mrf.mxu0
    %v548 = vadd.f32 %v483, %v547
    %v549 = vpop.f32.mrf.mxu0
    %v550 = vpop.f32.mrf.mxu0
    %v551 = vadd.f32 %v483, %v550
    %v552 = vpop.f32.mrf.mxu0
    %553 = vdwg.mxu0
    %v554 = vpack.c.bf16 %v551, %v548
    %v555 = vld [vmem:[%s5] sm:$0xf]
    %v556 = vld [vmem:[%s5 + $0x4] sm:$0xf]
    %v557 = vld [vmem:[%s5 + $0x8] sm:$0xf]
    %v558 = vld [vmem:[%s5 + $0xc] sm:$0xf]
    %v559 = vld [vmem:[#allocation8] sm:$0x1]
    %v561 = vlaneseq
    %v562 = vshrl.u32 %v561, 7
    %v563 = vsub.s32 0, %v562
    %v564 = vrot.slane %v559, %v563
    %v570 = vunpack.c.l.b16 %v555
    %v571 = vunpack.c.l.b16 %v556
    %v572 = vunpack.c.l.b16 %v557
    %v573 = vunpack.c.l.b16 %v558
    %v574 = vpack.c.b16 %v571, %v570
    %v575 = vpack.c.b16 %v573, %v572
    %vm578 = vcmask 261120
    %v580 = vsel %vm578, %v554, 0
    %582 = vmatprep.subr.bf16.mxu0 0
    %583 = vmatpush1.bf16.msra.mxu0 0
    %584 = vmatprep.subr.bf16.mxu0 0
    %585 = vmatpush1.bf16.msra.mxu0 0
    %586 = vmatprep.subr.bf16.mxu0 0
    %587 = vmatpush1.bf16.msra.mxu0 0
    %588 = vmatprep.subr.bf16.mxu0 0
    %589 = vmatpush1.bf16.msra.mxu0 0
    %590 = vmatprep.subr.bf16.mxu0 0
    %591 = vmatpush1.bf16.msra.mxu0 0
    %592 = vmatprep.subr.bf16.mxu0 0
    %593 = vmatpush1.bf16.msra.mxu0 0
    %594 = vmatprep.subr.bf16.mxu0 0
    %595 = vmatpush1.bf16.msra.mxu0 %v575
    %596 = vmatprep.subr.bf16.mxu0 0
    %597 = vmatpush1.bf16.msra.mxu0 %v574
    %598 = vmatprep.subr.bf16.mxu0 0
    %599 = vmatpush2.bf16.msra.mxu0 0
    %600 = vmatprep.subr.bf16.mxu0 0
    %601 = vmatpush2.bf16.msra.mxu0 0
    %602 = vmatprep.subr.bf16.mxu0 0
    %603 = vmatpush2.bf16.msra.mxu0 0
    %604 = vmatprep.subr.bf16.mxu0 0
    %605 = vmatpush2.bf16.msra.mxu0 0
    %606 = vmatprep.subr.bf16.mxu0 0
    %607 = vmatpush2.bf16.msra.mxu0 0
    %608 = vmatprep.subr.bf16.mxu0 0
    %609 = vmatpush2.bf16.msra.mxu0 0
    %610 = vmatprep.subr.bf16.mxu0 0
    %611 = vmatpush2.bf16.msra.mxu0 0
    %612 = vmatprep.subr.bf16.mxu0 0
    %613 = vmatpush2.bf16.msra.mxu0 0
    %614 = vmatprep.mubr.bf16.mxu0 0
    %615 = vmatmul.mubr.bf16.gmra.mxu0 %v580
    %v616 = vpop.f32.mrf.mxu0
    %v617 = vadd.f32 %v564, %v616
    %v618 = vpop.f32.mrf.mxu0
    %v619 = vpop.f32.mrf.mxu0
    %v620 = vadd.f32 %v564, %v619
    %v621 = vpop.f32.mrf.mxu0
    %622 = vdwg.mxu0
    %v623 = vpack.c.bf16 %v620, %v617
    %v624 = vld [vmem:[%s7] sm:$0xf]
    %v625 = vld [vmem:[%s7 + $0x4] sm:$0xf]
    %v626 = vld [vmem:[%s7 + $0x8] sm:$0xf]
    %v627 = vld [vmem:[%s7 + $0xc] sm:$0xf]
    %v628 = vld [vmem:[%s8] sm:$0x1]
    %630 = vrot.lane.b32.xlu0 %v623, 96
    %v631 = vpop.permute.xlu0 %630
    %vm632 = vcmask 64512
    %v634 = vsel %vm632, %v623, 0
    %v637 = vsel %vm632, %v631, 0
    %639 = vmatprep.subr.bf16.mxu0 0
    %640 = vmatpush1.bf16.xpose.msra.mxu0 0
    %641 = vmatprep.subr.bf16.mxu0 0
    %642 = vmatpush1.bf16.xpose.msra.mxu0 0
    %643 = vmatprep.subr.bf16.mxu0 0
    %644 = vmatpush1.bf16.xpose.msra.mxu0 0
    %645 = vmatprep.subr.bf16.mxu0 0
    %646 = vmatpush1.bf16.xpose.msra.mxu0 0
    %647 = vmatprep.subr.bf16.mxu0 0
    %648 = vmatpush1.bf16.xpose.msra.mxu0 0
    %649 = vmatprep.subr.bf16.mxu0 0
    %650 = vmatpush1.bf16.xpose.msra.mxu0 0
    %651 = vmatprep.subr.bf16.mxu0 0
    %652 = vmatpush1.bf16.xpose.msra.mxu0 0
    %653 = vmatprep.subr.bf16.mxu0 0
    %654 = vmatpush1.bf16.xpose.msra.mxu0 %v637
    %655 = vmatprep.subr.bf16.mxu0 0
    %656 = vmatpush2.bf16.xpose.msra.mxu0 0
    %657 = vmatprep.subr.bf16.mxu0 0
    %658 = vmatpush2.bf16.xpose.msra.mxu0 0
    %659 = vmatprep.subr.bf16.mxu0 0
    %660 = vmatpush2.bf16.xpose.msra.mxu0 0
    %661 = vmatprep.subr.bf16.mxu0 0
    %662 = vmatpush2.bf16.xpose.msra.mxu0 0
    %663 = vmatprep.subr.bf16.mxu0 0
    %664 = vmatpush2.bf16.xpose.msra.mxu0 0
    %665 = vmatprep.subr.bf16.mxu0 0
    %666 = vmatpush2.bf16.xpose.msra.mxu0 0
    %667 = vmatprep.subr.bf16.mxu0 0
    %668 = vmatpush2.bf16.xpose.msra.mxu0 0
    %669 = vmatprep.subr.bf16.mxu0 0
    %670 = vmatpush2.bf16.xpose.msra.mxu0 0
    %671 = vmatprep.mubr.bf16.mxu0 0
    %672 = vmatmul.mubr.bf16.gmra.mxu0 %v634
    %v673 = vpop.f32.mrf.mxu0
    %v674 = vadd.f32 0.0, %v673
    %v675 = vpop.f32.mrf.mxu0
    %v676 = vpop.f32.mrf.mxu0
    %v677 = vpop.f32.mrf.mxu0
    %678 = vdwg.mxu0
    %679 = vrot.lane.b32.xlu0 %v623, 120
    %v680 = vpop.permute.xlu0 %679
    %681 = vrot.lane.b32.xlu0 %v623, 88
    %v682 = vpop.permute.xlu0 %681
    %v684 = vsel %vm632, %v680, 0
    %v687 = vsel %vm632, %v682, 0
    %689 = vmatprep.subr.bf16.mxu0 0
    %690 = vmatpush1.bf16.xpose.msra.mxu0 0
    %691 = vmatprep.subr.bf16.mxu0 0
    %692 = vmatpush1.bf16.xpose.msra.mxu0 0
    %693 = vmatprep.subr.bf16.mxu0 0
    %694 = vmatpush1.bf16.xpose.msra.mxu0 0
    %695 = vmatprep.subr.bf16.mxu0 0
    %696 = vmatpush1.bf16.xpose.msra.mxu0 0
    %697 = vmatprep.subr.bf16.mxu0 0
    %698 = vmatpush1.bf16.xpose.msra.mxu0 0
    %699 = vmatprep.subr.bf16.mxu0 0
    %700 = vmatpush1.bf16.xpose.msra.mxu0 0
    %701 = vmatprep.subr.bf16.mxu0 0
    %702 = vmatpush1.bf16.xpose.msra.mxu0 0
    %703 = vmatprep.subr.bf16.mxu0 0
    %704 = vmatpush1.bf16.xpose.msra.mxu0 %v687
    %705 = vmatprep.subr.bf16.mxu0 0
    %706 = vmatpush2.bf16.xpose.msra.mxu0 0
    %707 = vmatprep.subr.bf16.mxu0 0
    %708 = vmatpush2.bf16.xpose.msra.mxu0 0
    %709 = vmatprep.subr.bf16.mxu0 0
    %710 = vmatpush2.bf16.xpose.msra.mxu0 0
    %711 = vmatprep.subr.bf16.mxu0 0
    %712 = vmatpush2.bf16.xpose.msra.mxu0 0
    %713 = vmatprep.subr.bf16.mxu0 0
    %714 = vmatpush2.bf16.xpose.msra.mxu0 0
    %715 = vmatprep.subr.bf16.mxu0 0
    %716 = vmatpush2.bf16.xpose.msra.mxu0 0
    %717 = vmatprep.subr.bf16.mxu0 0
    %718 = vmatpush2.bf16.xpose.msra.mxu0 0
    %719 = vmatprep.subr.bf16.mxu0 0
    %720 = vmatpush2.bf16.xpose.msra.mxu0 0
    %721 = vmatprep.mubr.bf16.mxu0 0
    %722 = vmatmul.mubr.bf16.gmra.mxu0 %v684
    %v723 = vpop.f32.mrf.mxu0
    %v724 = vadd.f32 0.0, %v723
    %v725 = vpop.f32.mrf.mxu0
    %v726 = vpop.f32.mrf.mxu0
    %v727 = vpop.f32.mrf.mxu0
    %728 = vdwg.mxu0
    %729 = vrot.lane.b32.xlu0 %v623, 112
    %v730 = vpop.permute.xlu0 %729
    %731 = vrot.lane.b32.xlu0 %v623, 80
    %v732 = vpop.permute.xlu0 %731
    %v734 = vsel %vm632, %v730, 0
    %v737 = vsel %vm632, %v732, 0
    %739 = vmatprep.subr.bf16.mxu0 0
    %740 = vmatpush1.bf16.xpose.msra.mxu0 0
    %741 = vmatprep.subr.bf16.mxu0 0
    %742 = vmatpush1.bf16.xpose.msra.mxu0 0
    %743 = vmatprep.subr.bf16.mxu0 0
    %744 = vmatpush1.bf16.xpose.msra.mxu0 0
    %745 = vmatprep.subr.bf16.mxu0 0
    %746 = vmatpush1.bf16.xpose.msra.mxu0 0
    %747 = vmatprep.subr.bf16.mxu0 0
    %748 = vmatpush1.bf16.xpose.msra.mxu0 0
    %749 = vmatprep.subr.bf16.mxu0 0
    %750 = vmatpush1.bf16.xpose.msra.mxu0 0
    %751 = vmatprep.subr.bf16.mxu0 0
    %752 = vmatpush1.bf16.xpose.msra.mxu0 0
    %753 = vmatprep.subr.bf16.mxu0 0
    %754 = vmatpush1.bf16.xpose.msra.mxu0 %v737
    %755 = vmatprep.subr.bf16.mxu0 0
    %756 = vmatpush2.bf16.xpose.msra.mxu0 0
    %757 = vmatprep.subr.bf16.mxu0 0
    %758 = vmatpush2.bf16.xpose.msra.mxu0 0
    %759 = vmatprep.subr.bf16.mxu0 0
    %760 = vmatpush2.bf16.xpose.msra.mxu0 0
    %761 = vmatprep.subr.bf16.mxu0 0
    %762 = vmatpush2.bf16.xpose.msra.mxu0 0
    %763 = vmatprep.subr.bf16.mxu0 0
    %764 = vmatpush2.bf16.xpose.msra.mxu0 0
    %765 = vmatprep.subr.bf16.mxu0 0
    %766 = vmatpush2.bf16.xpose.msra.mxu0 0
    %767 = vmatprep.subr.bf16.mxu0 0
    %768 = vmatpush2.bf16.xpose.msra.mxu0 0
    %769 = vmatprep.subr.bf16.mxu0 0
    %770 = vmatpush2.bf16.xpose.msra.mxu0 0
    %771 = vmatprep.mubr.bf16.mxu0 0
    %772 = vmatmul.mubr.bf16.gmra.mxu0 %v734
    %v773 = vpop.f32.mrf.mxu0
    %v774 = vadd.f32 0.0, %v773
    %v775 = vpop.f32.mrf.mxu0
    %v776 = vpop.f32.mrf.mxu0
    %v777 = vpop.f32.mrf.mxu0
    %778 = vdwg.mxu0
    %779 = vrot.lane.b32.xlu0 %v623, 104
    %v780 = vpop.permute.xlu0 %779
    %781 = vrot.lane.b32.xlu0 %v623, 72
    %v782 = vpop.permute.xlu0 %781
    %v784 = vsel %vm632, %v780, 0
    %v787 = vsel %vm632, %v782, 0
    %789 = vmatprep.subr.bf16.mxu0 0
    %790 = vmatpush1.bf16.xpose.msra.mxu0 0
    %791 = vmatprep.subr.bf16.mxu0 0
    %792 = vmatpush1.bf16.xpose.msra.mxu0 0
    %793 = vmatprep.subr.bf16.mxu0 0
    %794 = vmatpush1.bf16.xpose.msra.mxu0 0
    %795 = vmatprep.subr.bf16.mxu0 0
    %796 = vmatpush1.bf16.xpose.msra.mxu0 0
    %797 = vmatprep.subr.bf16.mxu0 0
    %798 = vmatpush1.bf16.xpose.msra.mxu0 0
    %799 = vmatprep.subr.bf16.mxu0 0
    %800 = vmatpush1.bf16.xpose.msra.mxu0 0
    %801 = vmatprep.subr.bf16.mxu0 0
    %802 = vmatpush1.bf16.xpose.msra.mxu0 0
    %803 = vmatprep.subr.bf16.mxu0 0
    %804 = vmatpush1.bf16.xpose.msra.mxu0 %v787
    %805 = vmatprep.subr.bf16.mxu0 0
    %806 = vmatpush2.bf16.xpose.msra.mxu0 0
    %807 = vmatprep.subr.bf16.mxu0 0
    %808 = vmatpush2.bf16.xpose.msra.mxu0 0
    %809 = vmatprep.subr.bf16.mxu0 0
    %810 = vmatpush2.bf16.xpose.msra.mxu0 0
    %811 = vmatprep.subr.bf16.mxu0 0
    %812 = vmatpush2.bf16.xpose.msra.mxu0 0
    %813 = vmatprep.subr.bf16.mxu0 0
    %814 = vmatpush2.bf16.xpose.msra.mxu0 0
    %815 = vmatprep.subr.bf16.mxu0 0
    %816 = vmatpush2.bf16.xpose.msra.mxu0 0
    %817 = vmatprep.subr.bf16.mxu0 0
    %818 = vmatpush2.bf16.xpose.msra.mxu0 0
    %819 = vmatprep.subr.bf16.mxu0 0
    %820 = vmatpush2.bf16.xpose.msra.mxu0 0
    %821 = vmatprep.mubr.bf16.mxu0 0
    %822 = vmatmul.mubr.bf16.gmra.mxu0 %v784
    %v823 = vpop.f32.mrf.mxu0
    %v824 = vadd.f32 0.0, %v823
    %v825 = vpop.f32.mrf.mxu0
    %v826 = vpop.f32.mrf.mxu0
    %v827 = vpop.f32.mrf.mxu0
    %828 = vdwg.mxu0
    %v829 = vrot.slane %v623, 4
    %830 = vrot.lane.b32.xlu0 %v829, 96
    %v831 = vpop.permute.xlu0 %830
    %v833 = vsel %vm632, %v829, 0
    %v836 = vsel %vm632, %v831, 0
    %838 = vmatprep.subr.bf16.mxu0 0
    %839 = vmatpush1.bf16.xpose.msra.mxu0 0
    %840 = vmatprep.subr.bf16.mxu0 0
    %841 = vmatpush1.bf16.xpose.msra.mxu0 0
    %842 = vmatprep.subr.bf16.mxu0 0
    %843 = vmatpush1.bf16.xpose.msra.mxu0 0
    %844 = vmatprep.subr.bf16.mxu0 0
    %845 = vmatpush1.bf16.xpose.msra.mxu0 0
    %846 = vmatprep.subr.bf16.mxu0 0
    %847 = vmatpush1.bf16.xpose.msra.mxu0 0
    %848 = vmatprep.subr.bf16.mxu0 0
    %849 = vmatpush1.bf16.xpose.msra.mxu0 0
    %850 = vmatprep.subr.bf16.mxu0 0
    %851 = vmatpush1.bf16.xpose.msra.mxu0 0
    %852 = vmatprep.subr.bf16.mxu0 0
    %853 = vmatpush1.bf16.xpose.msra.mxu0 %v836
    %854 = vmatprep.subr.bf16.mxu0 0
    %855 = vmatpush2.bf16.xpose.msra.mxu0 0
    %856 = vmatprep.subr.bf16.mxu0 0
    %857 = vmatpush2.bf16.xpose.msra.mxu0 0
    %858 = vmatprep.subr.bf16.mxu0 0
    %859 = vmatpush2.bf16.xpose.msra.mxu0 0
    %860 = vmatprep.subr.bf16.mxu0 0
    %861 = vmatpush2.bf16.xpose.msra.mxu0 0
    %862 = vmatprep.subr.bf16.mxu0 0
    %863 = vmatpush2.bf16.xpose.msra.mxu0 0
    %864 = vmatprep.subr.bf16.mxu0 0
    %865 = vmatpush2.bf16.xpose.msra.mxu0 0
    %866 = vmatprep.subr.bf16.mxu0 0
    %867 = vmatpush2.bf16.xpose.msra.mxu0 0
    %868 = vmatprep.subr.bf16.mxu0 0
    %869 = vmatpush2.bf16.xpose.msra.mxu0 0
    %870 = vmatprep.mubr.bf16.mxu0 0
    %871 = vmatmul.mubr.bf16.gmra.mxu0 %v833
    %v872 = vpop.f32.mrf.mxu0
    %v873 = vadd.f32 0.0, %v872
    %v874 = vpop.f32.mrf.mxu0
    %v875 = vpop.f32.mrf.mxu0
    %v876 = vpop.f32.mrf.mxu0
    %877 = vdwg.mxu0
    %878 = vrot.lane.b32.xlu0 %v829, 120
    %v879 = vpop.permute.xlu0 %878
    %880 = vrot.lane.b32.xlu0 %v829, 88
    %v881 = vpop.permute.xlu0 %880
    %v883 = vsel %vm632, %v879, 0
    %v886 = vsel %vm632, %v881, 0
    %888 = vmatprep.subr.bf16.mxu0 0
    %889 = vmatpush1.bf16.xpose.msra.mxu0 0
    %890 = vmatprep.subr.bf16.mxu0 0
    %891 = vmatpush1.bf16.xpose.msra.mxu0 0
    %892 = vmatprep.subr.bf16.mxu0 0
    %893 = vmatpush1.bf16.xpose.msra.mxu0 0
    %894 = vmatprep.subr.bf16.mxu0 0
    %895 = vmatpush1.bf16.xpose.msra.mxu0 0
    %896 = vmatprep.subr.bf16.mxu0 0
    %897 = vmatpush1.bf16.xpose.msra.mxu0 0
    %898 = vmatprep.subr.bf16.mxu0 0
    %899 = vmatpush1.bf16.xpose.msra.mxu0 0
    %900 = vmatprep.subr.bf16.mxu0 0
    %901 = vmatpush1.bf16.xpose.msra.mxu0 0
    %902 = vmatprep.subr.bf16.mxu0 0
    %903 = vmatpush1.bf16.xpose.msra.mxu0 %v886
    %904 = vmatprep.subr.bf16.mxu0 0
    %905 = vmatpush2.bf16.xpose.msra.mxu0 0
    %906 = vmatprep.subr.bf16.mxu0 0
    %907 = vmatpush2.bf16.xpose.msra.mxu0 0
    %908 = vmatprep.subr.bf16.mxu0 0
    %909 = vmatpush2.bf16.xpose.msra.mxu0 0
    %910 = vmatprep.subr.bf16.mxu0 0
    %911 = vmatpush2.bf16.xpose.msra.mxu0 0
    %912 = vmatprep.subr.bf16.mxu0 0
    %913 = vmatpush2.bf16.xpose.msra.mxu0 0
    %914 = vmatprep.subr.bf16.mxu0 0
    %915 = vmatpush2.bf16.xpose.msra.mxu0 0
    %916 = vmatprep.subr.bf16.mxu0 0
    %917 = vmatpush2.bf16.xpose.msra.mxu0 0
    %918 = vmatprep.subr.bf16.mxu0 0
    %919 = vmatpush2.bf16.xpose.msra.mxu0 0
    %920 = vmatprep.mubr.bf16.mxu0 0
    %921 = vmatmul.mubr.bf16.gmra.mxu0 %v883
    %v922 = vpop.f32.mrf.mxu0
    %v923 = vadd.f32 0.0, %v922
    %v924 = vpop.f32.mrf.mxu0
    %v925 = vpop.f32.mrf.mxu0
    %v926 = vpop.f32.mrf.mxu0
    %927 = vdwg.mxu0
    %928 = vrot.lane.b32.xlu0 %v829, 112
    %v929 = vpop.permute.xlu0 %928
    %930 = vrot.lane.b32.xlu0 %v829, 80
    %v931 = vpop.permute.xlu0 %930
    %v933 = vsel %vm632, %v929, 0
    %v936 = vsel %vm632, %v931, 0
    %938 = vmatprep.subr.bf16.mxu0 0
    %939 = vmatpush1.bf16.xpose.msra.mxu0 0
    %940 = vmatprep.subr.bf16.mxu0 0
    %941 = vmatpush1.bf16.xpose.msra.mxu0 0
    %942 = vmatprep.subr.bf16.mxu0 0
    %943 = vmatpush1.bf16.xpose.msra.mxu0 0
    %944 = vmatprep.subr.bf16.mxu0 0
    %945 = vmatpush1.bf16.xpose.msra.mxu0 0
    %946 = vmatprep.subr.bf16.mxu0 0
    %947 = vmatpush1.bf16.xpose.msra.mxu0 0
    %948 = vmatprep.subr.bf16.mxu0 0
    %949 = vmatpush1.bf16.xpose.msra.mxu0 0
    %950 = vmatprep.subr.bf16.mxu0 0
    %951 = vmatpush1.bf16.xpose.msra.mxu0 0
    %952 = vmatprep.subr.bf16.mxu0 0
    %953 = vmatpush1.bf16.xpose.msra.mxu0 %v936
    %954 = vmatprep.subr.bf16.mxu0 0
    %955 = vmatpush2.bf16.xpose.msra.mxu0 0
    %956 = vmatprep.subr.bf16.mxu0 0
    %957 = vmatpush2.bf16.xpose.msra.mxu0 0
    %958 = vmatprep.subr.bf16.mxu0 0
    %959 = vmatpush2.bf16.xpose.msra.mxu0 0
    %960 = vmatprep.subr.bf16.mxu0 0
    %961 = vmatpush2.bf16.xpose.msra.mxu0 0
    %962 = vmatprep.subr.bf16.mxu0 0
    %963 = vmatpush2.bf16.xpose.msra.mxu0 0
    %964 = vmatprep.subr.bf16.mxu0 0
    %965 = vmatpush2.bf16.xpose.msra.mxu0 0
    %966 = vmatprep.subr.bf16.mxu0 0
    %967 = vmatpush2.bf16.xpose.msra.mxu0 0
    %968 = vmatprep.subr.bf16.mxu0 0
    %969 = vmatpush2.bf16.xpose.msra.mxu0 0
    %970 = vmatprep.mubr.bf16.mxu0 0
    %971 = vmatmul.mubr.bf16.gmra.mxu0 %v933
    %v972 = vpop.f32.mrf.mxu0
    %v973 = vadd.f32 0.0, %v972
    %v974 = vpop.f32.mrf.mxu0
    %v975 = vpop.f32.mrf.mxu0
    %v976 = vpop.f32.mrf.mxu0
    %977 = vdwg.mxu0
    %978 = vrot.lane.b32.xlu0 %v829, 104
    %v979 = vpop.permute.xlu0 %978
    %980 = vrot.lane.b32.xlu0 %v829, 72
    %v981 = vpop.permute.xlu0 %980
    %v983 = vsel %vm632, %v979, 0
    %v986 = vsel %vm632, %v981, 0
    %988 = vmatprep.subr.bf16.mxu0 0
    %989 = vmatpush1.bf16.xpose.msra.mxu0 0
    %990 = vmatprep.subr.bf16.mxu0 0
    %991 = vmatpush1.bf16.xpose.msra.mxu0 0
    %992 = vmatprep.subr.bf16.mxu0 0
    %993 = vmatpush1.bf16.xpose.msra.mxu0 0
    %994 = vmatprep.subr.bf16.mxu0 0
    %995 = vmatpush1.bf16.xpose.msra.mxu0 0
    %996 = vmatprep.subr.bf16.mxu0 0
    %997 = vmatpush1.bf16.xpose.msra.mxu0 0
    %998 = vmatprep.subr.bf16.mxu0 0
    %999 = vmatpush1.bf16.xpose.msra.mxu0 0
    %1000 = vmatprep.subr.bf16.mxu0 0
    %1001 = vmatpush1.bf16.xpose.msra.mxu0 0
    %1002 = vmatprep.subr.bf16.mxu0 0
    %1003 = vmatpush1.bf16.xpose.msra.mxu0 %v986
    %1004 = vmatprep.subr.bf16.mxu0 0
    %1005 = vmatpush2.bf16.xpose.msra.mxu0 0
    %1006 = vmatprep.subr.bf16.mxu0 0
    %1007 = vmatpush2.bf16.xpose.msra.mxu0 0
    %1008 = vmatprep.subr.bf16.mxu0 0
    %1009 = vmatpush2.bf16.xpose.msra.mxu0 0
    %1010 = vmatprep.subr.bf16.mxu0 0
    %1011 = vmatpush2.bf16.xpose.msra.mxu0 0
    %1012 = vmatprep.subr.bf16.mxu0 0
    %1013 = vmatpush2.bf16.xpose.msra.mxu0 0
    %1014 = vmatprep.subr.bf16.mxu0 0
    %1015 = vmatpush2.bf16.xpose.msra.mxu0 0
    %1016 = vmatprep.subr.bf16.mxu0 0
    %1017 = vmatpush2.bf16.xpose.msra.mxu0 0
    %1018 = vmatprep.subr.bf16.mxu0 0
    %1019 = vmatpush2.bf16.xpose.msra.mxu0 0
    %1020 = vmatprep.mubr.bf16.mxu0 0
    %1021 = vmatmul.mubr.bf16.gmra.mxu0 %v983
    %v1022 = vpop.f32.mrf.mxu0
    %v1023 = vadd.f32 0.0, %v1022
    %v1024 = vpop.f32.mrf.mxu0
    %v1025 = vpop.f32.mrf.mxu0
    %v1026 = vpop.f32.mrf.mxu0
    %1027 = vdwg.mxu0
    %v1028 = vadd.f32 %v674, %v468
    %v1029 = vadd.f32 %v724, %v468
    %v1030 = vadd.f32 %v774, %v468
    %v1031 = vadd.f32 %v824, %v468
    %v1032 = vadd.f32 %v873, %v468
    %v1033 = vadd.f32 %v923, %v468
    %v1034 = vadd.f32 %v973, %v468
    %v1035 = vadd.f32 %v1023, %v468
    %v1036 = vsel %vm632, %v1028, -inf
    %1037 = vmax.xlane.f32.xlu0 %v1036
    %v1038 = vpop.xlane.xlu0 %1037
    %v1039 = vsel %vm632, %v1029, -inf
    %1040 = vmax.xlane.f32.xlu0 %v1039
    %v1041 = vpop.xlane.xlu0 %1040
    %v1042 = vsel %vm632, %v1030, -inf
    %1043 = vmax.xlane.f32.xlu0 %v1042
    %v1044 = vpop.xlane.xlu0 %1043
    %v1045 = vsel %vm632, %v1031, -inf
    %1046 = vmax.xlane.f32.xlu0 %v1045
    %v1047 = vpop.xlane.xlu0 %1046
    %v1048 = vsel %vm632, %v1032, -inf
    %1049 = vmax.xlane.f32.xlu0 %v1048
    %v1050 = vpop.xlane.xlu0 %1049
    %v1051 = vsel %vm632, %v1033, -inf
    %1052 = vmax.xlane.f32.xlu0 %v1051
    %v1053 = vpop.xlane.xlu0 %1052
    %v1054 = vsel %vm632, %v1034, -inf
    %1055 = vmax.xlane.f32.xlu0 %v1054
    %v1056 = vpop.xlane.xlu0 %1055
    %v1057 = vsel %vm632, %v1035, -inf
    %1058 = vmax.xlane.f32.xlu0 %v1057
    %v1059 = vpop.xlane.xlu0 %1058
    %v1060 = vsub.f32 %v1028, %v1038
    %v1061 = vsub.f32 %v1029, %v1041
    %v1062 = vsub.f32 %v1030, %v1044
    %v1063 = vsub.f32 %v1031, %v1047
    %v1064 = vsub.f32 %v1032, %v1050
    %v1065 = vsub.f32 %v1033, %v1053
    %v1066 = vsub.f32 %v1034, %v1056
    %v1067 = vsub.f32 %v1035, %v1059
    %v1068 = vmul.f32 %v1060, 1.442695
    %v1069 = vpow.pop %v1068
    %v1070 = vmul.f32 %v1061, 1.442695
    %v1071 = vpow.pop %v1070
    %v1072 = vmul.f32 %v1062, 1.442695
    %v1073 = vpow.pop %v1072
    %v1074 = vmul.f32 %v1063, 1.442695
    %v1075 = vpow.pop %v1074
    %v1076 = vmul.f32 %v1064, 1.442695
    %v1077 = vpow.pop %v1076
    %v1078 = vmul.f32 %v1065, 1.442695
    %v1079 = vpow.pop %v1078
    %v1080 = vmul.f32 %v1066, 1.442695
    %v1081 = vpow.pop %v1080
    %v1082 = vmul.f32 %v1067, 1.442695
    %v1083 = vpow.pop %v1082
    %v1084 = vsel %vm632, %v1069, 0.0
    %1085 = vadd.xlane.f32.xlu0 %v1084
    %v1086 = vpop.xlane.xlu0 %1085
    %v1087 = vsel %vm632, %v1071, 0.0
    %1088 = vadd.xlane.f32.xlu0 %v1087
    %v1089 = vpop.xlane.xlu0 %1088
    %v1090 = vsel %vm632, %v1073, 0.0
    %1091 = vadd.xlane.f32.xlu0 %v1090
    %v1092 = vpop.xlane.xlu0 %1091
    %v1093 = vsel %vm632, %v1075, 0.0
    %1094 = vadd.xlane.f32.xlu0 %v1093
    %v1095 = vpop.xlane.xlu0 %1094
    %v1096 = vsel %vm632, %v1077, 0.0
    %1097 = vadd.xlane.f32.xlu0 %v1096
    %v1098 = vpop.xlane.xlu0 %1097
    %v1099 = vsel %vm632, %v1079, 0.0
    %1100 = vadd.xlane.f32.xlu0 %v1099
    %v1101 = vpop.xlane.xlu0 %1100
    %v1102 = vsel %vm632, %v1081, 0.0
    %1103 = vadd.xlane.f32.xlu0 %v1102
    %v1104 = vpop.xlane.xlu0 %1103
    %v1105 = vsel %vm632, %v1083, 0.0
    %1106 = vadd.xlane.f32.xlu0 %v1105
    %v1107 = vpop.xlane.xlu0 %1106
    %v1108 = vrcp.pop %v1086
    %v1109 = vrcp.pop %v1089
    %v1110 = vrcp.pop %v1092
    %v1111 = vrcp.pop %v1095
    %v1112 = vrcp.pop %v1098
    %v1113 = vrcp.pop %v1101
    %v1114 = vrcp.pop %v1104
    %v1115 = vrcp.pop %v1107
    %v1116 = vmul.f32 %v1069, %v1108
    %v1117 = vmul.f32 %v1071, %v1109
    %v1118 = vmul.f32 %v1073, %v1110
    %v1119 = vmul.f32 %v1075, %v1111
    %v1120 = vmul.f32 %v1077, %v1112
    %v1121 = vmul.f32 %v1079, %v1113
    %v1122 = vmul.f32 %v1081, %v1114
    %v1123 = vmul.f32 %v1083, %v1115
    %v1124 = vpack.c.bf16 %v1117, %v1116
    %v1125 = vpack.c.bf16 %v1119, %v1118
    %v1126 = vpack.c.bf16 %v1121, %v1120
    %v1127 = vpack.c.bf16 %v1123, %v1122
    %1128 = vrot.lane.b32.xlu0 %v623, 64
    %v1129 = vpop.permute.xlu0 %1128
    %v1131 = vsel %vm632, %v1124, 0
    %vm1133 = vcmask 1043456
    %v1135 = vsel %vm1133, %v1129, 0
    %1137 = vmatprep.subr.bf16.mxu0 0
    %1138 = vmatpush1.bf16.msra.mxu0 0
    %1139 = vmatprep.subr.bf16.mxu0 0
    %1140 = vmatpush1.bf16.msra.mxu0 0
    %1141 = vmatprep.subr.bf16.mxu0 0
    %1142 = vmatpush1.bf16.msra.mxu0 0
    %1143 = vmatprep.subr.bf16.mxu0 0
    %1144 = vmatpush1.bf16.msra.mxu0 0
    %1145 = vmatprep.subr.bf16.mxu0 0
    %1146 = vmatpush1.bf16.msra.mxu0 0
    %1147 = vmatprep.subr.bf16.mxu0 0
    %1148 = vmatpush1.bf16.msra.mxu0 0
    %1149 = vmatprep.subr.bf16.mxu0 0
    %1150 = vmatpush1.bf16.msra.mxu0 0
    %1151 = vmatprep.subr.bf16.mxu0 0
    %1152 = vmatpush1.bf16.msra.mxu0 %v1135
    %1153 = vmatprep.subr.bf16.mxu0 0
    %1154 = vmatpush2.bf16.msra.mxu0 0
    %1155 = vmatprep.subr.bf16.mxu0 0
    %1156 = vmatpush2.bf16.msra.mxu0 0
    %1157 = vmatprep.subr.bf16.mxu0 0
    %1158 = vmatpush2.bf16.msra.mxu0 0
    %1159 = vmatprep.subr.bf16.mxu0 0
    %1160 = vmatpush2.bf16.msra.mxu0 0
    %1161 = vmatprep.subr.bf16.mxu0 0
    %1162 = vmatpush2.bf16.msra.mxu0 0
    %1163 = vmatprep.subr.bf16.mxu0 0
    %1164 = vmatpush2.bf16.msra.mxu0 0
    %1165 = vmatprep.subr.bf16.mxu0 0
    %1166 = vmatpush2.bf16.msra.mxu0 0
    %1167 = vmatprep.subr.bf16.mxu0 0
    %1168 = vmatpush2.bf16.msra.mxu0 0
    %1169 = vmatprep.mubr.bf16.mxu0 0
    %1170 = vmatmul.mubr.bf16.gmra.mxu0 %v1131
    %v1171 = vpop.f32.mrf.mxu0
    %v1172 = vadd.f32 0.0, %v1171
    %v1173 = vpop.f32.mrf.mxu0
    %v1174 = vpop.f32.mrf.mxu0
    %v1175 = vpop.f32.mrf.mxu0
    %1176 = vdwg.mxu0
    %v1178 = vrot.slane %v1124, 4
    %1179 = vrot.lane.b32.xlu0 %v623, 56
    %v1180 = vpop.permute.xlu0 %1179
    %v1182 = vsel %vm632, %v1178, 0
    %v1185 = vsel %vm1133, %v1180, 0
    %1187 = vmatprep.subr.bf16.mxu0 0
    %1188 = vmatpush1.bf16.msra.mxu0 0
    %1189 = vmatprep.subr.bf16.mxu0 0
    %1190 = vmatpush1.bf16.msra.mxu0 0
    %1191 = vmatprep.subr.bf16.mxu0 0
    %1192 = vmatpush1.bf16.msra.mxu0 0
    %1193 = vmatprep.subr.bf16.mxu0 0
    %1194 = vmatpush1.bf16.msra.mxu0 0
    %1195 = vmatprep.subr.bf16.mxu0 0
    %1196 = vmatpush1.bf16.msra.mxu0 0
    %1197 = vmatprep.subr.bf16.mxu0 0
    %1198 = vmatpush1.bf16.msra.mxu0 0
    %1199 = vmatprep.subr.bf16.mxu0 0
    %1200 = vmatpush1.bf16.msra.mxu0 0
    %1201 = vmatprep.subr.bf16.mxu0 0
    %1202 = vmatpush1.bf16.msra.mxu0 %v1185
    %1203 = vmatprep.subr.bf16.mxu0 0
    %1204 = vmatpush2.bf16.msra.mxu0 0
    %1205 = vmatprep.subr.bf16.mxu0 0
    %1206 = vmatpush2.bf16.msra.mxu0 0
    %1207 = vmatprep.subr.bf16.mxu0 0
    %1208 = vmatpush2.bf16.msra.mxu0 0
    %1209 = vmatprep.subr.bf16.mxu0 0
    %1210 = vmatpush2.bf16.msra.mxu0 0
    %1211 = vmatprep.subr.bf16.mxu0 0
    %1212 = vmatpush2.bf16.msra.mxu0 0
    %1213 = vmatprep.subr.bf16.mxu0 0
    %1214 = vmatpush2.bf16.msra.mxu0 0
    %1215 = vmatprep.subr.bf16.mxu0 0
    %1216 = vmatpush2.bf16.msra.mxu0 0
    %1217 = vmatprep.subr.bf16.mxu0 0
    %1218 = vmatpush2.bf16.msra.mxu0 0
    %1219 = vmatprep.mubr.bf16.mxu0 0
    %1220 = vmatmul.mubr.bf16.gmra.mxu0 %v1182
    %v1221 = vpop.f32.mrf.mxu0
    %v1222 = vadd.f32 0.0, %v1221
    %v1223 = vpop.f32.mrf.mxu0
    %v1224 = vpop.f32.mrf.mxu0
    %v1225 = vpop.f32.mrf.mxu0
    %1226 = vdwg.mxu0
    %1227 = vrot.lane.b32.xlu0 %v623, 48
    %v1228 = vpop.permute.xlu0 %1227
    %v1230 = vsel %vm632, %v1125, 0
    %v1233 = vsel %vm1133, %v1228, 0
    %1235 = vmatprep.subr.bf16.mxu0 0
    %1236 = vmatpush1.bf16.msra.mxu0 0
    %1237 = vmatprep.subr.bf16.mxu0 0
    %1238 = vmatpush1.bf16.msra.mxu0 0
    %1239 = vmatprep.subr.bf16.mxu0 0
    %1240 = vmatpush1.bf16.msra.mxu0 0
    %1241 = vmatprep.subr.bf16.mxu0 0
    %1242 = vmatpush1.bf16.msra.mxu0 0
    %1243 = vmatprep.subr.bf16.mxu0 0
    %1244 = vmatpush1.bf16.msra.mxu0 0
    %1245 = vmatprep.subr.bf16.mxu0 0
    %1246 = vmatpush1.bf16.msra.mxu0 0
    %1247 = vmatprep.subr.bf16.mxu0 0
    %1248 = vmatpush1.bf16.msra.mxu0 0
    %1249 = vmatprep.subr.bf16.mxu0 0
    %1250 = vmatpush1.bf16.msra.mxu0 %v1233
    %1251 = vmatprep.subr.bf16.mxu0 0
    %1252 = vmatpush2.bf16.msra.mxu0 0
    %1253 = vmatprep.subr.bf16.mxu0 0
    %1254 = vmatpush2.bf16.msra.mxu0 0
    %1255 = vmatprep.subr.bf16.mxu0 0
    %1256 = vmatpush2.bf16.msra.mxu0 0
    %1257 = vmatprep.subr.bf16.mxu0 0
    %1258 = vmatpush2.bf16.msra.mxu0 0
    %1259 = vmatprep.subr.bf16.mxu0 0
    %1260 = vmatpush2.bf16.msra.mxu0 0
    %1261 = vmatprep.subr.bf16.mxu0 0
    %1262 = vmatpush2.bf16.msra.mxu0 0
    %1263 = vmatprep.subr.bf16.mxu0 0
    %1264 = vmatpush2.bf16.msra.mxu0 0
    %1265 = vmatprep.subr.bf16.mxu0 0
    %1266 = vmatpush2.bf16.msra.mxu0 0
    %1267 = vmatprep.mubr.bf16.mxu0 0
    %1268 = vmatmul.mubr.bf16.gmra.mxu0 %v1230
    %v1269 = vpop.f32.mrf.mxu0
    %v1270 = vadd.f32 0.0, %v1269
    %v1271 = vpop.f32.mrf.mxu0
    %v1272 = vpop.f32.mrf.mxu0
    %v1273 = vpop.f32.mrf.mxu0
    %1274 = vdwg.mxu0
    %v1276 = vrot.slane %v1125, 4
    %1277 = vrot.lane.b32.xlu0 %v623, 40
    %v1278 = vpop.permute.xlu0 %1277
    %v1280 = vsel %vm632, %v1276, 0
    %v1283 = vsel %vm1133, %v1278, 0
    %1285 = vmatprep.subr.bf16.mxu0 0
    %1286 = vmatpush1.bf16.msra.mxu0 0
    %1287 = vmatprep.subr.bf16.mxu0 0
    %1288 = vmatpush1.bf16.msra.mxu0 0
    %1289 = vmatprep.subr.bf16.mxu0 0
    %1290 = vmatpush1.bf16.msra.mxu0 0
    %1291 = vmatprep.subr.bf16.mxu0 0
    %1292 = vmatpush1.bf16.msra.mxu0 0
    %1293 = vmatprep.subr.bf16.mxu0 0
    %1294 = vmatpush1.bf16.msra.mxu0 0
    %1295 = vmatprep.subr.bf16.mxu0 0
    %1296 = vmatpush1.bf16.msra.mxu0 0
    %1297 = vmatprep.subr.bf16.mxu0 0
    %1298 = vmatpush1.bf16.msra.mxu0 0
    %1299 = vmatprep.subr.bf16.mxu0 0
    %1300 = vmatpush1.bf16.msra.mxu0 %v1283
    %1301 = vmatprep.subr.bf16.mxu0 0
    %1302 = vmatpush2.bf16.msra.mxu0 0
    %1303 = vmatprep.subr.bf16.mxu0 0
    %1304 = vmatpush2.bf16.msra.mxu0 0
    %1305 = vmatprep.subr.bf16.mxu0 0
    %1306 = vmatpush2.bf16.msra.mxu0 0
    %1307 = vmatprep.subr.bf16.mxu0 0
    %1308 = vmatpush2.bf16.msra.mxu0 0
    %1309 = vmatprep.subr.bf16.mxu0 0
    %1310 = vmatpush2.bf16.msra.mxu0 0
    %1311 = vmatprep.subr.bf16.mxu0 0
    %1312 = vmatpush2.bf16.msra.mxu0 0
    %1313 = vmatprep.subr.bf16.mxu0 0
    %1314 = vmatpush2.bf16.msra.mxu0 0
    %1315 = vmatprep.subr.bf16.mxu0 0
    %1316 = vmatpush2.bf16.msra.mxu0 0
    %1317 = vmatprep.mubr.bf16.mxu0 0
    %1318 = vmatmul.mubr.bf16.gmra.mxu0 %v1280
    %v1319 = vpop.f32.mrf.mxu0
    %v1320 = vadd.f32 0.0, %v1319
    %v1321 = vpop.f32.mrf.mxu0
    %v1322 = vpop.f32.mrf.mxu0
    %v1323 = vpop.f32.mrf.mxu0
    %1324 = vdwg.mxu0
    %1326 = vrot.lane.b32.xlu0 %v1222, 8
    %v1327 = vpop.permute.xlu0 %1326
    %1330 = vrot.lane.b32.xlu0 %v1270, 16
    %v1331 = vpop.permute.xlu0 %1330
    %1334 = vrot.lane.b32.xlu0 %v1320, 24
    %v1335 = vpop.permute.xlu0 %1334
    %v1337 = vsel %vm632, %v1172, %v1327
    %vm1338 = vcmask 130048
    %v1339 = vsel %vm1338, %v1337, %v1331
    %vm1340 = vcmask 195584
    %v1341 = vsel %vm1340, %v1339, %v1335
    %1342 = vrot.lane.b32.xlu0 %v829, 64
    %v1343 = vpop.permute.xlu0 %1342
    %v1345 = vsel %vm632, %v1126, 0
    %v1348 = vsel %vm1133, %v1343, 0
    %1350 = vmatprep.subr.bf16.mxu0 0
    %1351 = vmatpush1.bf16.msra.mxu0 0
    %1352 = vmatprep.subr.bf16.mxu0 0
    %1353 = vmatpush1.bf16.msra.mxu0 0
    %1354 = vmatprep.subr.bf16.mxu0 0
    %1355 = vmatpush1.bf16.msra.mxu0 0
    %1356 = vmatprep.subr.bf16.mxu0 0
    %1357 = vmatpush1.bf16.msra.mxu0 0
    %1358 = vmatprep.subr.bf16.mxu0 0
    %1359 = vmatpush1.bf16.msra.mxu0 0
    %1360 = vmatprep.subr.bf16.mxu0 0
    %1361 = vmatpush1.bf16.msra.mxu0 0
    %1362 = vmatprep.subr.bf16.mxu0 0
    %1363 = vmatpush1.bf16.msra.mxu0 0
    %1364 = vmatprep.subr.bf16.mxu0 0
    %1365 = vmatpush1.bf16.msra.mxu0 %v1348
    %1366 = vmatprep.subr.bf16.mxu0 0
    %1367 = vmatpush2.bf16.msra.mxu0 0
    %1368 = vmatprep.subr.bf16.mxu0 0
    %1369 = vmatpush2.bf16.msra.mxu0 0
    %1370 = vmatprep.subr.bf16.mxu0 0
    %1371 = vmatpush2.bf16.msra.mxu0 0
    %1372 = vmatprep.subr.bf16.mxu0 0
    %1373 = vmatpush2.bf16.msra.mxu0 0
    %1374 = vmatprep.subr.bf16.mxu0 0
    %1375 = vmatpush2.bf16.msra.mxu0 0
    %1376 = vmatprep.subr.bf16.mxu0 0
    %1377 = vmatpush2.bf16.msra.mxu0 0
    %1378 = vmatprep.subr.bf16.mxu0 0
    %1379 = vmatpush2.bf16.msra.mxu0 0
    %1380 = vmatprep.subr.bf16.mxu0 0
    %1381 = vmatpush2.bf16.msra.mxu0 0
    %1382 = vmatprep.mubr.bf16.mxu0 0
    %1383 = vmatmul.mubr.bf16.gmra.mxu0 %v1345
    %v1384 = vpop.f32.mrf.mxu0
    %v1385 = vadd.f32 0.0, %v1384
    %v1386 = vpop.f32.mrf.mxu0
    %v1387 = vpop.f32.mrf.mxu0
    %v1388 = vpop.f32.mrf.mxu0
    %1389 = vdwg.mxu0
    %v1391 = vrot.slane %v1126, 4
    %1392 = vrot.lane.b32.xlu0 %v829, 56
    %v1393 = vpop.permute.xlu0 %1392
    %v1395 = vsel %vm632, %v1391, 0
    %v1398 = vsel %vm1133, %v1393, 0
    %1400 = vmatprep.subr.bf16.mxu0 0
    %1401 = vmatpush1.bf16.msra.mxu0 0
    %1402 = vmatprep.subr.bf16.mxu0 0
    %1403 = vmatpush1.bf16.msra.mxu0 0
    %1404 = vmatprep.subr.bf16.mxu0 0
    %1405 = vmatpush1.bf16.msra.mxu0 0
    %1406 = vmatprep.subr.bf16.mxu0 0
    %1407 = vmatpush1.bf16.msra.mxu0 0
    %1408 = vmatprep.subr.bf16.mxu0 0
    %1409 = vmatpush1.bf16.msra.mxu0 0
    %1410 = vmatprep.subr.bf16.mxu0 0
    %1411 = vmatpush1.bf16.msra.mxu0 0
    %1412 = vmatprep.subr.bf16.mxu0 0
    %1413 = vmatpush1.bf16.msra.mxu0 0
    %1414 = vmatprep.subr.bf16.mxu0 0
    %1415 = vmatpush1.bf16.msra.mxu0 %v1398
    %1416 = vmatprep.subr.bf16.mxu0 0
    %1417 = vmatpush2.bf16.msra.mxu0 0
    %1418 = vmatprep.subr.bf16.mxu0 0
    %1419 = vmatpush2.bf16.msra.mxu0 0
    %1420 = vmatprep.subr.bf16.mxu0 0
    %1421 = vmatpush2.bf16.msra.mxu0 0
    %1422 = vmatprep.subr.bf16.mxu0 0
    %1423 = vmatpush2.bf16.msra.mxu0 0
    %1424 = vmatprep.subr.bf16.mxu0 0
    %1425 = vmatpush2.bf16.msra.mxu0 0
    %1426 = vmatprep.subr.bf16.mxu0 0
    %1427 = vmatpush2.bf16.msra.mxu0 0
    %1428 = vmatprep.subr.bf16.mxu0 0
    %1429 = vmatpush2.bf16.msra.mxu0 0
    %1430 = vmatprep.subr.bf16.mxu0 0
    %1431 = vmatpush2.bf16.msra.mxu0 0
    %1432 = vmatprep.mubr.bf16.mxu0 0
    %1433 = vmatmul.mubr.bf16.gmra.mxu0 %v1395
    %v1434 = vpop.f32.mrf.mxu0
    %v1435 = vadd.f32 0.0, %v1434
    %v1436 = vpop.f32.mrf.mxu0
    %v1437 = vpop.f32.mrf.mxu0
    %v1438 = vpop.f32.mrf.mxu0
    %1439 = vdwg.mxu0
    %1440 = vrot.lane.b32.xlu0 %v829, 48
    %v1441 = vpop.permute.xlu0 %1440
    %v1443 = vsel %vm632, %v1127, 0
    %v1446 = vsel %vm1133, %v1441, 0
    %1448 = vmatprep.subr.bf16.mxu0 0
    %1449 = vmatpush1.bf16.msra.mxu0 0
    %1450 = vmatprep.subr.bf16.mxu0 0
    %1451 = vmatpush1.bf16.msra.mxu0 0
    %1452 = vmatprep.subr.bf16.mxu0 0
    %1453 = vmatpush1.bf16.msra.mxu0 0
    %1454 = vmatprep.subr.bf16.mxu0 0
    %1455 = vmatpush1.bf16.msra.mxu0 0
    %1456 = vmatprep.subr.bf16.mxu0 0
    %1457 = vmatpush1.bf16.msra.mxu0 0
    %1458 = vmatprep.subr.bf16.mxu0 0
    %1459 = vmatpush1.bf16.msra.mxu0 0
    %1460 = vmatprep.subr.bf16.mxu0 0
    %1461 = vmatpush1.bf16.msra.mxu0 0
    %1462 = vmatprep.subr.bf16.mxu0 0
    %1463 = vmatpush1.bf16.msra.mxu0 %v1446
    %1464 = vmatprep.subr.bf16.mxu0 0
    %1465 = vmatpush2.bf16.msra.mxu0 0
    %1466 = vmatprep.subr.bf16.mxu0 0
    %1467 = vmatpush2.bf16.msra.mxu0 0
    %1468 = vmatprep.subr.bf16.mxu0 0
    %1469 = vmatpush2.bf16.msra.mxu0 0
    %1470 = vmatprep.subr.bf16.mxu0 0
    %1471 = vmatpush2.bf16.msra.mxu0 0
    %1472 = vmatprep.subr.bf16.mxu0 0
    %1473 = vmatpush2.bf16.msra.mxu0 0
    %1474 = vmatprep.subr.bf16.mxu0 0
    %1475 = vmatpush2.bf16.msra.mxu0 0
    %1476 = vmatprep.subr.bf16.mxu0 0
    %1477 = vmatpush2.bf16.msra.mxu0 0
    %1478 = vmatprep.subr.bf16.mxu0 0
    %1479 = vmatpush2.bf16.msra.mxu0 0
    %1480 = vmatprep.mubr.bf16.mxu0 0
    %1481 = vmatmul.mubr.bf16.gmra.mxu0 %v1443
    %v1482 = vpop.f32.mrf.mxu0
    %v1483 = vadd.f32 0.0, %v1482
    %v1484 = vpop.f32.mrf.mxu0
    %v1485 = vpop.f32.mrf.mxu0
    %v1486 = vpop.f32.mrf.mxu0
    %1487 = vdwg.mxu0
    %v1489 = vrot.slane %v1127, 4
    %1490 = vrot.lane.b32.xlu0 %v829, 40
    %v1491 = vpop.permute.xlu0 %1490
    %v1493 = vsel %vm632, %v1489, 0
    %v1496 = vsel %vm1133, %v1491, 0
    %1498 = vmatprep.subr.bf16.mxu0 0
    %1499 = vmatpush1.bf16.msra.mxu0 0
    %1500 = vmatprep.subr.bf16.mxu0 0
    %1501 = vmatpush1.bf16.msra.mxu0 0
    %1502 = vmatprep.subr.bf16.mxu0 0
    %1503 = vmatpush1.bf16.msra.mxu0 0
    %1504 = vmatprep.subr.bf16.mxu0 0
    %1505 = vmatpush1.bf16.msra.mxu0 0
    %1506 = vmatprep.subr.bf16.mxu0 0
    %1507 = vmatpush1.bf16.msra.mxu0 0
    %1508 = vmatprep.subr.bf16.mxu0 0
    %1509 = vmatpush1.bf16.msra.mxu0 0
    %1510 = vmatprep.subr.bf16.mxu0 0
    %1511 = vmatpush1.bf16.msra.mxu0 0
    %1512 = vmatprep.subr.bf16.mxu0 0
    %1513 = vmatpush1.bf16.msra.mxu0 %v1496
    %1514 = vmatprep.subr.bf16.mxu0 0
    %1515 = vmatpush2.bf16.msra.mxu0 0
    %1516 = vmatprep.subr.bf16.mxu0 0
    %1517 = vmatpush2.bf16.msra.mxu0 0
    %1518 = vmatprep.subr.bf16.mxu0 0
    %1519 = vmatpush2.bf16.msra.mxu0 0
    %1520 = vmatprep.subr.bf16.mxu0 0
    %1521 = vmatpush2.bf16.msra.mxu0 0
    %1522 = vmatprep.subr.bf16.mxu0 0
    %1523 = vmatpush2.bf16.msra.mxu0 0
    %1524 = vmatprep.subr.bf16.mxu0 0
    %1525 = vmatpush2.bf16.msra.mxu0 0
    %1526 = vmatprep.subr.bf16.mxu0 0
    %1527 = vmatpush2.bf16.msra.mxu0 0
    %1528 = vmatprep.subr.bf16.mxu0 0
    %1529 = vmatpush2.bf16.msra.mxu0 0
    %1530 = vmatprep.mubr.bf16.mxu0 0
    %1531 = vmatmul.mubr.bf16.gmra.mxu0 %v1493
    %v1532 = vpop.f32.mrf.mxu0
    %v1533 = vadd.f32 0.0, %v1532
    %v1534 = vpop.f32.mrf.mxu0
    %v1535 = vpop.f32.mrf.mxu0
    %v1536 = vpop.f32.mrf.mxu0
    %1537 = vdwg.mxu0
    %1539 = vrot.lane.b32.xlu0 %v1435, 8
    %v1540 = vpop.permute.xlu0 %1539
    %1543 = vrot.lane.b32.xlu0 %v1483, 16
    %v1544 = vpop.permute.xlu0 %1543
    %1547 = vrot.lane.b32.xlu0 %v1533, 24
    %v1548 = vpop.permute.xlu0 %1547
    %v1550 = vsel %vm632, %v1385, %v1540
    %v1551 = vsel %vm1338, %v1550, %v1544
    %v1552 = vsel %vm1340, %v1551, %v1548
    %v1553 = vpack.c.bf16 %v1552, %v1341
    %v1555 = vlaneseq
    %v1556 = vshrl.u32 %v1555, 7
    %v1557 = vsub.s32 0, %v1556
    %v1558 = vrot.slane %v628, %v1557
    %v1564 = vunpack.c.l.b16 %v624
    %v1565 = vunpack.c.l.b16 %v625
    %v1566 = vunpack.c.l.b16 %v626
    %v1567 = vunpack.c.l.b16 %v627
    %v1568 = vpack.c.b16 %v1565, %v1564
    %v1569 = vpack.c.b16 %v1567, %v1566
    %v1573 = vsel %vm578, %v1553, 0
    %1575 = vmatprep.subr.bf16.mxu0 0
    %1576 = vmatpush1.bf16.msra.mxu0 0
    %1577 = vmatprep.subr.bf16.mxu0 0
    %1578 = vmatpush1.bf16.msra.mxu0 0
    %1579 = vmatprep.subr.bf16.mxu0 0
    %1580 = vmatpush1.bf16.msra.mxu0 0
    %1581 = vmatprep.subr.bf16.mxu0 0
    %1582 = vmatpush1.bf16.msra.mxu0 0
    %1583 = vmatprep.subr.bf16.mxu0 0
    %1584 = vmatpush1.bf16.msra.mxu0 0
    %1585 = vmatprep.subr.bf16.mxu0 0
    %1586 = vmatpush1.bf16.msra.mxu0 0
    %1587 = vmatprep.subr.bf16.mxu0 0
    %1588 = vmatpush1.bf16.msra.mxu0 %v1569
    %1589 = vmatprep.subr.bf16.mxu0 0
    %1590 = vmatpush1.bf16.msra.mxu0 %v1568
    %1591 = vmatprep.subr.bf16.mxu0 0
    %1592 = vmatpush2.bf16.msra.mxu0 0
    %1593 = vmatprep.subr.bf16.mxu0 0
    %1594 = vmatpush2.bf16.msra.mxu0 0
    %1595 = vmatprep.subr.bf16.mxu0 0
    %1596 = vmatpush2.bf16.msra.mxu0 0
    %1597 = vmatprep.subr.bf16.mxu0 0
    %1598 = vmatpush2.bf16.msra.mxu0 0
    %1599 = vmatprep.subr.bf16.mxu0 0
    %1600 = vmatpush2.bf16.msra.mxu0 0
    %1601 = vmatprep.subr.bf16.mxu0 0
    %1602 = vmatpush2.bf16.msra.mxu0 0
    %1603 = vmatprep.subr.bf16.mxu0 0
    %1604 = vmatpush2.bf16.msra.mxu0 0
    %1605 = vmatprep.subr.bf16.mxu0 0
    %1606 = vmatpush2.bf16.msra.mxu0 0
    %1607 = vmatprep.mubr.bf16.mxu0 0
    %1608 = vmatmul.mubr.bf16.gmra.mxu0 %v1573
    %v1609 = vpop.f32.mrf.mxu0
    %v1610 = vadd.f32 %v1558, %v1609
    %v1611 = vpop.f32.mrf.mxu0
    %v1612 = vpop.f32.mrf.mxu0
    %v1613 = vadd.f32 %v1558, %v1612
    %v1614 = vpop.f32.mrf.mxu0
    %1615 = vdwg.mxu0
    %v1616 = vadd.f32 %v548, %v1610
    %v1617 = vadd.f32 %v551, %v1613
    %v1618 = vld [vmem:[#allocation19] sm:$0x1]
    %v1619 = vld [vmem:[#allocation20] sm:$0x1]
    %v1620 = vsel %vm578, %v1616, 0.0
    %1621 = vadd.xlane.f32.xlu0 %v1620
    %v1622 = vpop.xlane.xlu0 %1621
    %v1623 = vsel %vm578, %v1617, 0.0
    %1624 = vadd.xlane.f32.xlu0 %v1623
    %v1625 = vpop.xlane.xlu0 %1624
    %v1626 = vrcp.pop 32.0
    %v1627 = vmul.f32 %v1622, %v1626
    %v1628 = vmul.f32 %v1625, %v1626
    %v1629 = vsub.f32 %v1616, %v1627
    %v1630 = vsub.f32 %v1617, %v1628
    %v1631 = vmul.f32 %v1629, %v1629
    %v1632 = vmul.f32 %v1630, %v1630
    %v1633 = vsel %vm578, %v1631, 0.0
    %1634 = vadd.xlane.f32.xlu0 %v1633
    %v1635 = vpop.xlane.xlu0 %1634
    %v1636 = vsel %vm578, %v1632, 0.0
    %1637 = vadd.xlane.f32.xlu0 %v1636
    %v1638 = vpop.xlane.xlu0 %1637
    %v1639 = vmul.f32 %v1635, %v1626
    %v1640 = vmul.f32 %v1638, %v1626
    %v1641 = vadd.f32 %v1639, 1e-05
    %v1642 = vadd.f32 %v1640, 1e-05
    %v1643 = vrsqrt.pop %v1641
    %v1644 = vrsqrt.pop %v1642
    %v1645 = vmul.f32 %v1629, %v1643
    %v1646 = vmul.f32 %v1630, %v1644
    %v1648 = vlaneseq
    %v1649 = vshrl.u32 %v1648, 7
    %v1650 = vsub.s32 0, %v1649
    %v1651 = vrot.slane %v1618, %v1650
    %v1653 = vmul.f32 %v1645, %v1651
    %v1654 = vmul.f32 %v1646, %v1651
    %v1656 = vlaneseq
    %v1657 = vshrl.u32 %v1656, 7
    %v1658 = vsub.s32 0, %v1657
    %v1659 = vrot.slane %v1619, %v1658
    %v1661 = vadd.f32 %v1653, %v1659
    %v1662 = vadd.f32 %v1654, %v1659
    %v1663 = vpack.c.bf16 %v1662, %v1661
    %v1664 = vld [vmem:[#allocation10] sm:$0xf]
    %v1665 = vld [vmem:[#allocation10 + $0x4] sm:$0xf]
    %v1666 = vld [vmem:[#allocation10 + $0x8] sm:$0xf]
    %v1667 = vld [vmem:[#allocation10 + $0xc] sm:$0xf]
    %v1668 = vld [vmem:[#allocation11] sm:$0x1]
    %v1670 = vlaneseq
    %v1671 = vshrl.u32 %v1670, 7
    %v1672 = vsub.s32 0, %v1671
    %v1673 = vrot.slane %v1668, %v1672
    %v1679 = vunpack.c.l.b16 %v1664
    %v1680 = vunpack.c.l.b16 %v1665
    %v1681 = vunpack.c.l.b16 %v1666
    %v1682 = vunpack.c.l.b16 %v1667
    %v1683 = vpack.c.b16 %v1680, %v1679
    %v1684 = vpack.c.b16 %v1682, %v1681
    %v1688 = vsel %vm578, %v1663, 0
    %1690 = vmatprep.subr.bf16.mxu0 0
    %1691 = vmatpush1.bf16.msra.mxu0 0
    %1692 = vmatprep.subr.bf16.mxu0 0
    %1693 = vmatpush1.bf16.msra.mxu0 0
    %1694 = vmatprep.subr.bf16.mxu0 0
    %1695 = vmatpush1.bf16.msra.mxu0 0
    %1696 = vmatprep.subr.bf16.mxu0 0
    %1697 = vmatpush1.bf16.msra.mxu0 0
    %1698 = vmatprep.subr.bf16.mxu0 0
    %1699 = vmatpush1.bf16.msra.mxu0 0
    %1700 = vmatprep.subr.bf16.mxu0 0
    %1701 = vmatpush1.bf16.msra.mxu0 0
    %1702 = vmatprep.subr.bf16.mxu0 0
    %1703 = vmatpush1.bf16.msra.mxu0 %v1684
    %1704 = vmatprep.subr.bf16.mxu0 0
    %1705 = vmatpush1.bf16.msra.mxu0 %v1683
    %1706 = vmatprep.subr.bf16.mxu0 0
    %1707 = vmatpush2.bf16.msra.mxu0 0
    %1708 = vmatprep.subr.bf16.mxu0 0
    %1709 = vmatpush2.bf16.msra.mxu0 0
    %1710 = vmatprep.subr.bf16.mxu0 0
    %1711 = vmatpush2.bf16.msra.mxu0 0
    %1712 = vmatprep.subr.bf16.mxu0 0
    %1713 = vmatpush2.bf16.msra.mxu0 0
    %1714 = vmatprep.subr.bf16.mxu0 0
    %1715 = vmatpush2.bf16.msra.mxu0 0
    %1716 = vmatprep.subr.bf16.mxu0 0
    %1717 = vmatpush2.bf16.msra.mxu0 0
    %1718 = vmatprep.subr.bf16.mxu0 0
    %1719 = vmatpush2.bf16.msra.mxu0 0
    %1720 = vmatprep.subr.bf16.mxu0 0
    %1721 = vmatpush2.bf16.msra.mxu0 0
    %1722 = vmatprep.mubr.bf16.mxu0 0
    %1723 = vmatmul.mubr.bf16.gmra.mxu0 %v1688
    %v1724 = vpop.f32.mrf.mxu0
    %v1725 = vadd.f32 %v1673, %v1724
    %v1726 = vpop.f32.mrf.mxu0
    %v1727 = vpop.f32.mrf.mxu0
    %v1728 = vadd.f32 %v1673, %v1727
    %v1729 = vpop.f32.mrf.mxu0
    %1730 = vdwg.mxu0
    %v1731 = vpack.c.bf16 %v1728, %v1725
    %v1732 = vld [vmem:[#allocation13] sm:$0xf]
    %v1733 = vld [vmem:[#allocation13 + $0x4] sm:$0xf]
    %v1734 = vld [vmem:[#allocation13 + $0x8] sm:$0xf]
    %v1735 = vld [vmem:[#allocation13 + $0xc] sm:$0xf]
    %v1736 = vld [vmem:[#allocation14] sm:$0x1]
    %v1738 = vlaneseq
    %v1739 = vshrl.u32 %v1738, 7
    %v1740 = vsub.s32 0, %v1739
    %v1741 = vrot.slane %v1736, %v1740
    %v1747 = vunpack.c.l.b16 %v1732
    %v1748 = vunpack.c.l.b16 %v1733
    %v1749 = vunpack.c.l.b16 %v1734
    %v1750 = vunpack.c.l.b16 %v1735
    %v1751 = vpack.c.b16 %v1748, %v1747
    %v1752 = vpack.c.b16 %v1750, %v1749
    %v1756 = vsel %vm578, %v467, 0
    %1758 = vmatprep.subr.bf16.mxu0 0
    %1759 = vmatpush1.bf16.msra.mxu0 0
    %1760 = vmatprep.subr.bf16.mxu0 0
    %1761 = vmatpush1.bf16.msra.mxu0 0
    %1762 = vmatprep.subr.bf16.mxu0 0
    %1763 = vmatpush1.bf16.msra.mxu0 0
    %1764 = vmatprep.subr.bf16.mxu0 0
    %1765 = vmatpush1.bf16.msra.mxu0 0
    %1766 = vmatprep.subr.bf16.mxu0 0
    %1767 = vmatpush1.bf16.msra.mxu0 0
    %1768 = vmatprep.subr.bf16.mxu0 0
    %1769 = vmatpush1.bf16.msra.mxu0 0
    %1770 = vmatprep.subr.bf16.mxu0 0
    %1771 = vmatpush1.bf16.msra.mxu0 %v1752
    %1772 = vmatprep.subr.bf16.mxu0 0
    %1773 = vmatpush1.bf16.msra.mxu0 %v1751
    %1774 = vmatprep.subr.bf16.mxu0 0
    %1775 = vmatpush2.bf16.msra.mxu0 0
    %1776 = vmatprep.subr.bf16.mxu0 0
    %1777 = vmatpush2.bf16.msra.mxu0 0
    %1778 = vmatprep.subr.bf16.mxu0 0
    %1779 = vmatpush2.bf16.msra.mxu0 0
    %1780 = vmatprep.subr.bf16.mxu0 0
    %1781 = vmatpush2.bf16.msra.mxu0 0
    %1782 = vmatprep.subr.bf16.mxu0 0
    %1783 = vmatpush2.bf16.msra.mxu0 0
    %1784 = vmatprep.subr.bf16.mxu0 0
    %1785 = vmatpush2.bf16.msra.mxu0 0
    %1786 = vmatprep.subr.bf16.mxu0 0
    %1787 = vmatpush2.bf16.msra.mxu0 0
    %1788 = vmatprep.subr.bf16.mxu0 0
    %1789 = vmatpush2.bf16.msra.mxu0 0
    %1790 = vmatprep.mubr.bf16.mxu0 0
    %1791 = vmatmul.mubr.bf16.gmra.mxu0 %v1756
    %v1792 = vpop.f32.mrf.mxu0
    %v1793 = vadd.f32 %v1741, %v1792
    %v1794 = vpop.f32.mrf.mxu0
    %v1795 = vpop.f32.mrf.mxu0
    %v1796 = vadd.f32 %v1741, %v1795
    %v1797 = vpop.f32.mrf.mxu0
    %1798 = vdwg.mxu0
    %v1799 = vpack.c.bf16 %v1796, %v1793
    %v1800 = vld [vmem:[#allocation16] sm:$0xf]
    %v1801 = vld [vmem:[#allocation16 + $0x4] sm:$0xf]
    %v1802 = vld [vmem:[#allocation16 + $0x8] sm:$0xf]
    %v1803 = vld [vmem:[#allocation16 + $0xc] sm:$0xf]
    %v1804 = vld [vmem:[#allocation17] sm:$0x1]
    %v1806 = vsel %vm632, %v1731, 0
    %v1809 = vsel %vm632, %v1799, 0
    %1811 = vmatprep.subr.bf16.mxu0 0
    %1812 = vmatpush1.bf16.xpose.msra.mxu0 0
    %1813 = vmatprep.subr.bf16.mxu0 0
    %1814 = vmatpush1.bf16.xpose.msra.mxu0 0
    %1815 = vmatprep.subr.bf16.mxu0 0
    %1816 = vmatpush1.bf16.xpose.msra.mxu0 0
    %1817 = vmatprep.subr.bf16.mxu0 0
    %1818 = vmatpush1.bf16.xpose.msra.mxu0 0
    %1819 = vmatprep.subr.bf16.mxu0 0
    %1820 = vmatpush1.bf16.xpose.msra.mxu0 0
    %1821 = vmatprep.subr.bf16.mxu0 0
    %1822 = vmatpush1.bf16.xpose.msra.mxu0 0
    %1823 = vmatprep.subr.bf16.mxu0 0
    %1824 = vmatpush1.bf16.xpose.msra.mxu0 0
    %1825 = vmatprep.subr.bf16.mxu0 0
    %1826 = vmatpush1.bf16.xpose.msra.mxu0 %v1809
    %1827 = vmatprep.subr.bf16.mxu0 0
    %1828 = vmatpush2.bf16.xpose.msra.mxu0 0
    %1829 = vmatprep.subr.bf16.mxu0 0
    %1830 = vmatpush2.bf16.xpose.msra.mxu0 0
    %1831 = vmatprep.subr.bf16.mxu0 0
    %1832 = vmatpush2.bf16.xpose.msra.mxu0 0
    %1833 = vmatprep.subr.bf16.mxu0 0
    %1834 = vmatpush2.bf16.xpose.msra.mxu0 0
    %1835 = vmatprep.subr.bf16.mxu0 0
    %1836 = vmatpush2.bf16.xpose.msra.mxu0 0
    %1837 = vmatprep.subr.bf16.mxu0 0
    %1838 = vmatpush2.bf16.xpose.msra.mxu0 0
    %1839 = vmatprep.subr.bf16.mxu0 0
    %1840 = vmatpush2.bf16.xpose.msra.mxu0 0
    %1841 = vmatprep.subr.bf16.mxu0 0
    %1842 = vmatpush2.bf16.xpose.msra.mxu0 0
    %1843 = vmatprep.mubr.bf16.mxu0 0
    %1844 = vmatmul.mubr.bf16.gmra.mxu0 %v1806
    %v1845 = vpop.f32.mrf.mxu0
    %v1846 = vadd.f32 0.0, %v1845
    %v1847 = vpop.f32.mrf.mxu0
    %v1848 = vpop.f32.mrf.mxu0
    %v1849 = vpop.f32.mrf.mxu0
    %1850 = vdwg.mxu0
    %1852 = vrot.lane.b32.xlu0 %v1731, 120
    %v1853 = vpop.permute.xlu0 %1852
    %1855 = vrot.lane.b32.xlu0 %v1799, 120
    %v1856 = vpop.permute.xlu0 %1855
    %v1858 = vsel %vm632, %v1853, 0
    %v1861 = vsel %vm632, %v1856, 0
    %1863 = vmatprep.subr.bf16.mxu0 0
    %1864 = vmatpush1.bf16.xpose.msra.mxu0 0
    %1865 = vmatprep.subr.bf16.mxu0 0
    %1866 = vmatpush1.bf16.xpose.msra.mxu0 0
    %1867 = vmatprep.subr.bf16.mxu0 0
    %1868 = vmatpush1.bf16.xpose.msra.mxu0 0
    %1869 = vmatprep.subr.bf16.mxu0 0
    %1870 = vmatpush1.bf16.xpose.msra.mxu0 0
    %1871 = vmatprep.subr.bf16.mxu0 0
    %1872 = vmatpush1.bf16.xpose.msra.mxu0 0
    %1873 = vmatprep.subr.bf16.mxu0 0
    %1874 = vmatpush1.bf16.xpose.msra.mxu0 0
    %1875 = vmatprep.subr.bf16.mxu0 0
    %1876 = vmatpush1.bf16.xpose.msra.mxu0 0
    %1877 = vmatprep.subr.bf16.mxu0 0
    %1878 = vmatpush1.bf16.xpose.msra.mxu0 %v1861
    %1879 = vmatprep.subr.bf16.mxu0 0
    %1880 = vmatpush2.bf16.xpose.msra.mxu0 0
    %1881 = vmatprep.subr.bf16.mxu0 0
    %1882 = vmatpush2.bf16.xpose.msra.mxu0 0
    %1883 = vmatprep.subr.bf16.mxu0 0
    %1884 = vmatpush2.bf16.xpose.msra.mxu0 0
    %1885 = vmatprep.subr.bf16.mxu0 0
    %1886 = vmatpush2.bf16.xpose.msra.mxu0 0
    %1887 = vmatprep.subr.bf16.mxu0 0
    %1888 = vmatpush2.bf16.xpose.msra.mxu0 0
    %1889 = vmatprep.subr.bf16.mxu0 0
    %1890 = vmatpush2.bf16.xpose.msra.mxu0 0
    %1891 = vmatprep.subr.bf16.mxu0 0
    %1892 = vmatpush2.bf16.xpose.msra.mxu0 0
    %1893 = vmatprep.subr.bf16.mxu0 0
    %1894 = vmatpush2.bf16.xpose.msra.mxu0 0
    %1895 = vmatprep.mubr.bf16.mxu0 0
    %1896 = vmatmul.mubr.bf16.gmra.mxu0 %v1858
    %v1897 = vpop.f32.mrf.mxu0
    %v1898 = vadd.f32 0.0, %v1897
    %v1899 = vpop.f32.mrf.mxu0
    %v1900 = vpop.f32.mrf.mxu0
    %v1901 = vpop.f32.mrf.mxu0
    %1902 = vdwg.mxu0
    %1903 = vrot.lane.b32.xlu0 %v1731, 112
    %v1904 = vpop.permute.xlu0 %1903
    %1905 = vrot.lane.b32.xlu0 %v1799, 112
    %v1906 = vpop.permute.xlu0 %1905
    %v1908 = vsel %vm632, %v1904, 0
    %v1911 = vsel %vm632, %v1906, 0
    %1913 = vmatprep.subr.bf16.mxu0 0
    %1914 = vmatpush1.bf16.xpose.msra.mxu0 0
    %1915 = vmatprep.subr.bf16.mxu0 0
    %1916 = vmatpush1.bf16.xpose.msra.mxu0 0
    %1917 = vmatprep.subr.bf16.mxu0 0
    %1918 = vmatpush1.bf16.xpose.msra.mxu0 0
    %1919 = vmatprep.subr.bf16.mxu0 0
    %1920 = vmatpush1.bf16.xpose.msra.mxu0 0
    %1921 = vmatprep.subr.bf16.mxu0 0
    %1922 = vmatpush1.bf16.xpose.msra.mxu0 0
    %1923 = vmatprep.subr.bf16.mxu0 0
    %1924 = vmatpush1.bf16.xpose.msra.mxu0 0
    %1925 = vmatprep.subr.bf16.mxu0 0
    %1926 = vmatpush1.bf16.xpose.msra.mxu0 0
    %1927 = vmatprep.subr.bf16.mxu0 0
    %1928 = vmatpush1.bf16.xpose.msra.mxu0 %v1911
    %1929 = vmatprep.subr.bf16.mxu0 0
    %1930 = vmatpush2.bf16.xpose.msra.mxu0 0
    %1931 = vmatprep.subr.bf16.mxu0 0
    %1932 = vmatpush2.bf16.xpose.msra.mxu0 0
    %1933 = vmatprep.subr.bf16.mxu0 0
    %1934 = vmatpush2.bf16.xpose.msra.mxu0 0
    %1935 = vmatprep.subr.bf16.mxu0 0
    %1936 = vmatpush2.bf16.xpose.msra.mxu0 0
    %1937 = vmatprep.subr.bf16.mxu0 0
    %1938 = vmatpush2.bf16.xpose.msra.mxu0 0
    %1939 = vmatprep.subr.bf16.mxu0 0
    %1940 = vmatpush2.bf16.xpose.msra.mxu0 0
    %1941 = vmatprep.subr.bf16.mxu0 0
    %1942 = vmatpush2.bf16.xpose.msra.mxu0 0
    %1943 = vmatprep.subr.bf16.mxu0 0
    %1944 = vmatpush2.bf16.xpose.msra.mxu0 0
    %1945 = vmatprep.mubr.bf16.mxu0 0
    %1946 = vmatmul.mubr.bf16.gmra.mxu0 %v1908
    %v1947 = vpop.f32.mrf.mxu0
    %v1948 = vadd.f32 0.0, %v1947
    %v1949 = vpop.f32.mrf.mxu0
    %v1950 = vpop.f32.mrf.mxu0
    %v1951 = vpop.f32.mrf.mxu0
    %1952 = vdwg.mxu0
    %1953 = vrot.lane.b32.xlu0 %v1731, 104
    %v1954 = vpop.permute.xlu0 %1953
    %1955 = vrot.lane.b32.xlu0 %v1799, 104
    %v1956 = vpop.permute.xlu0 %1955
    %v1958 = vsel %vm632, %v1954, 0
    %v1961 = vsel %vm632, %v1956, 0
    %1963 = vmatprep.subr.bf16.mxu0 0
    %1964 = vmatpush1.bf16.xpose.msra.mxu0 0
    %1965 = vmatprep.subr.bf16.mxu0 0
    %1966 = vmatpush1.bf16.xpose.msra.mxu0 0
    %1967 = vmatprep.subr.bf16.mxu0 0
    %1968 = vmatpush1.bf16.xpose.msra.mxu0 0
    %1969 = vmatprep.subr.bf16.mxu0 0
    %1970 = vmatpush1.bf16.xpose.msra.mxu0 0
    %1971 = vmatprep.subr.bf16.mxu0 0
    %1972 = vmatpush1.bf16.xpose.msra.mxu0 0
    %1973 = vmatprep.subr.bf16.mxu0 0
    %1974 = vmatpush1.bf16.xpose.msra.mxu0 0
    %1975 = vmatprep.subr.bf16.mxu0 0
    %1976 = vmatpush1.bf16.xpose.msra.mxu0 0
    %1977 = vmatprep.subr.bf16.mxu0 0
    %1978 = vmatpush1.bf16.xpose.msra.mxu0 %v1961
    %1979 = vmatprep.subr.bf16.mxu0 0
    %1980 = vmatpush2.bf16.xpose.msra.mxu0 0
    %1981 = vmatprep.subr.bf16.mxu0 0
    %1982 = vmatpush2.bf16.xpose.msra.mxu0 0
    %1983 = vmatprep.subr.bf16.mxu0 0
    %1984 = vmatpush2.bf16.xpose.msra.mxu0 0
    %1985 = vmatprep.subr.bf16.mxu0 0
    %1986 = vmatpush2.bf16.xpose.msra.mxu0 0
    %1987 = vmatprep.subr.bf16.mxu0 0
    %1988 = vmatpush2.bf16.xpose.msra.mxu0 0
    %1989 = vmatprep.subr.bf16.mxu0 0
    %1990 = vmatpush2.bf16.xpose.msra.mxu0 0
    %1991 = vmatprep.subr.bf16.mxu0 0
    %1992 = vmatpush2.bf16.xpose.msra.mxu0 0
    %1993 = vmatprep.subr.bf16.mxu0 0
    %1994 = vmatpush2.bf16.xpose.msra.mxu0 0
    %1995 = vmatprep.mubr.bf16.mxu0 0
    %1996 = vmatmul.mubr.bf16.gmra.mxu0 %v1958
    %v1997 = vpop.f32.mrf.mxu0
    %v1998 = vadd.f32 0.0, %v1997
    %v1999 = vpop.f32.mrf.mxu0
    %v2000 = vpop.f32.mrf.mxu0
    %v2001 = vpop.f32.mrf.mxu0
    %2002 = vdwg.mxu0
    %v2003 = vrot.slane %v1731, 4
    %v2004 = vrot.slane %v1799, 4
    %v2006 = vsel %vm632, %v2003, 0
    %v2009 = vsel %vm632, %v2004, 0
    %2011 = vmatprep.subr.bf16.mxu0 0
    %2012 = vmatpush1.bf16.xpose.msra.mxu0 0
    %2013 = vmatprep.subr.bf16.mxu0 0
    %2014 = vmatpush1.bf16.xpose.msra.mxu0 0
    %2015 = vmatprep.subr.bf16.mxu0 0
    %2016 = vmatpush1.bf16.xpose.msra.mxu0 0
    %2017 = vmatprep.subr.bf16.mxu0 0
    %2018 = vmatpush1.bf16.xpose.msra.mxu0 0
    %2019 = vmatprep.subr.bf16.mxu0 0
    %2020 = vmatpush1.bf16.xpose.msra.mxu0 0
    %2021 = vmatprep.subr.bf16.mxu0 0
    %2022 = vmatpush1.bf16.xpose.msra.mxu0 0
    %2023 = vmatprep.subr.bf16.mxu0 0
    %2024 = vmatpush1.bf16.xpose.msra.mxu0 0
    %2025 = vmatprep.subr.bf16.mxu0 0
    %2026 = vmatpush1.bf16.xpose.msra.mxu0 %v2009
    %2027 = vmatprep.subr.bf16.mxu0 0
    %2028 = vmatpush2.bf16.xpose.msra.mxu0 0
    %2029 = vmatprep.subr.bf16.mxu0 0
    %2030 = vmatpush2.bf16.xpose.msra.mxu0 0
    %2031 = vmatprep.subr.bf16.mxu0 0
    %2032 = vmatpush2.bf16.xpose.msra.mxu0 0
    %2033 = vmatprep.subr.bf16.mxu0 0
    %2034 = vmatpush2.bf16.xpose.msra.mxu0 0
    %2035 = vmatprep.subr.bf16.mxu0 0
    %2036 = vmatpush2.bf16.xpose.msra.mxu0 0
    %2037 = vmatprep.subr.bf16.mxu0 0
    %2038 = vmatpush2.bf16.xpose.msra.mxu0 0
    %2039 = vmatprep.subr.bf16.mxu0 0
    %2040 = vmatpush2.bf16.xpose.msra.mxu0 0
    %2041 = vmatprep.subr.bf16.mxu0 0
    %2042 = vmatpush2.bf16.xpose.msra.mxu0 0
    %2043 = vmatprep.mubr.bf16.mxu0 0
    %2044 = vmatmul.mubr.bf16.gmra.mxu0 %v2006
    %v2045 = vpop.f32.mrf.mxu0
    %v2046 = vadd.f32 0.0, %v2045
    %v2047 = vpop.f32.mrf.mxu0
    %v2048 = vpop.f32.mrf.mxu0
    %v2049 = vpop.f32.mrf.mxu0
    %2050 = vdwg.mxu0
    %2051 = vrot.lane.b32.xlu0 %v2003, 120
    %v2052 = vpop.permute.xlu0 %2051
    %2053 = vrot.lane.b32.xlu0 %v2004, 120
    %v2054 = vpop.permute.xlu0 %2053
    %v2056 = vsel %vm632, %v2052, 0
    %v2059 = vsel %vm632, %v2054, 0
    %2061 = vmatprep.subr.bf16.mxu0 0
    %2062 = vmatpush1.bf16.xpose.msra.mxu0 0
    %2063 = vmatprep.subr.bf16.mxu0 0
    %2064 = vmatpush1.bf16.xpose.msra.mxu0 0
    %2065 = vmatprep.subr.bf16.mxu0 0
    %2066 = vmatpush1.bf16.xpose.msra.mxu0 0
    %2067 = vmatprep.subr.bf16.mxu0 0
    %2068 = vmatpush1.bf16.xpose.msra.mxu0 0
    %2069 = vmatprep.subr.bf16.mxu0 0
    %2070 = vmatpush1.bf16.xpose.msra.mxu0 0
    %2071 = vmatprep.subr.bf16.mxu0 0
    %2072 = vmatpush1.bf16.xpose.msra.mxu0 0
    %2073 = vmatprep.subr.bf16.mxu0 0
    %2074 = vmatpush1.bf16.xpose.msra.mxu0 0
    %2075 = vmatprep.subr.bf16.mxu0 0
    %2076 = vmatpush1.bf16.xpose.msra.mxu0 %v2059
    %2077 = vmatprep.subr.bf16.mxu0 0
    %2078 = vmatpush2.bf16.xpose.msra.mxu0 0
    %2079 = vmatprep.subr.bf16.mxu0 0
    %2080 = vmatpush2.bf16.xpose.msra.mxu0 0
    %2081 = vmatprep.subr.bf16.mxu0 0
    %2082 = vmatpush2.bf16.xpose.msra.mxu0 0
    %2083 = vmatprep.subr.bf16.mxu0 0
    %2084 = vmatpush2.bf16.xpose.msra.mxu0 0
    %2085 = vmatprep.subr.bf16.mxu0 0
    %2086 = vmatpush2.bf16.xpose.msra.mxu0 0
    %2087 = vmatprep.subr.bf16.mxu0 0
    %2088 = vmatpush2.bf16.xpose.msra.mxu0 0
    %2089 = vmatprep.subr.bf16.mxu0 0
    %2090 = vmatpush2.bf16.xpose.msra.mxu0 0
    %2091 = vmatprep.subr.bf16.mxu0 0
    %2092 = vmatpush2.bf16.xpose.msra.mxu0 0
    %2093 = vmatprep.mubr.bf16.mxu0 0
    %2094 = vmatmul.mubr.bf16.gmra.mxu0 %v2056
    %v2095 = vpop.f32.mrf.mxu0
    %v2096 = vadd.f32 0.0, %v2095
    %v2097 = vpop.f32.mrf.mxu0
    %v2098 = vpop.f32.mrf.mxu0
    %v2099 = vpop.f32.mrf.mxu0
    %2100 = vdwg.mxu0
    %2101 = vrot.lane.b32.xlu0 %v2003, 112
    %v2102 = vpop.permute.xlu0 %2101
    %2103 = vrot.lane.b32.xlu0 %v2004, 112
    %v2104 = vpop.permute.xlu0 %2103
    %v2106 = vsel %vm632, %v2102, 0
    %v2109 = vsel %vm632, %v2104, 0
    %2111 = vmatprep.subr.bf16.mxu0 0
    %2112 = vmatpush1.bf16.xpose.msra.mxu0 0
    %2113 = vmatprep.subr.bf16.mxu0 0
    %2114 = vmatpush1.bf16.xpose.msra.mxu0 0
    %2115 = vmatprep.subr.bf16.mxu0 0
    %2116 = vmatpush1.bf16.xpose.msra.mxu0 0
    %2117 = vmatprep.subr.bf16.mxu0 0
    %2118 = vmatpush1.bf16.xpose.msra.mxu0 0
    %2119 = vmatprep.subr.bf16.mxu0 0
    %2120 = vmatpush1.bf16.xpose.msra.mxu0 0
    %2121 = vmatprep.subr.bf16.mxu0 0
    %2122 = vmatpush1.bf16.xpose.msra.mxu0 0
    %2123 = vmatprep.subr.bf16.mxu0 0
    %2124 = vmatpush1.bf16.xpose.msra.mxu0 0
    %2125 = vmatprep.subr.bf16.mxu0 0
    %2126 = vmatpush1.bf16.xpose.msra.mxu0 %v2109
    %2127 = vmatprep.subr.bf16.mxu0 0
    %2128 = vmatpush2.bf16.xpose.msra.mxu0 0
    %2129 = vmatprep.subr.bf16.mxu0 0
    %2130 = vmatpush2.bf16.xpose.msra.mxu0 0
    %2131 = vmatprep.subr.bf16.mxu0 0
    %2132 = vmatpush2.bf16.xpose.msra.mxu0 0
    %2133 = vmatprep.subr.bf16.mxu0 0
    %2134 = vmatpush2.bf16.xpose.msra.mxu0 0
    %2135 = vmatprep.subr.bf16.mxu0 0
    %2136 = vmatpush2.bf16.xpose.msra.mxu0 0
    %2137 = vmatprep.subr.bf16.mxu0 0
    %2138 = vmatpush2.bf16.xpose.msra.mxu0 0
    %2139 = vmatprep.subr.bf16.mxu0 0
    %2140 = vmatpush2.bf16.xpose.msra.mxu0 0
    %2141 = vmatprep.subr.bf16.mxu0 0
    %2142 = vmatpush2.bf16.xpose.msra.mxu0 0
    %2143 = vmatprep.mubr.bf16.mxu0 0
    %2144 = vmatmul.mubr.bf16.gmra.mxu0 %v2106
    %v2145 = vpop.f32.mrf.mxu0
    %v2146 = vadd.f32 0.0, %v2145
    %v2147 = vpop.f32.mrf.mxu0
    %v2148 = vpop.f32.mrf.mxu0
    %v2149 = vpop.f32.mrf.mxu0
    %2150 = vdwg.mxu0
    %2151 = vrot.lane.b32.xlu0 %v2003, 104
    %v2152 = vpop.permute.xlu0 %2151
    %2153 = vrot.lane.b32.xlu0 %v2004, 104
    %v2154 = vpop.permute.xlu0 %2153
    %v2156 = vsel %vm632, %v2152, 0
    %v2159 = vsel %vm632, %v2154, 0
    %2161 = vmatprep.subr.bf16.mxu0 0
    %2162 = vmatpush1.bf16.xpose.msra.mxu0 0
    %2163 = vmatprep.subr.bf16.mxu0 0
    %2164 = vmatpush1.bf16.xpose.msra.mxu0 0
    %2165 = vmatprep.subr.bf16.mxu0 0
    %2166 = vmatpush1.bf16.xpose.msra.mxu0 0
    %2167 = vmatprep.subr.bf16.mxu0 0
    %2168 = vmatpush1.bf16.xpose.msra.mxu0 0
    %2169 = vmatprep.subr.bf16.mxu0 0
    %2170 = vmatpush1.bf16.xpose.msra.mxu0 0
    %2171 = vmatprep.subr.bf16.mxu0 0
    %2172 = vmatpush1.bf16.xpose.msra.mxu0 0
    %2173 = vmatprep.subr.bf16.mxu0 0
    %2174 = vmatpush1.bf16.xpose.msra.mxu0 0
    %2175 = vmatprep.subr.bf16.mxu0 0
    %2176 = vmatpush1.bf16.xpose.msra.mxu0 %v2159
    %2177 = vmatprep.subr.bf16.mxu0 0
    %2178 = vmatpush2.bf16.xpose.msra.mxu0 0
    %2179 = vmatprep.subr.bf16.mxu0 0
    %2180 = vmatpush2.bf16.xpose.msra.mxu0 0
    %2181 = vmatprep.subr.bf16.mxu0 0
    %2182 = vmatpush2.bf16.xpose.msra.mxu0 0
    %2183 = vmatprep.subr.bf16.mxu0 0
    %2184 = vmatpush2.bf16.xpose.msra.mxu0 0
    %2185 = vmatprep.subr.bf16.mxu0 0
    %2186 = vmatpush2.bf16.xpose.msra.mxu0 0
    %2187 = vmatprep.subr.bf16.mxu0 0
    %2188 = vmatpush2.bf16.xpose.msra.mxu0 0
    %2189 = vmatprep.subr.bf16.mxu0 0
    %2190 = vmatpush2.bf16.xpose.msra.mxu0 0
    %2191 = vmatprep.subr.bf16.mxu0 0
    %2192 = vmatpush2.bf16.xpose.msra.mxu0 0
    %2193 = vmatprep.mubr.bf16.mxu0 0
    %2194 = vmatmul.mubr.bf16.gmra.mxu0 %v2156
    %v2195 = vpop.f32.mrf.mxu0
    %v2196 = vadd.f32 0.0, %v2195
    %v2197 = vpop.f32.mrf.mxu0
    %v2198 = vpop.f32.mrf.mxu0
    %v2199 = vpop.f32.mrf.mxu0
    %2200 = vdwg.mxu0
    %v2201 = vsel %vm632, %v1846, -inf
    %2202 = vmax.xlane.f32.xlu0 %v2201
    %v2203 = vpop.xlane.xlu0 %2202
    %v2204 = vsel %vm632, %v1898, -inf
    %2205 = vmax.xlane.f32.xlu0 %v2204
    %v2206 = vpop.xlane.xlu0 %2205
    %v2207 = vsel %vm632, %v1948, -inf
    %2208 = vmax.xlane.f32.xlu0 %v2207
    %v2209 = vpop.xlane.xlu0 %2208
    %v2210 = vsel %vm632, %v1998, -inf
    %2211 = vmax.xlane.f32.xlu0 %v2210
    %v2212 = vpop.xlane.xlu0 %2211
    %v2213 = vsel %vm632, %v2046, -inf
    %2214 = vmax.xlane.f32.xlu0 %v2213
    %v2215 = vpop.xlane.xlu0 %2214
    %v2216 = vsel %vm632, %v2096, -inf
    %2217 = vmax.xlane.f32.xlu0 %v2216
    %v2218 = vpop.xlane.xlu0 %2217
    %v2219 = vsel %vm632, %v2146, -inf
    %2220 = vmax.xlane.f32.xlu0 %v2219
    %v2221 = vpop.xlane.xlu0 %2220
    %v2222 = vsel %vm632, %v2196, -inf
    %2223 = vmax.xlane.f32.xlu0 %v2222
    %v2224 = vpop.xlane.xlu0 %2223
    %v2225 = vsub.f32 %v1846, %v2203
    %v2226 = vsub.f32 %v1898, %v2206
    %v2227 = vsub.f32 %v1948, %v2209
    %v2228 = vsub.f32 %v1998, %v2212
    %v2229 = vsub.f32 %v2046, %v2215
    %v2230 = vsub.f32 %v2096, %v2218
    %v2231 = vsub.f32 %v2146, %v2221
    %v2232 = vsub.f32 %v2196, %v2224
    %v2233 = vmul.f32 %v2225, 1.442695
    %v2234 = vpow.pop %v2233
    %v2235 = vmul.f32 %v2226, 1.442695
    %v2236 = vpow.pop %v2235
    %v2237 = vmul.f32 %v2227, 1.442695
    %v2238 = vpow.pop %v2237
    %v2239 = vmul.f32 %v2228, 1.442695
    %v2240 = vpow.pop %v2239
    %v2241 = vmul.f32 %v2229, 1.442695
    %v2242 = vpow.pop %v2241
    %v2243 = vmul.f32 %v2230, 1.442695
    %v2244 = vpow.pop %v2243
    %v2245 = vmul.f32 %v2231, 1.442695
    %v2246 = vpow.pop %v2245
    %v2247 = vmul.f32 %v2232, 1.442695
    %v2248 = vpow.pop %v2247
    %v2249 = vsel %vm632, %v2234, 0.0
    %2250 = vadd.xlane.f32.xlu0 %v2249
    %v2251 = vpop.xlane.xlu0 %2250
    %v2252 = vsel %vm632, %v2236, 0.0
    %2253 = vadd.xlane.f32.xlu0 %v2252
    %v2254 = vpop.xlane.xlu0 %2253
    %v2255 = vsel %vm632, %v2238, 0.0
    %2256 = vadd.xlane.f32.xlu0 %v2255
    %v2257 = vpop.xlane.xlu0 %2256
    %v2258 = vsel %vm632, %v2240, 0.0
    %2259 = vadd.xlane.f32.xlu0 %v2258
    %v2260 = vpop.xlane.xlu0 %2259
    %v2261 = vsel %vm632, %v2242, 0.0
    %2262 = vadd.xlane.f32.xlu0 %v2261
    %v2263 = vpop.xlane.xlu0 %2262
    %v2264 = vsel %vm632, %v2244, 0.0
    %2265 = vadd.xlane.f32.xlu0 %v2264
    %v2266 = vpop.xlane.xlu0 %2265
    %v2267 = vsel %vm632, %v2246, 0.0
    %2268 = vadd.xlane.f32.xlu0 %v2267
    %v2269 = vpop.xlane.xlu0 %2268
    %v2270 = vsel %vm632, %v2248, 0.0
    %2271 = vadd.xlane.f32.xlu0 %v2270
    %v2272 = vpop.xlane.xlu0 %2271
    %v2273 = vrcp.pop %v2251
    %v2274 = vrcp.pop %v2254
    %v2275 = vrcp.pop %v2257
    %v2276 = vrcp.pop %v2260
    %v2277 = vrcp.pop %v2263
    %v2278 = vrcp.pop %v2266
    %v2279 = vrcp.pop %v2269
    %v2280 = vrcp.pop %v2272
    %v2281 = vmul.f32 %v2234, %v2273
    %v2282 = vmul.f32 %v2236, %v2274
    %v2283 = vmul.f32 %v2238, %v2275
    %v2284 = vmul.f32 %v2240, %v2276
    %v2285 = vmul.f32 %v2242, %v2277
    %v2286 = vmul.f32 %v2244, %v2278
    %v2287 = vmul.f32 %v2246, %v2279
    %v2288 = vmul.f32 %v2248, %v2280
    %v2289 = vpack.c.bf16 %v2282, %v2281
    %v2290 = vpack.c.bf16 %v2284, %v2283
    %v2291 = vpack.c.bf16 %v2286, %v2285
    %v2292 = vpack.c.bf16 %v2288, %v2287
    %2293 = vrot.lane.b32.xlu0 %v1799, 96
    %v2294 = vpop.permute.xlu0 %2293
    %v2296 = vsel %vm632, %v2289, 0
    %v2299 = vsel %vm1133, %v2294, 0
    %2301 = vmatprep.subr.bf16.mxu0 0
    %2302 = vmatpush1.bf16.msra.mxu0 0
    %2303 = vmatprep.subr.bf16.mxu0 0
    %2304 = vmatpush1.bf16.msra.mxu0 0
    %2305 = vmatprep.subr.bf16.mxu0 0
    %2306 = vmatpush1.bf16.msra.mxu0 0
    %2307 = vmatprep.subr.bf16.mxu0 0
    %2308 = vmatpush1.bf16.msra.mxu0 0
    %2309 = vmatprep.subr.bf16.mxu0 0
    %2310 = vmatpush1.bf16.msra.mxu0 0
    %2311 = vmatprep.subr.bf16.mxu0 0
    %2312 = vmatpush1.bf16.msra.mxu0 0
    %2313 = vmatprep.subr.bf16.mxu0 0
    %2314 = vmatpush1.bf16.msra.mxu0 0
    %2315 = vmatprep.subr.bf16.mxu0 0
    %2316 = vmatpush1.bf16.msra.mxu0 %v2299
    %2317 = vmatprep.subr.bf16.mxu0 0
    %2318 = vmatpush2.bf16.msra.mxu0 0
    %2319 = vmatprep.subr.bf16.mxu0 0
    %2320 = vmatpush2.bf16.msra.mxu0 0
    %2321 = vmatprep.subr.bf16.mxu0 0
    %2322 = vmatpush2.bf16.msra.mxu0 0
    %2323 = vmatprep.subr.bf16.mxu0 0
    %2324 = vmatpush2.bf16.msra.mxu0 0
    %2325 = vmatprep.subr.bf16.mxu0 0
    %2326 = vmatpush2.bf16.msra.mxu0 0
    %2327 = vmatprep.subr.bf16.mxu0 0
    %2328 = vmatpush2.bf16.msra.mxu0 0
    %2329 = vmatprep.subr.bf16.mxu0 0
    %2330 = vmatpush2.bf16.msra.mxu0 0
    %2331 = vmatprep.subr.bf16.mxu0 0
    %2332 = vmatpush2.bf16.msra.mxu0 0
    %2333 = vmatprep.mubr.bf16.mxu0 0
    %2334 = vmatmul.mubr.bf16.gmra.mxu0 %v2296
    %v2335 = vpop.f32.mrf.mxu0
    %v2336 = vadd.f32 0.0, %v2335
    %v2337 = vpop.f32.mrf.mxu0
    %v2338 = vpop.f32.mrf.mxu0
    %v2339 = vpop.f32.mrf.mxu0
    %2340 = vdwg.mxu0
    %v2342 = vrot.slane %v2289, 4
    %2343 = vrot.lane.b32.xlu0 %v1799, 88
    %v2344 = vpop.permute.xlu0 %2343
    %v2346 = vsel %vm632, %v2342, 0
    %v2349 = vsel %vm1133, %v2344, 0
    %2351 = vmatprep.subr.bf16.mxu0 0
    %2352 = vmatpush1.bf16.msra.mxu0 0
    %2353 = vmatprep.subr.bf16.mxu0 0
    %2354 = vmatpush1.bf16.msra.mxu0 0
    %2355 = vmatprep.subr.bf16.mxu0 0
    %2356 = vmatpush1.bf16.msra.mxu0 0
    %2357 = vmatprep.subr.bf16.mxu0 0
    %2358 = vmatpush1.bf16.msra.mxu0 0
    %2359 = vmatprep.subr.bf16.mxu0 0
    %2360 = vmatpush1.bf16.msra.mxu0 0
    %2361 = vmatprep.subr.bf16.mxu0 0
    %2362 = vmatpush1.bf16.msra.mxu0 0
    %2363 = vmatprep.subr.bf16.mxu0 0
    %2364 = vmatpush1.bf16.msra.mxu0 0
    %2365 = vmatprep.subr.bf16.mxu0 0
    %2366 = vmatpush1.bf16.msra.mxu0 %v2349
    %2367 = vmatprep.subr.bf16.mxu0 0
    %2368 = vmatpush2.bf16.msra.mxu0 0
    %2369 = vmatprep.subr.bf16.mxu0 0
    %2370 = vmatpush2.bf16.msra.mxu0 0
    %2371 = vmatprep.subr.bf16.mxu0 0
    %2372 = vmatpush2.bf16.msra.mxu0 0
    %2373 = vmatprep.subr.bf16.mxu0 0
    %2374 = vmatpush2.bf16.msra.mxu0 0
    %2375 = vmatprep.subr.bf16.mxu0 0
    %2376 = vmatpush2.bf16.msra.mxu0 0
    %2377 = vmatprep.subr.bf16.mxu0 0
    %2378 = vmatpush2.bf16.msra.mxu0 0
    %2379 = vmatprep.subr.bf16.mxu0 0
    %2380 = vmatpush2.bf16.msra.mxu0 0
    %2381 = vmatprep.subr.bf16.mxu0 0
    %2382 = vmatpush2.bf16.msra.mxu0 0
    %2383 = vmatprep.mubr.bf16.mxu0 0
    %2384 = vmatmul.mubr.bf16.gmra.mxu0 %v2346
    %v2385 = vpop.f32.mrf.mxu0
    %v2386 = vadd.f32 0.0, %v2385
    %v2387 = vpop.f32.mrf.mxu0
    %v2388 = vpop.f32.mrf.mxu0
    %v2389 = vpop.f32.mrf.mxu0
    %2390 = vdwg.mxu0
    %2391 = vrot.lane.b32.xlu0 %v1799, 80
    %v2392 = vpop.permute.xlu0 %2391
    %v2394 = vsel %vm632, %v2290, 0
    %v2397 = vsel %vm1133, %v2392, 0
    %2399 = vmatprep.subr.bf16.mxu0 0
    %2400 = vmatpush1.bf16.msra.mxu0 0
    %2401 = vmatprep.subr.bf16.mxu0 0
    %2402 = vmatpush1.bf16.msra.mxu0 0
    %2403 = vmatprep.subr.bf16.mxu0 0
    %2404 = vmatpush1.bf16.msra.mxu0 0
    %2405 = vmatprep.subr.bf16.mxu0 0
    %2406 = vmatpush1.bf16.msra.mxu0 0
    %2407 = vmatprep.subr.bf16.mxu0 0
    %2408 = vmatpush1.bf16.msra.mxu0 0
    %2409 = vmatprep.subr.bf16.mxu0 0
    %2410 = vmatpush1.bf16.msra.mxu0 0
    %2411 = vmatprep.subr.bf16.mxu0 0
    %2412 = vmatpush1.bf16.msra.mxu0 0
    %2413 = vmatprep.subr.bf16.mxu0 0
    %2414 = vmatpush1.bf16.msra.mxu0 %v2397
    %2415 = vmatprep.subr.bf16.mxu0 0
    %2416 = vmatpush2.bf16.msra.mxu0 0
    %2417 = vmatprep.subr.bf16.mxu0 0
    %2418 = vmatpush2.bf16.msra.mxu0 0
    %2419 = vmatprep.subr.bf16.mxu0 0
    %2420 = vmatpush2.bf16.msra.mxu0 0
    %2421 = vmatprep.subr.bf16.mxu0 0
    %2422 = vmatpush2.bf16.msra.mxu0 0
    %2423 = vmatprep.subr.bf16.mxu0 0
    %2424 = vmatpush2.bf16.msra.mxu0 0
    %2425 = vmatprep.subr.bf16.mxu0 0
    %2426 = vmatpush2.bf16.msra.mxu0 0
    %2427 = vmatprep.subr.bf16.mxu0 0
    %2428 = vmatpush2.bf16.msra.mxu0 0
    %2429 = vmatprep.subr.bf16.mxu0 0
    %2430 = vmatpush2.bf16.msra.mxu0 0
    %2431 = vmatprep.mubr.bf16.mxu0 0
    %2432 = vmatmul.mubr.bf16.gmra.mxu0 %v2394
    %v2433 = vpop.f32.mrf.mxu0
    %v2434 = vadd.f32 0.0, %v2433
    %v2435 = vpop.f32.mrf.mxu0
    %v2436 = vpop.f32.mrf.mxu0
    %v2437 = vpop.f32.mrf.mxu0
    %2438 = vdwg.mxu0
    %v2440 = vrot.slane %v2290, 4
    %2441 = vrot.lane.b32.xlu0 %v1799, 72
    %v2442 = vpop.permute.xlu0 %2441
    %v2444 = vsel %vm632, %v2440, 0
    %v2447 = vsel %vm1133, %v2442, 0
    %2449 = vmatprep.subr.bf16.mxu0 0
    %2450 = vmatpush1.bf16.msra.mxu0 0
    %2451 = vmatprep.subr.bf16.mxu0 0
    %2452 = vmatpush1.bf16.msra.mxu0 0
    %2453 = vmatprep.subr.bf16.mxu0 0
    %2454 = vmatpush1.bf16.msra.mxu0 0
    %2455 = vmatprep.subr.bf16.mxu0 0
    %2456 = vmatpush1.bf16.msra.mxu0 0
    %2457 = vmatprep.subr.bf16.mxu0 0
    %2458 = vmatpush1.bf16.msra.mxu0 0
    %2459 = vmatprep.subr.bf16.mxu0 0
    %2460 = vmatpush1.bf16.msra.mxu0 0
    %2461 = vmatprep.subr.bf16.mxu0 0
    %2462 = vmatpush1.bf16.msra.mxu0 0
    %2463 = vmatprep.subr.bf16.mxu0 0
    %2464 = vmatpush1.bf16.msra.mxu0 %v2447
    %2465 = vmatprep.subr.bf16.mxu0 0
    %2466 = vmatpush2.bf16.msra.mxu0 0
    %2467 = vmatprep.subr.bf16.mxu0 0
    %2468 = vmatpush2.bf16.msra.mxu0 0
    %2469 = vmatprep.subr.bf16.mxu0 0
    %2470 = vmatpush2.bf16.msra.mxu0 0
    %2471 = vmatprep.subr.bf16.mxu0 0
    %2472 = vmatpush2.bf16.msra.mxu0 0
    %2473 = vmatprep.subr.bf16.mxu0 0
    %2474 = vmatpush2.bf16.msra.mxu0 0
    %2475 = vmatprep.subr.bf16.mxu0 0
    %2476 = vmatpush2.bf16.msra.mxu0 0
    %2477 = vmatprep.subr.bf16.mxu0 0
    %2478 = vmatpush2.bf16.msra.mxu0 0
    %2479 = vmatprep.subr.bf16.mxu0 0
    %2480 = vmatpush2.bf16.msra.mxu0 0
    %2481 = vmatprep.mubr.bf16.mxu0 0
    %2482 = vmatmul.mubr.bf16.gmra.mxu0 %v2444
    %v2483 = vpop.f32.mrf.mxu0
    %v2484 = vadd.f32 0.0, %v2483
    %v2485 = vpop.f32.mrf.mxu0
    %v2486 = vpop.f32.mrf.mxu0
    %v2487 = vpop.f32.mrf.mxu0
    %2488 = vdwg.mxu0
    %2490 = vrot.lane.b32.xlu0 %v2386, 8
    %v2491 = vpop.permute.xlu0 %2490
    %2494 = vrot.lane.b32.xlu0 %v2434, 16
    %v2495 = vpop.permute.xlu0 %2494
    %2498 = vrot.lane.b32.xlu0 %v2484, 24
    %v2499 = vpop.permute.xlu0 %2498
    %v2501 = vsel %vm632, %v2336, %v2491
    %v2502 = vsel %vm1338, %v2501, %v2495
    %v2503 = vsel %vm1340, %v2502, %v2499
    %2504 = vrot.lane.b32.xlu0 %v2004, 96
    %v2505 = vpop.permute.xlu0 %2504
    %v2507 = vsel %vm632, %v2291, 0
    %v2510 = vsel %vm1133, %v2505, 0
    %2512 = vmatprep.subr.bf16.mxu0 0
    %2513 = vmatpush1.bf16.msra.mxu0 0
    %2514 = vmatprep.subr.bf16.mxu0 0
    %2515 = vmatpush1.bf16.msra.mxu0 0
    %2516 = vmatprep.subr.bf16.mxu0 0
    %2517 = vmatpush1.bf16.msra.mxu0 0
    %2518 = vmatprep.subr.bf16.mxu0 0
    %2519 = vmatpush1.bf16.msra.mxu0 0
    %2520 = vmatprep.subr.bf16.mxu0 0
    %2521 = vmatpush1.bf16.msra.mxu0 0
    %2522 = vmatprep.subr.bf16.mxu0 0
    %2523 = vmatpush1.bf16.msra.mxu0 0
    %2524 = vmatprep.subr.bf16.mxu0 0
    %2525 = vmatpush1.bf16.msra.mxu0 0
    %2526 = vmatprep.subr.bf16.mxu0 0
    %2527 = vmatpush1.bf16.msra.mxu0 %v2510
    %2528 = vmatprep.subr.bf16.mxu0 0
    %2529 = vmatpush2.bf16.msra.mxu0 0
    %2530 = vmatprep.subr.bf16.mxu0 0
    %2531 = vmatpush2.bf16.msra.mxu0 0
    %2532 = vmatprep.subr.bf16.mxu0 0
    %2533 = vmatpush2.bf16.msra.mxu0 0
    %2534 = vmatprep.subr.bf16.mxu0 0
    %2535 = vmatpush2.bf16.msra.mxu0 0
    %2536 = vmatprep.subr.bf16.mxu0 0
    %2537 = vmatpush2.bf16.msra.mxu0 0
    %2538 = vmatprep.subr.bf16.mxu0 0
    %2539 = vmatpush2.bf16.msra.mxu0 0
    %2540 = vmatprep.subr.bf16.mxu0 0
    %2541 = vmatpush2.bf16.msra.mxu0 0
    %2542 = vmatprep.subr.bf16.mxu0 0
    %2543 = vmatpush2.bf16.msra.mxu0 0
    %2544 = vmatprep.mubr.bf16.mxu0 0
    %2545 = vmatmul.mubr.bf16.gmra.mxu0 %v2507
    %v2546 = vpop.f32.mrf.mxu0
    %v2547 = vadd.f32 0.0, %v2546
    %v2548 = vpop.f32.mrf.mxu0
    %v2549 = vpop.f32.mrf.mxu0
    %v2550 = vpop.f32.mrf.mxu0
    %2551 = vdwg.mxu0
    %v2553 = vrot.slane %v2291, 4
    %2554 = vrot.lane.b32.xlu0 %v2004, 88
    %v2555 = vpop.permute.xlu0 %2554
    %v2557 = vsel %vm632, %v2553, 0
    %v2560 = vsel %vm1133, %v2555, 0
    %2562 = vmatprep.subr.bf16.mxu0 0
    %2563 = vmatpush1.bf16.msra.mxu0 0
    %2564 = vmatprep.subr.bf16.mxu0 0
    %2565 = vmatpush1.bf16.msra.mxu0 0
    %2566 = vmatprep.subr.bf16.mxu0 0
    %2567 = vmatpush1.bf16.msra.mxu0 0
    %2568 = vmatprep.subr.bf16.mxu0 0
    %2569 = vmatpush1.bf16.msra.mxu0 0
    %2570 = vmatprep.subr.bf16.mxu0 0
    %2571 = vmatpush1.bf16.msra.mxu0 0
    %2572 = vmatprep.subr.bf16.mxu0 0
    %2573 = vmatpush1.bf16.msra.mxu0 0
    %2574 = vmatprep.subr.bf16.mxu0 0
    %2575 = vmatpush1.bf16.msra.mxu0 0
    %2576 = vmatprep.subr.bf16.mxu0 0
    %2577 = vmatpush1.bf16.msra.mxu0 %v2560
    %2578 = vmatprep.subr.bf16.mxu0 0
    %2579 = vmatpush2.bf16.msra.mxu0 0
    %2580 = vmatprep.subr.bf16.mxu0 0
    %2581 = vmatpush2.bf16.msra.mxu0 0
    %2582 = vmatprep.subr.bf16.mxu0 0
    %2583 = vmatpush2.bf16.msra.mxu0 0
    %2584 = vmatprep.subr.bf16.mxu0 0
    %2585 = vmatpush2.bf16.msra.mxu0 0
    %2586 = vmatprep.subr.bf16.mxu0 0
    %2587 = vmatpush2.bf16.msra.mxu0 0
    %2588 = vmatprep.subr.bf16.mxu0 0
    %2589 = vmatpush2.bf16.msra.mxu0 0
    %2590 = vmatprep.subr.bf16.mxu0 0
    %2591 = vmatpush2.bf16.msra.mxu0 0
    %2592 = vmatprep.subr.bf16.mxu0 0
    %2593 = vmatpush2.bf16.msra.mxu0 0
    %2594 = vmatprep.mubr.bf16.mxu0 0
    %2595 = vmatmul.mubr.bf16.gmra.mxu0 %v2557
    %v2596 = vpop.f32.mrf.mxu0
    %v2597 = vadd.f32 0.0, %v2596
    %v2598 = vpop.f32.mrf.mxu0
    %v2599 = vpop.f32.mrf.mxu0
    %v2600 = vpop.f32.mrf.mxu0
    %2601 = vdwg.mxu0
    %2602 = vrot.lane.b32.xlu0 %v2004, 80
    %v2603 = vpop.permute.xlu0 %2602
    %v2605 = vsel %vm632, %v2292, 0
    %v2608 = vsel %vm1133, %v2603, 0
    %2610 = vmatprep.subr.bf16.mxu0 0
    %2611 = vmatpush1.bf16.msra.mxu0 0
    %2612 = vmatprep.subr.bf16.mxu0 0
    %2613 = vmatpush1.bf16.msra.mxu0 0
    %2614 = vmatprep.subr.bf16.mxu0 0
    %2615 = vmatpush1.bf16.msra.mxu0 0
    %2616 = vmatprep.subr.bf16.mxu0 0
    %2617 = vmatpush1.bf16.msra.mxu0 0
    %2618 = vmatprep.subr.bf16.mxu0 0
    %2619 = vmatpush1.bf16.msra.mxu0 0
    %2620 = vmatprep.subr.bf16.mxu0 0
    %2621 = vmatpush1.bf16.msra.mxu0 0
    %2622 = vmatprep.subr.bf16.mxu0 0
    %2623 = vmatpush1.bf16.msra.mxu0 0
    %2624 = vmatprep.subr.bf16.mxu0 0
    %2625 = vmatpush1.bf16.msra.mxu0 %v2608
    %2626 = vmatprep.subr.bf16.mxu0 0
    %2627 = vmatpush2.bf16.msra.mxu0 0
    %2628 = vmatprep.subr.bf16.mxu0 0
    %2629 = vmatpush2.bf16.msra.mxu0 0
    %2630 = vmatprep.subr.bf16.mxu0 0
    %2631 = vmatpush2.bf16.msra.mxu0 0
    %2632 = vmatprep.subr.bf16.mxu0 0
    %2633 = vmatpush2.bf16.msra.mxu0 0
    %2634 = vmatprep.subr.bf16.mxu0 0
    %2635 = vmatpush2.bf16.msra.mxu0 0
    %2636 = vmatprep.subr.bf16.mxu0 0
    %2637 = vmatpush2.bf16.msra.mxu0 0
    %2638 = vmatprep.subr.bf16.mxu0 0
    %2639 = vmatpush2.bf16.msra.mxu0 0
    %2640 = vmatprep.subr.bf16.mxu0 0
    %2641 = vmatpush2.bf16.msra.mxu0 0
    %2642 = vmatprep.mubr.bf16.mxu0 0
    %2643 = vmatmul.mubr.bf16.gmra.mxu0 %v2605
    %v2644 = vpop.f32.mrf.mxu0
    %v2645 = vadd.f32 0.0, %v2644
    %v2646 = vpop.f32.mrf.mxu0
    %v2647 = vpop.f32.mrf.mxu0
    %v2648 = vpop.f32.mrf.mxu0
    %2649 = vdwg.mxu0
    %v2651 = vrot.slane %v2292, 4
    %2652 = vrot.lane.b32.xlu0 %v2004, 72
    %v2653 = vpop.permute.xlu0 %2652
    %v2655 = vsel %vm632, %v2651, 0
    %v2658 = vsel %vm1133, %v2653, 0
    %2660 = vmatprep.subr.bf16.mxu0 0
    %2661 = vmatpush1.bf16.msra.mxu0 0
    %2662 = vmatprep.subr.bf16.mxu0 0
    %2663 = vmatpush1.bf16.msra.mxu0 0
    %2664 = vmatprep.subr.bf16.mxu0 0
    %2665 = vmatpush1.bf16.msra.mxu0 0
    %2666 = vmatprep.subr.bf16.mxu0 0
    %2667 = vmatpush1.bf16.msra.mxu0 0
    %2668 = vmatprep.subr.bf16.mxu0 0
    %2669 = vmatpush1.bf16.msra.mxu0 0
    %2670 = vmatprep.subr.bf16.mxu0 0
    %2671 = vmatpush1.bf16.msra.mxu0 0
    %2672 = vmatprep.subr.bf16.mxu0 0
    %2673 = vmatpush1.bf16.msra.mxu0 0
    %2674 = vmatprep.subr.bf16.mxu0 0
    %2675 = vmatpush1.bf16.msra.mxu0 %v2658
    %2676 = vmatprep.subr.bf16.mxu0 0
    %2677 = vmatpush2.bf16.msra.mxu0 0
    %2678 = vmatprep.subr.bf16.mxu0 0
    %2679 = vmatpush2.bf16.msra.mxu0 0
    %2680 = vmatprep.subr.bf16.mxu0 0
    %2681 = vmatpush2.bf16.msra.mxu0 0
    %2682 = vmatprep.subr.bf16.mxu0 0
    %2683 = vmatpush2.bf16.msra.mxu0 0
    %2684 = vmatprep.subr.bf16.mxu0 0
    %2685 = vmatpush2.bf16.msra.mxu0 0
    %2686 = vmatprep.subr.bf16.mxu0 0
    %2687 = vmatpush2.bf16.msra.mxu0 0
    %2688 = vmatprep.subr.bf16.mxu0 0
    %2689 = vmatpush2.bf16.msra.mxu0 0
    %2690 = vmatprep.subr.bf16.mxu0 0
    %2691 = vmatpush2.bf16.msra.mxu0 0
    %2692 = vmatprep.mubr.bf16.mxu0 0
    %2693 = vmatmul.mubr.bf16.gmra.mxu0 %v2655
    %v2694 = vpop.f32.mrf.mxu0
    %v2695 = vadd.f32 0.0, %v2694
    %v2696 = vpop.f32.mrf.mxu0
    %v2697 = vpop.f32.mrf.mxu0
    %v2698 = vpop.f32.mrf.mxu0
    %2699 = vdwg.mxu0
    %2701 = vrot.lane.b32.xlu0 %v2597, 8
    %v2702 = vpop.permute.xlu0 %2701
    %2705 = vrot.lane.b32.xlu0 %v2645, 16
    %v2706 = vpop.permute.xlu0 %2705
    %2709 = vrot.lane.b32.xlu0 %v2695, 24
    %v2710 = vpop.permute.xlu0 %2709
    %v2712 = vsel %vm632, %v2547, %v2702
    %v2713 = vsel %vm1338, %v2712, %v2706
    %v2714 = vsel %vm1340, %v2713, %v2710
    %v2715 = vpack.c.bf16 %v2714, %v2503
    %v2717 = vlaneseq
    %v2718 = vshrl.u32 %v2717, 7
    %v2719 = vsub.s32 0, %v2718
    %v2720 = vrot.slane %v1804, %v2719
    %v2726 = vunpack.c.l.b16 %v1800
    %v2727 = vunpack.c.l.b16 %v1801
    %v2728 = vunpack.c.l.b16 %v1802
    %v2729 = vunpack.c.l.b16 %v1803
    %v2730 = vpack.c.b16 %v2727, %v2726
    %v2731 = vpack.c.b16 %v2729, %v2728
    %v2735 = vsel %vm578, %v2715, 0
    %2737 = vmatprep.subr.bf16.mxu0 0
    %2738 = vmatpush1.bf16.msra.mxu0 0
    %2739 = vmatprep.subr.bf16.mxu0 0
    %2740 = vmatpush1.bf16.msra.mxu0 0
    %2741 = vmatprep.subr.bf16.mxu0 0
    %2742 = vmatpush1.bf16.msra.mxu0 0
    %2743 = vmatprep.subr.bf16.mxu0 0
    %2744 = vmatpush1.bf16.msra.mxu0 0
    %2745 = vmatprep.subr.bf16.mxu0 0
    %2746 = vmatpush1.bf16.msra.mxu0 0
    %2747 = vmatprep.subr.bf16.mxu0 0
    %2748 = vmatpush1.bf16.msra.mxu0 0
    %2749 = vmatprep.subr.bf16.mxu0 0
    %2750 = vmatpush1.bf16.msra.mxu0 %v2731
    %2751 = vmatprep.subr.bf16.mxu0 0
    %2752 = vmatpush1.bf16.msra.mxu0 %v2730
    %2753 = vmatprep.subr.bf16.mxu0 0
    %2754 = vmatpush2.bf16.msra.mxu0 0
    %2755 = vmatprep.subr.bf16.mxu0 0
    %2756 = vmatpush2.bf16.msra.mxu0 0
    %2757 = vmatprep.subr.bf16.mxu0 0
    %2758 = vmatpush2.bf16.msra.mxu0 0
    %2759 = vmatprep.subr.bf16.mxu0 0
    %2760 = vmatpush2.bf16.msra.mxu0 0
    %2761 = vmatprep.subr.bf16.mxu0 0
    %2762 = vmatpush2.bf16.msra.mxu0 0
    %2763 = vmatprep.subr.bf16.mxu0 0
    %2764 = vmatpush2.bf16.msra.mxu0 0
    %2765 = vmatprep.subr.bf16.mxu0 0
    %2766 = vmatpush2.bf16.msra.mxu0 0
    %2767 = vmatprep.subr.bf16.mxu0 0
    %2768 = vmatpush2.bf16.msra.mxu0 0
    %2769 = vmatprep.mubr.bf16.mxu0 0
    %2770 = vmatmul.mubr.bf16.gmra.mxu0 %v2735
    %v2771 = vpop.f32.mrf.mxu0
    %v2772 = vadd.f32 %v2720, %v2771
    %v2773 = vpop.f32.mrf.mxu0
    %v2774 = vpop.f32.mrf.mxu0
    %v2775 = vadd.f32 %v2720, %v2774
    %v2776 = vpop.f32.mrf.mxu0
    %2777 = vdwg.mxu0
    %v2778 = vadd.f32 %v1661, %v2772
    %v2779 = vadd.f32 %v1662, %v2775
    %v2780 = vld [vmem:[#allocation22] sm:$0x1]
    %v2781 = vld [vmem:[#allocation23] sm:$0x1]
    %v2782 = vsel %vm578, %v2778, 0.0
    %2783 = vadd.xlane.f32.xlu0 %v2782
    %v2784 = vpop.xlane.xlu0 %2783
    %v2785 = vsel %vm578, %v2779, 0.0
    %2786 = vadd.xlane.f32.xlu0 %v2785
    %v2787 = vpop.xlane.xlu0 %2786
    %v2788 = vmul.f32 %v2784, %v1626
    %v2789 = vmul.f32 %v2787, %v1626
    %v2790 = vsub.f32 %v2778, %v2788
    %v2791 = vsub.f32 %v2779, %v2789
    %v2792 = vmul.f32 %v2790, %v2790
    %v2793 = vmul.f32 %v2791, %v2791
    %v2794 = vsel %vm578, %v2792, 0.0
    %2795 = vadd.xlane.f32.xlu0 %v2794
    %v2796 = vpop.xlane.xlu0 %2795
    %v2797 = vsel %vm578, %v2793, 0.0
    %2798 = vadd.xlane.f32.xlu0 %v2797
    %v2799 = vpop.xlane.xlu0 %2798
    %v2800 = vmul.f32 %v2796, %v1626
    %v2801 = vmul.f32 %v2799, %v1626
    %v2802 = vadd.f32 %v2800, 1e-05
    %v2803 = vadd.f32 %v2801, 1e-05
    %v2804 = vrsqrt.pop %v2802
    %v2805 = vrsqrt.pop %v2803
    %v2806 = vmul.f32 %v2790, %v2804
    %v2807 = vmul.f32 %v2791, %v2805
    %v2809 = vlaneseq
    %v2810 = vshrl.u32 %v2809, 7
    %v2811 = vsub.s32 0, %v2810
    %v2812 = vrot.slane %v2780, %v2811
    %v2814 = vmul.f32 %v2806, %v2812
    %v2815 = vmul.f32 %v2807, %v2812
    %v2817 = vlaneseq
    %v2818 = vshrl.u32 %v2817, 7
    %v2819 = vsub.s32 0, %v2818
    %v2820 = vrot.slane %v2781, %v2819
    %v2822 = vadd.f32 %v2814, %v2820
    %v2823 = vadd.f32 %v2815, %v2820
    %v2824 = vpack.c.bf16 %v2823, %v2822
    %v2825 = vld [vmem:[#allocation28] sm:$0xf]
    %v2826 = vld [vmem:[#allocation28 + $0x4] sm:$0xf]
    %v2827 = vld [vmem:[#allocation28 + $0x8] sm:$0xf]
    %v2828 = vld [vmem:[#allocation28 + $0xc] sm:$0xf]
    %v2829 = vld [vmem:[#allocation29] sm:$0x1]
    %v2831 = vlaneseq
    %v2832 = vshrl.u32 %v2831, 7
    %v2833 = vsub.s32 0, %v2832
    %v2834 = vrot.slane %v2829, %v2833
    %v2840 = vunpack.c.l.b16 %v2825
    %v2841 = vunpack.c.l.b16 %v2826
    %v2842 = vunpack.c.l.b16 %v2827
    %v2843 = vunpack.c.l.b16 %v2828
    %v2844 = vpack.c.b16 %v2841, %v2840
    %v2845 = vpack.c.b16 %v2843, %v2842
    %v2849 = vsel %vm578, %v2824, 0
    %2851 = vmatprep.subr.bf16.mxu0 0
    %2852 = vmatpush1.bf16.msra.mxu0 0
    %2853 = vmatprep.subr.bf16.mxu0 0
    %2854 = vmatpush1.bf16.msra.mxu0 0
    %2855 = vmatprep.subr.bf16.mxu0 0
    %2856 = vmatpush1.bf16.msra.mxu0 0
    %2857 = vmatprep.subr.bf16.mxu0 0
    %2858 = vmatpush1.bf16.msra.mxu0 0
    %2859 = vmatprep.subr.bf16.mxu0 0
    %2860 = vmatpush1.bf16.msra.mxu0 0
    %2861 = vmatprep.subr.bf16.mxu0 0
    %2862 = vmatpush1.bf16.msra.mxu0 0
    %2863 = vmatprep.subr.bf16.mxu0 0
    %2864 = vmatpush1.bf16.msra.mxu0 %v2845
    %2865 = vmatprep.subr.bf16.mxu0 0
    %2866 = vmatpush1.bf16.msra.mxu0 %v2844
    %2867 = vmatprep.subr.bf16.mxu0 0
    %2868 = vmatpush2.bf16.msra.mxu0 0
    %2869 = vmatprep.subr.bf16.mxu0 0
    %2870 = vmatpush2.bf16.msra.mxu0 0
    %2871 = vmatprep.subr.bf16.mxu0 0
    %2872 = vmatpush2.bf16.msra.mxu0 0
    %2873 = vmatprep.subr.bf16.mxu0 0
    %2874 = vmatpush2.bf16.msra.mxu0 0
    %2875 = vmatprep.subr.bf16.mxu0 0
    %2876 = vmatpush2.bf16.msra.mxu0 0
    %2877 = vmatprep.subr.bf16.mxu0 0
    %2878 = vmatpush2.bf16.msra.mxu0 0
    %2879 = vmatprep.subr.bf16.mxu0 0
    %2880 = vmatpush2.bf16.msra.mxu0 0
    %2881 = vmatprep.subr.bf16.mxu0 0
    %2882 = vmatpush2.bf16.msra.mxu0 0
    %2883 = vmatprep.mubr.bf16.mxu0 0
    %2884 = vmatmul.mubr.bf16.gmra.mxu0 %v2849
    %v2885 = vpop.f32.mrf.mxu0
    %v2886 = vadd.f32 %v2834, %v2885
    %v2887 = vpop.f32.mrf.mxu0
    %v2888 = vpop.f32.mrf.mxu0
    %v2889 = vadd.f32 %v2834, %v2888
    %v2890 = vpop.f32.mrf.mxu0
    %2891 = vdwg.mxu0
    %v2892 = vmax.f32 %v2886, 0.0
    %v2893 = vmax.f32 %v2889, 0.0
    %v2894 = vpack.c.bf16 %v2893, %v2892
    %v2895 = vld [vmem:[#allocation31] sm:$0xf]
    %v2896 = vld [vmem:[#allocation31 + $0x4] sm:$0xf]
    %v2897 = vld [vmem:[#allocation31 + $0x8] sm:$0xf]
    %v2898 = vld [vmem:[#allocation31 + $0xc] sm:$0xf]
    %v2899 = vld [vmem:[#allocation32] sm:$0x1]
    %v2901 = vlaneseq
    %v2902 = vshrl.u32 %v2901, 7
    %v2903 = vsub.s32 0, %v2902
    %v2904 = vrot.slane %v2899, %v2903
    %v2910 = vunpack.c.l.b16 %v2895
    %v2911 = vunpack.c.l.b16 %v2896
    %v2912 = vunpack.c.l.b16 %v2897
    %v2913 = vunpack.c.l.b16 %v2898
    %v2914 = vpack.c.b16 %v2911, %v2910
    %v2915 = vpack.c.b16 %v2913, %v2912
    %v2919 = vsel %vm578, %v2894, 0
    %2921 = vmatprep.subr.bf16.mxu0 0
    %2922 = vmatpush1.bf16.msra.mxu0 0
    %2923 = vmatprep.subr.bf16.mxu0 0
    %2924 = vmatpush1.bf16.msra.mxu0 0
    %2925 = vmatprep.subr.bf16.mxu0 0
    %2926 = vmatpush1.bf16.msra.mxu0 0
    %2927 = vmatprep.subr.bf16.mxu0 0
    %2928 = vmatpush1.bf16.msra.mxu0 0
    %2929 = vmatprep.subr.bf16.mxu0 0
    %2930 = vmatpush1.bf16.msra.mxu0 0
    %2931 = vmatprep.subr.bf16.mxu0 0
    %2932 = vmatpush1.bf16.msra.mxu0 0
    %2933 = vmatprep.subr.bf16.mxu0 0
    %2934 = vmatpush1.bf16.msra.mxu0 %v2915
    %2935 = vmatprep.subr.bf16.mxu0 0
    %2936 = vmatpush1.bf16.msra.mxu0 %v2914
    %2937 = vmatprep.subr.bf16.mxu0 0
    %2938 = vmatpush2.bf16.msra.mxu0 0
    %2939 = vmatprep.subr.bf16.mxu0 0
    %2940 = vmatpush2.bf16.msra.mxu0 0
    %2941 = vmatprep.subr.bf16.mxu0 0
    %2942 = vmatpush2.bf16.msra.mxu0 0
    %2943 = vmatprep.subr.bf16.mxu0 0
    %2944 = vmatpush2.bf16.msra.mxu0 0
    %2945 = vmatprep.subr.bf16.mxu0 0
    %2946 = vmatpush2.bf16.msra.mxu0 0
    %2947 = vmatprep.subr.bf16.mxu0 0
    %2948 = vmatpush2.bf16.msra.mxu0 0
    %2949 = vmatprep.subr.bf16.mxu0 0
    %2950 = vmatpush2.bf16.msra.mxu0 0
    %2951 = vmatprep.subr.bf16.mxu0 0
    %2952 = vmatpush2.bf16.msra.mxu0 0
    %2953 = vmatprep.mubr.bf16.mxu0 0
    %2954 = vmatmul.mubr.bf16.gmra.mxu0 %v2919
    %v2955 = vpop.f32.mrf.mxu0
    %v2956 = vadd.f32 %v2904, %v2955
    %v2957 = vpop.f32.mrf.mxu0
    %v2958 = vpop.f32.mrf.mxu0
    %v2959 = vadd.f32 %v2904, %v2958
    %v2960 = vpop.f32.mrf.mxu0
    %2961 = vdwg.mxu0
    %v2962 = vadd.f32 %v2822, %v2956
    %v2963 = vadd.f32 %v2823, %v2959
    %v2964 = vld [vmem:[#allocation25] sm:$0x1]
    %v2965 = vld [vmem:[#allocation26] sm:$0x1]
    %v2966 = vsel %vm578, %v2962, 0.0
    %2967 = vadd.xlane.f32.xlu0 %v2966
    %v2968 = vpop.xlane.xlu0 %2967
    %v2969 = vsel %vm578, %v2963, 0.0
    %2970 = vadd.xlane.f32.xlu0 %v2969
    %v2971 = vpop.xlane.xlu0 %2970
    %v2972 = vmul.f32 %v2968, %v1626
    %v2973 = vmul.f32 %v2971, %v1626
    %v2974 = vsub.f32 %v2962, %v2972
    %v2975 = vsub.f32 %v2963, %v2973
    %v2976 = vmul.f32 %v2974, %v2974
    %v2977 = vmul.f32 %v2975, %v2975
    %v2978 = vsel %vm578, %v2976, 0.0
    %2979 = vadd.xlane.f32.xlu0 %v2978
    %v2980 = vpop.xlane.xlu0 %2979
    %v2981 = vsel %vm578, %v2977, 0.0
    %2982 = vadd.xlane.f32.xlu0 %v2981
    %v2983 = vpop.xlane.xlu0 %2982
    %v2984 = vmul.f32 %v2980, %v1626
    %v2985 = vmul.f32 %v2983, %v1626
    %v2986 = vadd.f32 %v2984, 1e-05
    %v2987 = vadd.f32 %v2985, 1e-05
    %v2988 = vrsqrt.pop %v2986
    %v2989 = vrsqrt.pop %v2987
    %v2990 = vmul.f32 %v2974, %v2988
    %v2991 = vmul.f32 %v2975, %v2989
    %v2993 = vlaneseq
    %v2994 = vshrl.u32 %v2993, 7
    %v2995 = vsub.s32 0, %v2994
    %v2996 = vrot.slane %v2964, %v2995
    %v2998 = vmul.f32 %v2990, %v2996
    %v2999 = vmul.f32 %v2991, %v2996
    %v3001 = vlaneseq
    %v3002 = vshrl.u32 %v3001, 7
    %v3003 = vsub.s32 0, %v3002
    %v3004 = vrot.slane %v2965, %v3003
    %v3006 = vadd.f32 %v2998, %v3004
    %v3007 = vadd.f32 %v2999, %v3004
    %v3008 = vpack.c.bf16 %v3007, %v3006
    %s3009 = scalar_lea.vmem %s5, 16
    %v3010 = vld [vmem:[%s3009] sm:$0xf]
    %v3011 = vld [vmem:[%s3009 + $0x4] sm:$0xf]
    %v3012 = vld [vmem:[%s3009 + $0x8] sm:$0xf]
    %v3013 = vld [vmem:[%s3009 + $0xc] sm:$0xf]
    %s3014 = scalar_lea.vmem [#allocation8], 1
    %v3015 = vld [vmem:[%s3014] sm:$0x1]
    %v3017 = vlaneseq
    %v3018 = vshrl.u32 %v3017, 7
    %v3019 = vsub.s32 0, %v3018
    %v3020 = vrot.slane %v3015, %v3019
    %v3026 = vunpack.c.l.b16 %v3010
    %v3027 = vunpack.c.l.b16 %v3011
    %v3028 = vunpack.c.l.b16 %v3012
    %v3029 = vunpack.c.l.b16 %v3013
    %v3030 = vpack.c.b16 %v3027, %v3026
    %v3031 = vpack.c.b16 %v3029, %v3028
    %v3035 = vsel %vm578, %v3008, 0
    %3037 = vmatprep.subr.bf16.mxu0 0
    %3038 = vmatpush1.bf16.msra.mxu0 0
    %3039 = vmatprep.subr.bf16.mxu0 0
    %3040 = vmatpush1.bf16.msra.mxu0 0
    %3041 = vmatprep.subr.bf16.mxu0 0
    %3042 = vmatpush1.bf16.msra.mxu0 0
    %3043 = vmatprep.subr.bf16.mxu0 0
    %3044 = vmatpush1.bf16.msra.mxu0 0
    %3045 = vmatprep.subr.bf16.mxu0 0
    %3046 = vmatpush1.bf16.msra.mxu0 0
    %3047 = vmatprep.subr.bf16.mxu0 0
    %3048 = vmatpush1.bf16.msra.mxu0 0
    %3049 = vmatprep.subr.bf16.mxu0 0
    %3050 = vmatpush1.bf16.msra.mxu0 %v3031
    %3051 = vmatprep.subr.bf16.mxu0 0
    %3052 = vmatpush1.bf16.msra.mxu0 %v3030
    %3053 = vmatprep.subr.bf16.mxu0 0
    %3054 = vmatpush2.bf16.msra.mxu0 0
    %3055 = vmatprep.subr.bf16.mxu0 0
    %3056 = vmatpush2.bf16.msra.mxu0 0
    %3057 = vmatprep.subr.bf16.mxu0 0
    %3058 = vmatpush2.bf16.msra.mxu0 0
    %3059 = vmatprep.subr.bf16.mxu0 0
    %3060 = vmatpush2.bf16.msra.mxu0 0
    %3061 = vmatprep.subr.bf16.mxu0 0
    %3062 = vmatpush2.bf16.msra.mxu0 0
    %3063 = vmatprep.subr.bf16.mxu0 0
    %3064 = vmatpush2.bf16.msra.mxu0 0
    %3065 = vmatprep.subr.bf16.mxu0 0
    %3066 = vmatpush2.bf16.msra.mxu0 0
    %3067 = vmatprep.subr.bf16.mxu0 0
    %3068 = vmatpush2.bf16.msra.mxu0 0
    %3069 = vmatprep.mubr.bf16.mxu0 0
    %3070 = vmatmul.mubr.bf16.gmra.mxu0 %v3035
    %v3071 = vpop.f32.mrf.mxu0
    %v3072 = vadd.f32 %v3020, %v3071
    %v3073 = vpop.f32.mrf.mxu0
    %v3074 = vpop.f32.mrf.mxu0
    %v3075 = vadd.f32 %v3020, %v3074
    %v3076 = vpop.f32.mrf.mxu0
    %3077 = vdwg.mxu0
    %v3078 = vpack.c.bf16 %v3075, %v3072
    %s3079 = scalar_lea.vmem %s7, 16
    %v3080 = vld [vmem:[%s3079] sm:$0xf]
    %v3081 = vld [vmem:[%s3079 + $0x4] sm:$0xf]
    %v3082 = vld [vmem:[%s3079 + $0x8] sm:$0xf]
    %v3083 = vld [vmem:[%s3079 + $0xc] sm:$0xf]
    %s3084 = scalar_lea.vmem %s8, 1
    %v3085 = vld [vmem:[%s3084] sm:$0x1]
    %3087 = vrot.lane.b32.xlu0 %v3078, 96
    %v3088 = vpop.permute.xlu0 %3087
    %v3090 = vsel %vm632, %v3078, 0
    %v3093 = vsel %vm632, %v3088, 0
    %3095 = vmatprep.subr.bf16.mxu0 0
    %3096 = vmatpush1.bf16.xpose.msra.mxu0 0
    %3097 = vmatprep.subr.bf16.mxu0 0
    %3098 = vmatpush1.bf16.xpose.msra.mxu0 0
    %3099 = vmatprep.subr.bf16.mxu0 0
    %3100 = vmatpush1.bf16.xpose.msra.mxu0 0
    %3101 = vmatprep.subr.bf16.mxu0 0
    %3102 = vmatpush1.bf16.xpose.msra.mxu0 0
    %3103 = vmatprep.subr.bf16.mxu0 0
    %3104 = vmatpush1.bf16.xpose.msra.mxu0 0
    %3105 = vmatprep.subr.bf16.mxu0 0
    %3106 = vmatpush1.bf16.xpose.msra.mxu0 0
    %3107 = vmatprep.subr.bf16.mxu0 0
    %3108 = vmatpush1.bf16.xpose.msra.mxu0 0
    %3109 = vmatprep.subr.bf16.mxu0 0
    %3110 = vmatpush1.bf16.xpose.msra.mxu0 %v3093
    %3111 = vmatprep.subr.bf16.mxu0 0
    %3112 = vmatpush2.bf16.xpose.msra.mxu0 0
    %3113 = vmatprep.subr.bf16.mxu0 0
    %3114 = vmatpush2.bf16.xpose.msra.mxu0 0
    %3115 = vmatprep.subr.bf16.mxu0 0
    %3116 = vmatpush2.bf16.xpose.msra.mxu0 0
    %3117 = vmatprep.subr.bf16.mxu0 0
    %3118 = vmatpush2.bf16.xpose.msra.mxu0 0
    %3119 = vmatprep.subr.bf16.mxu0 0
    %3120 = vmatpush2.bf16.xpose.msra.mxu0 0
    %3121 = vmatprep.subr.bf16.mxu0 0
    %3122 = vmatpush2.bf16.xpose.msra.mxu0 0
    %3123 = vmatprep.subr.bf16.mxu0 0
    %3124 = vmatpush2.bf16.xpose.msra.mxu0 0
    %3125 = vmatprep.subr.bf16.mxu0 0
    %3126 = vmatpush2.bf16.xpose.msra.mxu0 0
    %3127 = vmatprep.mubr.bf16.mxu0 0
    %3128 = vmatmul.mubr.bf16.gmra.mxu0 %v3090
    %v3129 = vpop.f32.mrf.mxu0
    %v3130 = vadd.f32 0.0, %v3129
    %v3131 = vpop.f32.mrf.mxu0
    %v3132 = vpop.f32.mrf.mxu0
    %v3133 = vpop.f32.mrf.mxu0
    %3134 = vdwg.mxu0
    %3135 = vrot.lane.b32.xlu0 %v3078, 120
    %v3136 = vpop.permute.xlu0 %3135
    %3137 = vrot.lane.b32.xlu0 %v3078, 88
    %v3138 = vpop.permute.xlu0 %3137
    %v3140 = vsel %vm632, %v3136, 0
    %v3143 = vsel %vm632, %v3138, 0
    %3145 = vmatprep.subr.bf16.mxu0 0
    %3146 = vmatpush1.bf16.xpose.msra.mxu0 0
    %3147 = vmatprep.subr.bf16.mxu0 0
    %3148 = vmatpush1.bf16.xpose.msra.mxu0 0
    %3149 = vmatprep.subr.bf16.mxu0 0
    %3150 = vmatpush1.bf16.xpose.msra.mxu0 0
    %3151 = vmatprep.subr.bf16.mxu0 0
    %3152 = vmatpush1.bf16.xpose.msra.mxu0 0
    %3153 = vmatprep.subr.bf16.mxu0 0
    %3154 = vmatpush1.bf16.xpose.msra.mxu0 0
    %3155 = vmatprep.subr.bf16.mxu0 0
    %3156 = vmatpush1.bf16.xpose.msra.mxu0 0
    %3157 = vmatprep.subr.bf16.mxu0 0
    %3158 = vmatpush1.bf16.xpose.msra.mxu0 0
    %3159 = vmatprep.subr.bf16.mxu0 0
    %3160 = vmatpush1.bf16.xpose.msra.mxu0 %v3143
    %3161 = vmatprep.subr.bf16.mxu0 0
    %3162 = vmatpush2.bf16.xpose.msra.mxu0 0
    %3163 = vmatprep.subr.bf16.mxu0 0
    %3164 = vmatpush2.bf16.xpose.msra.mxu0 0
    %3165 = vmatprep.subr.bf16.mxu0 0
    %3166 = vmatpush2.bf16.xpose.msra.mxu0 0
    %3167 = vmatprep.subr.bf16.mxu0 0
    %3168 = vmatpush2.bf16.xpose.msra.mxu0 0
    %3169 = vmatprep.subr.bf16.mxu0 0
    %3170 = vmatpush2.bf16.xpose.msra.mxu0 0
    %3171 = vmatprep.subr.bf16.mxu0 0
    %3172 = vmatpush2.bf16.xpose.msra.mxu0 0
    %3173 = vmatprep.subr.bf16.mxu0 0
    %3174 = vmatpush2.bf16.xpose.msra.mxu0 0
    %3175 = vmatprep.subr.bf16.mxu0 0
    %3176 = vmatpush2.bf16.xpose.msra.mxu0 0
    %3177 = vmatprep.mubr.bf16.mxu0 0
    %3178 = vmatmul.mubr.bf16.gmra.mxu0 %v3140
    %v3179 = vpop.f32.mrf.mxu0
    %v3180 = vadd.f32 0.0, %v3179
    %v3181 = vpop.f32.mrf.mxu0
    %v3182 = vpop.f32.mrf.mxu0
    %v3183 = vpop.f32.mrf.mxu0
    %3184 = vdwg.mxu0
    %3185 = vrot.lane.b32.xlu0 %v3078, 112
    %v3186 = vpop.permute.xlu0 %3185
    %3187 = vrot.lane.b32.xlu0 %v3078, 80
    %v3188 = vpop.permute.xlu0 %3187
    %v3190 = vsel %vm632, %v3186, 0
    %v3193 = vsel %vm632, %v3188, 0
    %3195 = vmatprep.subr.bf16.mxu0 0
    %3196 = vmatpush1.bf16.xpose.msra.mxu0 0
    %3197 = vmatprep.subr.bf16.mxu0 0
    %3198 = vmatpush1.bf16.xpose.msra.mxu0 0
    %3199 = vmatprep.subr.bf16.mxu0 0
    %3200 = vmatpush1.bf16.xpose.msra.mxu0 0
    %3201 = vmatprep.subr.bf16.mxu0 0
    %3202 = vmatpush1.bf16.xpose.msra.mxu0 0
    %3203 = vmatprep.subr.bf16.mxu0 0
    %3204 = vmatpush1.bf16.xpose.msra.mxu0 0
    %3205 = vmatprep.subr.bf16.mxu0 0
    %3206 = vmatpush1.bf16.xpose.msra.mxu0 0
    %3207 = vmatprep.subr.bf16.mxu0 0
    %3208 = vmatpush1.bf16.xpose.msra.mxu0 0
    %3209 = vmatprep.subr.bf16.mxu0 0
    %3210 = vmatpush1.bf16.xpose.msra.mxu0 %v3193
    %3211 = vmatprep.subr.bf16.mxu0 0
    %3212 = vmatpush2.bf16.xpose.msra.mxu0 0
    %3213 = vmatprep.subr.bf16.mxu0 0
    %3214 = vmatpush2.bf16.xpose.msra.mxu0 0
    %3215 = vmatprep.subr.bf16.mxu0 0
    %3216 = vmatpush2.bf16.xpose.msra.mxu0 0
    %3217 = vmatprep.subr.bf16.mxu0 0
    %3218 = vmatpush2.bf16.xpose.msra.mxu0 0
    %3219 = vmatprep.subr.bf16.mxu0 0
    %3220 = vmatpush2.bf16.xpose.msra.mxu0 0
    %3221 = vmatprep.subr.bf16.mxu0 0
    %3222 = vmatpush2.bf16.xpose.msra.mxu0 0
    %3223 = vmatprep.subr.bf16.mxu0 0
    %3224 = vmatpush2.bf16.xpose.msra.mxu0 0
    %3225 = vmatprep.subr.bf16.mxu0 0
    %3226 = vmatpush2.bf16.xpose.msra.mxu0 0
    %3227 = vmatprep.mubr.bf16.mxu0 0
    %3228 = vmatmul.mubr.bf16.gmra.mxu0 %v3190
    %v3229 = vpop.f32.mrf.mxu0
    %v3230 = vadd.f32 0.0, %v3229
    %v3231 = vpop.f32.mrf.mxu0
    %v3232 = vpop.f32.mrf.mxu0
    %v3233 = vpop.f32.mrf.mxu0
    %3234 = vdwg.mxu0
    %3235 = vrot.lane.b32.xlu0 %v3078, 104
    %v3236 = vpop.permute.xlu0 %3235
    %3237 = vrot.lane.b32.xlu0 %v3078, 72
    %v3238 = vpop.permute.xlu0 %3237
    %v3240 = vsel %vm632, %v3236, 0
    %v3243 = vsel %vm632, %v3238, 0
    %3245 = vmatprep.subr.bf16.mxu0 0
    %3246 = vmatpush1.bf16.xpose.msra.mxu0 0
    %3247 = vmatprep.subr.bf16.mxu0 0
    %3248 = vmatpush1.bf16.xpose.msra.mxu0 0
    %3249 = vmatprep.subr.bf16.mxu0 0
    %3250 = vmatpush1.bf16.xpose.msra.mxu0 0
    %3251 = vmatprep.subr.bf16.mxu0 0
    %3252 = vmatpush1.bf16.xpose.msra.mxu0 0
    %3253 = vmatprep.subr.bf16.mxu0 0
    %3254 = vmatpush1.bf16.xpose.msra.mxu0 0
    %3255 = vmatprep.subr.bf16.mxu0 0
    %3256 = vmatpush1.bf16.xpose.msra.mxu0 0
    %3257 = vmatprep.subr.bf16.mxu0 0
    %3258 = vmatpush1.bf16.xpose.msra.mxu0 0
    %3259 = vmatprep.subr.bf16.mxu0 0
    %3260 = vmatpush1.bf16.xpose.msra.mxu0 %v3243
    %3261 = vmatprep.subr.bf16.mxu0 0
    %3262 = vmatpush2.bf16.xpose.msra.mxu0 0
    %3263 = vmatprep.subr.bf16.mxu0 0
    %3264 = vmatpush2.bf16.xpose.msra.mxu0 0
    %3265 = vmatprep.subr.bf16.mxu0 0
    %3266 = vmatpush2.bf16.xpose.msra.mxu0 0
    %3267 = vmatprep.subr.bf16.mxu0 0
    %3268 = vmatpush2.bf16.xpose.msra.mxu0 0
    %3269 = vmatprep.subr.bf16.mxu0 0
    %3270 = vmatpush2.bf16.xpose.msra.mxu0 0
    %3271 = vmatprep.subr.bf16.mxu0 0
    %3272 = vmatpush2.bf16.xpose.msra.mxu0 0
    %3273 = vmatprep.subr.bf16.mxu0 0
    %3274 = vmatpush2.bf16.xpose.msra.mxu0 0
    %3275 = vmatprep.subr.bf16.mxu0 0
    %3276 = vmatpush2.bf16.xpose.msra.mxu0 0
    %3277 = vmatprep.mubr.bf16.mxu0 0
    %3278 = vmatmul.mubr.bf16.gmra.mxu0 %v3240
    %v3279 = vpop.f32.mrf.mxu0
    %v3280 = vadd.f32 0.0, %v3279
    %v3281 = vpop.f32.mrf.mxu0
    %v3282 = vpop.f32.mrf.mxu0
    %v3283 = vpop.f32.mrf.mxu0
    %3284 = vdwg.mxu0
    %v3285 = vrot.slane %v3078, 4
    %3286 = vrot.lane.b32.xlu0 %v3285, 96
    %v3287 = vpop.permute.xlu0 %3286
    %v3289 = vsel %vm632, %v3285, 0
    %v3292 = vsel %vm632, %v3287, 0
    %3294 = vmatprep.subr.bf16.mxu0 0
    %3295 = vmatpush1.bf16.xpose.msra.mxu0 0
    %3296 = vmatprep.subr.bf16.mxu0 0
    %3297 = vmatpush1.bf16.xpose.msra.mxu0 0
    %3298 = vmatprep.subr.bf16.mxu0 0
    %3299 = vmatpush1.bf16.xpose.msra.mxu0 0
    %3300 = vmatprep.subr.bf16.mxu0 0
    %3301 = vmatpush1.bf16.xpose.msra.mxu0 0
    %3302 = vmatprep.subr.bf16.mxu0 0
    %3303 = vmatpush1.bf16.xpose.msra.mxu0 0
    %3304 = vmatprep.subr.bf16.mxu0 0
    %3305 = vmatpush1.bf16.xpose.msra.mxu0 0
    %3306 = vmatprep.subr.bf16.mxu0 0
    %3307 = vmatpush1.bf16.xpose.msra.mxu0 0
    %3308 = vmatprep.subr.bf16.mxu0 0
    %3309 = vmatpush1.bf16.xpose.msra.mxu0 %v3292
    %3310 = vmatprep.subr.bf16.mxu0 0
    %3311 = vmatpush2.bf16.xpose.msra.mxu0 0
    %3312 = vmatprep.subr.bf16.mxu0 0
    %3313 = vmatpush2.bf16.xpose.msra.mxu0 0
    %3314 = vmatprep.subr.bf16.mxu0 0
    %3315 = vmatpush2.bf16.xpose.msra.mxu0 0
    %3316 = vmatprep.subr.bf16.mxu0 0
    %3317 = vmatpush2.bf16.xpose.msra.mxu0 0
    %3318 = vmatprep.subr.bf16.mxu0 0
    %3319 = vmatpush2.bf16.xpose.msra.mxu0 0
    %3320 = vmatprep.subr.bf16.mxu0 0
    %3321 = vmatpush2.bf16.xpose.msra.mxu0 0
    %3322 = vmatprep.subr.bf16.mxu0 0
    %3323 = vmatpush2.bf16.xpose.msra.mxu0 0
    %3324 = vmatprep.subr.bf16.mxu0 0
    %3325 = vmatpush2.bf16.xpose.msra.mxu0 0
    %3326 = vmatprep.mubr.bf16.mxu0 0
    %3327 = vmatmul.mubr.bf16.gmra.mxu0 %v3289
    %v3328 = vpop.f32.mrf.mxu0
    %v3329 = vadd.f32 0.0, %v3328
    %v3330 = vpop.f32.mrf.mxu0
    %v3331 = vpop.f32.mrf.mxu0
    %v3332 = vpop.f32.mrf.mxu0
    %3333 = vdwg.mxu0
    %3334 = vrot.lane.b32.xlu0 %v3285, 120
    %v3335 = vpop.permute.xlu0 %3334
    %3336 = vrot.lane.b32.xlu0 %v3285, 88
    %v3337 = vpop.permute.xlu0 %3336
    %v3339 = vsel %vm632, %v3335, 0
    %v3342 = vsel %vm632, %v3337, 0
    %3344 = vmatprep.subr.bf16.mxu0 0
    %3345 = vmatpush1.bf16.xpose.msra.mxu0 0
    %3346 = vmatprep.subr.bf16.mxu0 0
    %3347 = vmatpush1.bf16.xpose.msra.mxu0 0
    %3348 = vmatprep.subr.bf16.mxu0 0
    %3349 = vmatpush1.bf16.xpose.msra.mxu0 0
    %3350 = vmatprep.subr.bf16.mxu0 0
    %3351 = vmatpush1.bf16.xpose.msra.mxu0 0
    %3352 = vmatprep.subr.bf16.mxu0 0
    %3353 = vmatpush1.bf16.xpose.msra.mxu0 0
    %3354 = vmatprep.subr.bf16.mxu0 0
    %3355 = vmatpush1.bf16.xpose.msra.mxu0 0
    %3356 = vmatprep.subr.bf16.mxu0 0
    %3357 = vmatpush1.bf16.xpose.msra.mxu0 0
    %3358 = vmatprep.subr.bf16.mxu0 0
    %3359 = vmatpush1.bf16.xpose.msra.mxu0 %v3342
    %3360 = vmatprep.subr.bf16.mxu0 0
    %3361 = vmatpush2.bf16.xpose.msra.mxu0 0
    %3362 = vmatprep.subr.bf16.mxu0 0
    %3363 = vmatpush2.bf16.xpose.msra.mxu0 0
    %3364 = vmatprep.subr.bf16.mxu0 0
    %3365 = vmatpush2.bf16.xpose.msra.mxu0 0
    %3366 = vmatprep.subr.bf16.mxu0 0
    %3367 = vmatpush2.bf16.xpose.msra.mxu0 0
    %3368 = vmatprep.subr.bf16.mxu0 0
    %3369 = vmatpush2.bf16.xpose.msra.mxu0 0
    %3370 = vmatprep.subr.bf16.mxu0 0
    %3371 = vmatpush2.bf16.xpose.msra.mxu0 0
    %3372 = vmatprep.subr.bf16.mxu0 0
    %3373 = vmatpush2.bf16.xpose.msra.mxu0 0
    %3374 = vmatprep.subr.bf16.mxu0 0
    %3375 = vmatpush2.bf16.xpose.msra.mxu0 0
    %3376 = vmatprep.mubr.bf16.mxu0 0
    %3377 = vmatmul.mubr.bf16.gmra.mxu0 %v3339
    %v3378 = vpop.f32.mrf.mxu0
    %v3379 = vadd.f32 0.0, %v3378
    %v3380 = vpop.f32.mrf.mxu0
    %v3381 = vpop.f32.mrf.mxu0
    %v3382 = vpop.f32.mrf.mxu0
    %3383 = vdwg.mxu0
    %3384 = vrot.lane.b32.xlu0 %v3285, 112
    %v3385 = vpop.permute.xlu0 %3384
    %3386 = vrot.lane.b32.xlu0 %v3285, 80
    %v3387 = vpop.permute.xlu0 %3386
    %v3389 = vsel %vm632, %v3385, 0
    %v3392 = vsel %vm632, %v3387, 0
    %3394 = vmatprep.subr.bf16.mxu0 0
    %3395 = vmatpush1.bf16.xpose.msra.mxu0 0
    %3396 = vmatprep.subr.bf16.mxu0 0
    %3397 = vmatpush1.bf16.xpose.msra.mxu0 0
    %3398 = vmatprep.subr.bf16.mxu0 0
    %3399 = vmatpush1.bf16.xpose.msra.mxu0 0
    %3400 = vmatprep.subr.bf16.mxu0 0
    %3401 = vmatpush1.bf16.xpose.msra.mxu0 0
    %3402 = vmatprep.subr.bf16.mxu0 0
    %3403 = vmatpush1.bf16.xpose.msra.mxu0 0
    %3404 = vmatprep.subr.bf16.mxu0 0
    %3405 = vmatpush1.bf16.xpose.msra.mxu0 0
    %3406 = vmatprep.subr.bf16.mxu0 0
    %3407 = vmatpush1.bf16.xpose.msra.mxu0 0
    %3408 = vmatprep.subr.bf16.mxu0 0
    %3409 = vmatpush1.bf16.xpose.msra.mxu0 %v3392
    %3410 = vmatprep.subr.bf16.mxu0 0
    %3411 = vmatpush2.bf16.xpose.msra.mxu0 0
    %3412 = vmatprep.subr.bf16.mxu0 0
    %3413 = vmatpush2.bf16.xpose.msra.mxu0 0
    %3414 = vmatprep.subr.bf16.mxu0 0
    %3415 = vmatpush2.bf16.xpose.msra.mxu0 0
    %3416 = vmatprep.subr.bf16.mxu0 0
    %3417 = vmatpush2.bf16.xpose.msra.mxu0 0
    %3418 = vmatprep.subr.bf16.mxu0 0
    %3419 = vmatpush2.bf16.xpose.msra.mxu0 0
    %3420 = vmatprep.subr.bf16.mxu0 0
    %3421 = vmatpush2.bf16.xpose.msra.mxu0 0
    %3422 = vmatprep.subr.bf16.mxu0 0
    %3423 = vmatpush2.bf16.xpose.msra.mxu0 0
    %3424 = vmatprep.subr.bf16.mxu0 0
    %3425 = vmatpush2.bf16.xpose.msra.mxu0 0
    %3426 = vmatprep.mubr.bf16.mxu0 0
    %3427 = vmatmul.mubr.bf16.gmra.mxu0 %v3389
    %v3428 = vpop.f32.mrf.mxu0
    %v3429 = vadd.f32 0.0, %v3428
    %v3430 = vpop.f32.mrf.mxu0
    %v3431 = vpop.f32.mrf.mxu0
    %v3432 = vpop.f32.mrf.mxu0
    %3433 = vdwg.mxu0
    %3434 = vrot.lane.b32.xlu0 %v3285, 104
    %v3435 = vpop.permute.xlu0 %3434
    %3436 = vrot.lane.b32.xlu0 %v3285, 72
    %v3437 = vpop.permute.xlu0 %3436
    %v3439 = vsel %vm632, %v3435, 0
    %v3442 = vsel %vm632, %v3437, 0
    %3444 = vmatprep.subr.bf16.mxu0 0
    %3445 = vmatpush1.bf16.xpose.msra.mxu0 0
    %3446 = vmatprep.subr.bf16.mxu0 0
    %3447 = vmatpush1.bf16.xpose.msra.mxu0 0
    %3448 = vmatprep.subr.bf16.mxu0 0
    %3449 = vmatpush1.bf16.xpose.msra.mxu0 0
    %3450 = vmatprep.subr.bf16.mxu0 0
    %3451 = vmatpush1.bf16.xpose.msra.mxu0 0
    %3452 = vmatprep.subr.bf16.mxu0 0
    %3453 = vmatpush1.bf16.xpose.msra.mxu0 0
    %3454 = vmatprep.subr.bf16.mxu0 0
    %3455 = vmatpush1.bf16.xpose.msra.mxu0 0
    %3456 = vmatprep.subr.bf16.mxu0 0
    %3457 = vmatpush1.bf16.xpose.msra.mxu0 0
    %3458 = vmatprep.subr.bf16.mxu0 0
    %3459 = vmatpush1.bf16.xpose.msra.mxu0 %v3442
    %3460 = vmatprep.subr.bf16.mxu0 0
    %3461 = vmatpush2.bf16.xpose.msra.mxu0 0
    %3462 = vmatprep.subr.bf16.mxu0 0
    %3463 = vmatpush2.bf16.xpose.msra.mxu0 0
    %3464 = vmatprep.subr.bf16.mxu0 0
    %3465 = vmatpush2.bf16.xpose.msra.mxu0 0
    %3466 = vmatprep.subr.bf16.mxu0 0
    %3467 = vmatpush2.bf16.xpose.msra.mxu0 0
    %3468 = vmatprep.subr.bf16.mxu0 0
    %3469 = vmatpush2.bf16.xpose.msra.mxu0 0
    %3470 = vmatprep.subr.bf16.mxu0 0
    %3471 = vmatpush2.bf16.xpose.msra.mxu0 0
    %3472 = vmatprep.subr.bf16.mxu0 0
    %3473 = vmatpush2.bf16.xpose.msra.mxu0 0
    %3474 = vmatprep.subr.bf16.mxu0 0
    %3475 = vmatpush2.bf16.xpose.msra.mxu0 0
    %3476 = vmatprep.mubr.bf16.mxu0 0
    %3477 = vmatmul.mubr.bf16.gmra.mxu0 %v3439
    %v3478 = vpop.f32.mrf.mxu0
    %v3479 = vadd.f32 0.0, %v3478
    %v3480 = vpop.f32.mrf.mxu0
    %v3481 = vpop.f32.mrf.mxu0
    %v3482 = vpop.f32.mrf.mxu0
    %3483 = vdwg.mxu0
    %v3484 = vadd.f32 %v3130, %v468
    %v3485 = vadd.f32 %v3180, %v468
    %v3486 = vadd.f32 %v3230, %v468
    %v3487 = vadd.f32 %v3280, %v468
    %v3488 = vadd.f32 %v3329, %v468
    %v3489 = vadd.f32 %v3379, %v468
    %v3490 = vadd.f32 %v3429, %v468
    %v3491 = vadd.f32 %v3479, %v468
    %v3492 = vsel %vm632, %v3484, -inf
    %3493 = vmax.xlane.f32.xlu0 %v3492
    %v3494 = vpop.xlane.xlu0 %3493
    %v3495 = vsel %vm632, %v3485, -inf
    %3496 = vmax.xlane.f32.xlu0 %v3495
    %v3497 = vpop.xlane.xlu0 %3496
    %v3498 = vsel %vm632, %v3486, -inf
    %3499 = vmax.xlane.f32.xlu0 %v3498
    %v3500 = vpop.xlane.xlu0 %3499
    %v3501 = vsel %vm632, %v3487, -inf
    %3502 = vmax.xlane.f32.xlu0 %v3501
    %v3503 = vpop.xlane.xlu0 %3502
    %v3504 = vsel %vm632, %v3488, -inf
    %3505 = vmax.xlane.f32.xlu0 %v3504
    %v3506 = vpop.xlane.xlu0 %3505
    %v3507 = vsel %vm632, %v3489, -inf
    %3508 = vmax.xlane.f32.xlu0 %v3507
    %v3509 = vpop.xlane.xlu0 %3508
    %v3510 = vsel %vm632, %v3490, -inf
    %3511 = vmax.xlane.f32.xlu0 %v3510
    %v3512 = vpop.xlane.xlu0 %3511
    %v3513 = vsel %vm632, %v3491, -inf
    %3514 = vmax.xlane.f32.xlu0 %v3513
    %v3515 = vpop.xlane.xlu0 %3514
    %v3516 = vsub.f32 %v3484, %v3494
    %v3517 = vsub.f32 %v3485, %v3497
    %v3518 = vsub.f32 %v3486, %v3500
    %v3519 = vsub.f32 %v3487, %v3503
    %v3520 = vsub.f32 %v3488, %v3506
    %v3521 = vsub.f32 %v3489, %v3509
    %v3522 = vsub.f32 %v3490, %v3512
    %v3523 = vsub.f32 %v3491, %v3515
    %v3524 = vmul.f32 %v3516, 1.442695
    %v3525 = vpow.pop %v3524
    %v3526 = vmul.f32 %v3517, 1.442695
    %v3527 = vpow.pop %v3526
    %v3528 = vmul.f32 %v3518, 1.442695
    %v3529 = vpow.pop %v3528
    %v3530 = vmul.f32 %v3519, 1.442695
    %v3531 = vpow.pop %v3530
    %v3532 = vmul.f32 %v3520, 1.442695
    %v3533 = vpow.pop %v3532
    %v3534 = vmul.f32 %v3521, 1.442695
    %v3535 = vpow.pop %v3534
    %v3536 = vmul.f32 %v3522, 1.442695
    %v3537 = vpow.pop %v3536
    %v3538 = vmul.f32 %v3523, 1.442695
    %v3539 = vpow.pop %v3538
    %v3540 = vsel %vm632, %v3525, 0.0
    %3541 = vadd.xlane.f32.xlu0 %v3540
    %v3542 = vpop.xlane.xlu0 %3541
    %v3543 = vsel %vm632, %v3527, 0.0
    %3544 = vadd.xlane.f32.xlu0 %v3543
    %v3545 = vpop.xlane.xlu0 %3544
    %v3546 = vsel %vm632, %v3529, 0.0
    %3547 = vadd.xlane.f32.xlu0 %v3546
    %v3548 = vpop.xlane.xlu0 %3547
    %v3549 = vsel %vm632, %v3531, 0.0
    %3550 = vadd.xlane.f32.xlu0 %v3549
    %v3551 = vpop.xlane.xlu0 %3550
    %v3552 = vsel %vm632, %v3533, 0.0
    %3553 = vadd.xlane.f32.xlu0 %v3552
    %v3554 = vpop.xlane.xlu0 %3553
    %v3555 = vsel %vm632, %v3535, 0.0
    %3556 = vadd.xlane.f32.xlu0 %v3555
    %v3557 = vpop.xlane.xlu0 %3556
    %v3558 = vsel %vm632, %v3537, 0.0
    %3559 = vadd.xlane.f32.xlu0 %v3558
    %v3560 = vpop.xlane.xlu0 %3559
    %v3561 = vsel %vm632, %v3539, 0.0
    %3562 = vadd.xlane.f32.xlu0 %v3561
    %v3563 = vpop.xlane.xlu0 %3562
    %v3564 = vrcp.pop %v3542
    %v3565 = vrcp.pop %v3545
    %v3566 = vrcp.pop %v3548
    %v3567 = vrcp.pop %v3551
    %v3568 = vrcp.pop %v3554
    %v3569 = vrcp.pop %v3557
    %v3570 = vrcp.pop %v3560
    %v3571 = vrcp.pop %v3563
    %v3572 = vmul.f32 %v3525, %v3564
    %v3573 = vmul.f32 %v3527, %v3565
    %v3574 = vmul.f32 %v3529, %v3566
    %v3575 = vmul.f32 %v3531, %v3567
    %v3576 = vmul.f32 %v3533, %v3568
    %v3577 = vmul.f32 %v3535, %v3569
    %v3578 = vmul.f32 %v3537, %v3570
    %v3579 = vmul.f32 %v3539, %v3571
    %v3580 = vpack.c.bf16 %v3573, %v3572
    %v3581 = vpack.c.bf16 %v3575, %v3574
    %v3582 = vpack.c.bf16 %v3577, %v3576
    %v3583 = vpack.c.bf16 %v3579, %v3578
    %3584 = vrot.lane.b32.xlu0 %v3078, 64
    %v3585 = vpop.permute.xlu0 %3584
    %v3587 = vsel %vm632, %v3580, 0
    %v3590 = vsel %vm1133, %v3585, 0
    %3592 = vmatprep.subr.bf16.mxu0 0
    %3593 = vmatpush1.bf16.msra.mxu0 0
    %3594 = vmatprep.subr.bf16.mxu0 0
    %3595 = vmatpush1.bf16.msra.mxu0 0
    %3596 = vmatprep.subr.bf16.mxu0 0
    %3597 = vmatpush1.bf16.msra.mxu0 0
    %3598 = vmatprep.subr.bf16.mxu0 0
    %3599 = vmatpush1.bf16.msra.mxu0 0
    %3600 = vmatprep.subr.bf16.mxu0 0
    %3601 = vmatpush1.bf16.msra.mxu0 0
    %3602 = vmatprep.subr.bf16.mxu0 0
    %3603 = vmatpush1.bf16.msra.mxu0 0
    %3604 = vmatprep.subr.bf16.mxu0 0
    %3605 = vmatpush1.bf16.msra.mxu0 0
    %3606 = vmatprep.subr.bf16.mxu0 0
    %3607 = vmatpush1.bf16.msra.mxu0 %v3590
    %3608 = vmatprep.subr.bf16.mxu0 0
    %3609 = vmatpush2.bf16.msra.mxu0 0
    %3610 = vmatprep.subr.bf16.mxu0 0
    %3611 = vmatpush2.bf16.msra.mxu0 0
    %3612 = vmatprep.subr.bf16.mxu0 0
    %3613 = vmatpush2.bf16.msra.mxu0 0
    %3614 = vmatprep.subr.bf16.mxu0 0
    %3615 = vmatpush2.bf16.msra.mxu0 0
    %3616 = vmatprep.subr.bf16.mxu0 0
    %3617 = vmatpush2.bf16.msra.mxu0 0
    %3618 = vmatprep.subr.bf16.mxu0 0
    %3619 = vmatpush2.bf16.msra.mxu0 0
    %3620 = vmatprep.subr.bf16.mxu0 0
    %3621 = vmatpush2.bf16.msra.mxu0 0
    %3622 = vmatprep.subr.bf16.mxu0 0
    %3623 = vmatpush2.bf16.msra.mxu0 0
    %3624 = vmatprep.mubr.bf16.mxu0 0
    %3625 = vmatmul.mubr.bf16.gmra.mxu0 %v3587
    %v3626 = vpop.f32.mrf.mxu0
    %v3627 = vadd.f32 0.0, %v3626
    %v3628 = vpop.f32.mrf.mxu0
    %v3629 = vpop.f32.mrf.mxu0
    %v3630 = vpop.f32.mrf.mxu0
    %3631 = vdwg.mxu0
    %v3633 = vrot.slane %v3580, 4
    %3634 = vrot.lane.b32.xlu0 %v3078, 56
    %v3635 = vpop.permute.xlu0 %3634
    %v3637 = vsel %vm632, %v3633, 0
    %v3640 = vsel %vm1133, %v3635, 0
    %3642 = vmatprep.subr.bf16.mxu0 0
    %3643 = vmatpush1.bf16.msra.mxu0 0
    %3644 = vmatprep.subr.bf16.mxu0 0
    %3645 = vmatpush1.bf16.msra.mxu0 0
    %3646 = vmatprep.subr.bf16.mxu0 0
    %3647 = vmatpush1.bf16.msra.mxu0 0
    %3648 = vmatprep.subr.bf16.mxu0 0
    %3649 = vmatpush1.bf16.msra.mxu0 0
    %3650 = vmatprep.subr.bf16.mxu0 0
    %3651 = vmatpush1.bf16.msra.mxu0 0
    %3652 = vmatprep.subr.bf16.mxu0 0
    %3653 = vmatpush1.bf16.msra.mxu0 0
    %3654 = vmatprep.subr.bf16.mxu0 0
    %3655 = vmatpush1.bf16.msra.mxu0 0
    %3656 = vmatprep.subr.bf16.mxu0 0
    %3657 = vmatpush1.bf16.msra.mxu0 %v3640
    %3658 = vmatprep.subr.bf16.mxu0 0
    %3659 = vmatpush2.bf16.msra.mxu0 0
    %3660 = vmatprep.subr.bf16.mxu0 0
    %3661 = vmatpush2.bf16.msra.mxu0 0
    %3662 = vmatprep.subr.bf16.mxu0 0
    %3663 = vmatpush2.bf16.msra.mxu0 0
    %3664 = vmatprep.subr.bf16.mxu0 0
    %3665 = vmatpush2.bf16.msra.mxu0 0
    %3666 = vmatprep.subr.bf16.mxu0 0
    %3667 = vmatpush2.bf16.msra.mxu0 0
    %3668 = vmatprep.subr.bf16.mxu0 0
    %3669 = vmatpush2.bf16.msra.mxu0 0
    %3670 = vmatprep.subr.bf16.mxu0 0
    %3671 = vmatpush2.bf16.msra.mxu0 0
    %3672 = vmatprep.subr.bf16.mxu0 0
    %3673 = vmatpush2.bf16.msra.mxu0 0
    %3674 = vmatprep.mubr.bf16.mxu0 0
    %3675 = vmatmul.mubr.bf16.gmra.mxu0 %v3637
    %v3676 = vpop.f32.mrf.mxu0
    %v3677 = vadd.f32 0.0, %v3676
    %v3678 = vpop.f32.mrf.mxu0
    %v3679 = vpop.f32.mrf.mxu0
    %v3680 = vpop.f32.mrf.mxu0
    %3681 = vdwg.mxu0
    %3682 = vrot.lane.b32.xlu0 %v3078, 48
    %v3683 = vpop.permute.xlu0 %3682
    %v3685 = vsel %vm632, %v3581, 0
    %v3688 = vsel %vm1133, %v3683, 0
    %3690 = vmatprep.subr.bf16.mxu0 0
    %3691 = vmatpush1.bf16.msra.mxu0 0
    %3692 = vmatprep.subr.bf16.mxu0 0
    %3693 = vmatpush1.bf16.msra.mxu0 0
    %3694 = vmatprep.subr.bf16.mxu0 0
    %3695 = vmatpush1.bf16.msra.mxu0 0
    %3696 = vmatprep.subr.bf16.mxu0 0
    %3697 = vmatpush1.bf16.msra.mxu0 0
    %3698 = vmatprep.subr.bf16.mxu0 0
    %3699 = vmatpush1.bf16.msra.mxu0 0
    %3700 = vmatprep.subr.bf16.mxu0 0
    %3701 = vmatpush1.bf16.msra.mxu0 0
    %3702 = vmatprep.subr.bf16.mxu0 0
    %3703 = vmatpush1.bf16.msra.mxu0 0
    %3704 = vmatprep.subr.bf16.mxu0 0
    %3705 = vmatpush1.bf16.msra.mxu0 %v3688
    %3706 = vmatprep.subr.bf16.mxu0 0
    %3707 = vmatpush2.bf16.msra.mxu0 0
    %3708 = vmatprep.subr.bf16.mxu0 0
    %3709 = vmatpush2.bf16.msra.mxu0 0
    %3710 = vmatprep.subr.bf16.mxu0 0
    %3711 = vmatpush2.bf16.msra.mxu0 0
    %3712 = vmatprep.subr.bf16.mxu0 0
    %3713 = vmatpush2.bf16.msra.mxu0 0
    %3714 = vmatprep.subr.bf16.mxu0 0
    %3715 = vmatpush2.bf16.msra.mxu0 0
    %3716 = vmatprep.subr.bf16.mxu0 0
    %3717 = vmatpush2.bf16.msra.mxu0 0
    %3718 = vmatprep.subr.bf16.mxu0 0
    %3719 = vmatpush2.bf16.msra.mxu0 0
    %3720 = vmatprep.subr.bf16.mxu0 0
    %3721 = vmatpush2.bf16.msra.mxu0 0
    %3722 = vmatprep.mubr.bf16.mxu0 0
    %3723 = vmatmul.mubr.bf16.gmra.mxu0 %v3685
    %v3724 = vpop.f32.mrf.mxu0
    %v3725 = vadd.f32 0.0, %v3724
    %v3726 = vpop.f32.mrf.mxu0
    %v3727 = vpop.f32.mrf.mxu0
    %v3728 = vpop.f32.mrf.mxu0
    %3729 = vdwg.mxu0
    %v3731 = vrot.slane %v3581, 4
    %3732 = vrot.lane.b32.xlu0 %v3078, 40
    %v3733 = vpop.permute.xlu0 %3732
    %v3735 = vsel %vm632, %v3731, 0
    %v3738 = vsel %vm1133, %v3733, 0
    %3740 = vmatprep.subr.bf16.mxu0 0
    %3741 = vmatpush1.bf16.msra.mxu0 0
    %3742 = vmatprep.subr.bf16.mxu0 0
    %3743 = vmatpush1.bf16.msra.mxu0 0
    %3744 = vmatprep.subr.bf16.mxu0 0
    %3745 = vmatpush1.bf16.msra.mxu0 0
    %3746 = vmatprep.subr.bf16.mxu0 0
    %3747 = vmatpush1.bf16.msra.mxu0 0
    %3748 = vmatprep.subr.bf16.mxu0 0
    %3749 = vmatpush1.bf16.msra.mxu0 0
    %3750 = vmatprep.subr.bf16.mxu0 0
    %3751 = vmatpush1.bf16.msra.mxu0 0
    %3752 = vmatprep.subr.bf16.mxu0 0
    %3753 = vmatpush1.bf16.msra.mxu0 0
    %3754 = vmatprep.subr.bf16.mxu0 0
    %3755 = vmatpush1.bf16.msra.mxu0 %v3738
    %3756 = vmatprep.subr.bf16.mxu0 0
    %3757 = vmatpush2.bf16.msra.mxu0 0
    %3758 = vmatprep.subr.bf16.mxu0 0
    %3759 = vmatpush2.bf16.msra.mxu0 0
    %3760 = vmatprep.subr.bf16.mxu0 0
    %3761 = vmatpush2.bf16.msra.mxu0 0
    %3762 = vmatprep.subr.bf16.mxu0 0
    %3763 = vmatpush2.bf16.msra.mxu0 0
    %3764 = vmatprep.subr.bf16.mxu0 0
    %3765 = vmatpush2.bf16.msra.mxu0 0
    %3766 = vmatprep.subr.bf16.mxu0 0
    %3767 = vmatpush2.bf16.msra.mxu0 0
    %3768 = vmatprep.subr.bf16.mxu0 0
    %3769 = vmatpush2.bf16.msra.mxu0 0
    %3770 = vmatprep.subr.bf16.mxu0 0
    %3771 = vmatpush2.bf16.msra.mxu0 0
    %3772 = vmatprep.mubr.bf16.mxu0 0
    %3773 = vmatmul.mubr.bf16.gmra.mxu0 %v3735
    %v3774 = vpop.f32.mrf.mxu0
    %v3775 = vadd.f32 0.0, %v3774
    %v3776 = vpop.f32.mrf.mxu0
    %v3777 = vpop.f32.mrf.mxu0
    %v3778 = vpop.f32.mrf.mxu0
    %3779 = vdwg.mxu0
    %3781 = vrot.lane.b32.xlu0 %v3677, 8
    %v3782 = vpop.permute.xlu0 %3781
    %3785 = vrot.lane.b32.xlu0 %v3725, 16
    %v3786 = vpop.permute.xlu0 %3785
    %3789 = vrot.lane.b32.xlu0 %v3775, 24
    %v3790 = vpop.permute.xlu0 %3789
    %v3792 = vsel %vm632, %v3627, %v3782
    %v3793 = vsel %vm1338, %v3792, %v3786
    %v3794 = vsel %vm1340, %v3793, %v3790
    %3795 = vrot.lane.b32.xlu0 %v3285, 64
    %v3796 = vpop.permute.xlu0 %3795
    %v3798 = vsel %vm632, %v3582, 0
    %v3801 = vsel %vm1133, %v3796, 0
    %3803 = vmatprep.subr.bf16.mxu0 0
    %3804 = vmatpush1.bf16.msra.mxu0 0
    %3805 = vmatprep.subr.bf16.mxu0 0
    %3806 = vmatpush1.bf16.msra.mxu0 0
    %3807 = vmatprep.subr.bf16.mxu0 0
    %3808 = vmatpush1.bf16.msra.mxu0 0
    %3809 = vmatprep.subr.bf16.mxu0 0
    %3810 = vmatpush1.bf16.msra.mxu0 0
    %3811 = vmatprep.subr.bf16.mxu0 0
    %3812 = vmatpush1.bf16.msra.mxu0 0
    %3813 = vmatprep.subr.bf16.mxu0 0
    %3814 = vmatpush1.bf16.msra.mxu0 0
    %3815 = vmatprep.subr.bf16.mxu0 0
    %3816 = vmatpush1.bf16.msra.mxu0 0
    %3817 = vmatprep.subr.bf16.mxu0 0
    %3818 = vmatpush1.bf16.msra.mxu0 %v3801
    %3819 = vmatprep.subr.bf16.mxu0 0
    %3820 = vmatpush2.bf16.msra.mxu0 0
    %3821 = vmatprep.subr.bf16.mxu0 0
    %3822 = vmatpush2.bf16.msra.mxu0 0
    %3823 = vmatprep.subr.bf16.mxu0 0
    %3824 = vmatpush2.bf16.msra.mxu0 0
    %3825 = vmatprep.subr.bf16.mxu0 0
    %3826 = vmatpush2.bf16.msra.mxu0 0
    %3827 = vmatprep.subr.bf16.mxu0 0
    %3828 = vmatpush2.bf16.msra.mxu0 0
    %3829 = vmatprep.subr.bf16.mxu0 0
    %3830 = vmatpush2.bf16.msra.mxu0 0
    %3831 = vmatprep.subr.bf16.mxu0 0
    %3832 = vmatpush2.bf16.msra.mxu0 0
    %3833 = vmatprep.subr.bf16.mxu0 0
    %3834 = vmatpush2.bf16.msra.mxu0 0
    %3835 = vmatprep.mubr.bf16.mxu0 0
    %3836 = vmatmul.mubr.bf16.gmra.mxu0 %v3798
    %v3837 = vpop.f32.mrf.mxu0
    %v3838 = vadd.f32 0.0, %v3837
    %v3839 = vpop.f32.mrf.mxu0
    %v3840 = vpop.f32.mrf.mxu0
    %v3841 = vpop.f32.mrf.mxu0
    %3842 = vdwg.mxu0
    %v3844 = vrot.slane %v3582, 4
    %3845 = vrot.lane.b32.xlu0 %v3285, 56
    %v3846 = vpop.permute.xlu0 %3845
    %v3848 = vsel %vm632, %v3844, 0
    %v3851 = vsel %vm1133, %v3846, 0
    %3853 = vmatprep.subr.bf16.mxu0 0
    %3854 = vmatpush1.bf16.msra.mxu0 0
    %3855 = vmatprep.subr.bf16.mxu0 0
    %3856 = vmatpush1.bf16.msra.mxu0 0
    %3857 = vmatprep.subr.bf16.mxu0 0
    %3858 = vmatpush1.bf16.msra.mxu0 0
    %3859 = vmatprep.subr.bf16.mxu0 0
    %3860 = vmatpush1.bf16.msra.mxu0 0
    %3861 = vmatprep.subr.bf16.mxu0 0
    %3862 = vmatpush1.bf16.msra.mxu0 0
    %3863 = vmatprep.subr.bf16.mxu0 0
    %3864 = vmatpush1.bf16.msra.mxu0 0
    %3865 = vmatprep.subr.bf16.mxu0 0
    %3866 = vmatpush1.bf16.msra.mxu0 0
    %3867 = vmatprep.subr.bf16.mxu0 0
    %3868 = vmatpush1.bf16.msra.mxu0 %v3851
    %3869 = vmatprep.subr.bf16.mxu0 0
    %3870 = vmatpush2.bf16.msra.mxu0 0
    %3871 = vmatprep.subr.bf16.mxu0 0
    %3872 = vmatpush2.bf16.msra.mxu0 0
    %3873 = vmatprep.subr.bf16.mxu0 0
    %3874 = vmatpush2.bf16.msra.mxu0 0
    %3875 = vmatprep.subr.bf16.mxu0 0
    %3876 = vmatpush2.bf16.msra.mxu0 0
    %3877 = vmatprep.subr.bf16.mxu0 0
    %3878 = vmatpush2.bf16.msra.mxu0 0
    %3879 = vmatprep.subr.bf16.mxu0 0
    %3880 = vmatpush2.bf16.msra.mxu0 0
    %3881 = vmatprep.subr.bf16.mxu0 0
    %3882 = vmatpush2.bf16.msra.mxu0 0
    %3883 = vmatprep.subr.bf16.mxu0 0
    %3884 = vmatpush2.bf16.msra.mxu0 0
    %3885 = vmatprep.mubr.bf16.mxu0 0
    %3886 = vmatmul.mubr.bf16.gmra.mxu0 %v3848
    %v3887 = vpop.f32.mrf.mxu0
    %v3888 = vadd.f32 0.0, %v3887
    %v3889 = vpop.f32.mrf.mxu0
    %v3890 = vpop.f32.mrf.mxu0
    %v3891 = vpop.f32.mrf.mxu0
    %3892 = vdwg.mxu0
    %3893 = vrot.lane.b32.xlu0 %v3285, 48
    %v3894 = vpop.permute.xlu0 %3893
    %v3896 = vsel %vm632, %v3583, 0
    %v3899 = vsel %vm1133, %v3894, 0
    %3901 = vmatprep.subr.bf16.mxu0 0
    %3902 = vmatpush1.bf16.msra.mxu0 0
    %3903 = vmatprep.subr.bf16.mxu0 0
    %3904 = vmatpush1.bf16.msra.mxu0 0
    %3905 = vmatprep.subr.bf16.mxu0 0
    %3906 = vmatpush1.bf16.msra.mxu0 0
    %3907 = vmatprep.subr.bf16.mxu0 0
    %3908 = vmatpush1.bf16.msra.mxu0 0
    %3909 = vmatprep.subr.bf16.mxu0 0
    %3910 = vmatpush1.bf16.msra.mxu0 0
    %3911 = vmatprep.subr.bf16.mxu0 0
    %3912 = vmatpush1.bf16.msra.mxu0 0
    %3913 = vmatprep.subr.bf16.mxu0 0
    %3914 = vmatpush1.bf16.msra.mxu0 0
    %3915 = vmatprep.subr.bf16.mxu0 0
    %3916 = vmatpush1.bf16.msra.mxu0 %v3899
    %3917 = vmatprep.subr.bf16.mxu0 0
    %3918 = vmatpush2.bf16.msra.mxu0 0
    %3919 = vmatprep.subr.bf16.mxu0 0
    %3920 = vmatpush2.bf16.msra.mxu0 0
    %3921 = vmatprep.subr.bf16.mxu0 0
    %3922 = vmatpush2.bf16.msra.mxu0 0
    %3923 = vmatprep.subr.bf16.mxu0 0
    %3924 = vmatpush2.bf16.msra.mxu0 0
    %3925 = vmatprep.subr.bf16.mxu0 0
    %3926 = vmatpush2.bf16.msra.mxu0 0
    %3927 = vmatprep.subr.bf16.mxu0 0
    %3928 = vmatpush2.bf16.msra.mxu0 0
    %3929 = vmatprep.subr.bf16.mxu0 0
    %3930 = vmatpush2.bf16.msra.mxu0 0
    %3931 = vmatprep.subr.bf16.mxu0 0
    %3932 = vmatpush2.bf16.msra.mxu0 0
    %3933 = vmatprep.mubr.bf16.mxu0 0
    %3934 = vmatmul.mubr.bf16.gmra.mxu0 %v3896
    %v3935 = vpop.f32.mrf.mxu0
    %v3936 = vadd.f32 0.0, %v3935
    %v3937 = vpop.f32.mrf.mxu0
    %v3938 = vpop.f32.mrf.mxu0
    %v3939 = vpop.f32.mrf.mxu0
    %3940 = vdwg.mxu0
    %v3942 = vrot.slane %v3583, 4
    %3943 = vrot.lane.b32.xlu0 %v3285, 40
    %v3944 = vpop.permute.xlu0 %3943
    %v3946 = vsel %vm632, %v3942, 0
    %v3949 = vsel %vm1133, %v3944, 0
    %3951 = vmatprep.subr.bf16.mxu0 0
    %3952 = vmatpush1.bf16.msra.mxu0 0
    %3953 = vmatprep.subr.bf16.mxu0 0
    %3954 = vmatpush1.bf16.msra.mxu0 0
    %3955 = vmatprep.subr.bf16.mxu0 0
    %3956 = vmatpush1.bf16.msra.mxu0 0
    %3957 = vmatprep.subr.bf16.mxu0 0
    %3958 = vmatpush1.bf16.msra.mxu0 0
    %3959 = vmatprep.subr.bf16.mxu0 0
    %3960 = vmatpush1.bf16.msra.mxu0 0
    %3961 = vmatprep.subr.bf16.mxu0 0
    %3962 = vmatpush1.bf16.msra.mxu0 0
    %3963 = vmatprep.subr.bf16.mxu0 0
    %3964 = vmatpush1.bf16.msra.mxu0 0
    %3965 = vmatprep.subr.bf16.mxu0 0
    %3966 = vmatpush1.bf16.msra.mxu0 %v3949
    %3967 = vmatprep.subr.bf16.mxu0 0
    %3968 = vmatpush2.bf16.msra.mxu0 0
    %3969 = vmatprep.subr.bf16.mxu0 0
    %3970 = vmatpush2.bf16.msra.mxu0 0
    %3971 = vmatprep.subr.bf16.mxu0 0
    %3972 = vmatpush2.bf16.msra.mxu0 0
    %3973 = vmatprep.subr.bf16.mxu0 0
    %3974 = vmatpush2.bf16.msra.mxu0 0
    %3975 = vmatprep.subr.bf16.mxu0 0
    %3976 = vmatpush2.bf16.msra.mxu0 0
    %3977 = vmatprep.subr.bf16.mxu0 0
    %3978 = vmatpush2.bf16.msra.mxu0 0
    %3979 = vmatprep.subr.bf16.mxu0 0
    %3980 = vmatpush2.bf16.msra.mxu0 0
    %3981 = vmatprep.subr.bf16.mxu0 0
    %3982 = vmatpush2.bf16.msra.mxu0 0
    %3983 = vmatprep.mubr.bf16.mxu0 0
    %3984 = vmatmul.mubr.bf16.gmra.mxu0 %v3946
    %v3985 = vpop.f32.mrf.mxu0
    %v3986 = vadd.f32 0.0, %v3985
    %v3987 = vpop.f32.mrf.mxu0
    %v3988 = vpop.f32.mrf.mxu0
    %v3989 = vpop.f32.mrf.mxu0
    %3990 = vdwg.mxu0
    %3992 = vrot.lane.b32.xlu0 %v3888, 8
    %v3993 = vpop.permute.xlu0 %3992
    %3996 = vrot.lane.b32.xlu0 %v3936, 16
    %v3997 = vpop.permute.xlu0 %3996
    %4000 = vrot.lane.b32.xlu0 %v3986, 24
    %v4001 = vpop.permute.xlu0 %4000
    %v4003 = vsel %vm632, %v3838, %v3993
    %v4004 = vsel %vm1338, %v4003, %v3997
    %v4005 = vsel %vm1340, %v4004, %v4001
    %v4006 = vpack.c.bf16 %v4005, %v3794
    %v4008 = vlaneseq
    %v4009 = vshrl.u32 %v4008, 7
    %v4010 = vsub.s32 0, %v4009
    %v4011 = vrot.slane %v3085, %v4010
    %v4017 = vunpack.c.l.b16 %v3080
    %v4018 = vunpack.c.l.b16 %v3081
    %v4019 = vunpack.c.l.b16 %v3082
    %v4020 = vunpack.c.l.b16 %v3083
    %v4021 = vpack.c.b16 %v4018, %v4017
    %v4022 = vpack.c.b16 %v4020, %v4019
    %v4026 = vsel %vm578, %v4006, 0
    %4028 = vmatprep.subr.bf16.mxu0 0
    %4029 = vmatpush1.bf16.msra.mxu0 0
    %4030 = vmatprep.subr.bf16.mxu0 0
    %4031 = vmatpush1.bf16.msra.mxu0 0
    %4032 = vmatprep.subr.bf16.mxu0 0
    %4033 = vmatpush1.bf16.msra.mxu0 0
    %4034 = vmatprep.subr.bf16.mxu0 0
    %4035 = vmatpush1.bf16.msra.mxu0 0
    %4036 = vmatprep.subr.bf16.mxu0 0
    %4037 = vmatpush1.bf16.msra.mxu0 0
    %4038 = vmatprep.subr.bf16.mxu0 0
    %4039 = vmatpush1.bf16.msra.mxu0 0
    %4040 = vmatprep.subr.bf16.mxu0 0
    %4041 = vmatpush1.bf16.msra.mxu0 %v4022
    %4042 = vmatprep.subr.bf16.mxu0 0
    %4043 = vmatpush1.bf16.msra.mxu0 %v4021
    %4044 = vmatprep.subr.bf16.mxu0 0
    %4045 = vmatpush2.bf16.msra.mxu0 0
    %4046 = vmatprep.subr.bf16.mxu0 0
    %4047 = vmatpush2.bf16.msra.mxu0 0
    %4048 = vmatprep.subr.bf16.mxu0 0
    %4049 = vmatpush2.bf16.msra.mxu0 0
    %4050 = vmatprep.subr.bf16.mxu0 0
    %4051 = vmatpush2.bf16.msra.mxu0 0
    %4052 = vmatprep.subr.bf16.mxu0 0
    %4053 = vmatpush2.bf16.msra.mxu0 0
    %4054 = vmatprep.subr.bf16.mxu0 0
    %4055 = vmatpush2.bf16.msra.mxu0 0
    %4056 = vmatprep.subr.bf16.mxu0 0
    %4057 = vmatpush2.bf16.msra.mxu0 0
    %4058 = vmatprep.subr.bf16.mxu0 0
    %4059 = vmatpush2.bf16.msra.mxu0 0
    %4060 = vmatprep.mubr.bf16.mxu0 0
    %4061 = vmatmul.mubr.bf16.gmra.mxu0 %v4026
    %v4062 = vpop.f32.mrf.mxu0
    %v4063 = vadd.f32 %v4011, %v4062
    %v4064 = vpop.f32.mrf.mxu0
    %v4065 = vpop.f32.mrf.mxu0
    %v4066 = vadd.f32 %v4011, %v4065
    %v4067 = vpop.f32.mrf.mxu0
    %4068 = vdwg.mxu0
    %v4069 = vadd.f32 %v3006, %v4063
    %v4070 = vadd.f32 %v3007, %v4066
    %s4071 = scalar_lea.vmem [#allocation19], 1
    %v4072 = vld [vmem:[%s4071] sm:$0x1]
    %s4073 = scalar_lea.vmem [#allocation20], 1
    %v4074 = vld [vmem:[%s4073] sm:$0x1]
    %v4075 = vsel %vm578, %v4069, 0.0
    %4076 = vadd.xlane.f32.xlu0 %v4075
    %v4077 = vpop.xlane.xlu0 %4076
    %v4078 = vsel %vm578, %v4070, 0.0
    %4079 = vadd.xlane.f32.xlu0 %v4078
    %v4080 = vpop.xlane.xlu0 %4079
    %v4081 = vmul.f32 %v4077, %v1626
    %v4082 = vmul.f32 %v4080, %v1626
    %v4083 = vsub.f32 %v4069, %v4081
    %v4084 = vsub.f32 %v4070, %v4082
    %v4085 = vmul.f32 %v4083, %v4083
    %v4086 = vmul.f32 %v4084, %v4084
    %v4087 = vsel %vm578, %v4085, 0.0
    %4088 = vadd.xlane.f32.xlu0 %v4087
    %v4089 = vpop.xlane.xlu0 %4088
    %v4090 = vsel %vm578, %v4086, 0.0
    %4091 = vadd.xlane.f32.xlu0 %v4090
    %v4092 = vpop.xlane.xlu0 %4091
    %v4093 = vmul.f32 %v4089, %v1626
    %v4094 = vmul.f32 %v4092, %v1626
    %v4095 = vadd.f32 %v4093, 1e-05
    %v4096 = vadd.f32 %v4094, 1e-05
    %v4097 = vrsqrt.pop %v4095
    %v4098 = vrsqrt.pop %v4096
    %v4099 = vmul.f32 %v4083, %v4097
    %v4100 = vmul.f32 %v4084, %v4098
    %v4102 = vlaneseq
    %v4103 = vshrl.u32 %v4102, 7
    %v4104 = vsub.s32 0, %v4103
    %v4105 = vrot.slane %v4072, %v4104
    %v4107 = vmul.f32 %v4099, %v4105
    %v4108 = vmul.f32 %v4100, %v4105
    %v4110 = vlaneseq
    %v4111 = vshrl.u32 %v4110, 7
    %v4112 = vsub.s32 0, %v4111
    %v4113 = vrot.slane %v4074, %v4112
    %v4115 = vadd.f32 %v4107, %v4113
    %v4116 = vadd.f32 %v4108, %v4113
    %v4117 = vpack.c.bf16 %v4116, %v4115
    %s4118 = scalar_lea.vmem [#allocation10], 16
    %v4119 = vld [vmem:[%s4118] sm:$0xf]
    %v4120 = vld [vmem:[%s4118 + $0x4] sm:$0xf]
    %v4121 = vld [vmem:[%s4118 + $0x8] sm:$0xf]
    %v4122 = vld [vmem:[%s4118 + $0xc] sm:$0xf]
    %s4123 = scalar_lea.vmem [#allocation11], 1
    %v4124 = vld [vmem:[%s4123] sm:$0x1]
    %v4126 = vlaneseq
    %v4127 = vshrl.u32 %v4126, 7
    %v4128 = vsub.s32 0, %v4127
    %v4129 = vrot.slane %v4124, %v4128
    %v4135 = vunpack.c.l.b16 %v4119
    %v4136 = vunpack.c.l.b16 %v4120
    %v4137 = vunpack.c.l.b16 %v4121
    %v4138 = vunpack.c.l.b16 %v4122
    %v4139 = vpack.c.b16 %v4136, %v4135
    %v4140 = vpack.c.b16 %v4138, %v4137
    %v4144 = vsel %vm578, %v4117, 0
    %4146 = vmatprep.subr.bf16.mxu0 0
    %4147 = vmatpush1.bf16.msra.mxu0 0
    %4148 = vmatprep.subr.bf16.mxu0 0
    %4149 = vmatpush1.bf16.msra.mxu0 0
    %4150 = vmatprep.subr.bf16.mxu0 0
    %4151 = vmatpush1.bf16.msra.mxu0 0
    %4152 = vmatprep.subr.bf16.mxu0 0
    %4153 = vmatpush1.bf16.msra.mxu0 0
    %4154 = vmatprep.subr.bf16.mxu0 0
    %4155 = vmatpush1.bf16.msra.mxu0 0
    %4156 = vmatprep.subr.bf16.mxu0 0
    %4157 = vmatpush1.bf16.msra.mxu0 0
    %4158 = vmatprep.subr.bf16.mxu0 0
    %4159 = vmatpush1.bf16.msra.mxu0 %v4140
    %4160 = vmatprep.subr.bf16.mxu0 0
    %4161 = vmatpush1.bf16.msra.mxu0 %v4139
    %4162 = vmatprep.subr.bf16.mxu0 0
    %4163 = vmatpush2.bf16.msra.mxu0 0
    %4164 = vmatprep.subr.bf16.mxu0 0
    %4165 = vmatpush2.bf16.msra.mxu0 0
    %4166 = vmatprep.subr.bf16.mxu0 0
    %4167 = vmatpush2.bf16.msra.mxu0 0
    %4168 = vmatprep.subr.bf16.mxu0 0
    %4169 = vmatpush2.bf16.msra.mxu0 0
    %4170 = vmatprep.subr.bf16.mxu0 0
    %4171 = vmatpush2.bf16.msra.mxu0 0
    %4172 = vmatprep.subr.bf16.mxu0 0
    %4173 = vmatpush2.bf16.msra.mxu0 0
    %4174 = vmatprep.subr.bf16.mxu0 0
    %4175 = vmatpush2.bf16.msra.mxu0 0
    %4176 = vmatprep.subr.bf16.mxu0 0
    %4177 = vmatpush2.bf16.msra.mxu0 0
    %4178 = vmatprep.mubr.bf16.mxu0 0
    %4179 = vmatmul.mubr.bf16.gmra.mxu0 %v4144
    %v4180 = vpop.f32.mrf.mxu0
    %v4181 = vadd.f32 %v4129, %v4180
    %v4182 = vpop.f32.mrf.mxu0
    %v4183 = vpop.f32.mrf.mxu0
    %v4184 = vadd.f32 %v4129, %v4183
    %v4185 = vpop.f32.mrf.mxu0
    %4186 = vdwg.mxu0
    %v4187 = vpack.c.bf16 %v4184, %v4181
    %s4188 = scalar_lea.vmem [#allocation13], 16
    %v4189 = vld [vmem:[%s4188] sm:$0xf]
    %v4190 = vld [vmem:[%s4188 + $0x4] sm:$0xf]
    %v4191 = vld [vmem:[%s4188 + $0x8] sm:$0xf]
    %v4192 = vld [vmem:[%s4188 + $0xc] sm:$0xf]
    %s4193 = scalar_lea.vmem [#allocation14], 1
    %v4194 = vld [vmem:[%s4193] sm:$0x1]
    %v4196 = vlaneseq
    %v4197 = vshrl.u32 %v4196, 7
    %v4198 = vsub.s32 0, %v4197
    %v4199 = vrot.slane %v4194, %v4198
    %v4205 = vunpack.c.l.b16 %v4189
    %v4206 = vunpack.c.l.b16 %v4190
    %v4207 = vunpack.c.l.b16 %v4191
    %v4208 = vunpack.c.l.b16 %v4192
    %v4209 = vpack.c.b16 %v4206, %v4205
    %v4210 = vpack.c.b16 %v4208, %v4207
    %4213 = vmatprep.subr.bf16.mxu0 0
    %4214 = vmatpush1.bf16.msra.mxu0 0
    %4215 = vmatprep.subr.bf16.mxu0 0
    %4216 = vmatpush1.bf16.msra.mxu0 0
    %4217 = vmatprep.subr.bf16.mxu0 0
    %4218 = vmatpush1.bf16.msra.mxu0 0
    %4219 = vmatprep.subr.bf16.mxu0 0
    %4220 = vmatpush1.bf16.msra.mxu0 0
    %4221 = vmatprep.subr.bf16.mxu0 0
    %4222 = vmatpush1.bf16.msra.mxu0 0
    %4223 = vmatprep.subr.bf16.mxu0 0
    %4224 = vmatpush1.bf16.msra.mxu0 0
    %4225 = vmatprep.subr.bf16.mxu0 0
    %4226 = vmatpush1.bf16.msra.mxu0 %v4210
    %4227 = vmatprep.subr.bf16.mxu0 0
    %4228 = vmatpush1.bf16.msra.mxu0 %v4209
    %4229 = vmatprep.subr.bf16.mxu0 0
    %4230 = vmatpush2.bf16.msra.mxu0 0
    %4231 = vmatprep.subr.bf16.mxu0 0
    %4232 = vmatpush2.bf16.msra.mxu0 0
    %4233 = vmatprep.subr.bf16.mxu0 0
    %4234 = vmatpush2.bf16.msra.mxu0 0
    %4235 = vmatprep.subr.bf16.mxu0 0
    %4236 = vmatpush2.bf16.msra.mxu0 0
    %4237 = vmatprep.subr.bf16.mxu0 0
    %4238 = vmatpush2.bf16.msra.mxu0 0
    %4239 = vmatprep.subr.bf16.mxu0 0
    %4240 = vmatpush2.bf16.msra.mxu0 0
    %4241 = vmatprep.subr.bf16.mxu0 0
    %4242 = vmatpush2.bf16.msra.mxu0 0
    %4243 = vmatprep.subr.bf16.mxu0 0
    %4244 = vmatpush2.bf16.msra.mxu0 0
    %4245 = vmatprep.mubr.bf16.mxu0 0
    %4246 = vmatmul.mubr.bf16.gmra.mxu0 %v1756
    %v4247 = vpop.f32.mrf.mxu0
    %v4248 = vadd.f32 %v4199, %v4247
    %v4249 = vpop.f32.mrf.mxu0
    %v4250 = vpop.f32.mrf.mxu0
    %v4251 = vadd.f32 %v4199, %v4250
    %v4252 = vpop.f32.mrf.mxu0
    %4253 = vdwg.mxu0
    %v4254 = vpack.c.bf16 %v4251, %v4248
    %s4255 = scalar_lea.vmem [#allocation16], 16
    %v4256 = vld [vmem:[%s4255] sm:$0xf]
    %v4257 = vld [vmem:[%s4255 + $0x4] sm:$0xf]
    %v4258 = vld [vmem:[%s4255 + $0x8] sm:$0xf]
    %v4259 = vld [vmem:[%s4255 + $0xc] sm:$0xf]
    %s4260 = scalar_lea.vmem [#allocation17], 1
    %v4261 = vld [vmem:[%s4260] sm:$0x1]
    %v4263 = vsel %vm632, %v4187, 0
    %v4266 = vsel %vm632, %v4254, 0
    %4268 = vmatprep.subr.bf16.mxu0 0
    %4269 = vmatpush1.bf16.xpose.msra.mxu0 0
    %4270 = vmatprep.subr.bf16.mxu0 0
    %4271 = vmatpush1.bf16.xpose.msra.mxu0 0
    %4272 = vmatprep.subr.bf16.mxu0 0
    %4273 = vmatpush1.bf16.xpose.msra.mxu0 0
    %4274 = vmatprep.subr.bf16.mxu0 0
    %4275 = vmatpush1.bf16.xpose.msra.mxu0 0
    %4276 = vmatprep.subr.bf16.mxu0 0
    %4277 = vmatpush1.bf16.xpose.msra.mxu0 0
    %4278 = vmatprep.subr.bf16.mxu0 0
    %4279 = vmatpush1.bf16.xpose.msra.mxu0 0
    %4280 = vmatprep.subr.bf16.mxu0 0
    %4281 = vmatpush1.bf16.xpose.msra.mxu0 0
    %4282 = vmatprep.subr.bf16.mxu0 0
    %4283 = vmatpush1.bf16.xpose.msra.mxu0 %v4266
    %4284 = vmatprep.subr.bf16.mxu0 0
    %4285 = vmatpush2.bf16.xpose.msra.mxu0 0
    %4286 = vmatprep.subr.bf16.mxu0 0
    %4287 = vmatpush2.bf16.xpose.msra.mxu0 0
    %4288 = vmatprep.subr.bf16.mxu0 0
    %4289 = vmatpush2.bf16.xpose.msra.mxu0 0
    %4290 = vmatprep.subr.bf16.mxu0 0
    %4291 = vmatpush2.bf16.xpose.msra.mxu0 0
    %4292 = vmatprep.subr.bf16.mxu0 0
    %4293 = vmatpush2.bf16.xpose.msra.mxu0 0
    %4294 = vmatprep.subr.bf16.mxu0 0
    %4295 = vmatpush2.bf16.xpose.msra.mxu0 0
    %4296 = vmatprep.subr.bf16.mxu0 0
    %4297 = vmatpush2.bf16.xpose.msra.mxu0 0
    %4298 = vmatprep.subr.bf16.mxu0 0
    %4299 = vmatpush2.bf16.xpose.msra.mxu0 0
    %4300 = vmatprep.mubr.bf16.mxu0 0
    %4301 = vmatmul.mubr.bf16.gmra.mxu0 %v4263
    %v4302 = vpop.f32.mrf.mxu0
    %v4303 = vadd.f32 0.0, %v4302
    %v4304 = vpop.f32.mrf.mxu0
    %v4305 = vpop.f32.mrf.mxu0
    %v4306 = vpop.f32.mrf.mxu0
    %4307 = vdwg.mxu0
    %4309 = vrot.lane.b32.xlu0 %v4187, 120
    %v4310 = vpop.permute.xlu0 %4309
    %4312 = vrot.lane.b32.xlu0 %v4254, 120
    %v4313 = vpop.permute.xlu0 %4312
    %v4315 = vsel %vm632, %v4310, 0
    %v4318 = vsel %vm632, %v4313, 0
    %4320 = vmatprep.subr.bf16.mxu0 0
    %4321 = vmatpush1.bf16.xpose.msra.mxu0 0
    %4322 = vmatprep.subr.bf16.mxu0 0
    %4323 = vmatpush1.bf16.xpose.msra.mxu0 0
    %4324 = vmatprep.subr.bf16.mxu0 0
    %4325 = vmatpush1.bf16.xpose.msra.mxu0 0
    %4326 = vmatprep.subr.bf16.mxu0 0
    %4327 = vmatpush1.bf16.xpose.msra.mxu0 0
    %4328 = vmatprep.subr.bf16.mxu0 0
    %4329 = vmatpush1.bf16.xpose.msra.mxu0 0
    %4330 = vmatprep.subr.bf16.mxu0 0
    %4331 = vmatpush1.bf16.xpose.msra.mxu0 0
    %4332 = vmatprep.subr.bf16.mxu0 0
    %4333 = vmatpush1.bf16.xpose.msra.mxu0 0
    %4334 = vmatprep.subr.bf16.mxu0 0
    %4335 = vmatpush1.bf16.xpose.msra.mxu0 %v4318
    %4336 = vmatprep.subr.bf16.mxu0 0
    %4337 = vmatpush2.bf16.xpose.msra.mxu0 0
    %4338 = vmatprep.subr.bf16.mxu0 0
    %4339 = vmatpush2.bf16.xpose.msra.mxu0 0
    %4340 = vmatprep.subr.bf16.mxu0 0
    %4341 = vmatpush2.bf16.xpose.msra.mxu0 0
    %4342 = vmatprep.subr.bf16.mxu0 0
    %4343 = vmatpush2.bf16.xpose.msra.mxu0 0
    %4344 = vmatprep.subr.bf16.mxu0 0
    %4345 = vmatpush2.bf16.xpose.msra.mxu0 0
    %4346 = vmatprep.subr.bf16.mxu0 0
    %4347 = vmatpush2.bf16.xpose.msra.mxu0 0
    %4348 = vmatprep.subr.bf16.mxu0 0
    %4349 = vmatpush2.bf16.xpose.msra.mxu0 0
    %4350 = vmatprep.subr.bf16.mxu0 0
    %4351 = vmatpush2.bf16.xpose.msra.mxu0 0
    %4352 = vmatprep.mubr.bf16.mxu0 0
    %4353 = vmatmul.mubr.bf16.gmra.mxu0 %v4315
    %v4354 = vpop.f32.mrf.mxu0
    %v4355 = vadd.f32 0.0, %v4354
    %v4356 = vpop.f32.mrf.mxu0
    %v4357 = vpop.f32.mrf.mxu0
    %v4358 = vpop.f32.mrf.mxu0
    %4359 = vdwg.mxu0
    %4360 = vrot.lane.b32.xlu0 %v4187, 112
    %v4361 = vpop.permute.xlu0 %4360
    %4362 = vrot.lane.b32.xlu0 %v4254, 112
    %v4363 = vpop.permute.xlu0 %4362
    %v4365 = vsel %vm632, %v4361, 0
    %v4368 = vsel %vm632, %v4363, 0
    %4370 = vmatprep.subr.bf16.mxu0 0
    %4371 = vmatpush1.bf16.xpose.msra.mxu0 0
    %4372 = vmatprep.subr.bf16.mxu0 0
    %4373 = vmatpush1.bf16.xpose.msra.mxu0 0
    %4374 = vmatprep.subr.bf16.mxu0 0
    %4375 = vmatpush1.bf16.xpose.msra.mxu0 0
    %4376 = vmatprep.subr.bf16.mxu0 0
    %4377 = vmatpush1.bf16.xpose.msra.mxu0 0
    %4378 = vmatprep.subr.bf16.mxu0 0
    %4379 = vmatpush1.bf16.xpose.msra.mxu0 0
    %4380 = vmatprep.subr.bf16.mxu0 0
    %4381 = vmatpush1.bf16.xpose.msra.mxu0 0
    %4382 = vmatprep.subr.bf16.mxu0 0
    %4383 = vmatpush1.bf16.xpose.msra.mxu0 0
    %4384 = vmatprep.subr.bf16.mxu0 0
    %4385 = vmatpush1.bf16.xpose.msra.mxu0 %v4368
    %4386 = vmatprep.subr.bf16.mxu0 0
    %4387 = vmatpush2.bf16.xpose.msra.mxu0 0
    %4388 = vmatprep.subr.bf16.mxu0 0
    %4389 = vmatpush2.bf16.xpose.msra.mxu0 0
    %4390 = vmatprep.subr.bf16.mxu0 0
    %4391 = vmatpush2.bf16.xpose.msra.mxu0 0
    %4392 = vmatprep.subr.bf16.mxu0 0
    %4393 = vmatpush2.bf16.xpose.msra.mxu0 0
    %4394 = vmatprep.subr.bf16.mxu0 0
    %4395 = vmatpush2.bf16.xpose.msra.mxu0 0
    %4396 = vmatprep.subr.bf16.mxu0 0
    %4397 = vmatpush2.bf16.xpose.msra.mxu0 0
    %4398 = vmatprep.subr.bf16.mxu0 0
    %4399 = vmatpush2.bf16.xpose.msra.mxu0 0
    %4400 = vmatprep.subr.bf16.mxu0 0
    %4401 = vmatpush2.bf16.xpose.msra.mxu0 0
    %4402 = vmatprep.mubr.bf16.mxu0 0
    %4403 = vmatmul.mubr.bf16.gmra.mxu0 %v4365
    %v4404 = vpop.f32.mrf.mxu0
    %v4405 = vadd.f32 0.0, %v4404
    %v4406 = vpop.f32.mrf.mxu0
    %v4407 = vpop.f32.mrf.mxu0
    %v4408 = vpop.f32.mrf.mxu0
    %4409 = vdwg.mxu0
    %4410 = vrot.lane.b32.xlu0 %v4187, 104
    %v4411 = vpop.permute.xlu0 %4410
    %4412 = vrot.lane.b32.xlu0 %v4254, 104
    %v4413 = vpop.permute.xlu0 %4412
    %v4415 = vsel %vm632, %v4411, 0
    %v4418 = vsel %vm632, %v4413, 0
    %4420 = vmatprep.subr.bf16.mxu0 0
    %4421 = vmatpush1.bf16.xpose.msra.mxu0 0
    %4422 = vmatprep.subr.bf16.mxu0 0
    %4423 = vmatpush1.bf16.xpose.msra.mxu0 0
    %4424 = vmatprep.subr.bf16.mxu0 0
    %4425 = vmatpush1.bf16.xpose.msra.mxu0 0
    %4426 = vmatprep.subr.bf16.mxu0 0
    %4427 = vmatpush1.bf16.xpose.msra.mxu0 0
    %4428 = vmatprep.subr.bf16.mxu0 0
    %4429 = vmatpush1.bf16.xpose.msra.mxu0 0
    %4430 = vmatprep.subr.bf16.mxu0 0
    %4431 = vmatpush1.bf16.xpose.msra.mxu0 0
    %4432 = vmatprep.subr.bf16.mxu0 0
    %4433 = vmatpush1.bf16.xpose.msra.mxu0 0
    %4434 = vmatprep.subr.bf16.mxu0 0
    %4435 = vmatpush1.bf16.xpose.msra.mxu0 %v4418
    %4436 = vmatprep.subr.bf16.mxu0 0
    %4437 = vmatpush2.bf16.xpose.msra.mxu0 0
    %4438 = vmatprep.subr.bf16.mxu0 0
    %4439 = vmatpush2.bf16.xpose.msra.mxu0 0
    %4440 = vmatprep.subr.bf16.mxu0 0
    %4441 = vmatpush2.bf16.xpose.msra.mxu0 0
    %4442 = vmatprep.subr.bf16.mxu0 0
    %4443 = vmatpush2.bf16.xpose.msra.mxu0 0
    %4444 = vmatprep.subr.bf16.mxu0 0
    %4445 = vmatpush2.bf16.xpose.msra.mxu0 0
    %4446 = vmatprep.subr.bf16.mxu0 0
    %4447 = vmatpush2.bf16.xpose.msra.mxu0 0
    %4448 = vmatprep.subr.bf16.mxu0 0
    %4449 = vmatpush2.bf16.xpose.msra.mxu0 0
    %4450 = vmatprep.subr.bf16.mxu0 0
    %4451 = vmatpush2.bf16.xpose.msra.mxu0 0
    %4452 = vmatprep.mubr.bf16.mxu0 0
    %4453 = vmatmul.mubr.bf16.gmra.mxu0 %v4415
    %v4454 = vpop.f32.mrf.mxu0
    %v4455 = vadd.f32 0.0, %v4454
    %v4456 = vpop.f32.mrf.mxu0
    %v4457 = vpop.f32.mrf.mxu0
    %v4458 = vpop.f32.mrf.mxu0
    %4459 = vdwg.mxu0
    %v4460 = vrot.slane %v4187, 4
    %v4461 = vrot.slane %v4254, 4
    %v4463 = vsel %vm632, %v4460, 0
    %v4466 = vsel %vm632, %v4461, 0
    %4468 = vmatprep.subr.bf16.mxu0 0
    %4469 = vmatpush1.bf16.xpose.msra.mxu0 0
    %4470 = vmatprep.subr.bf16.mxu0 0
    %4471 = vmatpush1.bf16.xpose.msra.mxu0 0
    %4472 = vmatprep.subr.bf16.mxu0 0
    %4473 = vmatpush1.bf16.xpose.msra.mxu0 0
    %4474 = vmatprep.subr.bf16.mxu0 0
    %4475 = vmatpush1.bf16.xpose.msra.mxu0 0
    %4476 = vmatprep.subr.bf16.mxu0 0
    %4477 = vmatpush1.bf16.xpose.msra.mxu0 0
    %4478 = vmatprep.subr.bf16.mxu0 0
    %4479 = vmatpush1.bf16.xpose.msra.mxu0 0
    %4480 = vmatprep.subr.bf16.mxu0 0
    %4481 = vmatpush1.bf16.xpose.msra.mxu0 0
    %4482 = vmatprep.subr.bf16.mxu0 0
    %4483 = vmatpush1.bf16.xpose.msra.mxu0 %v4466
    %4484 = vmatprep.subr.bf16.mxu0 0
    %4485 = vmatpush2.bf16.xpose.msra.mxu0 0
    %4486 = vmatprep.subr.bf16.mxu0 0
    %4487 = vmatpush2.bf16.xpose.msra.mxu0 0
    %4488 = vmatprep.subr.bf16.mxu0 0
    %4489 = vmatpush2.bf16.xpose.msra.mxu0 0
    %4490 = vmatprep.subr.bf16.mxu0 0
    %4491 = vmatpush2.bf16.xpose.msra.mxu0 0
    %4492 = vmatprep.subr.bf16.mxu0 0
    %4493 = vmatpush2.bf16.xpose.msra.mxu0 0
    %4494 = vmatprep.subr.bf16.mxu0 0
    %4495 = vmatpush2.bf16.xpose.msra.mxu0 0
    %4496 = vmatprep.subr.bf16.mxu0 0
    %4497 = vmatpush2.bf16.xpose.msra.mxu0 0
    %4498 = vmatprep.subr.bf16.mxu0 0
    %4499 = vmatpush2.bf16.xpose.msra.mxu0 0
    %4500 = vmatprep.mubr.bf16.mxu0 0
    %4501 = vmatmul.mubr.bf16.gmra.mxu0 %v4463
    %v4502 = vpop.f32.mrf.mxu0
    %v4503 = vadd.f32 0.0, %v4502
    %v4504 = vpop.f32.mrf.mxu0
    %v4505 = vpop.f32.mrf.mxu0
    %v4506 = vpop.f32.mrf.mxu0
    %4507 = vdwg.mxu0
    %4508 = vrot.lane.b32.xlu0 %v4460, 120
    %v4509 = vpop.permute.xlu0 %4508
    %4510 = vrot.lane.b32.xlu0 %v4461, 120
    %v4511 = vpop.permute.xlu0 %4510
    %v4513 = vsel %vm632, %v4509, 0
    %v4516 = vsel %vm632, %v4511, 0
    %4518 = vmatprep.subr.bf16.mxu0 0
    %4519 = vmatpush1.bf16.xpose.msra.mxu0 0
    %4520 = vmatprep.subr.bf16.mxu0 0
    %4521 = vmatpush1.bf16.xpose.msra.mxu0 0
    %4522 = vmatprep.subr.bf16.mxu0 0
    %4523 = vmatpush1.bf16.xpose.msra.mxu0 0
    %4524 = vmatprep.subr.bf16.mxu0 0
    %4525 = vmatpush1.bf16.xpose.msra.mxu0 0
    %4526 = vmatprep.subr.bf16.mxu0 0
    %4527 = vmatpush1.bf16.xpose.msra.mxu0 0
    %4528 = vmatprep.subr.bf16.mxu0 0
    %4529 = vmatpush1.bf16.xpose.msra.mxu0 0
    %4530 = vmatprep.subr.bf16.mxu0 0
    %4531 = vmatpush1.bf16.xpose.msra.mxu0 0
    %4532 = vmatprep.subr.bf16.mxu0 0
    %4533 = vmatpush1.bf16.xpose.msra.mxu0 %v4516
    %4534 = vmatprep.subr.bf16.mxu0 0
    %4535 = vmatpush2.bf16.xpose.msra.mxu0 0
    %4536 = vmatprep.subr.bf16.mxu0 0
    %4537 = vmatpush2.bf16.xpose.msra.mxu0 0
    %4538 = vmatprep.subr.bf16.mxu0 0
    %4539 = vmatpush2.bf16.xpose.msra.mxu0 0
    %4540 = vmatprep.subr.bf16.mxu0 0
    %4541 = vmatpush2.bf16.xpose.msra.mxu0 0
    %4542 = vmatprep.subr.bf16.mxu0 0
    %4543 = vmatpush2.bf16.xpose.msra.mxu0 0
    %4544 = vmatprep.subr.bf16.mxu0 0
    %4545 = vmatpush2.bf16.xpose.msra.mxu0 0
    %4546 = vmatprep.subr.bf16.mxu0 0
    %4547 = vmatpush2.bf16.xpose.msra.mxu0 0
    %4548 = vmatprep.subr.bf16.mxu0 0
    %4549 = vmatpush2.bf16.xpose.msra.mxu0 0
    %4550 = vmatprep.mubr.bf16.mxu0 0
    %4551 = vmatmul.mubr.bf16.gmra.mxu0 %v4513
    %v4552 = vpop.f32.mrf.mxu0
    %v4553 = vadd.f32 0.0, %v4552
    %v4554 = vpop.f32.mrf.mxu0
    %v4555 = vpop.f32.mrf.mxu0
    %v4556 = vpop.f32.mrf.mxu0
    %4557 = vdwg.mxu0
    %4558 = vrot.lane.b32.xlu0 %v4460, 112
    %v4559 = vpop.permute.xlu0 %4558
    %4560 = vrot.lane.b32.xlu0 %v4461, 112
    %v4561 = vpop.permute.xlu0 %4560
    %v4563 = vsel %vm632, %v4559, 0
    %v4566 = vsel %vm632, %v4561, 0
    %4568 = vmatprep.subr.bf16.mxu0 0
    %4569 = vmatpush1.bf16.xpose.msra.mxu0 0
    %4570 = vmatprep.subr.bf16.mxu0 0
    %4571 = vmatpush1.bf16.xpose.msra.mxu0 0
    %4572 = vmatprep.subr.bf16.mxu0 0
    %4573 = vmatpush1.bf16.xpose.msra.mxu0 0
    %4574 = vmatprep.subr.bf16.mxu0 0
    %4575 = vmatpush1.bf16.xpose.msra.mxu0 0
    %4576 = vmatprep.subr.bf16.mxu0 0
    %4577 = vmatpush1.bf16.xpose.msra.mxu0 0
    %4578 = vmatprep.subr.bf16.mxu0 0
    %4579 = vmatpush1.bf16.xpose.msra.mxu0 0
    %4580 = vmatprep.subr.bf16.mxu0 0
    %4581 = vmatpush1.bf16.xpose.msra.mxu0 0
    %4582 = vmatprep.subr.bf16.mxu0 0
    %4583 = vmatpush1.bf16.xpose.msra.mxu0 %v4566
    %4584 = vmatprep.subr.bf16.mxu0 0
    %4585 = vmatpush2.bf16.xpose.msra.mxu0 0
    %4586 = vmatprep.subr.bf16.mxu0 0
    %4587 = vmatpush2.bf16.xpose.msra.mxu0 0
    %4588 = vmatprep.subr.bf16.mxu0 0
    %4589 = vmatpush2.bf16.xpose.msra.mxu0 0
    %4590 = vmatprep.subr.bf16.mxu0 0
    %4591 = vmatpush2.bf16.xpose.msra.mxu0 0
    %4592 = vmatprep.subr.bf16.mxu0 0
    %4593 = vmatpush2.bf16.xpose.msra.mxu0 0
    %4594 = vmatprep.subr.bf16.mxu0 0
    %4595 = vmatpush2.bf16.xpose.msra.mxu0 0
    %4596 = vmatprep.subr.bf16.mxu0 0
    %4597 = vmatpush2.bf16.xpose.msra.mxu0 0
    %4598 = vmatprep.subr.bf16.mxu0 0
    %4599 = vmatpush2.bf16.xpose.msra.mxu0 0
    %4600 = vmatprep.mubr.bf16.mxu0 0
    %4601 = vmatmul.mubr.bf16.gmra.mxu0 %v4563
    %v4602 = vpop.f32.mrf.mxu0
    %v4603 = vadd.f32 0.0, %v4602
    %v4604 = vpop.f32.mrf.mxu0
    %v4605 = vpop.f32.mrf.mxu0
    %v4606 = vpop.f32.mrf.mxu0
    %4607 = vdwg.mxu0
    %4608 = vrot.lane.b32.xlu0 %v4460, 104
    %v4609 = vpop.permute.xlu0 %4608
    %4610 = vrot.lane.b32.xlu0 %v4461, 104
    %v4611 = vpop.permute.xlu0 %4610
    %v4613 = vsel %vm632, %v4609, 0
    %v4616 = vsel %vm632, %v4611, 0
    %4618 = vmatprep.subr.bf16.mxu0 0
    %4619 = vmatpush1.bf16.xpose.msra.mxu0 0
    %4620 = vmatprep.subr.bf16.mxu0 0
    %4621 = vmatpush1.bf16.xpose.msra.mxu0 0
    %4622 = vmatprep.subr.bf16.mxu0 0
    %4623 = vmatpush1.bf16.xpose.msra.mxu0 0
    %4624 = vmatprep.subr.bf16.mxu0 0
    %4625 = vmatpush1.bf16.xpose.msra.mxu0 0
    %4626 = vmatprep.subr.bf16.mxu0 0
    %4627 = vmatpush1.bf16.xpose.msra.mxu0 0
    %4628 = vmatprep.subr.bf16.mxu0 0
    %4629 = vmatpush1.bf16.xpose.msra.mxu0 0
    %4630 = vmatprep.subr.bf16.mxu0 0
    %4631 = vmatpush1.bf16.xpose.msra.mxu0 0
    %4632 = vmatprep.subr.bf16.mxu0 0
    %4633 = vmatpush1.bf16.xpose.msra.mxu0 %v4616
    %4634 = vmatprep.subr.bf16.mxu0 0
    %4635 = vmatpush2.bf16.xpose.msra.mxu0 0
    %4636 = vmatprep.subr.bf16.mxu0 0
    %4637 = vmatpush2.bf16.xpose.msra.mxu0 0
    %4638 = vmatprep.subr.bf16.mxu0 0
    %4639 = vmatpush2.bf16.xpose.msra.mxu0 0
    %4640 = vmatprep.subr.bf16.mxu0 0
    %4641 = vmatpush2.bf16.xpose.msra.mxu0 0
    %4642 = vmatprep.subr.bf16.mxu0 0
    %4643 = vmatpush2.bf16.xpose.msra.mxu0 0
    %4644 = vmatprep.subr.bf16.mxu0 0
    %4645 = vmatpush2.bf16.xpose.msra.mxu0 0
    %4646 = vmatprep.subr.bf16.mxu0 0
    %4647 = vmatpush2.bf16.xpose.msra.mxu0 0
    %4648 = vmatprep.subr.bf16.mxu0 0
    %4649 = vmatpush2.bf16.xpose.msra.mxu0 0
    %4650 = vmatprep.mubr.bf16.mxu0 0
    %4651 = vmatmul.mubr.bf16.gmra.mxu0 %v4613
    %v4652 = vpop.f32.mrf.mxu0
    %v4653 = vadd.f32 0.0, %v4652
    %v4654 = vpop.f32.mrf.mxu0
    %v4655 = vpop.f32.mrf.mxu0
    %v4656 = vpop.f32.mrf.mxu0
    %4657 = vdwg.mxu0
    %v4658 = vsel %vm632, %v4303, -inf
    %4659 = vmax.xlane.f32.xlu0 %v4658
    %v4660 = vpop.xlane.xlu0 %4659
    %v4661 = vsel %vm632, %v4355, -inf
    %4662 = vmax.xlane.f32.xlu0 %v4661
    %v4663 = vpop.xlane.xlu0 %4662
    %v4664 = vsel %vm632, %v4405, -inf
    %4665 = vmax.xlane.f32.xlu0 %v4664
    %v4666 = vpop.xlane.xlu0 %4665
    %v4667 = vsel %vm632, %v4455, -inf
    %4668 = vmax.xlane.f32.xlu0 %v4667
    %v4669 = vpop.xlane.xlu0 %4668
    %v4670 = vsel %vm632, %v4503, -inf
    %4671 = vmax.xlane.f32.xlu0 %v4670
    %v4672 = vpop.xlane.xlu0 %4671
    %v4673 = vsel %vm632, %v4553, -inf
    %4674 = vmax.xlane.f32.xlu0 %v4673
    %v4675 = vpop.xlane.xlu0 %4674
    %v4676 = vsel %vm632, %v4603, -inf
    %4677 = vmax.xlane.f32.xlu0 %v4676
    %v4678 = vpop.xlane.xlu0 %4677
    %v4679 = vsel %vm632, %v4653, -inf
    %4680 = vmax.xlane.f32.xlu0 %v4679
    %v4681 = vpop.xlane.xlu0 %4680
    %v4682 = vsub.f32 %v4303, %v4660
    %v4683 = vsub.f32 %v4355, %v4663
    %v4684 = vsub.f32 %v4405, %v4666
    %v4685 = vsub.f32 %v4455, %v4669
    %v4686 = vsub.f32 %v4503, %v4672
    %v4687 = vsub.f32 %v4553, %v4675
    %v4688 = vsub.f32 %v4603, %v4678
    %v4689 = vsub.f32 %v4653, %v4681
    %v4690 = vmul.f32 %v4682, 1.442695
    %v4691 = vpow.pop %v4690
    %v4692 = vmul.f32 %v4683, 1.442695
    %v4693 = vpow.pop %v4692
    %v4694 = vmul.f32 %v4684, 1.442695
    %v4695 = vpow.pop %v4694
    %v4696 = vmul.f32 %v4685, 1.442695
    %v4697 = vpow.pop %v4696
    %v4698 = vmul.f32 %v4686, 1.442695
    %v4699 = vpow.pop %v4698
    %v4700 = vmul.f32 %v4687, 1.442695
    %v4701 = vpow.pop %v4700
    %v4702 = vmul.f32 %v4688, 1.442695
    %v4703 = vpow.pop %v4702
    %v4704 = vmul.f32 %v4689, 1.442695
    %v4705 = vpow.pop %v4704
    %v4706 = vsel %vm632, %v4691, 0.0
    %4707 = vadd.xlane.f32.xlu0 %v4706
    %v4708 = vpop.xlane.xlu0 %4707
    %v4709 = vsel %vm632, %v4693, 0.0
    %4710 = vadd.xlane.f32.xlu0 %v4709
    %v4711 = vpop.xlane.xlu0 %4710
    %v4712 = vsel %vm632, %v4695, 0.0
    %4713 = vadd.xlane.f32.xlu0 %v4712
    %v4714 = vpop.xlane.xlu0 %4713
    %v4715 = vsel %vm632, %v4697, 0.0
    %4716 = vadd.xlane.f32.xlu0 %v4715
    %v4717 = vpop.xlane.xlu0 %4716
    %v4718 = vsel %vm632, %v4699, 0.0
    %4719 = vadd.xlane.f32.xlu0 %v4718
    %v4720 = vpop.xlane.xlu0 %4719
    %v4721 = vsel %vm632, %v4701, 0.0
    %4722 = vadd.xlane.f32.xlu0 %v4721
    %v4723 = vpop.xlane.xlu0 %4722
    %v4724 = vsel %vm632, %v4703, 0.0
    %4725 = vadd.xlane.f32.xlu0 %v4724
    %v4726 = vpop.xlane.xlu0 %4725
    %v4727 = vsel %vm632, %v4705, 0.0
    %4728 = vadd.xlane.f32.xlu0 %v4727
    %v4729 = vpop.xlane.xlu0 %4728
    %v4730 = vrcp.pop %v4708
    %v4731 = vrcp.pop %v4711
    %v4732 = vrcp.pop %v4714
    %v4733 = vrcp.pop %v4717
    %v4734 = vrcp.pop %v4720
    %v4735 = vrcp.pop %v4723
    %v4736 = vrcp.pop %v4726
    %v4737 = vrcp.pop %v4729
    %v4738 = vmul.f32 %v4691, %v4730
    %v4739 = vmul.f32 %v4693, %v4731
    %v4740 = vmul.f32 %v4695, %v4732
    %v4741 = vmul.f32 %v4697, %v4733
    %v4742 = vmul.f32 %v4699, %v4734
    %v4743 = vmul.f32 %v4701, %v4735
    %v4744 = vmul.f32 %v4703, %v4736
    %v4745 = vmul.f32 %v4705, %v4737
    %v4746 = vpack.c.bf16 %v4739, %v4738
    %v4747 = vpack.c.bf16 %v4741, %v4740
    %v4748 = vpack.c.bf16 %v4743, %v4742
    %v4749 = vpack.c.bf16 %v4745, %v4744
    %4750 = vrot.lane.b32.xlu0 %v4254, 96
    %v4751 = vpop.permute.xlu0 %4750
    %v4753 = vsel %vm632, %v4746, 0
    %v4756 = vsel %vm1133, %v4751, 0
    %4758 = vmatprep.subr.bf16.mxu0 0
    %4759 = vmatpush1.bf16.msra.mxu0 0
    %4760 = vmatprep.subr.bf16.mxu0 0
    %4761 = vmatpush1.bf16.msra.mxu0 0
    %4762 = vmatprep.subr.bf16.mxu0 0
    %4763 = vmatpush1.bf16.msra.mxu0 0
    %4764 = vmatprep.subr.bf16.mxu0 0
    %4765 = vmatpush1.bf16.msra.mxu0 0
    %4766 = vmatprep.subr.bf16.mxu0 0
    %4767 = vmatpush1.bf16.msra.mxu0 0
    %4768 = vmatprep.subr.bf16.mxu0 0
    %4769 = vmatpush1.bf16.msra.mxu0 0
    %4770 = vmatprep.subr.bf16.mxu0 0
    %4771 = vmatpush1.bf16.msra.mxu0 0
    %4772 = vmatprep.subr.bf16.mxu0 0
    %4773 = vmatpush1.bf16.msra.mxu0 %v4756
    %4774 = vmatprep.subr.bf16.mxu0 0
    %4775 = vmatpush2.bf16.msra.mxu0 0
    %4776 = vmatprep.subr.bf16.mxu0 0
    %4777 = vmatpush2.bf16.msra.mxu0 0
    %4778 = vmatprep.subr.bf16.mxu0 0
    %4779 = vmatpush2.bf16.msra.mxu0 0
    %4780 = vmatprep.subr.bf16.mxu0 0
    %4781 = vmatpush2.bf16.msra.mxu0 0
    %4782 = vmatprep.subr.bf16.mxu0 0
    %4783 = vmatpush2.bf16.msra.mxu0 0
    %4784 = vmatprep.subr.bf16.mxu0 0
    %4785 = vmatpush2.bf16.msra.mxu0 0
    %4786 = vmatprep.subr.bf16.mxu0 0
    %4787 = vmatpush2.bf16.msra.mxu0 0
    %4788 = vmatprep.subr.bf16.mxu0 0
    %4789 = vmatpush2.bf16.msra.mxu0 0
    %4790 = vmatprep.mubr.bf16.mxu0 0
    %4791 = vmatmul.mubr.bf16.gmra.mxu0 %v4753
    %v4792 = vpop.f32.mrf.mxu0
    %v4793 = vadd.f32 0.0, %v4792
    %v4794 = vpop.f32.mrf.mxu0
    %v4795 = vpop.f32.mrf.mxu0
    %v4796 = vpop.f32.mrf.mxu0
    %4797 = vdwg.mxu0
    %v4799 = vrot.slane %v4746, 4
    %4800 = vrot.lane.b32.xlu0 %v4254, 88
    %v4801 = vpop.permute.xlu0 %4800
    %v4803 = vsel %vm632, %v4799, 0
    %v4806 = vsel %vm1133, %v4801, 0
    %4808 = vmatprep.subr.bf16.mxu0 0
    %4809 = vmatpush1.bf16.msra.mxu0 0
    %4810 = vmatprep.subr.bf16.mxu0 0
    %4811 = vmatpush1.bf16.msra.mxu0 0
    %4812 = vmatprep.subr.bf16.mxu0 0
    %4813 = vmatpush1.bf16.msra.mxu0 0
    %4814 = vmatprep.subr.bf16.mxu0 0
    %4815 = vmatpush1.bf16.msra.mxu0 0
    %4816 = vmatprep.subr.bf16.mxu0 0
    %4817 = vmatpush1.bf16.msra.mxu0 0
    %4818 = vmatprep.subr.bf16.mxu0 0
    %4819 = vmatpush1.bf16.msra.mxu0 0
    %4820 = vmatprep.subr.bf16.mxu0 0
    %4821 = vmatpush1.bf16.msra.mxu0 0
    %4822 = vmatprep.subr.bf16.mxu0 0
    %4823 = vmatpush1.bf16.msra.mxu0 %v4806
    %4824 = vmatprep.subr.bf16.mxu0 0
    %4825 = vmatpush2.bf16.msra.mxu0 0
    %4826 = vmatprep.subr.bf16.mxu0 0
    %4827 = vmatpush2.bf16.msra.mxu0 0
    %4828 = vmatprep.subr.bf16.mxu0 0
    %4829 = vmatpush2.bf16.msra.mxu0 0
    %4830 = vmatprep.subr.bf16.mxu0 0
    %4831 = vmatpush2.bf16.msra.mxu0 0
    %4832 = vmatprep.subr.bf16.mxu0 0
    %4833 = vmatpush2.bf16.msra.mxu0 0
    %4834 = vmatprep.subr.bf16.mxu0 0
    %4835 = vmatpush2.bf16.msra.mxu0 0
    %4836 = vmatprep.subr.bf16.mxu0 0
    %4837 = vmatpush2.bf16.msra.mxu0 0
    %4838 = vmatprep.subr.bf16.mxu0 0
    %4839 = vmatpush2.bf16.msra.mxu0 0
    %4840 = vmatprep.mubr.bf16.mxu0 0
    %4841 = vmatmul.mubr.bf16.gmra.mxu0 %v4803
    %v4842 = vpop.f32.mrf.mxu0
    %v4843 = vadd.f32 0.0, %v4842
    %v4844 = vpop.f32.mrf.mxu0
    %v4845 = vpop.f32.mrf.mxu0
    %v4846 = vpop.f32.mrf.mxu0
    %4847 = vdwg.mxu0
    %4848 = vrot.lane.b32.xlu0 %v4254, 80
    %v4849 = vpop.permute.xlu0 %4848
    %v4851 = vsel %vm632, %v4747, 0
    %v4854 = vsel %vm1133, %v4849, 0
    %4856 = vmatprep.subr.bf16.mxu0 0
    %4857 = vmatpush1.bf16.msra.mxu0 0
    %4858 = vmatprep.subr.bf16.mxu0 0
    %4859 = vmatpush1.bf16.msra.mxu0 0
    %4860 = vmatprep.subr.bf16.mxu0 0
    %4861 = vmatpush1.bf16.msra.mxu0 0
    %4862 = vmatprep.subr.bf16.mxu0 0
    %4863 = vmatpush1.bf16.msra.mxu0 0
    %4864 = vmatprep.subr.bf16.mxu0 0
    %4865 = vmatpush1.bf16.msra.mxu0 0
    %4866 = vmatprep.subr.bf16.mxu0 0
    %4867 = vmatpush1.bf16.msra.mxu0 0
    %4868 = vmatprep.subr.bf16.mxu0 0
    %4869 = vmatpush1.bf16.msra.mxu0 0
    %4870 = vmatprep.subr.bf16.mxu0 0
    %4871 = vmatpush1.bf16.msra.mxu0 %v4854
    %4872 = vmatprep.subr.bf16.mxu0 0
    %4873 = vmatpush2.bf16.msra.mxu0 0
    %4874 = vmatprep.subr.bf16.mxu0 0
    %4875 = vmatpush2.bf16.msra.mxu0 0
    %4876 = vmatprep.subr.bf16.mxu0 0
    %4877 = vmatpush2.bf16.msra.mxu0 0
    %4878 = vmatprep.subr.bf16.mxu0 0
    %4879 = vmatpush2.bf16.msra.mxu0 0
    %4880 = vmatprep.subr.bf16.mxu0 0
    %4881 = vmatpush2.bf16.msra.mxu0 0
    %4882 = vmatprep.subr.bf16.mxu0 0
    %4883 = vmatpush2.bf16.msra.mxu0 0
    %4884 = vmatprep.subr.bf16.mxu0 0
    %4885 = vmatpush2.bf16.msra.mxu0 0
    %4886 = vmatprep.subr.bf16.mxu0 0
    %4887 = vmatpush2.bf16.msra.mxu0 0
    %4888 = vmatprep.mubr.bf16.mxu0 0
    %4889 = vmatmul.mubr.bf16.gmra.mxu0 %v4851
    %v4890 = vpop.f32.mrf.mxu0
    %v4891 = vadd.f32 0.0, %v4890
    %v4892 = vpop.f32.mrf.mxu0
    %v4893 = vpop.f32.mrf.mxu0
    %v4894 = vpop.f32.mrf.mxu0
    %4895 = vdwg.mxu0
    %v4897 = vrot.slane %v4747, 4
    %4898 = vrot.lane.b32.xlu0 %v4254, 72
    %v4899 = vpop.permute.xlu0 %4898
    %v4901 = vsel %vm632, %v4897, 0
    %v4904 = vsel %vm1133, %v4899, 0
    %4906 = vmatprep.subr.bf16.mxu0 0
    %4907 = vmatpush1.bf16.msra.mxu0 0
    %4908 = vmatprep.subr.bf16.mxu0 0
    %4909 = vmatpush1.bf16.msra.mxu0 0
    %4910 = vmatprep.subr.bf16.mxu0 0
    %4911 = vmatpush1.bf16.msra.mxu0 0
    %4912 = vmatprep.subr.bf16.mxu0 0
    %4913 = vmatpush1.bf16.msra.mxu0 0
    %4914 = vmatprep.subr.bf16.mxu0 0
    %4915 = vmatpush1.bf16.msra.mxu0 0
    %4916 = vmatprep.subr.bf16.mxu0 0
    %4917 = vmatpush1.bf16.msra.mxu0 0
    %4918 = vmatprep.subr.bf16.mxu0 0
    %4919 = vmatpush1.bf16.msra.mxu0 0
    %4920 = vmatprep.subr.bf16.mxu0 0
    %4921 = vmatpush1.bf16.msra.mxu0 %v4904
    %4922 = vmatprep.subr.bf16.mxu0 0
    %4923 = vmatpush2.bf16.msra.mxu0 0
    %4924 = vmatprep.subr.bf16.mxu0 0
    %4925 = vmatpush2.bf16.msra.mxu0 0
    %4926 = vmatprep.subr.bf16.mxu0 0
    %4927 = vmatpush2.bf16.msra.mxu0 0
    %4928 = vmatprep.subr.bf16.mxu0 0
    %4929 = vmatpush2.bf16.msra.mxu0 0
    %4930 = vmatprep.subr.bf16.mxu0 0
    %4931 = vmatpush2.bf16.msra.mxu0 0
    %4932 = vmatprep.subr.bf16.mxu0 0
    %4933 = vmatpush2.bf16.msra.mxu0 0
    %4934 = vmatprep.subr.bf16.mxu0 0
    %4935 = vmatpush2.bf16.msra.mxu0 0
    %4936 = vmatprep.subr.bf16.mxu0 0
    %4937 = vmatpush2.bf16.msra.mxu0 0
    %4938 = vmatprep.mubr.bf16.mxu0 0
    %4939 = vmatmul.mubr.bf16.gmra.mxu0 %v4901
    %v4940 = vpop.f32.mrf.mxu0
    %v4941 = vadd.f32 0.0, %v4940
    %v4942 = vpop.f32.mrf.mxu0
    %v4943 = vpop.f32.mrf.mxu0
    %v4944 = vpop.f32.mrf.mxu0
    %4945 = vdwg.mxu0
    %4947 = vrot.lane.b32.xlu0 %v4843, 8
    %v4948 = vpop.permute.xlu0 %4947
    %4951 = vrot.lane.b32.xlu0 %v4891, 16
    %v4952 = vpop.permute.xlu0 %4951
    %4955 = vrot.lane.b32.xlu0 %v4941, 24
    %v4956 = vpop.permute.xlu0 %4955
    %v4958 = vsel %vm632, %v4793, %v4948
    %v4959 = vsel %vm1338, %v4958, %v4952
    %v4960 = vsel %vm1340, %v4959, %v4956
    %4961 = vrot.lane.b32.xlu0 %v4461, 96
    %v4962 = vpop.permute.xlu0 %4961
    %v4964 = vsel %vm632, %v4748, 0
    %v4967 = vsel %vm1133, %v4962, 0
    %4969 = vmatprep.subr.bf16.mxu0 0
    %4970 = vmatpush1.bf16.msra.mxu0 0
    %4971 = vmatprep.subr.bf16.mxu0 0
    %4972 = vmatpush1.bf16.msra.mxu0 0
    %4973 = vmatprep.subr.bf16.mxu0 0
    %4974 = vmatpush1.bf16.msra.mxu0 0
    %4975 = vmatprep.subr.bf16.mxu0 0
    %4976 = vmatpush1.bf16.msra.mxu0 0
    %4977 = vmatprep.subr.bf16.mxu0 0
    %4978 = vmatpush1.bf16.msra.mxu0 0
    %4979 = vmatprep.subr.bf16.mxu0 0
    %4980 = vmatpush1.bf16.msra.mxu0 0
    %4981 = vmatprep.subr.bf16.mxu0 0
    %4982 = vmatpush1.bf16.msra.mxu0 0
    %4983 = vmatprep.subr.bf16.mxu0 0
    %4984 = vmatpush1.bf16.msra.mxu0 %v4967
    %4985 = vmatprep.subr.bf16.mxu0 0
    %4986 = vmatpush2.bf16.msra.mxu0 0
    %4987 = vmatprep.subr.bf16.mxu0 0
    %4988 = vmatpush2.bf16.msra.mxu0 0
    %4989 = vmatprep.subr.bf16.mxu0 0
    %4990 = vmatpush2.bf16.msra.mxu0 0
    %4991 = vmatprep.subr.bf16.mxu0 0
    %4992 = vmatpush2.bf16.msra.mxu0 0
    %4993 = vmatprep.subr.bf16.mxu0 0
    %4994 = vmatpush2.bf16.msra.mxu0 0
    %4995 = vmatprep.subr.bf16.mxu0 0
    %4996 = vmatpush2.bf16.msra.mxu0 0
    %4997 = vmatprep.subr.bf16.mxu0 0
    %4998 = vmatpush2.bf16.msra.mxu0 0
    %4999 = vmatprep.subr.bf16.mxu0 0
    %5000 = vmatpush2.bf16.msra.mxu0 0
    %5001 = vmatprep.mubr.bf16.mxu0 0
    %5002 = vmatmul.mubr.bf16.gmra.mxu0 %v4964
    %v5003 = vpop.f32.mrf.mxu0
    %v5004 = vadd.f32 0.0, %v5003
    %v5005 = vpop.f32.mrf.mxu0
    %v5006 = vpop.f32.mrf.mxu0
    %v5007 = vpop.f32.mrf.mxu0
    %5008 = vdwg.mxu0
    %v5010 = vrot.slane %v4748, 4
    %5011 = vrot.lane.b32.xlu0 %v4461, 88
    %v5012 = vpop.permute.xlu0 %5011
    %v5014 = vsel %vm632, %v5010, 0
    %v5017 = vsel %vm1133, %v5012, 0
    %5019 = vmatprep.subr.bf16.mxu0 0
    %5020 = vmatpush1.bf16.msra.mxu0 0
    %5021 = vmatprep.subr.bf16.mxu0 0
    %5022 = vmatpush1.bf16.msra.mxu0 0
    %5023 = vmatprep.subr.bf16.mxu0 0
    %5024 = vmatpush1.bf16.msra.mxu0 0
    %5025 = vmatprep.subr.bf16.mxu0 0
    %5026 = vmatpush1.bf16.msra.mxu0 0
    %5027 = vmatprep.subr.bf16.mxu0 0
    %5028 = vmatpush1.bf16.msra.mxu0 0
    %5029 = vmatprep.subr.bf16.mxu0 0
    %5030 = vmatpush1.bf16.msra.mxu0 0
    %5031 = vmatprep.subr.bf16.mxu0 0
    %5032 = vmatpush1.bf16.msra.mxu0 0
    %5033 = vmatprep.subr.bf16.mxu0 0
    %5034 = vmatpush1.bf16.msra.mxu0 %v5017
    %5035 = vmatprep.subr.bf16.mxu0 0
    %5036 = vmatpush2.bf16.msra.mxu0 0
    %5037 = vmatprep.subr.bf16.mxu0 0
    %5038 = vmatpush2.bf16.msra.mxu0 0
    %5039 = vmatprep.subr.bf16.mxu0 0
    %5040 = vmatpush2.bf16.msra.mxu0 0
    %5041 = vmatprep.subr.bf16.mxu0 0
    %5042 = vmatpush2.bf16.msra.mxu0 0
    %5043 = vmatprep.subr.bf16.mxu0 0
    %5044 = vmatpush2.bf16.msra.mxu0 0
    %5045 = vmatprep.subr.bf16.mxu0 0
    %5046 = vmatpush2.bf16.msra.mxu0 0
    %5047 = vmatprep.subr.bf16.mxu0 0
    %5048 = vmatpush2.bf16.msra.mxu0 0
    %5049 = vmatprep.subr.bf16.mxu0 0
    %5050 = vmatpush2.bf16.msra.mxu0 0
    %5051 = vmatprep.mubr.bf16.mxu0 0
    %5052 = vmatmul.mubr.bf16.gmra.mxu0 %v5014
    %v5053 = vpop.f32.mrf.mxu0
    %v5054 = vadd.f32 0.0, %v5053
    %v5055 = vpop.f32.mrf.mxu0
    %v5056 = vpop.f32.mrf.mxu0
    %v5057 = vpop.f32.mrf.mxu0
    %5058 = vdwg.mxu0
    %5059 = vrot.lane.b32.xlu0 %v4461, 80
    %v5060 = vpop.permute.xlu0 %5059
    %v5062 = vsel %vm632, %v4749, 0
    %v5065 = vsel %vm1133, %v5060, 0
    %5067 = vmatprep.subr.bf16.mxu0 0
    %5068 = vmatpush1.bf16.msra.mxu0 0
    %5069 = vmatprep.subr.bf16.mxu0 0
    %5070 = vmatpush1.bf16.msra.mxu0 0
    %5071 = vmatprep.subr.bf16.mxu0 0
    %5072 = vmatpush1.bf16.msra.mxu0 0
    %5073 = vmatprep.subr.bf16.mxu0 0
    %5074 = vmatpush1.bf16.msra.mxu0 0
    %5075 = vmatprep.subr.bf16.mxu0 0
    %5076 = vmatpush1.bf16.msra.mxu0 0
    %5077 = vmatprep.subr.bf16.mxu0 0
    %5078 = vmatpush1.bf16.msra.mxu0 0
    %5079 = vmatprep.subr.bf16.mxu0 0
    %5080 = vmatpush1.bf16.msra.mxu0 0
    %5081 = vmatprep.subr.bf16.mxu0 0
    %5082 = vmatpush1.bf16.msra.mxu0 %v5065
    %5083 = vmatprep.subr.bf16.mxu0 0
    %5084 = vmatpush2.bf16.msra.mxu0 0
    %5085 = vmatprep.subr.bf16.mxu0 0
    %5086 = vmatpush2.bf16.msra.mxu0 0
    %5087 = vmatprep.subr.bf16.mxu0 0
    %5088 = vmatpush2.bf16.msra.mxu0 0
    %5089 = vmatprep.subr.bf16.mxu0 0
    %5090 = vmatpush2.bf16.msra.mxu0 0
    %5091 = vmatprep.subr.bf16.mxu0 0
    %5092 = vmatpush2.bf16.msra.mxu0 0
    %5093 = vmatprep.subr.bf16.mxu0 0
    %5094 = vmatpush2.bf16.msra.mxu0 0
    %5095 = vmatprep.subr.bf16.mxu0 0
    %5096 = vmatpush2.bf16.msra.mxu0 0
    %5097 = vmatprep.subr.bf16.mxu0 0
    %5098 = vmatpush2.bf16.msra.mxu0 0
    %5099 = vmatprep.mubr.bf16.mxu0 0
    %5100 = vmatmul.mubr.bf16.gmra.mxu0 %v5062
    %v5101 = vpop.f32.mrf.mxu0
    %v5102 = vadd.f32 0.0, %v5101
    %v5103 = vpop.f32.mrf.mxu0
    %v5104 = vpop.f32.mrf.mxu0
    %v5105 = vpop.f32.mrf.mxu0
    %5106 = vdwg.mxu0
    %v5108 = vrot.slane %v4749, 4
    %5109 = vrot.lane.b32.xlu0 %v4461, 72
    %v5110 = vpop.permute.xlu0 %5109
    %v5112 = vsel %vm632, %v5108, 0
    %v5115 = vsel %vm1133, %v5110, 0
    %5117 = vmatprep.subr.bf16.mxu0 0
    %5118 = vmatpush1.bf16.msra.mxu0 0
    %5119 = vmatprep.subr.bf16.mxu0 0
    %5120 = vmatpush1.bf16.msra.mxu0 0
    %5121 = vmatprep.subr.bf16.mxu0 0
    %5122 = vmatpush1.bf16.msra.mxu0 0
    %5123 = vmatprep.subr.bf16.mxu0 0
    %5124 = vmatpush1.bf16.msra.mxu0 0
    %5125 = vmatprep.subr.bf16.mxu0 0
    %5126 = vmatpush1.bf16.msra.mxu0 0
    %5127 = vmatprep.subr.bf16.mxu0 0
    %5128 = vmatpush1.bf16.msra.mxu0 0
    %5129 = vmatprep.subr.bf16.mxu0 0
    %5130 = vmatpush1.bf16.msra.mxu0 0
    %5131 = vmatprep.subr.bf16.mxu0 0
    %5132 = vmatpush1.bf16.msra.mxu0 %v5115
    %5133 = vmatprep.subr.bf16.mxu0 0
    %5134 = vmatpush2.bf16.msra.mxu0 0
    %5135 = vmatprep.subr.bf16.mxu0 0
    %5136 = vmatpush2.bf16.msra.mxu0 0
    %5137 = vmatprep.subr.bf16.mxu0 0
    %5138 = vmatpush2.bf16.msra.mxu0 0
    %5139 = vmatprep.subr.bf16.mxu0 0
    %5140 = vmatpush2.bf16.msra.mxu0 0
    %5141 = vmatprep.subr.bf16.mxu0 0
    %5142 = vmatpush2.bf16.msra.mxu0 0
    %5143 = vmatprep.subr.bf16.mxu0 0
    %5144 = vmatpush2.bf16.msra.mxu0 0
    %5145 = vmatprep.subr.bf16.mxu0 0
    %5146 = vmatpush2.bf16.msra.mxu0 0
    %5147 = vmatprep.subr.bf16.mxu0 0
    %5148 = vmatpush2.bf16.msra.mxu0 0
    %5149 = vmatprep.mubr.bf16.mxu0 0
    %5150 = vmatmul.mubr.bf16.gmra.mxu0 %v5112
    %v5151 = vpop.f32.mrf.mxu0
    %v5152 = vadd.f32 0.0, %v5151
    %v5153 = vpop.f32.mrf.mxu0
    %v5154 = vpop.f32.mrf.mxu0
    %v5155 = vpop.f32.mrf.mxu0
    %5156 = vdwg.mxu0
    %5158 = vrot.lane.b32.xlu0 %v5054, 8
    %v5159 = vpop.permute.xlu0 %5158
    %5162 = vrot.lane.b32.xlu0 %v5102, 16
    %v5163 = vpop.permute.xlu0 %5162
    %5166 = vrot.lane.b32.xlu0 %v5152, 24
    %v5167 = vpop.permute.xlu0 %5166
    %v5169 = vsel %vm632, %v5004, %v5159
    %v5170 = vsel %vm1338, %v5169, %v5163
    %v5171 = vsel %vm1340, %v5170, %v5167
    %v5172 = vpack.c.bf16 %v5171, %v4960
    %v5174 = vlaneseq
    %v5175 = vshrl.u32 %v5174, 7
    %v5176 = vsub.s32 0, %v5175
    %v5177 = vrot.slane %v4261, %v5176
    %v5183 = vunpack.c.l.b16 %v4256
    %v5184 = vunpack.c.l.b16 %v4257
    %v5185 = vunpack.c.l.b16 %v4258
    %v5186 = vunpack.c.l.b16 %v4259
    %v5187 = vpack.c.b16 %v5184, %v5183
    %v5188 = vpack.c.b16 %v5186, %v5185
    %v5192 = vsel %vm578, %v5172, 0
    %5194 = vmatprep.subr.bf16.mxu0 0
    %5195 = vmatpush1.bf16.msra.mxu0 0
    %5196 = vmatprep.subr.bf16.mxu0 0
    %5197 = vmatpush1.bf16.msra.mxu0 0
    %5198 = vmatprep.subr.bf16.mxu0 0
    %5199 = vmatpush1.bf16.msra.mxu0 0
    %5200 = vmatprep.subr.bf16.mxu0 0
    %5201 = vmatpush1.bf16.msra.mxu0 0
    %5202 = vmatprep.subr.bf16.mxu0 0
    %5203 = vmatpush1.bf16.msra.mxu0 0
    %5204 = vmatprep.subr.bf16.mxu0 0
    %5205 = vmatpush1.bf16.msra.mxu0 0
    %5206 = vmatprep.subr.bf16.mxu0 0
    %5207 = vmatpush1.bf16.msra.mxu0 %v5188
    %5208 = vmatprep.subr.bf16.mxu0 0
    %5209 = vmatpush1.bf16.msra.mxu0 %v5187
    %5210 = vmatprep.subr.bf16.mxu0 0
    %5211 = vmatpush2.bf16.msra.mxu0 0
    %5212 = vmatprep.subr.bf16.mxu0 0
    %5213 = vmatpush2.bf16.msra.mxu0 0
    %5214 = vmatprep.subr.bf16.mxu0 0
    %5215 = vmatpush2.bf16.msra.mxu0 0
    %5216 = vmatprep.subr.bf16.mxu0 0
    %5217 = vmatpush2.bf16.msra.mxu0 0
    %5218 = vmatprep.subr.bf16.mxu0 0
    %5219 = vmatpush2.bf16.msra.mxu0 0
    %5220 = vmatprep.subr.bf16.mxu0 0
    %5221 = vmatpush2.bf16.msra.mxu0 0
    %5222 = vmatprep.subr.bf16.mxu0 0
    %5223 = vmatpush2.bf16.msra.mxu0 0
    %5224 = vmatprep.subr.bf16.mxu0 0
    %5225 = vmatpush2.bf16.msra.mxu0 0
    %5226 = vmatprep.mubr.bf16.mxu0 0
    %5227 = vmatmul.mubr.bf16.gmra.mxu0 %v5192
    %v5228 = vpop.f32.mrf.mxu0
    %v5229 = vadd.f32 %v5177, %v5228
    %v5230 = vpop.f32.mrf.mxu0
    %v5231 = vpop.f32.mrf.mxu0
    %v5232 = vadd.f32 %v5177, %v5231
    %v5233 = vpop.f32.mrf.mxu0
    %5234 = vdwg.mxu0
    %v5235 = vadd.f32 %v4115, %v5229
    %v5236 = vadd.f32 %v4116, %v5232
    %s5237 = scalar_lea.vmem [#allocation22], 1
    %v5238 = vld [vmem:[%s5237] sm:$0x1]
    %s5239 = scalar_lea.vmem [#allocation23], 1
    %v5240 = vld [vmem:[%s5239] sm:$0x1]
    %v5241 = vsel %vm578, %v5235, 0.0
    %5242 = vadd.xlane.f32.xlu0 %v5241
    %v5243 = vpop.xlane.xlu0 %5242
    %v5244 = vsel %vm578, %v5236, 0.0
    %5245 = vadd.xlane.f32.xlu0 %v5244
    %v5246 = vpop.xlane.xlu0 %5245
    %v5247 = vmul.f32 %v5243, %v1626
    %v5248 = vmul.f32 %v5246, %v1626
    %v5249 = vsub.f32 %v5235, %v5247
    %v5250 = vsub.f32 %v5236, %v5248
    %v5251 = vmul.f32 %v5249, %v5249
    %v5252 = vmul.f32 %v5250, %v5250
    %v5253 = vsel %vm578, %v5251, 0.0
    %5254 = vadd.xlane.f32.xlu0 %v5253
    %v5255 = vpop.xlane.xlu0 %5254
    %v5256 = vsel %vm578, %v5252, 0.0
    %5257 = vadd.xlane.f32.xlu0 %v5256
    %v5258 = vpop.xlane.xlu0 %5257
    %v5259 = vmul.f32 %v5255, %v1626
    %v5260 = vmul.f32 %v5258, %v1626
    %v5261 = vadd.f32 %v5259, 1e-05
    %v5262 = vadd.f32 %v5260, 1e-05
    %v5263 = vrsqrt.pop %v5261
    %v5264 = vrsqrt.pop %v5262
    %v5265 = vmul.f32 %v5249, %v5263
    %v5266 = vmul.f32 %v5250, %v5264
    %v5268 = vlaneseq
    %v5269 = vshrl.u32 %v5268, 7
    %v5270 = vsub.s32 0, %v5269
    %v5271 = vrot.slane %v5238, %v5270
    %v5273 = vmul.f32 %v5265, %v5271
    %v5274 = vmul.f32 %v5266, %v5271
    %v5276 = vlaneseq
    %v5277 = vshrl.u32 %v5276, 7
    %v5278 = vsub.s32 0, %v5277
    %v5279 = vrot.slane %v5240, %v5278
    %v5281 = vadd.f32 %v5273, %v5279
    %v5282 = vadd.f32 %v5274, %v5279
    %v5283 = vpack.c.bf16 %v5282, %v5281
    %s5284 = scalar_lea.vmem [#allocation28], 16
    %v5285 = vld [vmem:[%s5284] sm:$0xf]
    %v5286 = vld [vmem:[%s5284 + $0x4] sm:$0xf]
    %v5287 = vld [vmem:[%s5284 + $0x8] sm:$0xf]
    %v5288 = vld [vmem:[%s5284 + $0xc] sm:$0xf]
    %s5289 = scalar_lea.vmem [#allocation29], 1
    %v5290 = vld [vmem:[%s5289] sm:$0x1]
    %v5292 = vlaneseq
    %v5293 = vshrl.u32 %v5292, 7
    %v5294 = vsub.s32 0, %v5293
    %v5295 = vrot.slane %v5290, %v5294
    %v5301 = vunpack.c.l.b16 %v5285
    %v5302 = vunpack.c.l.b16 %v5286
    %v5303 = vunpack.c.l.b16 %v5287
    %v5304 = vunpack.c.l.b16 %v5288
    %v5305 = vpack.c.b16 %v5302, %v5301
    %v5306 = vpack.c.b16 %v5304, %v5303
    %v5310 = vsel %vm578, %v5283, 0
    %5312 = vmatprep.subr.bf16.mxu0 0
    %5313 = vmatpush1.bf16.msra.mxu0 0
    %5314 = vmatprep.subr.bf16.mxu0 0
    %5315 = vmatpush1.bf16.msra.mxu0 0
    %5316 = vmatprep.subr.bf16.mxu0 0
    %5317 = vmatpush1.bf16.msra.mxu0 0
    %5318 = vmatprep.subr.bf16.mxu0 0
    %5319 = vmatpush1.bf16.msra.mxu0 0
    %5320 = vmatprep.subr.bf16.mxu0 0
    %5321 = vmatpush1.bf16.msra.mxu0 0
    %5322 = vmatprep.subr.bf16.mxu0 0
    %5323 = vmatpush1.bf16.msra.mxu0 0
    %5324 = vmatprep.subr.bf16.mxu0 0
    %5325 = vmatpush1.bf16.msra.mxu0 %v5306
    %5326 = vmatprep.subr.bf16.mxu0 0
    %5327 = vmatpush1.bf16.msra.mxu0 %v5305
    %5328 = vmatprep.subr.bf16.mxu0 0
    %5329 = vmatpush2.bf16.msra.mxu0 0
    %5330 = vmatprep.subr.bf16.mxu0 0
    %5331 = vmatpush2.bf16.msra.mxu0 0
    %5332 = vmatprep.subr.bf16.mxu0 0
    %5333 = vmatpush2.bf16.msra.mxu0 0
    %5334 = vmatprep.subr.bf16.mxu0 0
    %5335 = vmatpush2.bf16.msra.mxu0 0
    %5336 = vmatprep.subr.bf16.mxu0 0
    %5337 = vmatpush2.bf16.msra.mxu0 0
    %5338 = vmatprep.subr.bf16.mxu0 0
    %5339 = vmatpush2.bf16.msra.mxu0 0
    %5340 = vmatprep.subr.bf16.mxu0 0
    %5341 = vmatpush2.bf16.msra.mxu0 0
    %5342 = vmatprep.subr.bf16.mxu0 0
    %5343 = vmatpush2.bf16.msra.mxu0 0
    %5344 = vmatprep.mubr.bf16.mxu0 0
    %5345 = vmatmul.mubr.bf16.gmra.mxu0 %v5310
    %v5346 = vpop.f32.mrf.mxu0
    %v5347 = vadd.f32 %v5295, %v5346
    %v5348 = vpop.f32.mrf.mxu0
    %v5349 = vpop.f32.mrf.mxu0
    %v5350 = vadd.f32 %v5295, %v5349
    %v5351 = vpop.f32.mrf.mxu0
    %5352 = vdwg.mxu0
    %v5353 = vmax.f32 %v5347, 0.0
    %v5354 = vmax.f32 %v5350, 0.0
    %v5355 = vpack.c.bf16 %v5354, %v5353
    %s5356 = scalar_lea.vmem [#allocation31], 16
    %v5357 = vld [vmem:[%s5356] sm:$0xf]
    %v5358 = vld [vmem:[%s5356 + $0x4] sm:$0xf]
    %v5359 = vld [vmem:[%s5356 + $0x8] sm:$0xf]
    %v5360 = vld [vmem:[%s5356 + $0xc] sm:$0xf]
    %s5361 = scalar_lea.vmem [#allocation32], 1
    %v5362 = vld [vmem:[%s5361] sm:$0x1]
    %v5364 = vlaneseq
    %v5365 = vshrl.u32 %v5364, 7
    %v5366 = vsub.s32 0, %v5365
    %v5367 = vrot.slane %v5362, %v5366
    %v5373 = vunpack.c.l.b16 %v5357
    %v5374 = vunpack.c.l.b16 %v5358
    %v5375 = vunpack.c.l.b16 %v5359
    %v5376 = vunpack.c.l.b16 %v5360
    %v5377 = vpack.c.b16 %v5374, %v5373
    %v5378 = vpack.c.b16 %v5376, %v5375
    %v5382 = vsel %vm578, %v5355, 0
    %5384 = vmatprep.subr.bf16.mxu0 0
    %5385 = vmatpush1.bf16.msra.mxu0 0
    %5386 = vmatprep.subr.bf16.mxu0 0
    %5387 = vmatpush1.bf16.msra.mxu0 0
    %5388 = vmatprep.subr.bf16.mxu0 0
    %5389 = vmatpush1.bf16.msra.mxu0 0
    %5390 = vmatprep.subr.bf16.mxu0 0
    %5391 = vmatpush1.bf16.msra.mxu0 0
    %5392 = vmatprep.subr.bf16.mxu0 0
    %5393 = vmatpush1.bf16.msra.mxu0 0
    %5394 = vmatprep.subr.bf16.mxu0 0
    %5395 = vmatpush1.bf16.msra.mxu0 0
    %5396 = vmatprep.subr.bf16.mxu0 0
    %5397 = vmatpush1.bf16.msra.mxu0 %v5378
    %5398 = vmatprep.subr.bf16.mxu0 0
    %5399 = vmatpush1.bf16.msra.mxu0 %v5377
    %5400 = vmatprep.subr.bf16.mxu0 0
    %5401 = vmatpush2.bf16.msra.mxu0 0
    %5402 = vmatprep.subr.bf16.mxu0 0
    %5403 = vmatpush2.bf16.msra.mxu0 0
    %5404 = vmatprep.subr.bf16.mxu0 0
    %5405 = vmatpush2.bf16.msra.mxu0 0
    %5406 = vmatprep.subr.bf16.mxu0 0
    %5407 = vmatpush2.bf16.msra.mxu0 0
    %5408 = vmatprep.subr.bf16.mxu0 0
    %5409 = vmatpush2.bf16.msra.mxu0 0
    %5410 = vmatprep.subr.bf16.mxu0 0
    %5411 = vmatpush2.bf16.msra.mxu0 0
    %5412 = vmatprep.subr.bf16.mxu0 0
    %5413 = vmatpush2.bf16.msra.mxu0 0
    %5414 = vmatprep.subr.bf16.mxu0 0
    %5415 = vmatpush2.bf16.msra.mxu0 0
    %5416 = vmatprep.mubr.bf16.mxu0 0
    %5417 = vmatmul.mubr.bf16.gmra.mxu0 %v5382
    %v5418 = vpop.f32.mrf.mxu0
    %v5419 = vadd.f32 %v5367, %v5418
    %v5420 = vpop.f32.mrf.mxu0
    %v5421 = vpop.f32.mrf.mxu0
    %v5422 = vadd.f32 %v5367, %v5421
    %v5423 = vpop.f32.mrf.mxu0
    %5424 = vdwg.mxu0
    %v5425 = vadd.f32 %v5281, %v5419
    %v5426 = vadd.f32 %v5282, %v5422
    %s5427 = scalar_lea.vmem [#allocation25], 1
    %v5428 = vld [vmem:[%s5427] sm:$0x1]
    %s5429 = scalar_lea.vmem [#allocation26], 1
    %v5430 = vld [vmem:[%s5429] sm:$0x1]
    %v5431 = vsel %vm578, %v5425, 0.0
    %5432 = vadd.xlane.f32.xlu0 %v5431
    %v5433 = vpop.xlane.xlu0 %5432
    %v5434 = vsel %vm578, %v5426, 0.0
    %5435 = vadd.xlane.f32.xlu0 %v5434
    %v5436 = vpop.xlane.xlu0 %5435
    %v5437 = vmul.f32 %v5433, %v1626
    %v5438 = vmul.f32 %v5436, %v1626
    %v5439 = vsub.f32 %v5425, %v5437
    %v5440 = vsub.f32 %v5426, %v5438
    %v5441 = vmul.f32 %v5439, %v5439
    %v5442 = vmul.f32 %v5440, %v5440
    %v5443 = vsel %vm578, %v5441, 0.0
    %5444 = vadd.xlane.f32.xlu0 %v5443
    %v5445 = vpop.xlane.xlu0 %5444
    %v5446 = vsel %vm578, %v5442, 0.0
    %5447 = vadd.xlane.f32.xlu0 %v5446
    %v5448 = vpop.xlane.xlu0 %5447
    %v5449 = vmul.f32 %v5445, %v1626
    %v5450 = vmul.f32 %v5448, %v1626
    %v5451 = vadd.f32 %v5449, 1e-05
    %v5452 = vadd.f32 %v5450, 1e-05
    %v5453 = vrsqrt.pop %v5451
    %v5454 = vrsqrt.pop %v5452
    %v5455 = vmul.f32 %v5439, %v5453
    %v5456 = vmul.f32 %v5440, %v5454
    %v5458 = vlaneseq
    %v5459 = vshrl.u32 %v5458, 7
    %v5460 = vsub.s32 0, %v5459
    %v5461 = vrot.slane %v5428, %v5460
    %v5463 = vmul.f32 %v5455, %v5461
    %v5464 = vmul.f32 %v5456, %v5461
    %v5466 = vlaneseq
    %v5467 = vshrl.u32 %v5466, 7
    %v5468 = vsub.s32 0, %v5467
    %v5469 = vrot.slane %v5430, %v5468
    %v5471 = vadd.f32 %v5463, %v5469
    %v5472 = vadd.f32 %v5464, %v5469
    %v5473 = vpack.c.bf16 %v5472, %v5471
    %v5474 = vld [vmem:[%s25] sm:$0xf]
    %v5475 = vld [vmem:[%s25 + $0x4] sm:$0xf]
    %v5476 = vld [vmem:[%s25 + $0x8] sm:$0xf]
    %v5477 = vld [vmem:[%s25 + $0xc] sm:$0xf]
    %v5478 = vld [vmem:[#allocation34] sm:$0x1]
    %v5480 = vlaneseq
    %v5481 = vshrl.u32 %v5480, 7
    %v5482 = vsub.s32 0, %v5481
    %v5483 = vrot.slane %v5478, %v5482
    %v5489 = vunpack.c.l.b16 %v5474
    %v5490 = vunpack.c.l.b16 %v5475
    %v5491 = vunpack.c.l.b16 %v5476
    %v5492 = vunpack.c.l.b16 %v5477
    %v5493 = vpack.c.b16 %v5490, %v5489
    %v5494 = vpack.c.b16 %v5492, %v5491
    %v5498 = vsel %vm578, %v5473, 0
    %5500 = vmatprep.subr.bf16.mxu0 0
    %5501 = vmatpush1.bf16.msra.mxu0 0
    %5502 = vmatprep.subr.bf16.mxu0 0
    %5503 = vmatpush1.bf16.msra.mxu0 0
    %5504 = vmatprep.subr.bf16.mxu0 0
    %5505 = vmatpush1.bf16.msra.mxu0 0
    %5506 = vmatprep.subr.bf16.mxu0 0
    %5507 = vmatpush1.bf16.msra.mxu0 0
    %5508 = vmatprep.subr.bf16.mxu0 0
    %5509 = vmatpush1.bf16.msra.mxu0 0
    %5510 = vmatprep.subr.bf16.mxu0 0
    %5511 = vmatpush1.bf16.msra.mxu0 0
    %5512 = vmatprep.subr.bf16.mxu0 0
    %5513 = vmatpush1.bf16.msra.mxu0 %v5494
    %5514 = vmatprep.subr.bf16.mxu0 0
    %5515 = vmatpush1.bf16.msra.mxu0 %v5493
    %5516 = vmatprep.subr.bf16.mxu0 0
    %5517 = vmatpush2.bf16.msra.mxu0 0
    %5518 = vmatprep.subr.bf16.mxu0 0
    %5519 = vmatpush2.bf16.msra.mxu0 0
    %5520 = vmatprep.subr.bf16.mxu0 0
    %5521 = vmatpush2.bf16.msra.mxu0 0
    %5522 = vmatprep.subr.bf16.mxu0 0
    %5523 = vmatpush2.bf16.msra.mxu0 0
    %5524 = vmatprep.subr.bf16.mxu0 0
    %5525 = vmatpush2.bf16.msra.mxu0 0
    %5526 = vmatprep.subr.bf16.mxu0 0
    %5527 = vmatpush2.bf16.msra.mxu0 0
    %5528 = vmatprep.subr.bf16.mxu0 0
    %5529 = vmatpush2.bf16.msra.mxu0 0
    %5530 = vmatprep.subr.bf16.mxu0 0
    %5531 = vmatpush2.bf16.msra.mxu0 0
    %5532 = vmatprep.mubr.bf16.mxu0 0
    %5533 = vmatmul.mubr.bf16.gmra.mxu0 %v5498
    %v5534 = vpop.f32.mrf.mxu0
    %v5535 = vadd.f32 %v5483, %v5534
    %v5536 = vpop.f32.mrf.mxu0
    %v5537 = vpop.f32.mrf.mxu0
    %v5538 = vadd.f32 %v5483, %v5537
    %v5539 = vpop.f32.mrf.mxu0
    %5540 = vdwg.mxu0
    %v5542 = vcombine.high %v5535, %v5535
    %v5544 = vunpack.c.l.s4 1966171168
    %v5545 = vunpack.c.0.s8 %v5544
    %v5546 = vlaneseq
    %v5547 = vshrl.u32 %v5546, 7
    %v5548 = vsub.s32 %v5545, %v5547
    %v5549 = vrot.slane %v5535, %v5548
    %v5551 = vunpack.c.l.s4 1966171168
    %v5552 = vunpack.c.0.s8 %v5551
    %v5553 = vlaneseq
    %v5554 = vshrl.u32 %v5553, 7
    %v5555 = vsub.s32 %v5552, %v5554
    %v5556 = vrot.slane %v5542, %v5555
    %v5557 = vcombine.high %v5549, %v5549
    %v5558 = vcombine.high %v5556, %v5556
    %v5560 = vunpack.c.l.s4 1966171168
    %v5561 = vunpack.c.0.s8 %v5560
    %v5562 = vlaneseq
    %v5563 = vshrl.u32 %v5562, 7
    %v5564 = vsub.s32 %v5561, %v5563
    %v5565 = vrot.slane %v5549, %v5564
    %v5567 = vunpack.c.l.s4 1966171168
    %v5568 = vunpack.c.0.s8 %v5567
    %v5569 = vlaneseq
    %v5570 = vshrl.u32 %v5569, 7
    %v5571 = vsub.s32 %v5568, %v5570
    %v5572 = vrot.slane %v5556, %v5571
    %v5574 = vunpack.c.l.s4 1966171168
    %v5575 = vunpack.c.0.s8 %v5574
    %v5576 = vlaneseq
    %v5577 = vshrl.u32 %v5576, 7
    %v5578 = vsub.s32 %v5575, %v5577
    %v5579 = vrot.slane %v5557, %v5578
    %v5581 = vunpack.c.l.s4 1966171168
    %v5582 = vunpack.c.0.s8 %v5581
    %v5583 = vlaneseq
    %v5584 = vshrl.u32 %v5583, 7
    %v5585 = vsub.s32 %v5582, %v5584
    %v5586 = vrot.slane %v5558, %v5585
    %v5587 = vcombine.high %v5565, %v5565
    %v5588 = vcombine.high %v5572, %v5572
    %v5589 = vcombine.high %v5579, %v5579
    %v5590 = vcombine.high %v5586, %v5586
    %v5600 = vcombine.high %v5538, %v5538
    %v5602 = vunpack.c.l.s4 1966171168
    %v5603 = vunpack.c.0.s8 %v5602
    %v5604 = vlaneseq
    %v5605 = vshrl.u32 %v5604, 7
    %v5606 = vsub.s32 %v5603, %v5605
    %v5607 = vrot.slane %v5538, %v5606
    %v5609 = vunpack.c.l.s4 1966171168
    %v5610 = vunpack.c.0.s8 %v5609
    %v5611 = vlaneseq
    %v5612 = vshrl.u32 %v5611, 7
    %v5613 = vsub.s32 %v5610, %v5612
    %v5614 = vrot.slane %v5600, %v5613
    %v5615 = vcombine.high %v5607, %v5607
    %v5616 = vcombine.high %v5614, %v5614
    %v5618 = vunpack.c.l.s4 1966171168
    %v5619 = vunpack.c.0.s8 %v5618
    %v5620 = vlaneseq
    %v5621 = vshrl.u32 %v5620, 7
    %v5622 = vsub.s32 %v5619, %v5621
    %v5623 = vrot.slane %v5607, %v5622
    %v5625 = vunpack.c.l.s4 1966171168
    %v5626 = vunpack.c.0.s8 %v5625
    %v5627 = vlaneseq
    %v5628 = vshrl.u32 %v5627, 7
    %v5629 = vsub.s32 %v5626, %v5628
    %v5630 = vrot.slane %v5614, %v5629
    %v5632 = vunpack.c.l.s4 1966171168
    %v5633 = vunpack.c.0.s8 %v5632
    %v5634 = vlaneseq
    %v5635 = vshrl.u32 %v5634, 7
    %v5636 = vsub.s32 %v5633, %v5635
    %v5637 = vrot.slane %v5615, %v5636
    %v5639 = vunpack.c.l.s4 1966171168
    %v5640 = vunpack.c.0.s8 %v5639
    %v5641 = vlaneseq
    %v5642 = vshrl.u32 %v5641, 7
    %v5643 = vsub.s32 %v5640, %v5642
    %v5644 = vrot.slane %v5616, %v5643
    %v5645 = vcombine.high %v5623, %v5623
    %v5646 = vcombine.high %v5630, %v5630
    %v5647 = vcombine.high %v5637, %v5637
    %v5648 = vcombine.high %v5644, %v5644
    %v5649 = vlaneseq
    %v5650 = vshrl.u32 %v5649, 7
    %v5651 = vsub.s32 0, %v5650
    %v5652 = vrot.slane %v5623, %v5651
    %v5653 = vlaneseq
    %v5654 = vshrl.u32 %v5653, 7
    %v5655 = vsub.s32 0, %v5654
    %v5656 = vrot.slane %v5637, %v5655
    %v5657 = vlaneseq
    %v5658 = vshrl.u32 %v5657, 7
    %v5659 = vsub.s32 0, %v5658
    %v5660 = vrot.slane %v5645, %v5659
    %v5661 = vlaneseq
    %v5662 = vshrl.u32 %v5661, 7
    %v5663 = vsub.s32 0, %v5662
    %v5664 = vrot.slane %v5647, %v5663
    %v5665 = vlaneseq
    %v5666 = vshrl.u32 %v5665, 7
    %v5667 = vsub.s32 0, %v5666
    %v5668 = vrot.slane %v5630, %v5667
    %v5669 = vlaneseq
    %v5670 = vshrl.u32 %v5669, 7
    %v5671 = vsub.s32 0, %v5670
    %v5672 = vrot.slane %v5644, %v5671
    %v5673 = vlaneseq
    %v5674 = vshrl.u32 %v5673, 7
    %v5675 = vsub.s32 0, %v5674
    %v5676 = vrot.slane %v5646, %v5675
    %v5677 = vlaneseq
    %v5678 = vshrl.u32 %v5677, 7
    %v5679 = vsub.s32 0, %v5678
    %v5680 = vrot.slane %v5648, %v5679
    %vm5689 = vcmask 1040384
    %v5690 = vsel %vm5689, %v5565, %v5652
    %v5691 = vsel %vm5689, %v5579, %v5656
    %v5692 = vsel %vm5689, %v5587, %v5660
    %v5693 = vsel %vm5689, %v5589, %v5664
    %v5694 = vsel %vm5689, %v5572, %v5668
    %v5695 = vsel %vm5689, %v5586, %v5672
    %v5696 = vsel %vm5689, %v5588, %v5676
    %v5697 = vsel %vm5689, %v5590, %v5680
    %5698 = vst [vmem:[#allocation35] sm:$0x3] %v5690
    %5699 = vst [vmem:[#allocation35 + $0x2] sm:$0x3] %v5691
    %5700 = vst [vmem:[#allocation35 + $0x4] sm:$0x3] %v5692
    %5701 = vst [vmem:[#allocation35 + $0x6] sm:$0x3] %v5693
    %5702 = vst [vmem:[#allocation35 + $0x8] sm:$0x3] %v5694
    %5703 = vst [vmem:[#allocation35 + $0xa] sm:$0x3] %v5695
    %5704 = vst [vmem:[#allocation35 + $0xc] sm:$0x3] %v5696
    %5705 = vst [vmem:[#allocation35 + $0xe] sm:$0x3] %v5697
    // Predicated region
    $region194: #{autoregressive_decoder_forward.1} parent=1 // pred_check
      _
    $region195: #{autoregressive_decoder_forward.1} parent=1 // pred_check_branch
      %5707 = sbr.rel (0) target = $region197
    $region196: #{autoregressive_decoder_forward.1} parent=1 // pred_region
      %s5709 = ssub.s32 256, 256
      %5710 = vsyncadd [#allocation4], %s5709
      %s5711 = sshll.u32 [#allocation35], 4
      %s5712 = int_to_ptr.vmem [resolvable:$true] %s5711
      %5717 = dma.vmem_to_hbm [thread:$0]  %s5712, 256, %s27, [#allocation4], 32, 32, 2
    $region197: #{autoregressive_decoder_forward.1} parent=1 // pred_fallthru
      _
    // Predicated region
    $region198: #{autoregressive_decoder_forward.1} parent=1 // pred_check
      _
    $region199: #{autoregressive_decoder_forward.1} parent=1 // pred_check_branch
      %5719 = sbr.rel (0) target = $region201
    $region200: #{autoregressive_decoder_forward.1} parent=1 // pred_region
      %5720 = dma.done [#allocation4], 256
    $region201: #{autoregressive_decoder_forward.1} parent=1 // pred_fallthru
      _
    %5721 = vsyncpa [#allocation3], 1
    %5722 = vsyncpa [#allocation6], 1
    %5723 = vsyncpa [#allocation9], 1
    %5724 = vsyncpa [#allocation12], 1
    %5725 = vsyncpa [#allocation15], 1
    %5726 = vsyncpa [#allocation18], 1
    %5727 = vsyncpa [#allocation21], 1
    %5728 = vsyncpa [#allocation24], 1
    %5729 = vsyncpa [#allocation27], 1
    %5730 = vsyncpa [#allocation30], 1
    %5731 = vsyncpa [#allocation33], 1
    %5732 = vsyncpa [#allocation4], 1

</llo_original>
